<compile_context>
chip_gen: v7x
topology: tpu7x:2x2x1
jax: 0.10.0
libtpu: 0.0.40
codegen_flags: <defaults>
</compile_context>

<pallas_src>
import functools

import jax
import jax.numpy as jnp
from jax import lax
from jax.experimental import pallas as pl
from jax.experimental.pallas import tpu as pltpu


# ----------------------------- Pallas kernels ------------------------------

def _conv_bn_fused_kernel(xin_ref, w_ref, scale_ref, shift_ref, mask_ref,
                          y_ref, ps_ref, pss_ref,
                          *, wp, apply_act, compute_dtype):
    """Fused [previous-layer BN scale/shift (+ReLU)] -> zero-pad -> 3x3 conv.

    "Compact" layout: x[j] = padded-image pixel at flat index (wp + 1 + j),
    i.e. interior rows with zero pad columns, flattened; the top/bottom pad
    rows are supplied as zeros inside the kernel (no offset stores needed).

    xin_ref : (1, Cin, L)    pre-activation (or raw) input, f32
    w_ref   : (9, Cout, Cin) conv taps, k = ky*3 + kx
    scale_ref / shift_ref : (Cin, 1) previous layer's folded BN (identity for conv1)
    mask_ref: (1, L)         1.0 at real pixels, 0.0 at pad columns
    y_ref   : (1, Cout, L)   pre-BN conv output (lane-dense last dim)
    ps_ref / pss_ref : (1, Cout, 1) per-image sum / sum-of-squares (BN partials)
    """
    cin = xin_ref.shape[1]
    cout, l = y_ref.shape[1], y_ref.shape[2]

    x = xin_ref[0].astype(jnp.float32)                    # (Cin, L)
    v = x * scale_ref[...] + shift_ref[...]
    if apply_act:
        v = jnp.maximum(v, 0.0)
    mask = mask_ref[...] > 0.5                            # (1, L)
    xa = jnp.where(mask, v, 0.0).astype(compute_dtype)    # re-zero pad columns

    # Zero-padded full image, flattened: [wp+1 zeros | xa | wp+1 zeros].
    zpad = jnp.zeros((cin, wp + 1), compute_dtype)
    xfull = jnp.concatenate([zpad, xa, zpad], axis=1)     # (Cin, Hp*Wp)

    acc = jnp.zeros((cout, l), jnp.float32)
    for k in range(9):                                    # 9 static shifted taps
        ky, kx = k // 3, k % 3
        s = ky * wp + kx
        acc = acc + jnp.dot(w_ref[k], xfull[:, s:s + l],
                            preferred_element_type=jnp.float32)

    y_ref[0] = acc.astype(y_ref.dtype)

    # BN batch-statistic partials over real pixels only (pad columns masked).
    am = jnp.where(mask, acc, 0.0)
    ps_ref[0] = jnp.sum(am, axis=1, keepdims=True)
    pss_ref[0] = jnp.sum(am * am, axis=1, keepdims=True)


def _bn_relu_kernel(y_ref, scale_ref, shift_ref, o_ref):
    # Final-layer epilogue only: y*scale + shift, ReLU (earlier layers get this
    # folded into the next conv kernel's input path).
    o_ref[0] = jnp.maximum(y_ref[0] * scale_ref[...] + shift_ref[...], 0.0)


# ----------------------------- Pallas wrappers ------------------------------

def _compiler_params():
    return pltpu.CompilerParams(
        dimension_semantics=("parallel",),        # batch grid; v7x megacore 2-way
        vmem_limit_bytes=32 * 1024 * 1024)


def conv3x3_bn_fused(xc, w9, scale_in, shift_in, colmask, wp, *,
                     apply_act, compute_dtype=jnp.float32):
    n, cin, l = xc.shape
    cout = w9.shape[1]
    kernel = functools.partial(_conv_bn_fused_kernel, wp=wp,
                               apply_act=apply_act, compute_dtype=compute_dtype)
    return pl.pallas_call(
        kernel,
        out_shape=(jax.ShapeDtypeStruct((n, cout, l), jnp.float32),
                   jax.ShapeDtypeStruct((n, cout, 1), jnp.float32),
                   jax.ShapeDtypeStruct((n, cout, 1), jnp.float32)),
        grid=(n,),
        in_specs=[
            pl.BlockSpec((1, cin, l), lambda i: (i, 0, 0)),
            pl.BlockSpec((9, cout, cin), lambda i: (0, 0, 0)),
            pl.BlockSpec((cin, 1), lambda i: (0, 0)),
            pl.BlockSpec((cin, 1), lambda i: (0, 0)),
            pl.BlockSpec((1, l), lambda i: (0, 0)),
        ],
        out_specs=(
            pl.BlockSpec((1, cout, l), lambda i: (i, 0, 0)),
            pl.BlockSpec((1, cout, 1), lambda i: (i, 0, 0)),
            pl.BlockSpec((1, cout, 1), lambda i: (i, 0, 0)),
        ),
        compiler_params=_compiler_params(),
    )(xc, w9.astype(compute_dtype), scale_in, shift_in, colmask)


def bn_relu(y, scale, shift):
    n, c, l = y.shape
    return pl.pallas_call(
        _bn_relu_kernel,
        out_shape=jax.ShapeDtypeStruct((n, c, l), jnp.float32),
        grid=(n,),
        in_specs=[pl.BlockSpec((1, c, l), lambda i: (i, 0, 0)),
                  pl.BlockSpec((c, 1), lambda i: (0, 0)),
                  pl.BlockSpec((c, 1), lambda i: (0, 0))],
        out_specs=pl.BlockSpec((1, c, l), lambda i: (i, 0, 0)),
        compiler_params=_compiler_params(),
    )(y, scale, shift)


# ------------------------------ JAX glue ops --------------------------------

def upsample_bilinear_2x_nchw(x):
    """PyTorch nn.Upsample(scale_factor=2, mode='bilinear', align_corners=False)."""
    n, c, h, w = x.shape

    def coords(size_in, size_out):
        d = jnp.arange(size_out, dtype=jnp.float32)
        src = (d + 0.5) * (size_in / size_out) - 0.5
        src = jnp.maximum(src, 0.0)
        i0 = jnp.minimum(jnp.floor(src).astype(jnp.int32), size_in - 1)
        i1 = jnp.minimum(i0 + 1, size_in - 1)
        lam = src - i0.astype(jnp.float32)
        return i0, i1, lam

    h0, h1, lh = coords(h, 2 * h)
    w0, w1, lw = coords(w, 2 * w)
    rows = (x[:, :, h0, :] * (1.0 - lh)[None, None, :, None]
            + x[:, :, h1, :] * lh[None, None, :, None])
    out = (rows[:, :, :, w0] * (1.0 - lw)[None, None, None, :]
           + rows[:, :, :, w1] * lw[None, None, None, :])
    return out


def _bn_scale_shift(ps, pss, gamma, beta, count, eps):
    """Combine kernel-emitted partials into folded BN scale/shift (training stats)."""
    s = jnp.sum(ps[..., 0], axis=0)                       # (C,)
    ss = jnp.sum(pss[..., 0], axis=0)
    mean = s / count
    var = jnp.maximum(ss / count - mean * mean, 0.0)      # biased var (PyTorch training)
    scale = gamma / jnp.sqrt(var + eps)
    shift = beta - mean * scale
    return scale.reshape(-1, 1), shift.reshape(-1, 1)


def unet_up_block_forward(prev_nchw, x_nchw, params, eps=1e-5,
                          compute_dtype=jnp.float32):
    n, in_c, h, w = x_nchw.shape
    prev_c = prev_nchw.shape[1]
    h2, w2 = 2 * h, 2 * w
    wp = w2 + 2                              # padded width
    l = h2 * wp - 2                          # "compact" flattened spatial length
    count = n * h2 * w2

    # TODO(synk): upsample + concat are JAX glue; could be folded into conv1's
    # input BlockSpecs (two inputs, split along the K / channel dimension).
    x_up = upsample_bilinear_2x_nchw(x_nchw)                  # (N, in_c, H2, W2)
    x_cat = jnp.concatenate([x_up, prev_nchw], axis=1)        # torch.cat((x, prev), 1)

    # Build conv1's input in compact layout: pad columns, flatten, trim one
    # element at each end (so all 9 tap windows are in-bounds static slices).
    cin1 = in_c + prev_c
    xc = jnp.pad(x_cat, ((0, 0), (0, 0), (0, 0), (1, 1)))
    xc = xc.reshape(n, cin1, h2 * wp)[:, :, 1:-1]             # (N, Cin1, L)

    # Interior-column mask over the compact layout (1 = real pixel).
    col = (jnp.arange(l) + wp + 1) % wp
    colmask = ((col >= 1) & (col <= wp - 2)).astype(jnp.float32).reshape(1, l)

    # Layer 1 gets an identity "previous BN" and no input ReLU.
    scale = jnp.ones((cin1, 1), jnp.float32)
    shift = jnp.zeros((cin1, 1), jnp.float32)
    apply_act = False

    for i in (1, 2, 3):
        w_oihw = params[f"w{i}"]
        cout, cin = w_oihw.shape[0], w_oihw.shape[1]
        w9 = jnp.transpose(w_oihw, (2, 3, 0, 1)).reshape(9, cout, cin)
        # NOTE: conv bias params[f"b{i}"] is intentionally not used: under
        # training-mode BatchNorm it cancels exactly in the normalization.
        xc, ps, pss = conv3x3_bn_fused(xc, w9, scale, shift, colmask, wp,
                                       apply_act=apply_act,
                                       compute_dtype=compute_dtype)
        scale, shift = _bn_scale_shift(ps, pss, params[f"gamma{i}"],
                                       params[f"beta{i}"], count, eps)
        apply_act = True

    out_c = xc.shape[1]
    act = bn_relu(xc, scale, shift)                           # last-layer epilogue
    out = jnp.pad(act, ((0, 0), (0, 0), (1, 1))).reshape(n, out_c, h2, wp)
    return out[:, :, :, 1:-1]                                 # (N, out_c, H2, W2) NCHW


# ---------------------- pure-JAX reference (for check) ----------------------

def ref_forward(prev_nchw, x_nchw, params, eps=1e-5):
    x = upsample_bilinear_2x_nchw(x_nchw)
    x = jnp.concatenate([x, prev_nchw], axis=1)
    for i in (1, 2, 3):
        y = lax.conv_general_dilated(
            x, params[f"w{i}"], (1, 1), "SAME",
            dimension_numbers=("NCHW", "OIHW", "NCHW"))
        y = y + params[f"b{i}"][None, :, None, None]
        mean = jnp.mean(y, axis=(0, 2, 3))
        var = jnp.mean((y - mean[None, :, None, None]) ** 2, axis=(0, 2, 3))
        y = ((y - mean[None, :, None, None])
             / jnp.sqrt(var[None, :, None, None] + eps)
             * params[f"gamma{i}"][None, :, None, None]
             + params[f"beta{i}"][None, :, None, None])
        x = jnp.maximum(y, 0.0)
    return x


# --------------------------------- main --------------------------------------

if __name__ == "__main__":
    key = jax.random.PRNGKey(0)
    kx, kp, *kw = jax.random.split(key, 10)

    N, prev_c, in_c, out_c = 2, 4, 4, 8
    H = W = 16  # x spatial; prev_feature_map is 2x larger (UNet skip connection)

    x = jax.random.normal(kx, (N, in_c, H, W), jnp.float32)
    prev = jax.random.normal(kp, (N, prev_c, 2 * H, 2 * W), jnp.float32)

    params = {}
    for i, c_in in zip((1, 2, 3), (prev_c + in_c, out_c, out_c)):
        params[f"w{i}"] = 0.1 * jax.random.normal(
            kw[2 * (i - 1)], (out_c, c_in, 3, 3), jnp.float32)      # OIHW
        params[f"b{i}"] = 0.05 * jax.random.normal(
            kw[2 * (i - 1) + 1], (out_c,), jnp.float32)
        params[f"gamma{i}"] = 1.0 + 0.1 * jnp.cos(jnp.arange(out_c, dtype=jnp.float32))
        params[f"beta{i}"] = 0.1 * jnp.sin(jnp.arange(out_c, dtype=jnp.float32))

    out = jax.jit(unet_up_block_forward)(prev, x, params)
    out = jax.block_until_ready(out)

    assert out.shape == (N, out_c, 2 * H, 2 * W), out.shape
    ref = ref_forward(prev, x, params)
    err = float(jnp.max(jnp.abs(out - ref)))
    # Tolerance slightly looser than 1e-4: the kernel uses one-pass
    # (E[x^2] - E[x]^2) BN statistics from in-kernel f32 partials.
    assert jnp.allclose(out, ref, atol=2e-4, rtol=2e-4), err

    print("KERNEL_OK")
</pallas_src>

<mosaic_0001>
module attributes {stable_mosaic.version = 11 : i64} {
  func.func @_conv_bn_fused_kernel(%arg0: i32, %arg1: memref<1x8x1086xf32, #tpu.memory_space<vmem>>, %arg2: memref<9x8x8xf32, #tpu.memory_space<vmem>>, %arg3: memref<8x1xf32, #tpu.memory_space<vmem>>, %arg4: memref<8x1xf32, #tpu.memory_space<vmem>>, %arg5: memref<1x1086xf32, #tpu.memory_space<vmem>>, %arg6: memref<1x8x1086xf32, #tpu.memory_space<vmem>>, %arg7: memref<1x8x1xf32, #tpu.memory_space<vmem>>, %arg8: memref<1x8x1xf32, #tpu.memory_space<vmem>>) attributes {dimension_semantics = [#tpu.dimension_semantics<parallel>], iteration_bounds = array<i64: 2>, scalar_prefetch = 0 : i64, scratch_operands = 0 : i64, tpu.core_type = #tpu.core_type<tc>, window_params = [{transform_indices = @transform_0, window_bounds = array<i64: 1, 8, 1086>}, {pipeline_mode = #tpu.pipeline_mode<synchronous>, transform_indices = @transform_1, window_bounds = array<i64: 9, 8, 8>}, {pipeline_mode = #tpu.pipeline_mode<synchronous>, transform_indices = @transform_2, window_bounds = array<i64: 8, 1>}, {pipeline_mode = #tpu.pipeline_mode<synchronous>, transform_indices = @transform_3, window_bounds = array<i64: 8, 1>}, {pipeline_mode = #tpu.pipeline_mode<synchronous>, transform_indices = @transform_4, window_bounds = array<i64: 1, 1086>}, {transform_indices = @transform_5, window_bounds = array<i64: 1, 8, 1086>}, {transform_indices = @transform_6, window_bounds = array<i64: 1, 8, 1>}, {transform_indices = @transform_7, window_bounds = array<i64: 1, 8, 1>}]} {
    %c0 = arith.constant 0 : index
    %c0_0 = arith.constant 0 : index
    %c0_1 = arith.constant 0 : index
    %0 = vector.load %arg1[%c0, %c0_0, %c0_1] : memref<1x8x1086xf32, #tpu.memory_space<vmem>>, vector<1x8x1086xf32>
    %1 = vector.shape_cast %0 : vector<1x8x1086xf32> to vector<8x1086xf32>
    %c0_2 = arith.constant 0 : index
    %c0_3 = arith.constant 0 : index
    %2 = vector.load %arg3[%c0_2, %c0_3] : memref<8x1xf32, #tpu.memory_space<vmem>>, vector<8x1xf32>
    %3 = vector.broadcast %2 : vector<8x1xf32> to vector<8x1086xf32>
    %4 = arith.mulf %1, %3 : vector<8x1086xf32>
    %c0_4 = arith.constant 0 : index
    %c0_5 = arith.constant 0 : index
    %5 = vector.load %arg4[%c0_4, %c0_5] : memref<8x1xf32, #tpu.memory_space<vmem>>, vector<8x1xf32>
    %6 = vector.broadcast %5 : vector<8x1xf32> to vector<8x1086xf32>
    %7 = arith.addf %4, %6 : vector<8x1086xf32>
    %c0_6 = arith.constant 0 : index
    %c0_7 = arith.constant 0 : index
    %8 = vector.load %arg5[%c0_6, %c0_7] : memref<1x1086xf32, #tpu.memory_space<vmem>>, vector<1x1086xf32>
    %cst = arith.constant 5.000000e-01 : f32
    %9 = vector.broadcast %cst : f32 to vector<1x1086xf32>
    %10 = arith.cmpf ogt, %8, %9 : vector<1x1086xf32>
    %cst_8 = arith.constant 0.000000e+00 : f32
    %11 = vector.shape_cast %10 : vector<1x1086xi1> to vector<1x1086xi1>
    %12 = vector.broadcast %11 : vector<1x1086xi1> to vector<8x1086xi1>
    %13 = vector.broadcast %cst_8 : f32 to vector<8x1086xf32>
    %14 = arith.select %12, %7, %13 : vector<8x1086xi1>, vector<8x1086xf32>
    %cst_9 = arith.constant 0.000000e+00 : f32
    %15 = vector.broadcast %cst_9 : f32 to vector<8x35xf32>
    %16 = tpu.concatenate %15, %14, %15 in 1 : vector<8x35xf32>, vector<8x1086xf32>, vector<8x35xf32> -> vector<8x1156xf32>
    %cst_10 = arith.constant 0.000000e+00 : f32
    %17 = vector.broadcast %cst_10 : f32 to vector<8x1086xf32>
    %c0_11 = arith.constant 0 : index
    %c0_12 = arith.constant 0 : index
    %c0_13 = arith.constant 0 : index
    %18 = vector.load %arg2[%c0_11, %c0_12, %c0_13] : memref<9x8x8xf32, #tpu.memory_space<vmem>>, vector<1x8x8xf32>
    %19 = vector.shape_cast %18 : vector<1x8x8xf32> to vector<8x8xf32>
    %20 = vector.extract_strided_slice %16 {offsets = [0, 0], sizes = [8, 1086], strides = [1, 1]} : vector<8x1156xf32> to vector<8x1086xf32>
    %cst_14 = arith.constant dense<0.000000e+00> : vector<8x1086xf32>
    %21 = tpu.matmul %19, %20, %cst_14 {dimension_numbers = #tpu.dot_dimension_numbers<[1], [0], [0], [1], [0, 0, 1, 1], [], []>} : vector<8x8xf32>, vector<8x1086xf32>, vector<8x1086xf32> -> vector<8x1086xf32>
    %22 = arith.addf %17, %21 : vector<8x1086xf32>
    %c1 = arith.constant 1 : index
    %c0_15 = arith.constant 0 : index
    %c0_16 = arith.constant 0 : index
    %23 = vector.load %arg2[%c1, %c0_15, %c0_16] : memref<9x8x8xf32, #tpu.memory_space<vmem>>, vector<1x8x8xf32>
    %24 = vector.shape_cast %23 : vector<1x8x8xf32> to vector<8x8xf32>
    %25 = vector.extract_strided_slice %16 {offsets = [0, 1], sizes = [8, 1086], strides = [1, 1]} : vector<8x1156xf32> to vector<8x1086xf32>
    %cst_17 = arith.constant dense<0.000000e+00> : vector<8x1086xf32>
    %26 = tpu.matmul %24, %25, %cst_17 {dimension_numbers = #tpu.dot_dimension_numbers<[1], [0], [0], [1], [0, 0, 1, 1], [], []>} : vector<8x8xf32>, vector<8x1086xf32>, vector<8x1086xf32> -> vector<8x1086xf32>
    %27 = arith.addf %22, %26 : vector<8x1086xf32>
    %c2 = arith.constant 2 : index
    %c0_18 = arith.constant 0 : index
    %c0_19 = arith.constant 0 : index
    %28 = vector.load %arg2[%c2, %c0_18, %c0_19] : memref<9x8x8xf32, #tpu.memory_space<vmem>>, vector<1x8x8xf32>
    %29 = vector.shape_cast %28 : vector<1x8x8xf32> to vector<8x8xf32>
    %30 = vector.extract_strided_slice %16 {offsets = [0, 2], sizes = [8, 1086], strides = [1, 1]} : vector<8x1156xf32> to vector<8x1086xf32>
    %cst_20 = arith.constant dense<0.000000e+00> : vector<8x1086xf32>
    %31 = tpu.matmul %29, %30, %cst_20 {dimension_numbers = #tpu.dot_dimension_numbers<[1], [0], [0], [1], [0, 0, 1, 1], [], []>} : vector<8x8xf32>, vector<8x1086xf32>, vector<8x1086xf32> -> vector<8x1086xf32>
    %32 = arith.addf %27, %31 : vector<8x1086xf32>
    %c3 = arith.constant 3 : index
    %c0_21 = arith.constant 0 : index
    %c0_22 = arith.constant 0 : index
    %33 = vector.load %arg2[%c3, %c0_21, %c0_22] : memref<9x8x8xf32, #tpu.memory_space<vmem>>, vector<1x8x8xf32>
    %34 = vector.shape_cast %33 : vector<1x8x8xf32> to vector<8x8xf32>
    %35 = vector.extract_strided_slice %16 {offsets = [0, 34], sizes = [8, 1086], strides = [1, 1]} : vector<8x1156xf32> to vector<8x1086xf32>
    %cst_23 = arith.constant dense<0.000000e+00> : vector<8x1086xf32>
    %36 = tpu.matmul %34, %35, %cst_23 {dimension_numbers = #tpu.dot_dimension_numbers<[1], [0], [0], [1], [0, 0, 1, 1], [], []>} : vector<8x8xf32>, vector<8x1086xf32>, vector<8x1086xf32> -> vector<8x1086xf32>
    %37 = arith.addf %32, %36 : vector<8x1086xf32>
    %c4 = arith.constant 4 : index
    %c0_24 = arith.constant 0 : index
    %c0_25 = arith.constant 0 : index
    %38 = vector.load %arg2[%c4, %c0_24, %c0_25] : memref<9x8x8xf32, #tpu.memory_space<vmem>>, vector<1x8x8xf32>
    %39 = vector.shape_cast %38 : vector<1x8x8xf32> to vector<8x8xf32>
    %40 = vector.extract_strided_slice %16 {offsets = [0, 35], sizes = [8, 1086], strides = [1, 1]} : vector<8x1156xf32> to vector<8x1086xf32>
    %cst_26 = arith.constant dense<0.000000e+00> : vector<8x1086xf32>
    %41 = tpu.matmul %39, %40, %cst_26 {dimension_numbers = #tpu.dot_dimension_numbers<[1], [0], [0], [1], [0, 0, 1, 1], [], []>} : vector<8x8xf32>, vector<8x1086xf32>, vector<8x1086xf32> -> vector<8x1086xf32>
    %42 = arith.addf %37, %41 : vector<8x1086xf32>
    %c5 = arith.constant 5 : index
    %c0_27 = arith.constant 0 : index
    %c0_28 = arith.constant 0 : index
    %43 = vector.load %arg2[%c5, %c0_27, %c0_28] : memref<9x8x8xf32, #tpu.memory_space<vmem>>, vector<1x8x8xf32>
    %44 = vector.shape_cast %43 : vector<1x8x8xf32> to vector<8x8xf32>
    %45 = vector.extract_strided_slice %16 {offsets = [0, 36], sizes = [8, 1086], strides = [1, 1]} : vector<8x1156xf32> to vector<8x1086xf32>
    %cst_29 = arith.constant dense<0.000000e+00> : vector<8x1086xf32>
    %46 = tpu.matmul %44, %45, %cst_29 {dimension_numbers = #tpu.dot_dimension_numbers<[1], [0], [0], [1], [0, 0, 1, 1], [], []>} : vector<8x8xf32>, vector<8x1086xf32>, vector<8x1086xf32> -> vector<8x1086xf32>
    %47 = arith.addf %42, %46 : vector<8x1086xf32>
    %c6 = arith.constant 6 : index
    %c0_30 = arith.constant 0 : index
    %c0_31 = arith.constant 0 : index
    %48 = vector.load %arg2[%c6, %c0_30, %c0_31] : memref<9x8x8xf32, #tpu.memory_space<vmem>>, vector<1x8x8xf32>
    %49 = vector.shape_cast %48 : vector<1x8x8xf32> to vector<8x8xf32>
    %50 = vector.extract_strided_slice %16 {offsets = [0, 68], sizes = [8, 1086], strides = [1, 1]} : vector<8x1156xf32> to vector<8x1086xf32>
    %cst_32 = arith.constant dense<0.000000e+00> : vector<8x1086xf32>
    %51 = tpu.matmul %49, %50, %cst_32 {dimension_numbers = #tpu.dot_dimension_numbers<[1], [0], [0], [1], [0, 0, 1, 1], [], []>} : vector<8x8xf32>, vector<8x1086xf32>, vector<8x1086xf32> -> vector<8x1086xf32>
    %52 = arith.addf %47, %51 : vector<8x1086xf32>
    %c7 = arith.constant 7 : index
    %c0_33 = arith.constant 0 : index
    %c0_34 = arith.constant 0 : index
    %53 = vector.load %arg2[%c7, %c0_33, %c0_34] : memref<9x8x8xf32, #tpu.memory_space<vmem>>, vector<1x8x8xf32>
    %54 = vector.shape_cast %53 : vector<1x8x8xf32> to vector<8x8xf32>
    %55 = vector.extract_strided_slice %16 {offsets = [0, 69], sizes = [8, 1086], strides = [1, 1]} : vector<8x1156xf32> to vector<8x1086xf32>
    %cst_35 = arith.constant dense<0.000000e+00> : vector<8x1086xf32>
    %56 = tpu.matmul %54, %55, %cst_35 {dimension_numbers = #tpu.dot_dimension_numbers<[1], [0], [0], [1], [0, 0, 1, 1], [], []>} : vector<8x8xf32>, vector<8x1086xf32>, vector<8x1086xf32> -> vector<8x1086xf32>
    %57 = arith.addf %52, %56 : vector<8x1086xf32>
    %c8 = arith.constant 8 : index
    %c0_36 = arith.constant 0 : index
    %c0_37 = arith.constant 0 : index
    %58 = vector.load %arg2[%c8, %c0_36, %c0_37] : memref<9x8x8xf32, #tpu.memory_space<vmem>>, vector<1x8x8xf32>
    %59 = vector.shape_cast %58 : vector<1x8x8xf32> to vector<8x8xf32>
    %60 = vector.extract_strided_slice %16 {offsets = [0, 70], sizes = [8, 1086], strides = [1, 1]} : vector<8x1156xf32> to vector<8x1086xf32>
    %cst_38 = arith.constant dense<0.000000e+00> : vector<8x1086xf32>
    %61 = tpu.matmul %59, %60, %cst_38 {dimension_numbers = #tpu.dot_dimension_numbers<[1], [0], [0], [1], [0, 0, 1, 1], [], []>} : vector<8x8xf32>, vector<8x1086xf32>, vector<8x1086xf32> -> vector<8x1086xf32>
    %62 = arith.addf %57, %61 : vector<8x1086xf32>
    %c0_39 = arith.constant 0 : index
    %c0_40 = arith.constant 0 : index
    %c0_41 = arith.constant 0 : index
    %63 = vector.load %arg6[%c0_39, %c0_40, %c0_41] : memref<1x8x1086xf32, #tpu.memory_space<vmem>>, vector<1x8x1086xf32>
    %64 = vector.shape_cast %63 : vector<1x8x1086xf32> to vector<8x1086xf32>
    %65 = vector.shape_cast %62 : vector<8x1086xf32> to vector<1x8x1086xf32>
    tpu.vector_store %arg6[%c0_39, %c0_40, %c0_41], %65 {strides = array<i32>} : memref<1x8x1086xf32, #tpu.memory_space<vmem>>, vector<1x8x1086xf32>,
    %cst_42 = arith.constant 0.000000e+00 : f32
    %66 = vector.shape_cast %10 : vector<1x1086xi1> to vector<1x1086xi1>
    %67 = vector.broadcast %66 : vector<1x1086xi1> to vector<8x1086xi1>
    %68 = vector.broadcast %cst_42 : f32 to vector<8x1086xf32>
    %69 = arith.select %67, %62, %68 : vector<8x1086xi1>, vector<8x1086xf32>
    %cst_43 = arith.constant dense<0.000000e+00> : vector<8xf32>
    %70 = vector.multi_reduction <add>, %69, %cst_43 [1] : vector<8x1086xf32> to vector<8xf32>
    %71 = vector.shape_cast %70 : vector<8xf32> to vector<8x1xf32>
    %c0_44 = arith.constant 0 : index
    %c0_45 = arith.constant 0 : index
    %c0_46 = arith.constant 0 : index
    %72 = vector.load %arg7[%c0_44, %c0_45, %c0_46] : memref<1x8x1xf32, #tpu.memory_space<vmem>>, vector<1x8x1xf32>
    %73 = vector.shape_cast %72 : vector<1x8x1xf32> to vector<8x1xf32>
    %74 = vector.shape_cast %71 : vector<8x1xf32> to vector<1x8x1xf32>
    tpu.vector_store %arg7[%c0_44, %c0_45, %c0_46], %74 {strides = array<i32>} : memref<1x8x1xf32, #tpu.memory_space<vmem>>, vector<1x8x1xf32>,
    %75 = arith.mulf %69, %69 : vector<8x1086xf32>
    %cst_47 = arith.constant dense<0.000000e+00> : vector<8xf32>
    %76 = vector.multi_reduction <add>, %75, %cst_47 [1] : vector<8x1086xf32> to vector<8xf32>
    %77 = vector.shape_cast %76 : vector<8xf32> to vector<8x1xf32>
    %c0_48 = arith.constant 0 : index
    %c0_49 = arith.constant 0 : index
    %c0_50 = arith.constant 0 : index
    %78 = vector.load %arg8[%c0_48, %c0_49, %c0_50] : memref<1x8x1xf32, #tpu.memory_space<vmem>>, vector<1x8x1xf32>
    %79 = vector.shape_cast %78 : vector<1x8x1xf32> to vector<8x1xf32>
    %80 = vector.shape_cast %77 : vector<8x1xf32> to vector<1x8x1xf32>
    tpu.vector_store %arg8[%c0_48, %c0_49, %c0_50], %80 {strides = array<i32>} : memref<1x8x1xf32, #tpu.memory_space<vmem>>, vector<1x8x1xf32>,
    return
  }
  func.func @transform_0(%arg0: i32) -> (i32, i32, i32) {
    %c0_i32 = arith.constant 0 : i32
    %c0_i32_0 = arith.constant 0 : i32
    %c0_i32_1 = arith.constant 0 : i32
    return %arg0, %c0_i32, %c0_i32_0 : i32, i32, i32
  }
  func.func @transform_1(%arg0: i32) -> (i32, i32, i32) {
    %c0_i32 = arith.constant 0 : i32
    %c0_i32_0 = arith.constant 0 : i32
    %c0_i32_1 = arith.constant 0 : i32
    %c0_i32_2 = arith.constant 0 : i32
    return %c0_i32, %c0_i32_0, %c0_i32_1 : i32, i32, i32
  }
  func.func @transform_2(%arg0: i32) -> (i32, i32) {
    %c0_i32 = arith.constant 0 : i32
    %c0_i32_0 = arith.constant 0 : i32
    %c0_i32_1 = arith.constant 0 : i32
    return %c0_i32, %c0_i32_0 : i32, i32
  }
  func.func @transform_3(%arg0: i32) -> (i32, i32) {
    %c0_i32 = arith.constant 0 : i32
    %c0_i32_0 = arith.constant 0 : i32
    %c0_i32_1 = arith.constant 0 : i32
    return %c0_i32, %c0_i32_0 : i32, i32
  }
  func.func @transform_4(%arg0: i32) -> (i32, i32) {
    %c0_i32 = arith.constant 0 : i32
    %c0_i32_0 = arith.constant 0 : i32
    %c0_i32_1 = arith.constant 0 : i32
    return %c0_i32, %c0_i32_0 : i32, i32
  }
  func.func @transform_5(%arg0: i32) -> (i32, i32, i32) {
    %c0_i32 = arith.constant 0 : i32
    %c0_i32_0 = arith.constant 0 : i32
    %c0_i32_1 = arith.constant 0 : i32
    return %arg0, %c0_i32, %c0_i32_0 : i32, i32, i32
  }
  func.func @transform_6(%arg0: i32) -> (i32, i32, i32) {
    %c0_i32 = arith.constant 0 : i32
    %c0_i32_0 = arith.constant 0 : i32
    %c0_i32_1 = arith.constant 0 : i32
    return %arg0, %c0_i32, %c0_i32_0 : i32, i32, i32
  }
  func.func @transform_7(%arg0: i32) -> (i32, i32, i32) {
    %c0_i32 = arith.constant 0 : i32
    %c0_i32_0 = arith.constant 0 : i32
    %c0_i32_1 = arith.constant 0 : i32
    return %arg0, %c0_i32, %c0_i32_0 : i32, i32, i32
  }
}

module attributes {stable_mosaic.version = 11 : i64} {
  func.func @_bn_relu_kernel(%arg0: i32, %arg1: memref<1x8x1086xf32, #tpu.memory_space<vmem>>, %arg2: memref<8x1xf32, #tpu.memory_space<vmem>>, %arg3: memref<8x1xf32, #tpu.memory_space<vmem>>, %arg4: memref<1x8x1086xf32, #tpu.memory_space<vmem>>) attributes {dimension_semantics = [#tpu.dimension_semantics<parallel>], iteration_bounds = array<i64: 2>, scalar_prefetch = 0 : i64, scratch_operands = 0 : i64, tpu.core_type = #tpu.core_type<tc>, window_params = [{transform_indices = @transform_0, window_bounds = array<i64: 1, 8, 1086>}, {pipeline_mode = #tpu.pipeline_mode<synchronous>, transform_indices = @transform_1, window_bounds = array<i64: 8, 1>}, {pipeline_mode = #tpu.pipeline_mode<synchronous>, transform_indices = @transform_2, window_bounds = array<i64: 8, 1>}, {transform_indices = @transform_3, window_bounds = array<i64: 1, 8, 1086>}]} {
    %c0 = arith.constant 0 : index
    %c0_0 = arith.constant 0 : index
    %c0_1 = arith.constant 0 : index
    %0 = vector.load %arg1[%c0, %c0_0, %c0_1] : memref<1x8x1086xf32, #tpu.memory_space<vmem>>, vector<1x8x1086xf32>
    %1 = vector.shape_cast %0 : vector<1x8x1086xf32> to vector<8x1086xf32>
    %c0_2 = arith.constant 0 : index
    %c0_3 = arith.constant 0 : index
    %2 = vector.load %arg2[%c0_2, %c0_3] : memref<8x1xf32, #tpu.memory_space<vmem>>, vector<8x1xf32>
    %3 = vector.broadcast %2 : vector<8x1xf32> to vector<8x1086xf32>
    %4 = arith.mulf %1, %3 : vector<8x1086xf32>
    %c0_4 = arith.constant 0 : index
    %c0_5 = arith.constant 0 : index
    %5 = vector.load %arg3[%c0_4, %c0_5] : memref<8x1xf32, #tpu.memory_space<vmem>>, vector<8x1xf32>
    %6 = vector.broadcast %5 : vector<8x1xf32> to vector<8x1086xf32>
    %7 = arith.addf %4, %6 : vector<8x1086xf32>
    %cst = arith.constant 0.000000e+00 : f32
    %8 = vector.broadcast %cst : f32 to vector<8x1086xf32>
    %9 = arith.maximumf %7, %8 : vector<8x1086xf32>
    %c0_6 = arith.constant 0 : index
    %c0_7 = arith.constant 0 : index
    %c0_8 = arith.constant 0 : index
    %10 = vector.load %arg4[%c0_6, %c0_7, %c0_8] : memref<1x8x1086xf32, #tpu.memory_space<vmem>>, vector<1x8x1086xf32>
    %11 = vector.shape_cast %10 : vector<1x8x1086xf32> to vector<8x1086xf32>
    %12 = vector.shape_cast %9 : vector<8x1086xf32> to vector<1x8x1086xf32>
    tpu.vector_store %arg4[%c0_6, %c0_7, %c0_8], %12 {strides = array<i32>} : memref<1x8x1086xf32, #tpu.memory_space<vmem>>, vector<1x8x1086xf32>,
    return
  }
  func.func @transform_0(%arg0: i32) -> (i32, i32, i32) {
    %c0_i32 = arith.constant 0 : i32
    %c0_i32_0 = arith.constant 0 : i32
    %c0_i32_1 = arith.constant 0 : i32
    return %arg0, %c0_i32, %c0_i32_0 : i32, i32, i32
  }
  func.func @transform_1(%arg0: i32) -> (i32, i32) {
    %c0_i32 = arith.constant 0 : i32
    %c0_i32_0 = arith.constant 0 : i32
    %c0_i32_1 = arith.constant 0 : i32
    return %c0_i32, %c0_i32_0 : i32, i32
  }
  func.func @transform_2(%arg0: i32) -> (i32, i32) {
    %c0_i32 = arith.constant 0 : i32
    %c0_i32_0 = arith.constant 0 : i32
    %c0_i32_1 = arith.constant 0 : i32
    return %c0_i32, %c0_i32_0 : i32, i32
  }
  func.func @transform_3(%arg0: i32) -> (i32, i32, i32) {
    %c0_i32 = arith.constant 0 : i32
    %c0_i32_0 = arith.constant 0 : i32
    %c0_i32_1 = arith.constant 0 : i32
    return %arg0, %c0_i32, %c0_i32_0 : i32, i32, i32
  }
}

module attributes {stable_mosaic.version = 11 : i64} {
  func.func @_conv_bn_fused_kernel(%arg0: i32, %arg1: memref<1x8x1086xf32, #tpu.memory_space<vmem>>, %arg2: memref<9x8x8xf32, #tpu.memory_space<vmem>>, %arg3: memref<8x1xf32, #tpu.memory_space<vmem>>, %arg4: memref<8x1xf32, #tpu.memory_space<vmem>>, %arg5: memref<1x1086xf32, #tpu.memory_space<vmem>>, %arg6: memref<1x8x1086xf32, #tpu.memory_space<vmem>>, %arg7: memref<1x8x1xf32, #tpu.memory_space<vmem>>, %arg8: memref<1x8x1xf32, #tpu.memory_space<vmem>>) attributes {dimension_semantics = [#tpu.dimension_semantics<parallel>], iteration_bounds = array<i64: 2>, scalar_prefetch = 0 : i64, scratch_operands = 0 : i64, tpu.core_type = #tpu.core_type<tc>, window_params = [{transform_indices = @transform_0, window_bounds = array<i64: 1, 8, 1086>}, {pipeline_mode = #tpu.pipeline_mode<synchronous>, transform_indices = @transform_1, window_bounds = array<i64: 9, 8, 8>}, {pipeline_mode = #tpu.pipeline_mode<synchronous>, transform_indices = @transform_2, window_bounds = array<i64: 8, 1>}, {pipeline_mode = #tpu.pipeline_mode<synchronous>, transform_indices = @transform_3, window_bounds = array<i64: 8, 1>}, {pipeline_mode = #tpu.pipeline_mode<synchronous>, transform_indices = @transform_4, window_bounds = array<i64: 1, 1086>}, {transform_indices = @transform_5, window_bounds = array<i64: 1, 8, 1086>}, {transform_indices = @transform_6, window_bounds = array<i64: 1, 8, 1>}, {transform_indices = @transform_7, window_bounds = array<i64: 1, 8, 1>}]} {
    %c0 = arith.constant 0 : index
    %c0_0 = arith.constant 0 : index
    %c0_1 = arith.constant 0 : index
    %0 = vector.load %arg1[%c0, %c0_0, %c0_1] : memref<1x8x1086xf32, #tpu.memory_space<vmem>>, vector<1x8x1086xf32>
    %1 = vector.shape_cast %0 : vector<1x8x1086xf32> to vector<8x1086xf32>
    %c0_2 = arith.constant 0 : index
    %c0_3 = arith.constant 0 : index
    %2 = vector.load %arg3[%c0_2, %c0_3] : memref<8x1xf32, #tpu.memory_space<vmem>>, vector<8x1xf32>
    %3 = vector.broadcast %2 : vector<8x1xf32> to vector<8x1086xf32>
    %4 = arith.mulf %1, %3 : vector<8x1086xf32>
    %c0_4 = arith.constant 0 : index
    %c0_5 = arith.constant 0 : index
    %5 = vector.load %arg4[%c0_4, %c0_5] : memref<8x1xf32, #tpu.memory_space<vmem>>, vector<8x1xf32>
    %6 = vector.broadcast %5 : vector<8x1xf32> to vector<8x1086xf32>
    %7 = arith.addf %4, %6 : vector<8x1086xf32>
    %cst = arith.constant 0.000000e+00 : f32
    %8 = vector.broadcast %cst : f32 to vector<8x1086xf32>
    %9 = arith.maximumf %7, %8 : vector<8x1086xf32>
    %c0_6 = arith.constant 0 : index
    %c0_7 = arith.constant 0 : index
    %10 = vector.load %arg5[%c0_6, %c0_7] : memref<1x1086xf32, #tpu.memory_space<vmem>>, vector<1x1086xf32>
    %cst_8 = arith.constant 5.000000e-01 : f32
    %11 = vector.broadcast %cst_8 : f32 to vector<1x1086xf32>
    %12 = arith.cmpf ogt, %10, %11 : vector<1x1086xf32>
    %cst_9 = arith.constant 0.000000e+00 : f32
    %13 = vector.shape_cast %12 : vector<1x1086xi1> to vector<1x1086xi1>
    %14 = vector.broadcast %13 : vector<1x1086xi1> to vector<8x1086xi1>
    %15 = vector.broadcast %cst_9 : f32 to vector<8x1086xf32>
    %16 = arith.select %14, %9, %15 : vector<8x1086xi1>, vector<8x1086xf32>
    %cst_10 = arith.constant 0.000000e+00 : f32
    %17 = vector.broadcast %cst_10 : f32 to vector<8x35xf32>
    %18 = tpu.concatenate %17, %16, %17 in 1 : vector<8x35xf32>, vector<8x1086xf32>, vector<8x35xf32> -> vector<8x1156xf32>
    %cst_11 = arith.constant 0.000000e+00 : f32
    %19 = vector.broadcast %cst_11 : f32 to vector<8x1086xf32>
    %c0_12 = arith.constant 0 : index
    %c0_13 = arith.constant 0 : index
    %c0_14 = arith.constant 0 : index
    %20 = vector.load %arg2[%c0_12, %c0_13, %c0_14] : memref<9x8x8xf32, #tpu.memory_space<vmem>>, vector<1x8x8xf32>
    %21 = vector.shape_cast %20 : vector<1x8x8xf32> to vector<8x8xf32>
    %22 = vector.extract_strided_slice %18 {offsets = [0, 0], sizes = [8, 1086], strides = [1, 1]} : vector<8x1156xf32> to vector<8x1086xf32>
    %cst_15 = arith.constant dense<0.000000e+00> : vector<8x1086xf32>
    %23 = tpu.matmul %21, %22, %cst_15 {dimension_numbers = #tpu.dot_dimension_numbers<[1], [0], [0], [1], [0, 0, 1, 1], [], []>} : vector<8x8xf32>, vector<8x1086xf32>, vector<8x1086xf32> -> vector<8x1086xf32>
    %24 = arith.addf %19, %23 : vector<8x1086xf32>
    %c1 = arith.constant 1 : index
    %c0_16 = arith.constant 0 : index
    %c0_17 = arith.constant 0 : index
    %25 = vector.load %arg2[%c1, %c0_16, %c0_17] : memref<9x8x8xf32, #tpu.memory_space<vmem>>, vector<1x8x8xf32>
    %26 = vector.shape_cast %25 : vector<1x8x8xf32> to vector<8x8xf32>
    %27 = vector.extract_strided_slice %18 {offsets = [0, 1], sizes = [8, 1086], strides = [1, 1]} : vector<8x1156xf32> to vector<8x1086xf32>
    %cst_18 = arith.constant dense<0.000000e+00> : vector<8x1086xf32>
    %28 = tpu.matmul %26, %27, %cst_18 {dimension_numbers = #tpu.dot_dimension_numbers<[1], [0], [0], [1], [0, 0, 1, 1], [], []>} : vector<8x8xf32>, vector<8x1086xf32>, vector<8x1086xf32> -> vector<8x1086xf32>
    %29 = arith.addf %24, %28 : vector<8x1086xf32>
    %c2 = arith.constant 2 : index
    %c0_19 = arith.constant 0 : index
    %c0_20 = arith.constant 0 : index
    %30 = vector.load %arg2[%c2, %c0_19, %c0_20] : memref<9x8x8xf32, #tpu.memory_space<vmem>>, vector<1x8x8xf32>
    %31 = vector.shape_cast %30 : vector<1x8x8xf32> to vector<8x8xf32>
    %32 = vector.extract_strided_slice %18 {offsets = [0, 2], sizes = [8, 1086], strides = [1, 1]} : vector<8x1156xf32> to vector<8x1086xf32>
    %cst_21 = arith.constant dense<0.000000e+00> : vector<8x1086xf32>
    %33 = tpu.matmul %31, %32, %cst_21 {dimension_numbers = #tpu.dot_dimension_numbers<[1], [0], [0], [1], [0, 0, 1, 1], [], []>} : vector<8x8xf32>, vector<8x1086xf32>, vector<8x1086xf32> -> vector<8x1086xf32>
    %34 = arith.addf %29, %33 : vector<8x1086xf32>
    %c3 = arith.constant 3 : index
    %c0_22 = arith.constant 0 : index
    %c0_23 = arith.constant 0 : index
    %35 = vector.load %arg2[%c3, %c0_22, %c0_23] : memref<9x8x8xf32, #tpu.memory_space<vmem>>, vector<1x8x8xf32>
    %36 = vector.shape_cast %35 : vector<1x8x8xf32> to vector<8x8xf32>
    %37 = vector.extract_strided_slice %18 {offsets = [0, 34], sizes = [8, 1086], strides = [1, 1]} : vector<8x1156xf32> to vector<8x1086xf32>
    %cst_24 = arith.constant dense<0.000000e+00> : vector<8x1086xf32>
    %38 = tpu.matmul %36, %37, %cst_24 {dimension_numbers = #tpu.dot_dimension_numbers<[1], [0], [0], [1], [0, 0, 1, 1], [], []>} : vector<8x8xf32>, vector<8x1086xf32>, vector<8x1086xf32> -> vector<8x1086xf32>
    %39 = arith.addf %34, %38 : vector<8x1086xf32>
    %c4 = arith.constant 4 : index
    %c0_25 = arith.constant 0 : index
    %c0_26 = arith.constant 0 : index
    %40 = vector.load %arg2[%c4, %c0_25, %c0_26] : memref<9x8x8xf32, #tpu.memory_space<vmem>>, vector<1x8x8xf32>
    %41 = vector.shape_cast %40 : vector<1x8x8xf32> to vector<8x8xf32>
    %42 = vector.extract_strided_slice %18 {offsets = [0, 35], sizes = [8, 1086], strides = [1, 1]} : vector<8x1156xf32> to vector<8x1086xf32>
    %cst_27 = arith.constant dense<0.000000e+00> : vector<8x1086xf32>
    %43 = tpu.matmul %41, %42, %cst_27 {dimension_numbers = #tpu.dot_dimension_numbers<[1], [0], [0], [1], [0, 0, 1, 1], [], []>} : vector<8x8xf32>, vector<8x1086xf32>, vector<8x1086xf32> -> vector<8x1086xf32>
    %44 = arith.addf %39, %43 : vector<8x1086xf32>
    %c5 = arith.constant 5 : index
    %c0_28 = arith.constant 0 : index
    %c0_29 = arith.constant 0 : index
    %45 = vector.load %arg2[%c5, %c0_28, %c0_29] : memref<9x8x8xf32, #tpu.memory_space<vmem>>, vector<1x8x8xf32>
    %46 = vector.shape_cast %45 : vector<1x8x8xf32> to vector<8x8xf32>
    %47 = vector.extract_strided_slice %18 {offsets = [0, 36], sizes = [8, 1086], strides = [1, 1]} : vector<8x1156xf32> to vector<8x1086xf32>
    %cst_30 = arith.constant dense<0.000000e+00> : vector<8x1086xf32>
    %48 = tpu.matmul %46, %47, %cst_30 {dimension_numbers = #tpu.dot_dimension_numbers<[1], [0], [0], [1], [0, 0, 1, 1], [], []>} : vector<8x8xf32>, vector<8x1086xf32>, vector<8x1086xf32> -> vector<8x1086xf32>
    %49 = arith.addf %44, %48 : vector<8x1086xf32>
    %c6 = arith.constant 6 : index
    %c0_31 = arith.constant 0 : index
    %c0_32 = arith.constant 0 : index
    %50 = vector.load %arg2[%c6, %c0_31, %c0_32] : memref<9x8x8xf32, #tpu.memory_space<vmem>>, vector<1x8x8xf32>
    %51 = vector.shape_cast %50 : vector<1x8x8xf32> to vector<8x8xf32>
    %52 = vector.extract_strided_slice %18 {offsets = [0, 68], sizes = [8, 1086], strides = [1, 1]} : vector<8x1156xf32> to vector<8x1086xf32>
    %cst_33 = arith.constant dense<0.000000e+00> : vector<8x1086xf32>
    %53 = tpu.matmul %51, %52, %cst_33 {dimension_numbers = #tpu.dot_dimension_numbers<[1], [0], [0], [1], [0, 0, 1, 1], [], []>} : vector<8x8xf32>, vector<8x1086xf32>, vector<8x1086xf32> -> vector<8x1086xf32>
    %54 = arith.addf %49, %53 : vector<8x1086xf32>
    %c7 = arith.constant 7 : index
    %c0_34 = arith.constant 0 : index
    %c0_35 = arith.constant 0 : index
    %55 = vector.load %arg2[%c7, %c0_34, %c0_35] : memref<9x8x8xf32, #tpu.memory_space<vmem>>, vector<1x8x8xf32>
    %56 = vector.shape_cast %55 : vector<1x8x8xf32> to vector<8x8xf32>
    %57 = vector.extract_strided_slice %18 {offsets = [0, 69], sizes = [8, 1086], strides = [1, 1]} : vector<8x1156xf32> to vector<8x1086xf32>
    %cst_36 = arith.constant dense<0.000000e+00> : vector<8x1086xf32>
    %58 = tpu.matmul %56, %57, %cst_36 {dimension_numbers = #tpu.dot_dimension_numbers<[1], [0], [0], [1], [0, 0, 1, 1], [], []>} : vector<8x8xf32>, vector<8x1086xf32>, vector<8x1086xf32> -> vector<8x1086xf32>
    %59 = arith.addf %54, %58 : vector<8x1086xf32>
    %c8 = arith.constant 8 : index
    %c0_37 = arith.constant 0 : index
    %c0_38 = arith.constant 0 : index
    %60 = vector.load %arg2[%c8, %c0_37, %c0_38] : memref<9x8x8xf32, #tpu.memory_space<vmem>>, vector<1x8x8xf32>
    %61 = vector.shape_cast %60 : vector<1x8x8xf32> to vector<8x8xf32>
    %62 = vector.extract_strided_slice %18 {offsets = [0, 70], sizes = [8, 1086], strides = [1, 1]} : vector<8x1156xf32> to vector<8x1086xf32>
    %cst_39 = arith.constant dense<0.000000e+00> : vector<8x1086xf32>
    %63 = tpu.matmul %61, %62, %cst_39 {dimension_numbers = #tpu.dot_dimension_numbers<[1], [0], [0], [1], [0, 0, 1, 1], [], []>} : vector<8x8xf32>, vector<8x1086xf32>, vector<8x1086xf32> -> vector<8x1086xf32>
    %64 = arith.addf %59, %63 : vector<8x1086xf32>
    %c0_40 = arith.constant 0 : index
    %c0_41 = arith.constant 0 : index
    %c0_42 = arith.constant 0 : index
    %65 = vector.load %arg6[%c0_40, %c0_41, %c0_42] : memref<1x8x1086xf32, #tpu.memory_space<vmem>>, vector<1x8x1086xf32>
    %66 = vector.shape_cast %65 : vector<1x8x1086xf32> to vector<8x1086xf32>
    %67 = vector.shape_cast %64 : vector<8x1086xf32> to vector<1x8x1086xf32>
    tpu.vector_store %arg6[%c0_40, %c0_41, %c0_42], %67 {strides = array<i32>} : memref<1x8x1086xf32, #tpu.memory_space<vmem>>, vector<1x8x1086xf32>,
    %cst_43 = arith.constant 0.000000e+00 : f32
    %68 = vector.shape_cast %12 : vector<1x1086xi1> to vector<1x1086xi1>
    %69 = vector.broadcast %68 : vector<1x1086xi1> to vector<8x1086xi1>
    %70 = vector.broadcast %cst_43 : f32 to vector<8x1086xf32>
    %71 = arith.select %69, %64, %70 : vector<8x1086xi1>, vector<8x1086xf32>
    %cst_44 = arith.constant dense<0.000000e+00> : vector<8xf32>
    %72 = vector.multi_reduction <add>, %71, %cst_44 [1] : vector<8x1086xf32> to vector<8xf32>
    %73 = vector.shape_cast %72 : vector<8xf32> to vector<8x1xf32>
    %c0_45 = arith.constant 0 : index
    %c0_46 = arith.constant 0 : index
    %c0_47 = arith.constant 0 : index
    %74 = vector.load %arg7[%c0_45, %c0_46, %c0_47] : memref<1x8x1xf32, #tpu.memory_space<vmem>>, vector<1x8x1xf32>
    %75 = vector.shape_cast %74 : vector<1x8x1xf32> to vector<8x1xf32>
    %76 = vector.shape_cast %73 : vector<8x1xf32> to vector<1x8x1xf32>
    tpu.vector_store %arg7[%c0_45, %c0_46, %c0_47], %76 {strides = array<i32>} : memref<1x8x1xf32, #tpu.memory_space<vmem>>, vector<1x8x1xf32>,
    %77 = arith.mulf %71, %71 : vector<8x1086xf32>
    %cst_48 = arith.constant dense<0.000000e+00> : vector<8xf32>
    %78 = vector.multi_reduction <add>, %77, %cst_48 [1] : vector<8x1086xf32> to vector<8xf32>
    %79 = vector.shape_cast %78 : vector<8xf32> to vector<8x1xf32>
    %c0_49 = arith.constant 0 : index
    %c0_50 = arith.constant 0 : index
    %c0_51 = arith.constant 0 : index
    %80 = vector.load %arg8[%c0_49, %c0_50, %c0_51] : memref<1x8x1xf32, #tpu.memory_space<vmem>>, vector<1x8x1xf32>
    %81 = vector.shape_cast %80 : vector<1x8x1xf32> to vector<8x1xf32>
    %82 = vector.shape_cast %79 : vector<8x1xf32> to vector<1x8x1xf32>
    tpu.vector_store %arg8[%c0_49, %c0_50, %c0_51], %82 {strides = array<i32>} : memref<1x8x1xf32, #tpu.memory_space<vmem>>, vector<1x8x1xf32>,
    return
  }
  func.func @transform_0(%arg0: i32) -> (i32, i32, i32) {
    %c0_i32 = arith.constant 0 : i32
    %c0_i32_0 = arith.constant 0 : i32
    %c0_i32_1 = arith.constant 0 : i32
    return %arg0, %c0_i32, %c0_i32_0 : i32, i32, i32
  }
  func.func @transform_1(%arg0: i32) -> (i32, i32, i32) {
    %c0_i32 = arith.constant 0 : i32
    %c0_i32_0 = arith.constant 0 : i32
    %c0_i32_1 = arith.constant 0 : i32
    %c0_i32_2 = arith.constant 0 : i32
    return %c0_i32, %c0_i32_0, %c0_i32_1 : i32, i32, i32
  }
  func.func @transform_2(%arg0: i32) -> (i32, i32) {
    %c0_i32 = arith.constant 0 : i32
    %c0_i32_0 = arith.constant 0 : i32
    %c0_i32_1 = arith.constant 0 : i32
    return %c0_i32, %c0_i32_0 : i32, i32
  }
  func.func @transform_3(%arg0: i32) -> (i32, i32) {
    %c0_i32 = arith.constant 0 : i32
    %c0_i32_0 = arith.constant 0 : i32
    %c0_i32_1 = arith.constant 0 : i32
    return %c0_i32, %c0_i32_0 : i32, i32
  }
  func.func @transform_4(%arg0: i32) -> (i32, i32) {
    %c0_i32 = arith.constant 0 : i32
    %c0_i32_0 = arith.constant 0 : i32
    %c0_i32_1 = arith.constant 0 : i32
    return %c0_i32, %c0_i32_0 : i32, i32
  }
  func.func @transform_5(%arg0: i32) -> (i32, i32, i32) {
    %c0_i32 = arith.constant 0 : i32
    %c0_i32_0 = arith.constant 0 : i32
    %c0_i32_1 = arith.constant 0 : i32
    return %arg0, %c0_i32, %c0_i32_0 : i32, i32, i32
  }
  func.func @transform_6(%arg0: i32) -> (i32, i32, i32) {
    %c0_i32 = arith.constant 0 : i32
    %c0_i32_0 = arith.constant 0 : i32
    %c0_i32_1 = arith.constant 0 : i32
    return %arg0, %c0_i32, %c0_i32_0 : i32, i32, i32
  }
  func.func @transform_7(%arg0: i32) -> (i32, i32, i32) {
    %c0_i32 = arith.constant 0 : i32
    %c0_i32_0 = arith.constant 0 : i32
    %c0_i32_1 = arith.constant 0 : i32
    return %arg0, %c0_i32, %c0_i32_0 : i32, i32, i32
  }
}

</mosaic_0001>

<llo_original>
// kernel: unet_up_block_forward.7
$region0: #{unet_up_block_forward.7}
  #allocation0 [shape = 'u32[]', space=smem, size = 0x4, offset = 0x4, fixed_abs, tag = 'smem constant byte address 0x4 - core index']
  #allocation1 [shape = 'u32[144,128]{1,0:T(1,128)}', space=vmem, size = 0x12000, scoped, tag = 'internal scratch']
  %s0 = inlined_call_operand.vmem [shape: f32[2,8,1086], index: 0, kind: input, shape index: {}]
  %s1 = inlined_call_operand.vmem [shape: f32[8,1], index: 1, kind: input, shape index: {}]
  %s2 = inlined_call_operand.vmem [shape: f32[8,1], index: 2, kind: input, shape index: {}]
  %s3 = inlined_call_operand.vmem [shape: f32[2,8,1086], index: 3, kind: output, shape index: {}]
  %s4 = sld [smem:[#allocation0]]
  $region45: #{unet_up_block_forward.7} parent=0
    _
  %s6 = ssub.s32 1, %s4
  %s7 = scalar_select 0, %s6, %s4
  loop: start=0, step=1, limit=4
  $region2: #{unet_up_block_forward.7} parent=0 // loop_pre_header
    _
  $region3: #{unet_up_block_forward.7} parent=0 // loop_header
    %s9 = sphi 0, %s13
    %p10 = scmp.ge.s32.totalorder %s9, 4
    %s19 = sphi 0, %s21
    %s22 = sphi 0, %s19
    %s23 = sphi 0, %s22
    %s39 = sphi 0, %s23
    %s43 = sphi 0, %s43
    %s45 = sphi 0, %s43
    %s46 = sphi 0, %s45
    %s60 = sphi 0, %s46
    %s64 = sphi 0, %s64
    %s66 = sphi 0, %s64
    %s67 = sphi 0, %s66
    %s81 = sphi 0, %s67
    %s87 = sphi 0, %s89
    %s90 = sphi 0, %s87
    %s91 = sphi 0, %s90
    %s107 = sphi 0, %s91
  $region4: #{unet_up_block_forward.7} parent=0 // loop_header_branch
    %12 = sbr.rel (%p10) target = $region8
  $region5: #{unet_up_block_forward.7} parent=0 // loop_body
    %s14 = ssub.s32 %s9, 1
    %s15 = ssub.s32 %s9, 2
    %s16 = sadd.s32 %s9, 1
    %s17 = ssub.s32 %s9, %s16
    %p18 = scmp.eq.s32.totalorder %s17, 0
    %s20 = sadd.s32 %s19, 1
    %s21 = scalar_select %p18, %s19, %s20
    %p24 = pneg %p18
    %p25 = scmp.eq.s32.totalorder %s9, 1
    %p26 = por %p24, %p25
    %p27 = scmp.ne.s32.totalorder %s19, %s22
    %p28 = scmp.eq.s32.totalorder %s9, 0
    %p29 = por %p27, %p28
    %p30 = scmp.ne.s32.totalorder %s19, %s22
    %p31 = scmp.eq.s32.totalorder %s14, 1
    %p32 = por %p30, %p31
    %p33 = scmp.ne.s32.totalorder %s22, %s23
    %p34 = scmp.eq.s32.totalorder %s14, 0
    %p35 = por %p33, %p34
    %p36 = scmp.ne.s32.totalorder %s22, %s23
    %p37 = scmp.eq.s32.totalorder %s15, 1
    %p38 = por %p36, %p37
    %p40 = scmp.ne.s32.totalorder %s23, %s39
    %p41 = scmp.eq.s32.totalorder %s15, 0
    %p42 = por %p40, %p41
    %s44 = sadd.s32 %s43, 1
    %p47 = scmp.eq.s32.totalorder %s9, 1
    %p48 = scmp.ne.s32.totalorder %s43, %s45
    %p49 = scmp.eq.s32.totalorder %s9, 0
    %p50 = por %p48, %p49
    %p51 = scmp.ne.s32.totalorder %s43, %s45
    %p52 = scmp.eq.s32.totalorder %s14, 1
    %p53 = por %p51, %p52
    %p54 = scmp.ne.s32.totalorder %s45, %s46
    %p55 = scmp.eq.s32.totalorder %s14, 0
    %p56 = por %p54, %p55
    %p57 = scmp.ne.s32.totalorder %s45, %s46
    %p58 = scmp.eq.s32.totalorder %s15, 1
    %p59 = por %p57, %p58
    %p61 = scmp.ne.s32.totalorder %s46, %s60
    %p62 = scmp.eq.s32.totalorder %s15, 0
    %p63 = por %p61, %p62
    %s65 = sadd.s32 %s64, 1
    %p68 = scmp.eq.s32.totalorder %s9, 1
    %p69 = scmp.ne.s32.totalorder %s64, %s66
    %p70 = scmp.eq.s32.totalorder %s9, 0
    %p71 = por %p69, %p70
    %p72 = scmp.ne.s32.totalorder %s64, %s66
    %p73 = scmp.eq.s32.totalorder %s14, 1
    %p74 = por %p72, %p73
    %p75 = scmp.ne.s32.totalorder %s66, %s67
    %p76 = scmp.eq.s32.totalorder %s14, 0
    %p77 = por %p75, %p76
    %p78 = scmp.ne.s32.totalorder %s66, %s67
    %p79 = scmp.eq.s32.totalorder %s15, 1
    %p80 = por %p78, %p79
    %p82 = scmp.ne.s32.totalorder %s67, %s81
    %p83 = scmp.eq.s32.totalorder %s15, 0
    %p84 = por %p82, %p83
    %s85 = ssub.s32 %s9, %s16
    %p86 = scmp.eq.s32.totalorder %s85, 0
    %s88 = sadd.s32 %s87, 1
    %s89 = scalar_select %p86, %s87, %s88
    %p92 = pneg %p86
    %p93 = scmp.eq.s32.totalorder %s9, 1
    %p94 = por %p92, %p93
    %p95 = scmp.ne.s32.totalorder %s87, %s90
    %p96 = scmp.eq.s32.totalorder %s9, 0
    %p97 = por %p95, %p96
    %p98 = scmp.ne.s32.totalorder %s87, %s90
    %p99 = scmp.eq.s32.totalorder %s14, 1
    %p100 = por %p98, %p99
    %p101 = scmp.ne.s32.totalorder %s90, %s91
    %p102 = scmp.eq.s32.totalorder %s14, 0
    %p103 = por %p101, %p102
    %p104 = scmp.ne.s32.totalorder %s90, %s91
    %p105 = scmp.eq.s32.totalorder %s15, 1
    %p106 = por %p104, %p105
    %p108 = scmp.ne.s32.totalorder %s91, %s107
    %p109 = scmp.eq.s32.totalorder %s15, 0
    %p110 = por %p108, %p109
    %p111 = scmp.le.s32.totalorder 1, %s9
    %p112 = scmp.lt.s32.totalorder %s9, 3
    %p113 = pnand %p111, %p112
    %p114 = pneg %p113
    // Predicated region
    $region9: #{unet_up_block_forward.7} parent=5 // pred_check
      _
    $region10: #{unet_up_block_forward.7} parent=5 // pred_check_branch
      %116 = sbr.rel (%p113) target = $region12
    $region11: #{unet_up_block_forward.7} parent=5 // pred_region
      %s117 = ssub.s32 %s9, 1
      // Predicated region
      $region13: #{unet_up_block_forward.7} parent=11 // pred_check
        %p118 = pneg %p56
      $region14: #{unet_up_block_forward.7} parent=11 // pred_check_branch
        %120 = sbr.rel (%p118) target = $region16
      $region15: #{unet_up_block_forward.7} parent=11 // pred_region
        _
      $region16: #{unet_up_block_forward.7} parent=11 // pred_fallthru
        _
      // Predicated region
      $region17: #{unet_up_block_forward.7} parent=11 // pred_check
        %p121 = pneg %p77
      $region18: #{unet_up_block_forward.7} parent=11 // pred_check_branch
        %123 = sbr.rel (%p121) target = $region20
      $region19: #{unet_up_block_forward.7} parent=11 // pred_region
        _
      $region20: #{unet_up_block_forward.7} parent=11 // pred_fallthru
        _
    $region12: #{unet_up_block_forward.7} parent=5 // pred_fallthru
      _
    %p124 = scmp.lt.s32.totalorder %s9, 2
    // Predicated region
    $region21: #{unet_up_block_forward.7} parent=5 // pred_check
      %p125 = pneg %p124
    $region22: #{unet_up_block_forward.7} parent=5 // pred_check_branch
      %127 = sbr.rel (%p125) target = $region24
    $region23: #{unet_up_block_forward.7} parent=5 // pred_region
      // Predicated region
      $region25: #{unet_up_block_forward.7} parent=23 // pred_check
        %p128 = pneg %p29
      $region26: #{unet_up_block_forward.7} parent=23 // pred_check_branch
        %130 = sbr.rel (%p128) target = $region28
      $region27: #{unet_up_block_forward.7} parent=23 // pred_region
        %p131 = scmp.lt.s32.totalorder %s9, 1
        %s132 = scalar_select %p131, %s9, 1
        %s133 = smul.addr %s132, 9
        %s134 = smul.addr %s133, 8
        %s135 = scalar_lea.vmem %s0, %s134
      $region28: #{unet_up_block_forward.7} parent=23 // pred_fallthru
        _
    $region24: #{unet_up_block_forward.7} parent=5 // pred_fallthru
      _
    %p136 = scmp.le.s32.totalorder 1, %s9
    %p137 = scmp.lt.s32.totalorder %s9, 3
    %p138 = pnand %p136, %p137
    %p139 = pneg %p138
    // Predicated region
    $region29: #{unet_up_block_forward.7} parent=5 // pred_check
      _
    $region30: #{unet_up_block_forward.7} parent=5 // pred_check_branch
      %141 = sbr.rel (%p138) target = $region32
    $region31: #{unet_up_block_forward.7} parent=5 // pred_region
      %s142 = ssub.s32 %s9, 1
      %p143 = scmp.lt.s32.totalorder %s14, 1
      %s144 = scalar_select %p143, %s14, 1
      %s145 = smul.addr %s144, 9
      %s146 = smul.addr %s145, 8
      %s147 = scalar_lea.vmem %s0, %s146
      %p148 = pneg %p35
      %p149 = pneg %p32
      %p150 = pneg %p56
      %p151 = pneg %p53
      %p152 = pneg %p77
      %p153 = pneg %p74
      %p154 = pneg %p103
      %p155 = pneg %p100
      %p156 = scmp.lt.s32.totalorder %s14, 1
      %s157 = scalar_select %p156, %s14, 1
      %s158 = smul.addr %s157, 9
      %s159 = smul.addr %s158, 8
      %s160 = scalar_lea.vmem %s3, %s159
      %p161 = scmp.lt.s32.totalorder %s14, 1
      %s162 = scalar_select %p161, %s14, 1
      %s163 = smul.addr %s162, 9
      %s164 = smul.addr %s163, 8
      %s165 = scalar_lea.vmem %s0, %s164
      %p166 = scmp.lt.s32.totalorder %s14, 1
      %s167 = scalar_select %p166, %s14, 1
      %s168 = smul.addr %s167, 9
      %s169 = smul.addr %s168, 8
      %s170 = scalar_lea.vmem %s3, %s169
      %v171 = vld [vmem:[%s165] sm:$0xff]
      %v172 = vld [vmem:[%s165 + $0x8] sm:$0xff]
      %v173 = vld [vmem:[%s165 + $0x10] sm:$0xff]
      %v174 = vld [vmem:[%s165 + $0x18] sm:$0xff]
      %v175 = vld [vmem:[%s165 + $0x20] sm:$0xff]
      %v176 = vld [vmem:[%s165 + $0x28] sm:$0xff]
      %v177 = vld [vmem:[%s165 + $0x30] sm:$0xff]
      %v178 = vld [vmem:[%s165 + $0x38] sm:$0xff]
      %v179 = vld [vmem:[%s165 + $0x40] sm:$0xff]
      %v180 = vld [vmem:[%s1] sm:$0xff]
      %182 = vset.pattern.permute.xlu0 0
      %183 = vperm.xlu0 %182, %v180
      %v184 = vpop.permute.xlu0 %183
      %v186 = vmul.f32 %v171, %v184
      %v187 = vmul.f32 %v172, %v184
      %v188 = vmul.f32 %v173, %v184
      %v189 = vmul.f32 %v174, %v184
      %v190 = vmul.f32 %v175, %v184
      %v191 = vmul.f32 %v176, %v184
      %v192 = vmul.f32 %v177, %v184
      %v193 = vmul.f32 %v178, %v184
      %v194 = vmul.f32 %v179, %v184
      %v195 = vld [vmem:[%s2] sm:$0xff]
      %197 = vset.pattern.permute.xlu0 0
      %198 = vperm.xlu0 %197, %v195
      %v199 = vpop.permute.xlu0 %198
      %v201 = vadd.f32 %v186, %v199
      %v202 = vadd.f32 %v187, %v199
      %v203 = vadd.f32 %v188, %v199
      %v204 = vadd.f32 %v189, %v199
      %v205 = vadd.f32 %v190, %v199
      %v206 = vadd.f32 %v191, %v199
      %v207 = vadd.f32 %v192, %v199
      %v208 = vadd.f32 %v193, %v199
      %v209 = vadd.f32 %v194, %v199
      %v210 = vmax.f32 %v201, 0.0
      %v211 = vmax.f32 %v202, 0.0
      %v212 = vmax.f32 %v203, 0.0
      %v213 = vmax.f32 %v204, 0.0
      %v214 = vmax.f32 %v205, 0.0
      %v215 = vmax.f32 %v206, 0.0
      %v216 = vmax.f32 %v207, 0.0
      %v217 = vmax.f32 %v208, 0.0
      %v218 = vmax.f32 %v209, 0.0
      %219 = vst [vmem:[%s170] sm:$0xff] %v210
      %220 = vst [vmem:[%s170 + $0x8] sm:$0xff] %v211
      %221 = vst [vmem:[%s170 + $0x10] sm:$0xff] %v212
      %222 = vst [vmem:[%s170 + $0x18] sm:$0xff] %v213
      %223 = vst [vmem:[%s170 + $0x20] sm:$0xff] %v214
      %224 = vst [vmem:[%s170 + $0x28] sm:$0xff] %v215
      %225 = vst [vmem:[%s170 + $0x30] sm:$0xff] %v216
      %226 = vst [vmem:[%s170 + $0x38] sm:$0xff] %v217
      %vm227 = vcmask 506880
      %228 = vst.msk [vmem:[%s170 + $0x40] sm:$0xff] %vm227, %v218
      %p229 = scmp.lt.s32.totalorder %s14, 1
      %s230 = scalar_select %p229, %s14, 1
      %s231 = smul.addr %s230, 9
      %s232 = smul.addr %s231, 8
      %s233 = scalar_lea.vmem %s3, %s232
      // Predicated region
      $region33: #{unet_up_block_forward.7} parent=31 // pred_check
        %p234 = pneg %p100
      $region34: #{unet_up_block_forward.7} parent=31 // pred_check_branch
        %236 = sbr.rel (%p234) target = $region36
      $region35: #{unet_up_block_forward.7} parent=31 // pred_region
        _
      $region36: #{unet_up_block_forward.7} parent=31 // pred_fallthru
        _
    $region32: #{unet_up_block_forward.7} parent=5 // pred_fallthru
      _
    %p237 = scmp.le.s32.totalorder 2, %s9
    // Predicated region
    $region37: #{unet_up_block_forward.7} parent=5 // pred_check
      %p238 = pneg %p237
    $region38: #{unet_up_block_forward.7} parent=5 // pred_check_branch
      %240 = sbr.rel (%p238) target = $region40
    $region39: #{unet_up_block_forward.7} parent=5 // pred_region
      %s241 = ssub.s32 %s9, 2
      // Predicated region
      $region41: #{unet_up_block_forward.7} parent=39 // pred_check
        %p242 = pneg %p106
      $region42: #{unet_up_block_forward.7} parent=39 // pred_check_branch
        %244 = sbr.rel (%p242) target = $region44
      $region43: #{unet_up_block_forward.7} parent=39 // pred_region
        %p245 = scmp.lt.s32.totalorder %s15, 1
        %s246 = scalar_select %p245, %s15, 1
        %s247 = smul.addr %s246, 9
        %s248 = smul.addr %s247, 8
        %s249 = scalar_lea.vmem %s3, %s248
      $region44: #{unet_up_block_forward.7} parent=39 // pred_fallthru
        _
    $region40: #{unet_up_block_forward.7} parent=5 // pred_fallthru
      _
  $region6: #{unet_up_block_forward.7} parent=0 // loop_footer
    %s13 = sadd.s32 1, %s9
  $region7: #{unet_up_block_forward.7} parent=0 // loop_footer_branch
    %8 = sbr.rel target = $region3
  $region8: #{unet_up_block_forward.7} parent=0 // loop_exit
    _

// kernel: unet_up_block_forward.5
$region0: #{unet_up_block_forward.5}
  #allocation0 [shape = 'u32[]', space=smem, size = 0x4, offset = 0x4, fixed_abs, tag = 'smem constant byte address 0x4 - core index']
  #allocation1 [shape = 'u32[144,128]{1,0:T(1,128)}', space=vmem, size = 0x12000, scoped, tag = 'internal scratch']
  %s0 = inlined_call_operand.vmem [shape: f32[2,8,1086], index: 0, kind: input, shape index: {}]
  %s1 = inlined_call_operand.vmem [shape: f32[9,8,8], index: 1, kind: input, shape index: {}]
  %s2 = inlined_call_operand.vmem [shape: f32[8,1], index: 2, kind: input, shape index: {}]
  %s3 = inlined_call_operand.vmem [shape: f32[8,1], index: 3, kind: input, shape index: {}]
  %s4 = inlined_call_operand.vmem [shape: f32[1,1086], index: 4, kind: input, shape index: {}]
  %s5 = inlined_call_operand.vmem [shape: f32[2,8,1086], index: 5, kind: output, shape index: {0}]
  %s6 = inlined_call_operand.vmem [shape: f32[2,8,1], index: 6, kind: output, shape index: {1}]
  %s7 = inlined_call_operand.vmem [shape: f32[2,8,1], index: 7, kind: output, shape index: {2}]
  %8 = xla_tuple %s5, %s6, %s7
  %s9 = sld [smem:[#allocation0]]
  $region69: #{unet_up_block_forward.5} parent=0
    _
  %s11 = ssub.s32 1, %s9
  %s12 = scalar_select 0, %s11, %s9
  loop: start=0, step=1, limit=4
  $region2: #{unet_up_block_forward.5} parent=0 // loop_pre_header
    _
  $region3: #{unet_up_block_forward.5} parent=0 // loop_header
    %s14 = sphi 0, %s18
    %p15 = scmp.ge.s32.totalorder %s14, 4
    %s24 = sphi 0, %s26
    %s27 = sphi 0, %s24
    %s28 = sphi 0, %s27
    %s44 = sphi 0, %s28
    %s48 = sphi 0, %s48
    %s50 = sphi 0, %s48
    %s51 = sphi 0, %s50
    %s65 = sphi 0, %s51
    %s69 = sphi 0, %s69
    %s71 = sphi 0, %s69
    %s72 = sphi 0, %s71
    %s86 = sphi 0, %s72
    %s90 = sphi 0, %s90
    %s92 = sphi 0, %s90
    %s93 = sphi 0, %s92
    %s107 = sphi 0, %s93
    %s111 = sphi 0, %s111
    %s113 = sphi 0, %s111
    %s114 = sphi 0, %s113
    %s128 = sphi 0, %s114
    %s134 = sphi 0, %s136
    %s137 = sphi 0, %s134
    %s138 = sphi 0, %s137
    %s154 = sphi 0, %s138
    %s160 = sphi 0, %s162
    %s163 = sphi 0, %s160
    %s164 = sphi 0, %s163
    %s180 = sphi 0, %s164
    %s186 = sphi 0, %s188
    %s189 = sphi 0, %s186
    %s190 = sphi 0, %s189
    %s206 = sphi 0, %s190
  $region4: #{unet_up_block_forward.5} parent=0 // loop_header_branch
    %17 = sbr.rel (%p15) target = $region8
  $region5: #{unet_up_block_forward.5} parent=0 // loop_body
    %s19 = ssub.s32 %s14, 1
    %s20 = ssub.s32 %s14, 2
    %s21 = sadd.s32 %s14, 1
    %s22 = ssub.s32 %s14, %s21
    %p23 = scmp.eq.s32.totalorder %s22, 0
    %s25 = sadd.s32 %s24, 1
    %s26 = scalar_select %p23, %s24, %s25
    %p29 = pneg %p23
    %p30 = scmp.eq.s32.totalorder %s14, 1
    %p31 = por %p29, %p30
    %p32 = scmp.ne.s32.totalorder %s24, %s27
    %p33 = scmp.eq.s32.totalorder %s14, 0
    %p34 = por %p32, %p33
    %p35 = scmp.ne.s32.totalorder %s24, %s27
    %p36 = scmp.eq.s32.totalorder %s19, 1
    %p37 = por %p35, %p36
    %p38 = scmp.ne.s32.totalorder %s27, %s28
    %p39 = scmp.eq.s32.totalorder %s19, 0
    %p40 = por %p38, %p39
    %p41 = scmp.ne.s32.totalorder %s27, %s28
    %p42 = scmp.eq.s32.totalorder %s20, 1
    %p43 = por %p41, %p42
    %p45 = scmp.ne.s32.totalorder %s28, %s44
    %p46 = scmp.eq.s32.totalorder %s20, 0
    %p47 = por %p45, %p46
    %s49 = sadd.s32 %s48, 1
    %p52 = scmp.eq.s32.totalorder %s14, 1
    %p53 = scmp.ne.s32.totalorder %s48, %s50
    %p54 = scmp.eq.s32.totalorder %s14, 0
    %p55 = por %p53, %p54
    %p56 = scmp.ne.s32.totalorder %s48, %s50
    %p57 = scmp.eq.s32.totalorder %s19, 1
    %p58 = por %p56, %p57
    %p59 = scmp.ne.s32.totalorder %s50, %s51
    %p60 = scmp.eq.s32.totalorder %s19, 0
    %p61 = por %p59, %p60
    %p62 = scmp.ne.s32.totalorder %s50, %s51
    %p63 = scmp.eq.s32.totalorder %s20, 1
    %p64 = por %p62, %p63
    %p66 = scmp.ne.s32.totalorder %s51, %s65
    %p67 = scmp.eq.s32.totalorder %s20, 0
    %p68 = por %p66, %p67
    %s70 = sadd.s32 %s69, 1
    %p73 = scmp.eq.s32.totalorder %s14, 1
    %p74 = scmp.ne.s32.totalorder %s69, %s71
    %p75 = scmp.eq.s32.totalorder %s14, 0
    %p76 = por %p74, %p75
    %p77 = scmp.ne.s32.totalorder %s69, %s71
    %p78 = scmp.eq.s32.totalorder %s19, 1
    %p79 = por %p77, %p78
    %p80 = scmp.ne.s32.totalorder %s71, %s72
    %p81 = scmp.eq.s32.totalorder %s19, 0
    %p82 = por %p80, %p81
    %p83 = scmp.ne.s32.totalorder %s71, %s72
    %p84 = scmp.eq.s32.totalorder %s20, 1
    %p85 = por %p83, %p84
    %p87 = scmp.ne.s32.totalorder %s72, %s86
    %p88 = scmp.eq.s32.totalorder %s20, 0
    %p89 = por %p87, %p88
    %s91 = sadd.s32 %s90, 1
    %p94 = scmp.eq.s32.totalorder %s14, 1
    %p95 = scmp.ne.s32.totalorder %s90, %s92
    %p96 = scmp.eq.s32.totalorder %s14, 0
    %p97 = por %p95, %p96
    %p98 = scmp.ne.s32.totalorder %s90, %s92
    %p99 = scmp.eq.s32.totalorder %s19, 1
    %p100 = por %p98, %p99
    %p101 = scmp.ne.s32.totalorder %s92, %s93
    %p102 = scmp.eq.s32.totalorder %s19, 0
    %p103 = por %p101, %p102
    %p104 = scmp.ne.s32.totalorder %s92, %s93
    %p105 = scmp.eq.s32.totalorder %s20, 1
    %p106 = por %p104, %p105
    %p108 = scmp.ne.s32.totalorder %s93, %s107
    %p109 = scmp.eq.s32.totalorder %s20, 0
    %p110 = por %p108, %p109
    %s112 = sadd.s32 %s111, 1
    %p115 = scmp.eq.s32.totalorder %s14, 1
    %p116 = scmp.ne.s32.totalorder %s111, %s113
    %p117 = scmp.eq.s32.totalorder %s14, 0
    %p118 = por %p116, %p117
    %p119 = scmp.ne.s32.totalorder %s111, %s113
    %p120 = scmp.eq.s32.totalorder %s19, 1
    %p121 = por %p119, %p120
    %p122 = scmp.ne.s32.totalorder %s113, %s114
    %p123 = scmp.eq.s32.totalorder %s19, 0
    %p124 = por %p122, %p123
    %p125 = scmp.ne.s32.totalorder %s113, %s114
    %p126 = scmp.eq.s32.totalorder %s20, 1
    %p127 = por %p125, %p126
    %p129 = scmp.ne.s32.totalorder %s114, %s128
    %p130 = scmp.eq.s32.totalorder %s20, 0
    %p131 = por %p129, %p130
    %s132 = ssub.s32 %s14, %s21
    %p133 = scmp.eq.s32.totalorder %s132, 0
    %s135 = sadd.s32 %s134, 1
    %s136 = scalar_select %p133, %s134, %s135
    %p139 = pneg %p133
    %p140 = scmp.eq.s32.totalorder %s14, 1
    %p141 = por %p139, %p140
    %p142 = scmp.ne.s32.totalorder %s134, %s137
    %p143 = scmp.eq.s32.totalorder %s14, 0
    %p144 = por %p142, %p143
    %p145 = scmp.ne.s32.totalorder %s134, %s137
    %p146 = scmp.eq.s32.totalorder %s19, 1
    %p147 = por %p145, %p146
    %p148 = scmp.ne.s32.totalorder %s137, %s138
    %p149 = scmp.eq.s32.totalorder %s19, 0
    %p150 = por %p148, %p149
    %p151 = scmp.ne.s32.totalorder %s137, %s138
    %p152 = scmp.eq.s32.totalorder %s20, 1
    %p153 = por %p151, %p152
    %p155 = scmp.ne.s32.totalorder %s138, %s154
    %p156 = scmp.eq.s32.totalorder %s20, 0
    %p157 = por %p155, %p156
    %s158 = ssub.s32 %s14, %s21
    %p159 = scmp.eq.s32.totalorder %s158, 0
    %s161 = sadd.s32 %s160, 1
    %s162 = scalar_select %p159, %s160, %s161
    %p165 = pneg %p159
    %p166 = scmp.eq.s32.totalorder %s14, 1
    %p167 = por %p165, %p166
    %p168 = scmp.ne.s32.totalorder %s160, %s163
    %p169 = scmp.eq.s32.totalorder %s14, 0
    %p170 = por %p168, %p169
    %p171 = scmp.ne.s32.totalorder %s160, %s163
    %p172 = scmp.eq.s32.totalorder %s19, 1
    %p173 = por %p171, %p172
    %p174 = scmp.ne.s32.totalorder %s163, %s164
    %p175 = scmp.eq.s32.totalorder %s19, 0
    %p176 = por %p174, %p175
    %p177 = scmp.ne.s32.totalorder %s163, %s164
    %p178 = scmp.eq.s32.totalorder %s20, 1
    %p179 = por %p177, %p178
    %p181 = scmp.ne.s32.totalorder %s164, %s180
    %p182 = scmp.eq.s32.totalorder %s20, 0
    %p183 = por %p181, %p182
    %s184 = ssub.s32 %s14, %s21
    %p185 = scmp.eq.s32.totalorder %s184, 0
    %s187 = sadd.s32 %s186, 1
    %s188 = scalar_select %p185, %s186, %s187
    %p191 = pneg %p185
    %p192 = scmp.eq.s32.totalorder %s14, 1
    %p193 = por %p191, %p192
    %p194 = scmp.ne.s32.totalorder %s186, %s189
    %p195 = scmp.eq.s32.totalorder %s14, 0
    %p196 = por %p194, %p195
    %p197 = scmp.ne.s32.totalorder %s186, %s189
    %p198 = scmp.eq.s32.totalorder %s19, 1
    %p199 = por %p197, %p198
    %p200 = scmp.ne.s32.totalorder %s189, %s190
    %p201 = scmp.eq.s32.totalorder %s19, 0
    %p202 = por %p200, %p201
    %p203 = scmp.ne.s32.totalorder %s189, %s190
    %p204 = scmp.eq.s32.totalorder %s20, 1
    %p205 = por %p203, %p204
    %p207 = scmp.ne.s32.totalorder %s190, %s206
    %p208 = scmp.eq.s32.totalorder %s20, 0
    %p209 = por %p207, %p208
    %p210 = scmp.le.s32.totalorder 1, %s14
    %p211 = scmp.lt.s32.totalorder %s14, 3
    %p212 = pnand %p210, %p211
    %p213 = pneg %p212
    // Predicated region
    $region9: #{unet_up_block_forward.5} parent=5 // pred_check
      _
    $region10: #{unet_up_block_forward.5} parent=5 // pred_check_branch
      %215 = sbr.rel (%p212) target = $region12
    $region11: #{unet_up_block_forward.5} parent=5 // pred_region
      %s216 = ssub.s32 %s14, 1
      // Predicated region
      $region13: #{unet_up_block_forward.5} parent=11 // pred_check
        %p217 = pneg %p61
      $region14: #{unet_up_block_forward.5} parent=11 // pred_check_branch
        %219 = sbr.rel (%p217) target = $region16
      $region15: #{unet_up_block_forward.5} parent=11 // pred_region
        _
      $region16: #{unet_up_block_forward.5} parent=11 // pred_fallthru
        _
      // Predicated region
      $region17: #{unet_up_block_forward.5} parent=11 // pred_check
        %p220 = pneg %p82
      $region18: #{unet_up_block_forward.5} parent=11 // pred_check_branch
        %222 = sbr.rel (%p220) target = $region20
      $region19: #{unet_up_block_forward.5} parent=11 // pred_region
        _
      $region20: #{unet_up_block_forward.5} parent=11 // pred_fallthru
        _
      // Predicated region
      $region21: #{unet_up_block_forward.5} parent=11 // pred_check
        %p223 = pneg %p103
      $region22: #{unet_up_block_forward.5} parent=11 // pred_check_branch
        %225 = sbr.rel (%p223) target = $region24
      $region23: #{unet_up_block_forward.5} parent=11 // pred_region
        _
      $region24: #{unet_up_block_forward.5} parent=11 // pred_fallthru
        _
      // Predicated region
      $region25: #{unet_up_block_forward.5} parent=11 // pred_check
        %p226 = pneg %p124
      $region26: #{unet_up_block_forward.5} parent=11 // pred_check_branch
        %228 = sbr.rel (%p226) target = $region28
      $region27: #{unet_up_block_forward.5} parent=11 // pred_region
        _
      $region28: #{unet_up_block_forward.5} parent=11 // pred_fallthru
        _
    $region12: #{unet_up_block_forward.5} parent=5 // pred_fallthru
      _
    %p229 = scmp.lt.s32.totalorder %s14, 2
    // Predicated region
    $region29: #{unet_up_block_forward.5} parent=5 // pred_check
      %p230 = pneg %p229
    $region30: #{unet_up_block_forward.5} parent=5 // pred_check_branch
      %232 = sbr.rel (%p230) target = $region32
    $region31: #{unet_up_block_forward.5} parent=5 // pred_region
      // Predicated region
      $region33: #{unet_up_block_forward.5} parent=31 // pred_check
        %p233 = pneg %p34
      $region34: #{unet_up_block_forward.5} parent=31 // pred_check_branch
        %235 = sbr.rel (%p233) target = $region36
      $region35: #{unet_up_block_forward.5} parent=31 // pred_region
        %p236 = scmp.lt.s32.totalorder %s14, 1
        %s237 = scalar_select %p236, %s14, 1
        %s238 = smul.addr %s237, 9
        %s239 = smul.addr %s238, 8
        %s240 = scalar_lea.vmem %s0, %s239
      $region36: #{unet_up_block_forward.5} parent=31 // pred_fallthru
        _
    $region32: #{unet_up_block_forward.5} parent=5 // pred_fallthru
      _
    %p241 = scmp.le.s32.totalorder 1, %s14
    %p242 = scmp.lt.s32.totalorder %s14, 3
    %p243 = pnand %p241, %p242
    %p244 = pneg %p243
    // Predicated region
    $region37: #{unet_up_block_forward.5} parent=5 // pred_check
      _
    $region38: #{unet_up_block_forward.5} parent=5 // pred_check_branch
      %246 = sbr.rel (%p243) target = $region40
    $region39: #{unet_up_block_forward.5} parent=5 // pred_region
      %s247 = ssub.s32 %s14, 1
      %p248 = scmp.lt.s32.totalorder %s19, 1
      %s249 = scalar_select %p248, %s19, 1
      %s250 = smul.addr %s249, 9
      %s251 = smul.addr %s250, 8
      %s252 = scalar_lea.vmem %s0, %s251
      %p253 = pneg %p40
      %p254 = pneg %p37
      %p255 = pneg %p61
      %p256 = pneg %p58
      %p257 = pneg %p82
      %p258 = pneg %p79
      %p259 = pneg %p103
      %p260 = pneg %p100
      %p261 = pneg %p124
      %p262 = pneg %p121
      %p263 = pneg %p150
      %p264 = pneg %p147
      %p265 = scmp.lt.s32.totalorder %s19, 1
      %s266 = scalar_select %p265, %s19, 1
      %s267 = smul.addr %s266, 9
      %s268 = smul.addr %s267, 8
      %s269 = scalar_lea.vmem %s5, %s268
      %p270 = pneg %p176
      %p271 = pneg %p173
      %p272 = scmp.lt.s32.totalorder %s19, 1
      %s273 = scalar_select %p272, %s19, 1
      %s274 = smul.addr %s273, 8
      %s275 = scalar_lea.vmem %s6, %s274
      %p276 = pneg %p202
      %p277 = pneg %p199
      %p278 = scmp.lt.s32.totalorder %s19, 1
      %s279 = scalar_select %p278, %s19, 1
      %s280 = smul.addr %s279, 8
      %s281 = scalar_lea.vmem %s7, %s280
      %p282 = scmp.lt.s32.totalorder %s19, 1
      %s283 = scalar_select %p282, %s19, 1
      %s284 = smul.addr %s283, 9
      %s285 = smul.addr %s284, 8
      %s286 = scalar_lea.vmem %s0, %s285
      %p287 = scmp.lt.s32.totalorder %s19, 1
      %s288 = scalar_select %p287, %s19, 1
      %s289 = smul.addr %s288, 9
      %s290 = smul.addr %s289, 8
      %s291 = scalar_lea.vmem %s5, %s290
      %p292 = scmp.lt.s32.totalorder %s19, 1
      %s293 = scalar_select %p292, %s19, 1
      %s294 = smul.addr %s293, 8
      %s295 = scalar_lea.vmem %s6, %s294
      %p296 = scmp.lt.s32.totalorder %s19, 1
      %s297 = scalar_select %p296, %s19, 1
      %s298 = smul.addr %s297, 8
      %s299 = scalar_lea.vmem %s7, %s298
      %v300 = vld [vmem:[%s286] sm:$0xff]
      %v301 = vld [vmem:[%s286 + $0x8] sm:$0xff]
      %v302 = vld [vmem:[%s286 + $0x10] sm:$0xff]
      %v303 = vld [vmem:[%s286 + $0x18] sm:$0xff]
      %v304 = vld [vmem:[%s286 + $0x20] sm:$0xff]
      %v305 = vld [vmem:[%s286 + $0x28] sm:$0xff]
      %v306 = vld [vmem:[%s286 + $0x30] sm:$0xff]
      %v307 = vld [vmem:[%s286 + $0x38] sm:$0xff]
      %v308 = vld [vmem:[%s286 + $0x40] sm:$0xff]
      %v309 = vld [vmem:[%s2] sm:$0xff]
      %311 = vset.pattern.permute.xlu0 0
      %312 = vperm.xlu0 %311, %v309
      %v313 = vpop.permute.xlu0 %312
      %v315 = vmul.f32 %v300, %v313
      %v316 = vmul.f32 %v301, %v313
      %v317 = vmul.f32 %v302, %v313
      %v318 = vmul.f32 %v303, %v313
      %v319 = vmul.f32 %v304, %v313
      %v320 = vmul.f32 %v305, %v313
      %v321 = vmul.f32 %v306, %v313
      %v322 = vmul.f32 %v307, %v313
      %v323 = vmul.f32 %v308, %v313
      %v324 = vld [vmem:[%s3] sm:$0xff]
      %326 = vset.pattern.permute.xlu0 0
      %327 = vperm.xlu0 %326, %v324
      %v328 = vpop.permute.xlu0 %327
      %v330 = vadd.f32 %v315, %v328
      %v331 = vadd.f32 %v316, %v328
      %v332 = vadd.f32 %v317, %v328
      %v333 = vadd.f32 %v318, %v328
      %v334 = vadd.f32 %v319, %v328
      %v335 = vadd.f32 %v320, %v328
      %v336 = vadd.f32 %v321, %v328
      %v337 = vadd.f32 %v322, %v328
      %v338 = vadd.f32 %v323, %v328
      %v339 = vmax.f32 %v330, 0.0
      %v340 = vmax.f32 %v331, 0.0
      %v341 = vmax.f32 %v332, 0.0
      %v342 = vmax.f32 %v333, 0.0
      %v343 = vmax.f32 %v334, 0.0
      %v344 = vmax.f32 %v335, 0.0
      %v345 = vmax.f32 %v336, 0.0
      %v346 = vmax.f32 %v337, 0.0
      %v347 = vmax.f32 %v338, 0.0
      %v348 = vld [vmem:[%s4] sm:$0xff]
      %v349 = vld [vmem:[%s4 + $0x8] sm:$0x1]
      %vm350 = vcmp.gt.f32.partialorder %v348, 0.5
      %vm351 = vcmp.gt.f32.partialorder %v349, 0.5
      %v352 = vsel %vm350, 1, 0
      %v353 = vsel %vm351, 1, 0
      %v354 = vlaneseq
      %v355 = vshrl.u32 %v354, 7
      %v356 = vsub.s32 0, %v355
      %v357 = vrot.slane %v352, %v356
      %v358 = vlaneseq
      %v359 = vshrl.u32 %v358, 7
      %v360 = vsub.s32 1, %v359
      %v361 = vrot.slane %v352, %v360
      %v362 = vlaneseq
      %v363 = vshrl.u32 %v362, 7
      %v364 = vsub.s32 2, %v363
      %v365 = vrot.slane %v352, %v364
      %v366 = vlaneseq
      %v367 = vshrl.u32 %v366, 7
      %v368 = vsub.s32 3, %v367
      %v369 = vrot.slane %v352, %v368
      %v370 = vlaneseq
      %v371 = vshrl.u32 %v370, 7
      %v372 = vsub.s32 4, %v371
      %v373 = vrot.slane %v352, %v372
      %v374 = vlaneseq
      %v375 = vshrl.u32 %v374, 7
      %v376 = vsub.s32 5, %v375
      %v377 = vrot.slane %v352, %v376
      %v378 = vlaneseq
      %v379 = vshrl.u32 %v378, 7
      %v380 = vsub.s32 6, %v379
      %v381 = vrot.slane %v352, %v380
      %v382 = vlaneseq
      %v383 = vshrl.u32 %v382, 7
      %v384 = vsub.s32 7, %v383
      %v385 = vrot.slane %v352, %v384
      %v386 = vlaneseq
      %v387 = vshrl.u32 %v386, 7
      %v388 = vsub.s32 0, %v387
      %v389 = vrot.slane %v353, %v388
      %vm390 = vcmp.eq.s32.totalorder %v357, 1
      %vm391 = vcmp.eq.s32.totalorder %v361, 1
      %vm392 = vcmp.eq.s32.totalorder %v365, 1
      %vm393 = vcmp.eq.s32.totalorder %v369, 1
      %vm394 = vcmp.eq.s32.totalorder %v373, 1
      %vm395 = vcmp.eq.s32.totalorder %v377, 1
      %vm396 = vcmp.eq.s32.totalorder %v381, 1
      %vm397 = vcmp.eq.s32.totalorder %v385, 1
      %vm398 = vcmp.eq.s32.totalorder %v389, 1
      %v399 = vsel %vm390, %v339, 0.0
      %v400 = vsel %vm391, %v340, 0.0
      %v401 = vsel %vm392, %v341, 0.0
      %v402 = vsel %vm393, %v342, 0.0
      %v403 = vsel %vm394, %v343, 0.0
      %v404 = vsel %vm395, %v344, 0.0
      %v405 = vsel %vm396, %v345, 0.0
      %v406 = vsel %vm397, %v346, 0.0
      %v407 = vsel %vm398, %v347, 0.0
      %417 = vrot.lane.b32.xlu0 %v399, 35
      %v418 = vpop.permute.xlu0 %417
      %419 = vrot.lane.b32.xlu0 %v400, 35
      %v420 = vpop.permute.xlu0 %419
      %421 = vrot.lane.b32.xlu0 %v401, 35
      %v422 = vpop.permute.xlu0 %421
      %423 = vrot.lane.b32.xlu0 %v402, 35
      %v424 = vpop.permute.xlu0 %423
      %425 = vrot.lane.b32.xlu0 %v403, 35
      %v426 = vpop.permute.xlu0 %425
      %427 = vrot.lane.b32.xlu0 %v404, 35
      %v428 = vpop.permute.xlu0 %427
      %429 = vrot.lane.b32.xlu0 %v405, 35
      %v430 = vpop.permute.xlu0 %429
      %431 = vrot.lane.b32.xlu0 %v406, 35
      %v432 = vpop.permute.xlu0 %431
      %433 = vrot.lane.b32.xlu0 %v407, 35
      %v434 = vpop.permute.xlu0 %433
      %vm435 = vcmask 285696
      %v436 = vsel %vm435, %v418, %v420
      %v437 = vsel %vm435, %v420, %v422
      %v438 = vsel %vm435, %v422, %v424
      %v439 = vsel %vm435, %v424, %v426
      %v440 = vsel %vm435, %v426, %v428
      %v441 = vsel %vm435, %v428, %v430
      %v442 = vsel %vm435, %v430, %v432
      %v443 = vsel %vm435, %v432, %v434
      %v453 = vsel %vm435, 0.0, %v418
      %vm454 = vcmask 793600
      %v455 = vsel %vm454, %v443, 0.0
      %v456 = vld [vmem:[%s1] sm:$0xff]
      %s457 = scalar_lea.vmem %s1, 8
      %v458 = vld [vmem:[%s457] sm:$0xff]
      %461 = vrot.lane.b32.xlu0 %v453, 127
      %v462 = vpop.permute.xlu0 %461
      %463 = vrot.lane.b32.xlu0 %v436, 127
      %v464 = vpop.permute.xlu0 %463
      %465 = vrot.lane.b32.xlu0 %v437, 127
      %v466 = vpop.permute.xlu0 %465
      %467 = vrot.lane.b32.xlu0 %v438, 127
      %v468 = vpop.permute.xlu0 %467
      %469 = vrot.lane.b32.xlu0 %v439, 127
      %v470 = vpop.permute.xlu0 %469
      %471 = vrot.lane.b32.xlu0 %v440, 127
      %v472 = vpop.permute.xlu0 %471
      %473 = vrot.lane.b32.xlu0 %v441, 127
      %v474 = vpop.permute.xlu0 %473
      %475 = vrot.lane.b32.xlu0 %v442, 127
      %v476 = vpop.permute.xlu0 %475
      %477 = vrot.lane.b32.xlu0 %v455, 127
      %v478 = vpop.permute.xlu0 %477
      %vm479 = vcmask 1039360
      %v480 = vsel %vm479, %v462, %v464
      %v481 = vsel %vm479, %v464, %v466
      %v482 = vsel %vm479, %v466, %v468
      %v483 = vsel %vm479, %v468, %v470
      %v484 = vsel %vm479, %v470, %v472
      %v485 = vsel %vm479, %v472, %v474
      %v486 = vsel %vm479, %v474, %v476
      %v487 = vsel %vm479, %v476, %v478
      %vm497 = vcmask 64512
      %v499 = vsel %vm497, %v458, 0
      %501 = vmatprep.subr.mxu0 %v481
      %502 = vmatpush1.msra.mxu0 %v480
      %503 = vmatprep.subr.mxu0 0.0
      %504 = vmatpush1.msra.mxu0 0.0
      %505 = vmatprep.subr.mxu0 0.0
      %506 = vmatpush1.msra.mxu0 0.0
      %507 = vmatprep.subr.mxu0 0.0
      %508 = vmatpush1.msra.mxu0 0.0
      %509 = vmatprep.subr.mxu0 0.0
      %510 = vmatpush1.msra.mxu0 0.0
      %511 = vmatprep.subr.mxu0 0.0
      %512 = vmatpush1.msra.mxu0 0.0
      %513 = vmatprep.subr.mxu0 0.0
      %514 = vmatpush1.msra.mxu0 0.0
      %515 = vmatprep.subr.mxu0 0.0
      %516 = vmatpush1.msra.mxu0 0.0
      %517 = vmatprep.subr.mxu0 0.0
      %518 = vmatpush1.msra.mxu0 0.0
      %519 = vmatprep.subr.mxu0 0.0
      %520 = vmatpush1.msra.mxu0 0.0
      %521 = vmatprep.subr.mxu0 0.0
      %522 = vmatpush1.msra.mxu0 0.0
      %523 = vmatprep.subr.mxu0 0.0
      %524 = vmatpush1.msra.mxu0 0.0
      %525 = vmatprep.subr.mxu0 0.0
      %526 = vmatpush1.msra.mxu0 0.0
      %527 = vmatprep.subr.mxu0 0.0
      %528 = vmatpush1.msra.mxu0 0.0
      %529 = vmatprep.subr.mxu0 0.0
      %530 = vmatpush1.msra.mxu0 0.0
      %531 = vmatprep.subr.mxu0 0.0
      %532 = vmatpush1.msra.mxu0 0.0
      %533 = vmatprep.subr.mxu0 0.0
      %534 = vmatpush1.msra.mxu0 0.0
      %535 = vmatprep.subr.mxu0 0.0
      %536 = vmatpush1.msra.mxu0 0.0
      %537 = vmatprep.subr.mxu0 0.0
      %538 = vmatpush1.msra.mxu0 0.0
      %539 = vmatprep.subr.mxu0 0.0
      %540 = vmatpush1.msra.mxu0 0.0
      %541 = vmatprep.subr.mxu0 0.0
      %542 = vmatpush1.msra.mxu0 0.0
      %543 = vmatprep.subr.mxu0 0.0
      %544 = vmatpush1.msra.mxu0 0.0
      %545 = vmatprep.subr.mxu0 0.0
      %546 = vmatpush1.msra.mxu0 0.0
      %547 = vmatprep.subr.mxu0 0.0
      %548 = vmatpush1.msra.mxu0 0.0
      %549 = vmatprep.subr.mxu0 0.0
      %550 = vmatpush1.msra.mxu0 0.0
      %551 = vmatprep.subr.mxu0 0.0
      %552 = vmatpush1.msra.mxu0 0.0
      %553 = vmatprep.subr.mxu0 0.0
      %554 = vmatpush1.msra.mxu0 0.0
      %555 = vmatprep.subr.mxu0 0.0
      %556 = vmatpush1.msra.mxu0 0.0
      %557 = vmatprep.subr.mxu0 0.0
      %558 = vmatpush1.msra.mxu0 0.0
      %559 = vmatprep.subr.mxu0 0.0
      %560 = vmatpush1.msra.mxu0 0.0
      %561 = vmatprep.subr.mxu0 0.0
      %562 = vmatpush1.msra.mxu0 0.0
      %563 = vmatprep.subr.mxu0 0.0
      %564 = vmatpush1.msra.mxu0 0.0
      %565 = vmatprep.mubr.f32.mxu0 0.0
      %566 = vmatmul.mubr.f32.gmra.mrb[0].mxu0 %v499
      %v567 = vpop.f32.mrb[0].mxu0
      %v568 = vadd.f32 0.0, %v567
      %v569 = vpop.f32.mrb[0].mxu0
      %v570 = vadd.f32 0.0, %v569
      %571 = vdwg.mxu0
      %572 = vmatprep.subr.mxu0 %v483
      %573 = vmatpush1.msra.mxu0 %v482
      %574 = vmatprep.subr.mxu0 0.0
      %575 = vmatpush1.msra.mxu0 0.0
      %576 = vmatprep.subr.mxu0 0.0
      %577 = vmatpush1.msra.mxu0 0.0
      %578 = vmatprep.subr.mxu0 0.0
      %579 = vmatpush1.msra.mxu0 0.0
      %580 = vmatprep.subr.mxu0 0.0
      %581 = vmatpush1.msra.mxu0 0.0
      %582 = vmatprep.subr.mxu0 0.0
      %583 = vmatpush1.msra.mxu0 0.0
      %584 = vmatprep.subr.mxu0 0.0
      %585 = vmatpush1.msra.mxu0 0.0
      %586 = vmatprep.subr.mxu0 0.0
      %587 = vmatpush1.msra.mxu0 0.0
      %588 = vmatprep.subr.mxu0 0.0
      %589 = vmatpush1.msra.mxu0 0.0
      %590 = vmatprep.subr.mxu0 0.0
      %591 = vmatpush1.msra.mxu0 0.0
      %592 = vmatprep.subr.mxu0 0.0
      %593 = vmatpush1.msra.mxu0 0.0
      %594 = vmatprep.subr.mxu0 0.0
      %595 = vmatpush1.msra.mxu0 0.0
      %596 = vmatprep.subr.mxu0 0.0
      %597 = vmatpush1.msra.mxu0 0.0
      %598 = vmatprep.subr.mxu0 0.0
      %599 = vmatpush1.msra.mxu0 0.0
      %600 = vmatprep.subr.mxu0 0.0
      %601 = vmatpush1.msra.mxu0 0.0
      %602 = vmatprep.subr.mxu0 0.0
      %603 = vmatpush1.msra.mxu0 0.0
      %604 = vmatprep.subr.mxu0 0.0
      %605 = vmatpush1.msra.mxu0 0.0
      %606 = vmatprep.subr.mxu0 0.0
      %607 = vmatpush1.msra.mxu0 0.0
      %608 = vmatprep.subr.mxu0 0.0
      %609 = vmatpush1.msra.mxu0 0.0
      %610 = vmatprep.subr.mxu0 0.0
      %611 = vmatpush1.msra.mxu0 0.0
      %612 = vmatprep.subr.mxu0 0.0
      %613 = vmatpush1.msra.mxu0 0.0
      %614 = vmatprep.subr.mxu0 0.0
      %615 = vmatpush1.msra.mxu0 0.0
      %616 = vmatprep.subr.mxu0 0.0
      %617 = vmatpush1.msra.mxu0 0.0
      %618 = vmatprep.subr.mxu0 0.0
      %619 = vmatpush1.msra.mxu0 0.0
      %620 = vmatprep.subr.mxu0 0.0
      %621 = vmatpush1.msra.mxu0 0.0
      %622 = vmatprep.subr.mxu0 0.0
      %623 = vmatpush1.msra.mxu0 0.0
      %624 = vmatprep.subr.mxu0 0.0
      %625 = vmatpush1.msra.mxu0 0.0
      %626 = vmatprep.subr.mxu0 0.0
      %627 = vmatpush1.msra.mxu0 0.0
      %628 = vmatprep.subr.mxu0 0.0
      %629 = vmatpush1.msra.mxu0 0.0
      %630 = vmatprep.subr.mxu0 0.0
      %631 = vmatpush1.msra.mxu0 0.0
      %632 = vmatprep.subr.mxu0 0.0
      %633 = vmatpush1.msra.mxu0 0.0
      %634 = vmatprep.subr.mxu0 0.0
      %635 = vmatpush1.msra.mxu0 0.0
      %636 = vmatprep.mubr.f32.mxu0 0.0
      %637 = vmatmul.mubr.f32.gmra.mrb[0].mxu0 %v499
      %v638 = vpop.f32.mrb[0].mxu0
      %v639 = vadd.f32 0.0, %v638
      %v640 = vpop.f32.mrb[0].mxu0
      %v641 = vadd.f32 0.0, %v640
      %642 = vdwg.mxu0
      %643 = vmatprep.subr.mxu0 %v485
      %644 = vmatpush1.msra.mxu0 %v484
      %645 = vmatprep.subr.mxu0 0.0
      %646 = vmatpush1.msra.mxu0 0.0
      %647 = vmatprep.subr.mxu0 0.0
      %648 = vmatpush1.msra.mxu0 0.0
      %649 = vmatprep.subr.mxu0 0.0
      %650 = vmatpush1.msra.mxu0 0.0
      %651 = vmatprep.subr.mxu0 0.0
      %652 = vmatpush1.msra.mxu0 0.0
      %653 = vmatprep.subr.mxu0 0.0
      %654 = vmatpush1.msra.mxu0 0.0
      %655 = vmatprep.subr.mxu0 0.0
      %656 = vmatpush1.msra.mxu0 0.0
      %657 = vmatprep.subr.mxu0 0.0
      %658 = vmatpush1.msra.mxu0 0.0
      %659 = vmatprep.subr.mxu0 0.0
      %660 = vmatpush1.msra.mxu0 0.0
      %661 = vmatprep.subr.mxu0 0.0
      %662 = vmatpush1.msra.mxu0 0.0
      %663 = vmatprep.subr.mxu0 0.0
      %664 = vmatpush1.msra.mxu0 0.0
      %665 = vmatprep.subr.mxu0 0.0
      %666 = vmatpush1.msra.mxu0 0.0
      %667 = vmatprep.subr.mxu0 0.0
      %668 = vmatpush1.msra.mxu0 0.0
      %669 = vmatprep.subr.mxu0 0.0
      %670 = vmatpush1.msra.mxu0 0.0
      %671 = vmatprep.subr.mxu0 0.0
      %672 = vmatpush1.msra.mxu0 0.0
      %673 = vmatprep.subr.mxu0 0.0
      %674 = vmatpush1.msra.mxu0 0.0
      %675 = vmatprep.subr.mxu0 0.0
      %676 = vmatpush1.msra.mxu0 0.0
      %677 = vmatprep.subr.mxu0 0.0
      %678 = vmatpush1.msra.mxu0 0.0
      %679 = vmatprep.subr.mxu0 0.0
      %680 = vmatpush1.msra.mxu0 0.0
      %681 = vmatprep.subr.mxu0 0.0
      %682 = vmatpush1.msra.mxu0 0.0
      %683 = vmatprep.subr.mxu0 0.0
      %684 = vmatpush1.msra.mxu0 0.0
      %685 = vmatprep.subr.mxu0 0.0
      %686 = vmatpush1.msra.mxu0 0.0
      %687 = vmatprep.subr.mxu0 0.0
      %688 = vmatpush1.msra.mxu0 0.0
      %689 = vmatprep.subr.mxu0 0.0
      %690 = vmatpush1.msra.mxu0 0.0
      %691 = vmatprep.subr.mxu0 0.0
      %692 = vmatpush1.msra.mxu0 0.0
      %693 = vmatprep.subr.mxu0 0.0
      %694 = vmatpush1.msra.mxu0 0.0
      %695 = vmatprep.subr.mxu0 0.0
      %696 = vmatpush1.msra.mxu0 0.0
      %697 = vmatprep.subr.mxu0 0.0
      %698 = vmatpush1.msra.mxu0 0.0
      %699 = vmatprep.subr.mxu0 0.0
      %700 = vmatpush1.msra.mxu0 0.0
      %701 = vmatprep.subr.mxu0 0.0
      %702 = vmatpush1.msra.mxu0 0.0
      %703 = vmatprep.subr.mxu0 0.0
      %704 = vmatpush1.msra.mxu0 0.0
      %705 = vmatprep.subr.mxu0 0.0
      %706 = vmatpush1.msra.mxu0 0.0
      %707 = vmatprep.mubr.f32.mxu0 0.0
      %708 = vmatmul.mubr.f32.gmra.mrb[0].mxu0 %v499
      %v709 = vpop.f32.mrb[0].mxu0
      %v710 = vadd.f32 0.0, %v709
      %v711 = vpop.f32.mrb[0].mxu0
      %v712 = vadd.f32 0.0, %v711
      %713 = vdwg.mxu0
      %714 = vmatprep.subr.mxu0 %v487
      %715 = vmatpush1.msra.mxu0 %v486
      %716 = vmatprep.subr.mxu0 0.0
      %717 = vmatpush1.msra.mxu0 0.0
      %718 = vmatprep.subr.mxu0 0.0
      %719 = vmatpush1.msra.mxu0 0.0
      %720 = vmatprep.subr.mxu0 0.0
      %721 = vmatpush1.msra.mxu0 0.0
      %722 = vmatprep.subr.mxu0 0.0
      %723 = vmatpush1.msra.mxu0 0.0
      %724 = vmatprep.subr.mxu0 0.0
      %725 = vmatpush1.msra.mxu0 0.0
      %726 = vmatprep.subr.mxu0 0.0
      %727 = vmatpush1.msra.mxu0 0.0
      %728 = vmatprep.subr.mxu0 0.0
      %729 = vmatpush1.msra.mxu0 0.0
      %730 = vmatprep.subr.mxu0 0.0
      %731 = vmatpush1.msra.mxu0 0.0
      %732 = vmatprep.subr.mxu0 0.0
      %733 = vmatpush1.msra.mxu0 0.0
      %734 = vmatprep.subr.mxu0 0.0
      %735 = vmatpush1.msra.mxu0 0.0
      %736 = vmatprep.subr.mxu0 0.0
      %737 = vmatpush1.msra.mxu0 0.0
      %738 = vmatprep.subr.mxu0 0.0
      %739 = vmatpush1.msra.mxu0 0.0
      %740 = vmatprep.subr.mxu0 0.0
      %741 = vmatpush1.msra.mxu0 0.0
      %742 = vmatprep.subr.mxu0 0.0
      %743 = vmatpush1.msra.mxu0 0.0
      %744 = vmatprep.subr.mxu0 0.0
      %745 = vmatpush1.msra.mxu0 0.0
      %746 = vmatprep.subr.mxu0 0.0
      %747 = vmatpush1.msra.mxu0 0.0
      %748 = vmatprep.subr.mxu0 0.0
      %749 = vmatpush1.msra.mxu0 0.0
      %750 = vmatprep.subr.mxu0 0.0
      %751 = vmatpush1.msra.mxu0 0.0
      %752 = vmatprep.subr.mxu0 0.0
      %753 = vmatpush1.msra.mxu0 0.0
      %754 = vmatprep.subr.mxu0 0.0
      %755 = vmatpush1.msra.mxu0 0.0
      %756 = vmatprep.subr.mxu0 0.0
      %757 = vmatpush1.msra.mxu0 0.0
      %758 = vmatprep.subr.mxu0 0.0
      %759 = vmatpush1.msra.mxu0 0.0
      %760 = vmatprep.subr.mxu0 0.0
      %761 = vmatpush1.msra.mxu0 0.0
      %762 = vmatprep.subr.mxu0 0.0
      %763 = vmatpush1.msra.mxu0 0.0
      %764 = vmatprep.subr.mxu0 0.0
      %765 = vmatpush1.msra.mxu0 0.0
      %766 = vmatprep.subr.mxu0 0.0
      %767 = vmatpush1.msra.mxu0 0.0
      %768 = vmatprep.subr.mxu0 0.0
      %769 = vmatpush1.msra.mxu0 0.0
      %770 = vmatprep.subr.mxu0 0.0
      %771 = vmatpush1.msra.mxu0 0.0
      %772 = vmatprep.subr.mxu0 0.0
      %773 = vmatpush1.msra.mxu0 0.0
      %774 = vmatprep.subr.mxu0 0.0
      %775 = vmatpush1.msra.mxu0 0.0
      %776 = vmatprep.subr.mxu0 0.0
      %777 = vmatpush1.msra.mxu0 0.0
      %778 = vmatprep.mubr.f32.mxu0 0.0
      %779 = vmatmul.mubr.f32.gmra.mrb[0].mxu0 %v499
      %v780 = vpop.f32.mrb[0].mxu0
      %v781 = vadd.f32 0.0, %v780
      %v782 = vpop.f32.mrb[0].mxu0
      %v783 = vadd.f32 0.0, %v782
      %784 = vdwg.mxu0
      %785 = vmatprep.subr.mxu0 0.0
      %786 = vmatpush1.msra.mxu0 %v478
      %787 = vmatprep.subr.mxu0 0.0
      %788 = vmatpush1.msra.mxu0 0.0
      %789 = vmatprep.subr.mxu0 0.0
      %790 = vmatpush1.msra.mxu0 0.0
      %791 = vmatprep.subr.mxu0 0.0
      %792 = vmatpush1.msra.mxu0 0.0
      %793 = vmatprep.subr.mxu0 0.0
      %794 = vmatpush1.msra.mxu0 0.0
      %795 = vmatprep.subr.mxu0 0.0
      %796 = vmatpush1.msra.mxu0 0.0
      %797 = vmatprep.subr.mxu0 0.0
      %798 = vmatpush1.msra.mxu0 0.0
      %799 = vmatprep.subr.mxu0 0.0
      %800 = vmatpush1.msra.mxu0 0.0
      %801 = vmatprep.subr.mxu0 0.0
      %802 = vmatpush1.msra.mxu0 0.0
      %803 = vmatprep.subr.mxu0 0.0
      %804 = vmatpush1.msra.mxu0 0.0
      %805 = vmatprep.subr.mxu0 0.0
      %806 = vmatpush1.msra.mxu0 0.0
      %807 = vmatprep.subr.mxu0 0.0
      %808 = vmatpush1.msra.mxu0 0.0
      %809 = vmatprep.subr.mxu0 0.0
      %810 = vmatpush1.msra.mxu0 0.0
      %811 = vmatprep.subr.mxu0 0.0
      %812 = vmatpush1.msra.mxu0 0.0
      %813 = vmatprep.subr.mxu0 0.0
      %814 = vmatpush1.msra.mxu0 0.0
      %815 = vmatprep.subr.mxu0 0.0
      %816 = vmatpush1.msra.mxu0 0.0
      %817 = vmatprep.subr.mxu0 0.0
      %818 = vmatpush1.msra.mxu0 0.0
      %819 = vmatprep.subr.mxu0 0.0
      %820 = vmatpush1.msra.mxu0 0.0
      %821 = vmatprep.subr.mxu0 0.0
      %822 = vmatpush1.msra.mxu0 0.0
      %823 = vmatprep.subr.mxu0 0.0
      %824 = vmatpush1.msra.mxu0 0.0
      %825 = vmatprep.subr.mxu0 0.0
      %826 = vmatpush1.msra.mxu0 0.0
      %827 = vmatprep.subr.mxu0 0.0
      %828 = vmatpush1.msra.mxu0 0.0
      %829 = vmatprep.subr.mxu0 0.0
      %830 = vmatpush1.msra.mxu0 0.0
      %831 = vmatprep.subr.mxu0 0.0
      %832 = vmatpush1.msra.mxu0 0.0
      %833 = vmatprep.subr.mxu0 0.0
      %834 = vmatpush1.msra.mxu0 0.0
      %835 = vmatprep.subr.mxu0 0.0
      %836 = vmatpush1.msra.mxu0 0.0
      %837 = vmatprep.subr.mxu0 0.0
      %838 = vmatpush1.msra.mxu0 0.0
      %839 = vmatprep.subr.mxu0 0.0
      %840 = vmatpush1.msra.mxu0 0.0
      %841 = vmatprep.subr.mxu0 0.0
      %842 = vmatpush1.msra.mxu0 0.0
      %843 = vmatprep.subr.mxu0 0.0
      %844 = vmatpush1.msra.mxu0 0.0
      %845 = vmatprep.subr.mxu0 0.0
      %846 = vmatpush1.msra.mxu0 0.0
      %847 = vmatprep.subr.mxu0 0.0
      %848 = vmatpush1.msra.mxu0 0.0
      %849 = vmatprep.mubr.f32.mxu0 0.0
      %850 = vmatmul.mubr.f32.gmra.mrb[0].mxu0 %v499
      %v851 = vpop.f32.mrb[0].mxu0
      %v852 = vadd.f32 0.0, %v851
      %v853 = vpop.f32.mrb[0].mxu0
      %854 = vdwg.mxu0
      %v856 = vsel %vm497, %v456, 0
      %858 = vmatprep.subr.mxu0 %v436
      %859 = vmatpush1.msra.mxu0 %v453
      %860 = vmatprep.subr.mxu0 0.0
      %861 = vmatpush1.msra.mxu0 0.0
      %862 = vmatprep.subr.mxu0 0.0
      %863 = vmatpush1.msra.mxu0 0.0
      %864 = vmatprep.subr.mxu0 0.0
      %865 = vmatpush1.msra.mxu0 0.0
      %866 = vmatprep.subr.mxu0 0.0
      %867 = vmatpush1.msra.mxu0 0.0
      %868 = vmatprep.subr.mxu0 0.0
      %869 = vmatpush1.msra.mxu0 0.0
      %870 = vmatprep.subr.mxu0 0.0
      %871 = vmatpush1.msra.mxu0 0.0
      %872 = vmatprep.subr.mxu0 0.0
      %873 = vmatpush1.msra.mxu0 0.0
      %874 = vmatprep.subr.mxu0 0.0
      %875 = vmatpush1.msra.mxu0 0.0
      %876 = vmatprep.subr.mxu0 0.0
      %877 = vmatpush1.msra.mxu0 0.0
      %878 = vmatprep.subr.mxu0 0.0
      %879 = vmatpush1.msra.mxu0 0.0
      %880 = vmatprep.subr.mxu0 0.0
      %881 = vmatpush1.msra.mxu0 0.0
      %882 = vmatprep.subr.mxu0 0.0
      %883 = vmatpush1.msra.mxu0 0.0
      %884 = vmatprep.subr.mxu0 0.0
      %885 = vmatpush1.msra.mxu0 0.0
      %886 = vmatprep.subr.mxu0 0.0
      %887 = vmatpush1.msra.mxu0 0.0
      %888 = vmatprep.subr.mxu0 0.0
      %889 = vmatpush1.msra.mxu0 0.0
      %890 = vmatprep.subr.mxu0 0.0
      %891 = vmatpush1.msra.mxu0 0.0
      %892 = vmatprep.subr.mxu0 0.0
      %893 = vmatpush1.msra.mxu0 0.0
      %894 = vmatprep.subr.mxu0 0.0
      %895 = vmatpush1.msra.mxu0 0.0
      %896 = vmatprep.subr.mxu0 0.0
      %897 = vmatpush1.msra.mxu0 0.0
      %898 = vmatprep.subr.mxu0 0.0
      %899 = vmatpush1.msra.mxu0 0.0
      %900 = vmatprep.subr.mxu0 0.0
      %901 = vmatpush1.msra.mxu0 0.0
      %902 = vmatprep.subr.mxu0 0.0
      %903 = vmatpush1.msra.mxu0 0.0
      %904 = vmatprep.subr.mxu0 0.0
      %905 = vmatpush1.msra.mxu0 0.0
      %906 = vmatprep.subr.mxu0 0.0
      %907 = vmatpush1.msra.mxu0 0.0
      %908 = vmatprep.subr.mxu0 0.0
      %909 = vmatpush1.msra.mxu0 0.0
      %910 = vmatprep.subr.mxu0 0.0
      %911 = vmatpush1.msra.mxu0 0.0
      %912 = vmatprep.subr.mxu0 0.0
      %913 = vmatpush1.msra.mxu0 0.0
      %914 = vmatprep.subr.mxu0 0.0
      %915 = vmatpush1.msra.mxu0 0.0
      %916 = vmatprep.subr.mxu0 0.0
      %917 = vmatpush1.msra.mxu0 0.0
      %918 = vmatprep.subr.mxu0 0.0
      %919 = vmatpush1.msra.mxu0 0.0
      %920 = vmatprep.subr.mxu0 0.0
      %921 = vmatpush1.msra.mxu0 0.0
      %922 = vmatprep.mubr.f32.mxu0 0.0
      %923 = vmatmul.mubr.f32.gmra.mrb[0].mxu0 %v856
      %v924 = vpop.f32.mrb[0].mxu0
      %v925 = vadd.f32 %v568, %v924
      %v926 = vpop.f32.mrb[0].mxu0
      %v927 = vadd.f32 %v570, %v926
      %928 = vdwg.mxu0
      %929 = vmatprep.subr.mxu0 %v438
      %930 = vmatpush1.msra.mxu0 %v437
      %931 = vmatprep.subr.mxu0 0.0
      %932 = vmatpush1.msra.mxu0 0.0
      %933 = vmatprep.subr.mxu0 0.0
      %934 = vmatpush1.msra.mxu0 0.0
      %935 = vmatprep.subr.mxu0 0.0
      %936 = vmatpush1.msra.mxu0 0.0
      %937 = vmatprep.subr.mxu0 0.0
      %938 = vmatpush1.msra.mxu0 0.0
      %939 = vmatprep.subr.mxu0 0.0
      %940 = vmatpush1.msra.mxu0 0.0
      %941 = vmatprep.subr.mxu0 0.0
      %942 = vmatpush1.msra.mxu0 0.0
      %943 = vmatprep.subr.mxu0 0.0
      %944 = vmatpush1.msra.mxu0 0.0
      %945 = vmatprep.subr.mxu0 0.0
      %946 = vmatpush1.msra.mxu0 0.0
      %947 = vmatprep.subr.mxu0 0.0
      %948 = vmatpush1.msra.mxu0 0.0
      %949 = vmatprep.subr.mxu0 0.0
      %950 = vmatpush1.msra.mxu0 0.0
      %951 = vmatprep.subr.mxu0 0.0
      %952 = vmatpush1.msra.mxu0 0.0
      %953 = vmatprep.subr.mxu0 0.0
      %954 = vmatpush1.msra.mxu0 0.0
      %955 = vmatprep.subr.mxu0 0.0
      %956 = vmatpush1.msra.mxu0 0.0
      %957 = vmatprep.subr.mxu0 0.0
      %958 = vmatpush1.msra.mxu0 0.0
      %959 = vmatprep.subr.mxu0 0.0
      %960 = vmatpush1.msra.mxu0 0.0
      %961 = vmatprep.subr.mxu0 0.0
      %962 = vmatpush1.msra.mxu0 0.0
      %963 = vmatprep.subr.mxu0 0.0
      %964 = vmatpush1.msra.mxu0 0.0
      %965 = vmatprep.subr.mxu0 0.0
      %966 = vmatpush1.msra.mxu0 0.0
      %967 = vmatprep.subr.mxu0 0.0
      %968 = vmatpush1.msra.mxu0 0.0
      %969 = vmatprep.subr.mxu0 0.0
      %970 = vmatpush1.msra.mxu0 0.0
      %971 = vmatprep.subr.mxu0 0.0
      %972 = vmatpush1.msra.mxu0 0.0
      %973 = vmatprep.subr.mxu0 0.0
      %974 = vmatpush1.msra.mxu0 0.0
      %975 = vmatprep.subr.mxu0 0.0
      %976 = vmatpush1.msra.mxu0 0.0
      %977 = vmatprep.subr.mxu0 0.0
      %978 = vmatpush1.msra.mxu0 0.0
      %979 = vmatprep.subr.mxu0 0.0
      %980 = vmatpush1.msra.mxu0 0.0
      %981 = vmatprep.subr.mxu0 0.0
      %982 = vmatpush1.msra.mxu0 0.0
      %983 = vmatprep.subr.mxu0 0.0
      %984 = vmatpush1.msra.mxu0 0.0
      %985 = vmatprep.subr.mxu0 0.0
      %986 = vmatpush1.msra.mxu0 0.0
      %987 = vmatprep.subr.mxu0 0.0
      %988 = vmatpush1.msra.mxu0 0.0
      %989 = vmatprep.subr.mxu0 0.0
      %990 = vmatpush1.msra.mxu0 0.0
      %991 = vmatprep.subr.mxu0 0.0
      %992 = vmatpush1.msra.mxu0 0.0
      %993 = vmatprep.mubr.f32.mxu0 0.0
      %994 = vmatmul.mubr.f32.gmra.mrb[0].mxu0 %v856
      %v995 = vpop.f32.mrb[0].mxu0
      %v996 = vadd.f32 %v639, %v995
      %v997 = vpop.f32.mrb[0].mxu0
      %v998 = vadd.f32 %v641, %v997
      %999 = vdwg.mxu0
      %1000 = vmatprep.subr.mxu0 %v440
      %1001 = vmatpush1.msra.mxu0 %v439
      %1002 = vmatprep.subr.mxu0 0.0
      %1003 = vmatpush1.msra.mxu0 0.0
      %1004 = vmatprep.subr.mxu0 0.0
      %1005 = vmatpush1.msra.mxu0 0.0
      %1006 = vmatprep.subr.mxu0 0.0
      %1007 = vmatpush1.msra.mxu0 0.0
      %1008 = vmatprep.subr.mxu0 0.0
      %1009 = vmatpush1.msra.mxu0 0.0
      %1010 = vmatprep.subr.mxu0 0.0
      %1011 = vmatpush1.msra.mxu0 0.0
      %1012 = vmatprep.subr.mxu0 0.0
      %1013 = vmatpush1.msra.mxu0 0.0
      %1014 = vmatprep.subr.mxu0 0.0
      %1015 = vmatpush1.msra.mxu0 0.0
      %1016 = vmatprep.subr.mxu0 0.0
      %1017 = vmatpush1.msra.mxu0 0.0
      %1018 = vmatprep.subr.mxu0 0.0
      %1019 = vmatpush1.msra.mxu0 0.0
      %1020 = vmatprep.subr.mxu0 0.0
      %1021 = vmatpush1.msra.mxu0 0.0
      %1022 = vmatprep.subr.mxu0 0.0
      %1023 = vmatpush1.msra.mxu0 0.0
      %1024 = vmatprep.subr.mxu0 0.0
      %1025 = vmatpush1.msra.mxu0 0.0
      %1026 = vmatprep.subr.mxu0 0.0
      %1027 = vmatpush1.msra.mxu0 0.0
      %1028 = vmatprep.subr.mxu0 0.0
      %1029 = vmatpush1.msra.mxu0 0.0
      %1030 = vmatprep.subr.mxu0 0.0
      %1031 = vmatpush1.msra.mxu0 0.0
      %1032 = vmatprep.subr.mxu0 0.0
      %1033 = vmatpush1.msra.mxu0 0.0
      %1034 = vmatprep.subr.mxu0 0.0
      %1035 = vmatpush1.msra.mxu0 0.0
      %1036 = vmatprep.subr.mxu0 0.0
      %1037 = vmatpush1.msra.mxu0 0.0
      %1038 = vmatprep.subr.mxu0 0.0
      %1039 = vmatpush1.msra.mxu0 0.0
      %1040 = vmatprep.subr.mxu0 0.0
      %1041 = vmatpush1.msra.mxu0 0.0
      %1042 = vmatprep.subr.mxu0 0.0
      %1043 = vmatpush1.msra.mxu0 0.0
      %1044 = vmatprep.subr.mxu0 0.0
      %1045 = vmatpush1.msra.mxu0 0.0
      %1046 = vmatprep.subr.mxu0 0.0
      %1047 = vmatpush1.msra.mxu0 0.0
      %1048 = vmatprep.subr.mxu0 0.0
      %1049 = vmatpush1.msra.mxu0 0.0
      %1050 = vmatprep.subr.mxu0 0.0
      %1051 = vmatpush1.msra.mxu0 0.0
      %1052 = vmatprep.subr.mxu0 0.0
      %1053 = vmatpush1.msra.mxu0 0.0
      %1054 = vmatprep.subr.mxu0 0.0
      %1055 = vmatpush1.msra.mxu0 0.0
      %1056 = vmatprep.subr.mxu0 0.0
      %1057 = vmatpush1.msra.mxu0 0.0
      %1058 = vmatprep.subr.mxu0 0.0
      %1059 = vmatpush1.msra.mxu0 0.0
      %1060 = vmatprep.subr.mxu0 0.0
      %1061 = vmatpush1.msra.mxu0 0.0
      %1062 = vmatprep.subr.mxu0 0.0
      %1063 = vmatpush1.msra.mxu0 0.0
      %1064 = vmatprep.mubr.f32.mxu0 0.0
      %1065 = vmatmul.mubr.f32.gmra.mrb[0].mxu0 %v856
      %v1066 = vpop.f32.mrb[0].mxu0
      %v1067 = vadd.f32 %v710, %v1066
      %v1068 = vpop.f32.mrb[0].mxu0
      %v1069 = vadd.f32 %v712, %v1068
      %1070 = vdwg.mxu0
      %1071 = vmatprep.subr.mxu0 %v442
      %1072 = vmatpush1.msra.mxu0 %v441
      %1073 = vmatprep.subr.mxu0 0.0
      %1074 = vmatpush1.msra.mxu0 0.0
      %1075 = vmatprep.subr.mxu0 0.0
      %1076 = vmatpush1.msra.mxu0 0.0
      %1077 = vmatprep.subr.mxu0 0.0
      %1078 = vmatpush1.msra.mxu0 0.0
      %1079 = vmatprep.subr.mxu0 0.0
      %1080 = vmatpush1.msra.mxu0 0.0
      %1081 = vmatprep.subr.mxu0 0.0
      %1082 = vmatpush1.msra.mxu0 0.0
      %1083 = vmatprep.subr.mxu0 0.0
      %1084 = vmatpush1.msra.mxu0 0.0
      %1085 = vmatprep.subr.mxu0 0.0
      %1086 = vmatpush1.msra.mxu0 0.0
      %1087 = vmatprep.subr.mxu0 0.0
      %1088 = vmatpush1.msra.mxu0 0.0
      %1089 = vmatprep.subr.mxu0 0.0
      %1090 = vmatpush1.msra.mxu0 0.0
      %1091 = vmatprep.subr.mxu0 0.0
      %1092 = vmatpush1.msra.mxu0 0.0
      %1093 = vmatprep.subr.mxu0 0.0
      %1094 = vmatpush1.msra.mxu0 0.0
      %1095 = vmatprep.subr.mxu0 0.0
      %1096 = vmatpush1.msra.mxu0 0.0
      %1097 = vmatprep.subr.mxu0 0.0
      %1098 = vmatpush1.msra.mxu0 0.0
      %1099 = vmatprep.subr.mxu0 0.0
      %1100 = vmatpush1.msra.mxu0 0.0
      %1101 = vmatprep.subr.mxu0 0.0
      %1102 = vmatpush1.msra.mxu0 0.0
      %1103 = vmatprep.subr.mxu0 0.0
      %1104 = vmatpush1.msra.mxu0 0.0
      %1105 = vmatprep.subr.mxu0 0.0
      %1106 = vmatpush1.msra.mxu0 0.0
      %1107 = vmatprep.subr.mxu0 0.0
      %1108 = vmatpush1.msra.mxu0 0.0
      %1109 = vmatprep.subr.mxu0 0.0
      %1110 = vmatpush1.msra.mxu0 0.0
      %1111 = vmatprep.subr.mxu0 0.0
      %1112 = vmatpush1.msra.mxu0 0.0
      %1113 = vmatprep.subr.mxu0 0.0
      %1114 = vmatpush1.msra.mxu0 0.0
      %1115 = vmatprep.subr.mxu0 0.0
      %1116 = vmatpush1.msra.mxu0 0.0
      %1117 = vmatprep.subr.mxu0 0.0
      %1118 = vmatpush1.msra.mxu0 0.0
      %1119 = vmatprep.subr.mxu0 0.0
      %1120 = vmatpush1.msra.mxu0 0.0
      %1121 = vmatprep.subr.mxu0 0.0
      %1122 = vmatpush1.msra.mxu0 0.0
      %1123 = vmatprep.subr.mxu0 0.0
      %1124 = vmatpush1.msra.mxu0 0.0
      %1125 = vmatprep.subr.mxu0 0.0
      %1126 = vmatpush1.msra.mxu0 0.0
      %1127 = vmatprep.subr.mxu0 0.0
      %1128 = vmatpush1.msra.mxu0 0.0
      %1129 = vmatprep.subr.mxu0 0.0
      %1130 = vmatpush1.msra.mxu0 0.0
      %1131 = vmatprep.subr.mxu0 0.0
      %1132 = vmatpush1.msra.mxu0 0.0
      %1133 = vmatprep.subr.mxu0 0.0
      %1134 = vmatpush1.msra.mxu0 0.0
      %1135 = vmatprep.mubr.f32.mxu0 0.0
      %1136 = vmatmul.mubr.f32.gmra.mrb[0].mxu0 %v856
      %v1137 = vpop.f32.mrb[0].mxu0
      %v1138 = vadd.f32 %v781, %v1137
      %v1139 = vpop.f32.mrb[0].mxu0
      %v1140 = vadd.f32 %v783, %v1139
      %1141 = vdwg.mxu0
      %1142 = vmatprep.subr.mxu0 0.0
      %1143 = vmatpush1.msra.mxu0 %v455
      %1144 = vmatprep.subr.mxu0 0.0
      %1145 = vmatpush1.msra.mxu0 0.0
      %1146 = vmatprep.subr.mxu0 0.0
      %1147 = vmatpush1.msra.mxu0 0.0
      %1148 = vmatprep.subr.mxu0 0.0
      %1149 = vmatpush1.msra.mxu0 0.0
      %1150 = vmatprep.subr.mxu0 0.0
      %1151 = vmatpush1.msra.mxu0 0.0
      %1152 = vmatprep.subr.mxu0 0.0
      %1153 = vmatpush1.msra.mxu0 0.0
      %1154 = vmatprep.subr.mxu0 0.0
      %1155 = vmatpush1.msra.mxu0 0.0
      %1156 = vmatprep.subr.mxu0 0.0
      %1157 = vmatpush1.msra.mxu0 0.0
      %1158 = vmatprep.subr.mxu0 0.0
      %1159 = vmatpush1.msra.mxu0 0.0
      %1160 = vmatprep.subr.mxu0 0.0
      %1161 = vmatpush1.msra.mxu0 0.0
      %1162 = vmatprep.subr.mxu0 0.0
      %1163 = vmatpush1.msra.mxu0 0.0
      %1164 = vmatprep.subr.mxu0 0.0
      %1165 = vmatpush1.msra.mxu0 0.0
      %1166 = vmatprep.subr.mxu0 0.0
      %1167 = vmatpush1.msra.mxu0 0.0
      %1168 = vmatprep.subr.mxu0 0.0
      %1169 = vmatpush1.msra.mxu0 0.0
      %1170 = vmatprep.subr.mxu0 0.0
      %1171 = vmatpush1.msra.mxu0 0.0
      %1172 = vmatprep.subr.mxu0 0.0
      %1173 = vmatpush1.msra.mxu0 0.0
      %1174 = vmatprep.subr.mxu0 0.0
      %1175 = vmatpush1.msra.mxu0 0.0
      %1176 = vmatprep.subr.mxu0 0.0
      %1177 = vmatpush1.msra.mxu0 0.0
      %1178 = vmatprep.subr.mxu0 0.0
      %1179 = vmatpush1.msra.mxu0 0.0
      %1180 = vmatprep.subr.mxu0 0.0
      %1181 = vmatpush1.msra.mxu0 0.0
      %1182 = vmatprep.subr.mxu0 0.0
      %1183 = vmatpush1.msra.mxu0 0.0
      %1184 = vmatprep.subr.mxu0 0.0
      %1185 = vmatpush1.msra.mxu0 0.0
      %1186 = vmatprep.subr.mxu0 0.0
      %1187 = vmatpush1.msra.mxu0 0.0
      %1188 = vmatprep.subr.mxu0 0.0
      %1189 = vmatpush1.msra.mxu0 0.0
      %1190 = vmatprep.subr.mxu0 0.0
      %1191 = vmatpush1.msra.mxu0 0.0
      %1192 = vmatprep.subr.mxu0 0.0
      %1193 = vmatpush1.msra.mxu0 0.0
      %1194 = vmatprep.subr.mxu0 0.0
      %1195 = vmatpush1.msra.mxu0 0.0
      %1196 = vmatprep.subr.mxu0 0.0
      %1197 = vmatpush1.msra.mxu0 0.0
      %1198 = vmatprep.subr.mxu0 0.0
      %1199 = vmatpush1.msra.mxu0 0.0
      %1200 = vmatprep.subr.mxu0 0.0
      %1201 = vmatpush1.msra.mxu0 0.0
      %1202 = vmatprep.subr.mxu0 0.0
      %1203 = vmatpush1.msra.mxu0 0.0
      %1204 = vmatprep.subr.mxu0 0.0
      %1205 = vmatpush1.msra.mxu0 0.0
      %1206 = vmatprep.mubr.f32.mxu0 0.0
      %1207 = vmatmul.mubr.f32.gmra.mrb[0].mxu0 %v856
      %v1208 = vpop.f32.mrb[0].mxu0
      %v1209 = vadd.f32 %v852, %v1208
      %v1210 = vpop.f32.mrb[0].mxu0
      %1211 = vdwg.mxu0
      %s1212 = scalar_lea.vmem %s1, 16
      %v1213 = vld [vmem:[%s1212] sm:$0xff]
      %1214 = vrot.lane.b32.xlu0 %v453, 126
      %v1215 = vpop.permute.xlu0 %1214
      %1216 = vrot.lane.b32.xlu0 %v436, 126
      %v1217 = vpop.permute.xlu0 %1216
      %1218 = vrot.lane.b32.xlu0 %v437, 126
      %v1219 = vpop.permute.xlu0 %1218
      %1220 = vrot.lane.b32.xlu0 %v438, 126
      %v1221 = vpop.permute.xlu0 %1220
      %1222 = vrot.lane.b32.xlu0 %v439, 126
      %v1223 = vpop.permute.xlu0 %1222
      %1224 = vrot.lane.b32.xlu0 %v440, 126
      %v1225 = vpop.permute.xlu0 %1224
      %1226 = vrot.lane.b32.xlu0 %v441, 126
      %v1227 = vpop.permute.xlu0 %1226
      %1228 = vrot.lane.b32.xlu0 %v442, 126
      %v1229 = vpop.permute.xlu0 %1228
      %1230 = vrot.lane.b32.xlu0 %v455, 126
      %v1231 = vpop.permute.xlu0 %1230
      %vm1232 = vcmask 1031168
      %v1233 = vsel %vm1232, %v1215, %v1217
      %v1234 = vsel %vm1232, %v1217, %v1219
      %v1235 = vsel %vm1232, %v1219, %v1221
      %v1236 = vsel %vm1232, %v1221, %v1223
      %v1237 = vsel %vm1232, %v1223, %v1225
      %v1238 = vsel %vm1232, %v1225, %v1227
      %v1239 = vsel %vm1232, %v1227, %v1229
      %v1240 = vsel %vm1232, %v1229, %v1231
      %v1251 = vsel %vm497, %v1213, 0
      %1253 = vmatprep.subr.mxu0 %v1234
      %1254 = vmatpush1.msra.mxu0 %v1233
      %1255 = vmatprep.subr.mxu0 0.0
      %1256 = vmatpush1.msra.mxu0 0.0
      %1257 = vmatprep.subr.mxu0 0.0
      %1258 = vmatpush1.msra.mxu0 0.0
      %1259 = vmatprep.subr.mxu0 0.0
      %1260 = vmatpush1.msra.mxu0 0.0
      %1261 = vmatprep.subr.mxu0 0.0
      %1262 = vmatpush1.msra.mxu0 0.0
      %1263 = vmatprep.subr.mxu0 0.0
      %1264 = vmatpush1.msra.mxu0 0.0
      %1265 = vmatprep.subr.mxu0 0.0
      %1266 = vmatpush1.msra.mxu0 0.0
      %1267 = vmatprep.subr.mxu0 0.0
      %1268 = vmatpush1.msra.mxu0 0.0
      %1269 = vmatprep.subr.mxu0 0.0
      %1270 = vmatpush1.msra.mxu0 0.0
      %1271 = vmatprep.subr.mxu0 0.0
      %1272 = vmatpush1.msra.mxu0 0.0
      %1273 = vmatprep.subr.mxu0 0.0
      %1274 = vmatpush1.msra.mxu0 0.0
      %1275 = vmatprep.subr.mxu0 0.0
      %1276 = vmatpush1.msra.mxu0 0.0
      %1277 = vmatprep.subr.mxu0 0.0
      %1278 = vmatpush1.msra.mxu0 0.0
      %1279 = vmatprep.subr.mxu0 0.0
      %1280 = vmatpush1.msra.mxu0 0.0
      %1281 = vmatprep.subr.mxu0 0.0
      %1282 = vmatpush1.msra.mxu0 0.0
      %1283 = vmatprep.subr.mxu0 0.0
      %1284 = vmatpush1.msra.mxu0 0.0
      %1285 = vmatprep.subr.mxu0 0.0
      %1286 = vmatpush1.msra.mxu0 0.0
      %1287 = vmatprep.subr.mxu0 0.0
      %1288 = vmatpush1.msra.mxu0 0.0
      %1289 = vmatprep.subr.mxu0 0.0
      %1290 = vmatpush1.msra.mxu0 0.0
      %1291 = vmatprep.subr.mxu0 0.0
      %1292 = vmatpush1.msra.mxu0 0.0
      %1293 = vmatprep.subr.mxu0 0.0
      %1294 = vmatpush1.msra.mxu0 0.0
      %1295 = vmatprep.subr.mxu0 0.0
      %1296 = vmatpush1.msra.mxu0 0.0
      %1297 = vmatprep.subr.mxu0 0.0
      %1298 = vmatpush1.msra.mxu0 0.0
      %1299 = vmatprep.subr.mxu0 0.0
      %1300 = vmatpush1.msra.mxu0 0.0
      %1301 = vmatprep.subr.mxu0 0.0
      %1302 = vmatpush1.msra.mxu0 0.0
      %1303 = vmatprep.subr.mxu0 0.0
      %1304 = vmatpush1.msra.mxu0 0.0
      %1305 = vmatprep.subr.mxu0 0.0
      %1306 = vmatpush1.msra.mxu0 0.0
      %1307 = vmatprep.subr.mxu0 0.0
      %1308 = vmatpush1.msra.mxu0 0.0
      %1309 = vmatprep.subr.mxu0 0.0
      %1310 = vmatpush1.msra.mxu0 0.0
      %1311 = vmatprep.subr.mxu0 0.0
      %1312 = vmatpush1.msra.mxu0 0.0
      %1313 = vmatprep.subr.mxu0 0.0
      %1314 = vmatpush1.msra.mxu0 0.0
      %1315 = vmatprep.subr.mxu0 0.0
      %1316 = vmatpush1.msra.mxu0 0.0
      %1317 = vmatprep.mubr.f32.mxu0 0.0
      %1318 = vmatmul.mubr.f32.gmra.mrb[0].mxu0 %v1251
      %v1319 = vpop.f32.mrb[0].mxu0
      %v1320 = vadd.f32 0.0, %v1319
      %v1321 = vpop.f32.mrb[0].mxu0
      %v1322 = vadd.f32 0.0, %v1321
      %1323 = vdwg.mxu0
      %1324 = vmatprep.subr.mxu0 %v1236
      %1325 = vmatpush1.msra.mxu0 %v1235
      %1326 = vmatprep.subr.mxu0 0.0
      %1327 = vmatpush1.msra.mxu0 0.0
      %1328 = vmatprep.subr.mxu0 0.0
      %1329 = vmatpush1.msra.mxu0 0.0
      %1330 = vmatprep.subr.mxu0 0.0
      %1331 = vmatpush1.msra.mxu0 0.0
      %1332 = vmatprep.subr.mxu0 0.0
      %1333 = vmatpush1.msra.mxu0 0.0
      %1334 = vmatprep.subr.mxu0 0.0
      %1335 = vmatpush1.msra.mxu0 0.0
      %1336 = vmatprep.subr.mxu0 0.0
      %1337 = vmatpush1.msra.mxu0 0.0
      %1338 = vmatprep.subr.mxu0 0.0
      %1339 = vmatpush1.msra.mxu0 0.0
      %1340 = vmatprep.subr.mxu0 0.0
      %1341 = vmatpush1.msra.mxu0 0.0
      %1342 = vmatprep.subr.mxu0 0.0
      %1343 = vmatpush1.msra.mxu0 0.0
      %1344 = vmatprep.subr.mxu0 0.0
      %1345 = vmatpush1.msra.mxu0 0.0
      %1346 = vmatprep.subr.mxu0 0.0
      %1347 = vmatpush1.msra.mxu0 0.0
      %1348 = vmatprep.subr.mxu0 0.0
      %1349 = vmatpush1.msra.mxu0 0.0
      %1350 = vmatprep.subr.mxu0 0.0
      %1351 = vmatpush1.msra.mxu0 0.0
      %1352 = vmatprep.subr.mxu0 0.0
      %1353 = vmatpush1.msra.mxu0 0.0
      %1354 = vmatprep.subr.mxu0 0.0
      %1355 = vmatpush1.msra.mxu0 0.0
      %1356 = vmatprep.subr.mxu0 0.0
      %1357 = vmatpush1.msra.mxu0 0.0
      %1358 = vmatprep.subr.mxu0 0.0
      %1359 = vmatpush1.msra.mxu0 0.0
      %1360 = vmatprep.subr.mxu0 0.0
      %1361 = vmatpush1.msra.mxu0 0.0
      %1362 = vmatprep.subr.mxu0 0.0
      %1363 = vmatpush1.msra.mxu0 0.0
      %1364 = vmatprep.subr.mxu0 0.0
      %1365 = vmatpush1.msra.mxu0 0.0
      %1366 = vmatprep.subr.mxu0 0.0
      %1367 = vmatpush1.msra.mxu0 0.0
      %1368 = vmatprep.subr.mxu0 0.0
      %1369 = vmatpush1.msra.mxu0 0.0
      %1370 = vmatprep.subr.mxu0 0.0
      %1371 = vmatpush1.msra.mxu0 0.0
      %1372 = vmatprep.subr.mxu0 0.0
      %1373 = vmatpush1.msra.mxu0 0.0
      %1374 = vmatprep.subr.mxu0 0.0
      %1375 = vmatpush1.msra.mxu0 0.0
      %1376 = vmatprep.subr.mxu0 0.0
      %1377 = vmatpush1.msra.mxu0 0.0
      %1378 = vmatprep.subr.mxu0 0.0
      %1379 = vmatpush1.msra.mxu0 0.0
      %1380 = vmatprep.subr.mxu0 0.0
      %1381 = vmatpush1.msra.mxu0 0.0
      %1382 = vmatprep.subr.mxu0 0.0
      %1383 = vmatpush1.msra.mxu0 0.0
      %1384 = vmatprep.subr.mxu0 0.0
      %1385 = vmatpush1.msra.mxu0 0.0
      %1386 = vmatprep.subr.mxu0 0.0
      %1387 = vmatpush1.msra.mxu0 0.0
      %1388 = vmatprep.mubr.f32.mxu0 0.0
      %1389 = vmatmul.mubr.f32.gmra.mrb[0].mxu0 %v1251
      %v1390 = vpop.f32.mrb[0].mxu0
      %v1391 = vadd.f32 0.0, %v1390
      %v1392 = vpop.f32.mrb[0].mxu0
      %v1393 = vadd.f32 0.0, %v1392
      %1394 = vdwg.mxu0
      %1395 = vmatprep.subr.mxu0 %v1238
      %1396 = vmatpush1.msra.mxu0 %v1237
      %1397 = vmatprep.subr.mxu0 0.0
      %1398 = vmatpush1.msra.mxu0 0.0
      %1399 = vmatprep.subr.mxu0 0.0
      %1400 = vmatpush1.msra.mxu0 0.0
      %1401 = vmatprep.subr.mxu0 0.0
      %1402 = vmatpush1.msra.mxu0 0.0
      %1403 = vmatprep.subr.mxu0 0.0
      %1404 = vmatpush1.msra.mxu0 0.0
      %1405 = vmatprep.subr.mxu0 0.0
      %1406 = vmatpush1.msra.mxu0 0.0
      %1407 = vmatprep.subr.mxu0 0.0
      %1408 = vmatpush1.msra.mxu0 0.0
      %1409 = vmatprep.subr.mxu0 0.0
      %1410 = vmatpush1.msra.mxu0 0.0
      %1411 = vmatprep.subr.mxu0 0.0
      %1412 = vmatpush1.msra.mxu0 0.0
      %1413 = vmatprep.subr.mxu0 0.0
      %1414 = vmatpush1.msra.mxu0 0.0
      %1415 = vmatprep.subr.mxu0 0.0
      %1416 = vmatpush1.msra.mxu0 0.0
      %1417 = vmatprep.subr.mxu0 0.0
      %1418 = vmatpush1.msra.mxu0 0.0
      %1419 = vmatprep.subr.mxu0 0.0
      %1420 = vmatpush1.msra.mxu0 0.0
      %1421 = vmatprep.subr.mxu0 0.0
      %1422 = vmatpush1.msra.mxu0 0.0
      %1423 = vmatprep.subr.mxu0 0.0
      %1424 = vmatpush1.msra.mxu0 0.0
      %1425 = vmatprep.subr.mxu0 0.0
      %1426 = vmatpush1.msra.mxu0 0.0
      %1427 = vmatprep.subr.mxu0 0.0
      %1428 = vmatpush1.msra.mxu0 0.0
      %1429 = vmatprep.subr.mxu0 0.0
      %1430 = vmatpush1.msra.mxu0 0.0
      %1431 = vmatprep.subr.mxu0 0.0
      %1432 = vmatpush1.msra.mxu0 0.0
      %1433 = vmatprep.subr.mxu0 0.0
      %1434 = vmatpush1.msra.mxu0 0.0
      %1435 = vmatprep.subr.mxu0 0.0
      %1436 = vmatpush1.msra.mxu0 0.0
      %1437 = vmatprep.subr.mxu0 0.0
      %1438 = vmatpush1.msra.mxu0 0.0
      %1439 = vmatprep.subr.mxu0 0.0
      %1440 = vmatpush1.msra.mxu0 0.0
      %1441 = vmatprep.subr.mxu0 0.0
      %1442 = vmatpush1.msra.mxu0 0.0
      %1443 = vmatprep.subr.mxu0 0.0
      %1444 = vmatpush1.msra.mxu0 0.0
      %1445 = vmatprep.subr.mxu0 0.0
      %1446 = vmatpush1.msra.mxu0 0.0
      %1447 = vmatprep.subr.mxu0 0.0
      %1448 = vmatpush1.msra.mxu0 0.0
      %1449 = vmatprep.subr.mxu0 0.0
      %1450 = vmatpush1.msra.mxu0 0.0
      %1451 = vmatprep.subr.mxu0 0.0
      %1452 = vmatpush1.msra.mxu0 0.0
      %1453 = vmatprep.subr.mxu0 0.0
      %1454 = vmatpush1.msra.mxu0 0.0
      %1455 = vmatprep.subr.mxu0 0.0
      %1456 = vmatpush1.msra.mxu0 0.0
      %1457 = vmatprep.subr.mxu0 0.0
      %1458 = vmatpush1.msra.mxu0 0.0
      %1459 = vmatprep.mubr.f32.mxu0 0.0
      %1460 = vmatmul.mubr.f32.gmra.mrb[0].mxu0 %v1251
      %v1461 = vpop.f32.mrb[0].mxu0
      %v1462 = vadd.f32 0.0, %v1461
      %v1463 = vpop.f32.mrb[0].mxu0
      %v1464 = vadd.f32 0.0, %v1463
      %1465 = vdwg.mxu0
      %1466 = vmatprep.subr.mxu0 %v1240
      %1467 = vmatpush1.msra.mxu0 %v1239
      %1468 = vmatprep.subr.mxu0 0.0
      %1469 = vmatpush1.msra.mxu0 0.0
      %1470 = vmatprep.subr.mxu0 0.0
      %1471 = vmatpush1.msra.mxu0 0.0
      %1472 = vmatprep.subr.mxu0 0.0
      %1473 = vmatpush1.msra.mxu0 0.0
      %1474 = vmatprep.subr.mxu0 0.0
      %1475 = vmatpush1.msra.mxu0 0.0
      %1476 = vmatprep.subr.mxu0 0.0
      %1477 = vmatpush1.msra.mxu0 0.0
      %1478 = vmatprep.subr.mxu0 0.0
      %1479 = vmatpush1.msra.mxu0 0.0
      %1480 = vmatprep.subr.mxu0 0.0
      %1481 = vmatpush1.msra.mxu0 0.0
      %1482 = vmatprep.subr.mxu0 0.0
      %1483 = vmatpush1.msra.mxu0 0.0
      %1484 = vmatprep.subr.mxu0 0.0
      %1485 = vmatpush1.msra.mxu0 0.0
      %1486 = vmatprep.subr.mxu0 0.0
      %1487 = vmatpush1.msra.mxu0 0.0
      %1488 = vmatprep.subr.mxu0 0.0
      %1489 = vmatpush1.msra.mxu0 0.0
      %1490 = vmatprep.subr.mxu0 0.0
      %1491 = vmatpush1.msra.mxu0 0.0
      %1492 = vmatprep.subr.mxu0 0.0
      %1493 = vmatpush1.msra.mxu0 0.0
      %1494 = vmatprep.subr.mxu0 0.0
      %1495 = vmatpush1.msra.mxu0 0.0
      %1496 = vmatprep.subr.mxu0 0.0
      %1497 = vmatpush1.msra.mxu0 0.0
      %1498 = vmatprep.subr.mxu0 0.0
      %1499 = vmatpush1.msra.mxu0 0.0
      %1500 = vmatprep.subr.mxu0 0.0
      %1501 = vmatpush1.msra.mxu0 0.0
      %1502 = vmatprep.subr.mxu0 0.0
      %1503 = vmatpush1.msra.mxu0 0.0
      %1504 = vmatprep.subr.mxu0 0.0
      %1505 = vmatpush1.msra.mxu0 0.0
      %1506 = vmatprep.subr.mxu0 0.0
      %1507 = vmatpush1.msra.mxu0 0.0
      %1508 = vmatprep.subr.mxu0 0.0
      %1509 = vmatpush1.msra.mxu0 0.0
      %1510 = vmatprep.subr.mxu0 0.0
      %1511 = vmatpush1.msra.mxu0 0.0
      %1512 = vmatprep.subr.mxu0 0.0
      %1513 = vmatpush1.msra.mxu0 0.0
      %1514 = vmatprep.subr.mxu0 0.0
      %1515 = vmatpush1.msra.mxu0 0.0
      %1516 = vmatprep.subr.mxu0 0.0
      %1517 = vmatpush1.msra.mxu0 0.0
      %1518 = vmatprep.subr.mxu0 0.0
      %1519 = vmatpush1.msra.mxu0 0.0
      %1520 = vmatprep.subr.mxu0 0.0
      %1521 = vmatpush1.msra.mxu0 0.0
      %1522 = vmatprep.subr.mxu0 0.0
      %1523 = vmatpush1.msra.mxu0 0.0
      %1524 = vmatprep.subr.mxu0 0.0
      %1525 = vmatpush1.msra.mxu0 0.0
      %1526 = vmatprep.subr.mxu0 0.0
      %1527 = vmatpush1.msra.mxu0 0.0
      %1528 = vmatprep.subr.mxu0 0.0
      %1529 = vmatpush1.msra.mxu0 0.0
      %1530 = vmatprep.mubr.f32.mxu0 0.0
      %1531 = vmatmul.mubr.f32.gmra.mrb[0].mxu0 %v1251
      %v1532 = vpop.f32.mrb[0].mxu0
      %v1533 = vadd.f32 0.0, %v1532
      %v1534 = vpop.f32.mrb[0].mxu0
      %v1535 = vadd.f32 0.0, %v1534
      %1536 = vdwg.mxu0
      %1537 = vmatprep.subr.mxu0 0.0
      %1538 = vmatpush1.msra.mxu0 %v1231
      %1539 = vmatprep.subr.mxu0 0.0
      %1540 = vmatpush1.msra.mxu0 0.0
      %1541 = vmatprep.subr.mxu0 0.0
      %1542 = vmatpush1.msra.mxu0 0.0
      %1543 = vmatprep.subr.mxu0 0.0
      %1544 = vmatpush1.msra.mxu0 0.0
      %1545 = vmatprep.subr.mxu0 0.0
      %1546 = vmatpush1.msra.mxu0 0.0
      %1547 = vmatprep.subr.mxu0 0.0
      %1548 = vmatpush1.msra.mxu0 0.0
      %1549 = vmatprep.subr.mxu0 0.0
      %1550 = vmatpush1.msra.mxu0 0.0
      %1551 = vmatprep.subr.mxu0 0.0
      %1552 = vmatpush1.msra.mxu0 0.0
      %1553 = vmatprep.subr.mxu0 0.0
      %1554 = vmatpush1.msra.mxu0 0.0
      %1555 = vmatprep.subr.mxu0 0.0
      %1556 = vmatpush1.msra.mxu0 0.0
      %1557 = vmatprep.subr.mxu0 0.0
      %1558 = vmatpush1.msra.mxu0 0.0
      %1559 = vmatprep.subr.mxu0 0.0
      %1560 = vmatpush1.msra.mxu0 0.0
      %1561 = vmatprep.subr.mxu0 0.0
      %1562 = vmatpush1.msra.mxu0 0.0
      %1563 = vmatprep.subr.mxu0 0.0
      %1564 = vmatpush1.msra.mxu0 0.0
      %1565 = vmatprep.subr.mxu0 0.0
      %1566 = vmatpush1.msra.mxu0 0.0
      %1567 = vmatprep.subr.mxu0 0.0
      %1568 = vmatpush1.msra.mxu0 0.0
      %1569 = vmatprep.subr.mxu0 0.0
      %1570 = vmatpush1.msra.mxu0 0.0
      %1571 = vmatprep.subr.mxu0 0.0
      %1572 = vmatpush1.msra.mxu0 0.0
      %1573 = vmatprep.subr.mxu0 0.0
      %1574 = vmatpush1.msra.mxu0 0.0
      %1575 = vmatprep.subr.mxu0 0.0
      %1576 = vmatpush1.msra.mxu0 0.0
      %1577 = vmatprep.subr.mxu0 0.0
      %1578 = vmatpush1.msra.mxu0 0.0
      %1579 = vmatprep.subr.mxu0 0.0
      %1580 = vmatpush1.msra.mxu0 0.0
      %1581 = vmatprep.subr.mxu0 0.0
      %1582 = vmatpush1.msra.mxu0 0.0
      %1583 = vmatprep.subr.mxu0 0.0
      %1584 = vmatpush1.msra.mxu0 0.0
      %1585 = vmatprep.subr.mxu0 0.0
      %1586 = vmatpush1.msra.mxu0 0.0
      %1587 = vmatprep.subr.mxu0 0.0
      %1588 = vmatpush1.msra.mxu0 0.0
      %1589 = vmatprep.subr.mxu0 0.0
      %1590 = vmatpush1.msra.mxu0 0.0
      %1591 = vmatprep.subr.mxu0 0.0
      %1592 = vmatpush1.msra.mxu0 0.0
      %1593 = vmatprep.subr.mxu0 0.0
      %1594 = vmatpush1.msra.mxu0 0.0
      %1595 = vmatprep.subr.mxu0 0.0
      %1596 = vmatpush1.msra.mxu0 0.0
      %1597 = vmatprep.subr.mxu0 0.0
      %1598 = vmatpush1.msra.mxu0 0.0
      %1599 = vmatprep.subr.mxu0 0.0
      %1600 = vmatpush1.msra.mxu0 0.0
      %1601 = vmatprep.mubr.f32.mxu0 0.0
      %1602 = vmatmul.mubr.f32.gmra.mrb[0].mxu0 %v1251
      %v1603 = vpop.f32.mrb[0].mxu0
      %v1604 = vadd.f32 0.0, %v1603
      %v1605 = vpop.f32.mrb[0].mxu0
      %1606 = vdwg.mxu0
      %v1607 = vadd.f32 %v925, %v1320
      %v1608 = vadd.f32 %v927, %v1322
      %v1609 = vadd.f32 %v996, %v1391
      %v1610 = vadd.f32 %v998, %v1393
      %v1611 = vadd.f32 %v1067, %v1462
      %v1612 = vadd.f32 %v1069, %v1464
      %v1613 = vadd.f32 %v1138, %v1533
      %v1614 = vadd.f32 %v1140, %v1535
      %v1615 = vadd.f32 %v1209, %v1604
      %s1616 = scalar_lea.vmem %s1, 24
      %v1617 = vld [vmem:[%s1616] sm:$0xff]
      %1618 = vrot.lane.b32.xlu0 %v453, 94
      %v1619 = vpop.permute.xlu0 %1618
      %1620 = vrot.lane.b32.xlu0 %v436, 94
      %v1621 = vpop.permute.xlu0 %1620
      %1622 = vrot.lane.b32.xlu0 %v437, 94
      %v1623 = vpop.permute.xlu0 %1622
      %1624 = vrot.lane.b32.xlu0 %v438, 94
      %v1625 = vpop.permute.xlu0 %1624
      %1626 = vrot.lane.b32.xlu0 %v439, 94
      %v1627 = vpop.permute.xlu0 %1626
      %1628 = vrot.lane.b32.xlu0 %v440, 94
      %v1629 = vpop.permute.xlu0 %1628
      %1630 = vrot.lane.b32.xlu0 %v441, 94
      %v1631 = vpop.permute.xlu0 %1630
      %1632 = vrot.lane.b32.xlu0 %v442, 94
      %v1633 = vpop.permute.xlu0 %1632
      %1634 = vrot.lane.b32.xlu0 %v455, 94
      %v1635 = vpop.permute.xlu0 %1634
      %vm1636 = vcmask 769024
      %v1637 = vsel %vm1636, %v1619, %v1621
      %v1638 = vsel %vm1636, %v1621, %v1623
      %v1639 = vsel %vm1636, %v1623, %v1625
      %v1640 = vsel %vm1636, %v1625, %v1627
      %v1641 = vsel %vm1636, %v1627, %v1629
      %v1642 = vsel %vm1636, %v1629, %v1631
      %v1643 = vsel %vm1636, %v1631, %v1633
      %v1644 = vsel %vm1636, %v1633, %v1635
      %v1655 = vsel %vm497, %v1617, 0
      %1657 = vmatprep.subr.mxu0 %v1638
      %1658 = vmatpush1.msra.mxu0 %v1637
      %1659 = vmatprep.subr.mxu0 0.0
      %1660 = vmatpush1.msra.mxu0 0.0
      %1661 = vmatprep.subr.mxu0 0.0
      %1662 = vmatpush1.msra.mxu0 0.0
      %1663 = vmatprep.subr.mxu0 0.0
      %1664 = vmatpush1.msra.mxu0 0.0
      %1665 = vmatprep.subr.mxu0 0.0
      %1666 = vmatpush1.msra.mxu0 0.0
      %1667 = vmatprep.subr.mxu0 0.0
      %1668 = vmatpush1.msra.mxu0 0.0
      %1669 = vmatprep.subr.mxu0 0.0
      %1670 = vmatpush1.msra.mxu0 0.0
      %1671 = vmatprep.subr.mxu0 0.0
      %1672 = vmatpush1.msra.mxu0 0.0
      %1673 = vmatprep.subr.mxu0 0.0
      %1674 = vmatpush1.msra.mxu0 0.0
      %1675 = vmatprep.subr.mxu0 0.0
      %1676 = vmatpush1.msra.mxu0 0.0
      %1677 = vmatprep.subr.mxu0 0.0
      %1678 = vmatpush1.msra.mxu0 0.0
      %1679 = vmatprep.subr.mxu0 0.0
      %1680 = vmatpush1.msra.mxu0 0.0
      %1681 = vmatprep.subr.mxu0 0.0
      %1682 = vmatpush1.msra.mxu0 0.0
      %1683 = vmatprep.subr.mxu0 0.0
      %1684 = vmatpush1.msra.mxu0 0.0
      %1685 = vmatprep.subr.mxu0 0.0
      %1686 = vmatpush1.msra.mxu0 0.0
      %1687 = vmatprep.subr.mxu0 0.0
      %1688 = vmatpush1.msra.mxu0 0.0
      %1689 = vmatprep.subr.mxu0 0.0
      %1690 = vmatpush1.msra.mxu0 0.0
      %1691 = vmatprep.subr.mxu0 0.0
      %1692 = vmatpush1.msra.mxu0 0.0
      %1693 = vmatprep.subr.mxu0 0.0
      %1694 = vmatpush1.msra.mxu0 0.0
      %1695 = vmatprep.subr.mxu0 0.0
      %1696 = vmatpush1.msra.mxu0 0.0
      %1697 = vmatprep.subr.mxu0 0.0
      %1698 = vmatpush1.msra.mxu0 0.0
      %1699 = vmatprep.subr.mxu0 0.0
      %1700 = vmatpush1.msra.mxu0 0.0
      %1701 = vmatprep.subr.mxu0 0.0
      %1702 = vmatpush1.msra.mxu0 0.0
      %1703 = vmatprep.subr.mxu0 0.0
      %1704 = vmatpush1.msra.mxu0 0.0
      %1705 = vmatprep.subr.mxu0 0.0
      %1706 = vmatpush1.msra.mxu0 0.0
      %1707 = vmatprep.subr.mxu0 0.0
      %1708 = vmatpush1.msra.mxu0 0.0
      %1709 = vmatprep.subr.mxu0 0.0
      %1710 = vmatpush1.msra.mxu0 0.0
      %1711 = vmatprep.subr.mxu0 0.0
      %1712 = vmatpush1.msra.mxu0 0.0
      %1713 = vmatprep.subr.mxu0 0.0
      %1714 = vmatpush1.msra.mxu0 0.0
      %1715 = vmatprep.subr.mxu0 0.0
      %1716 = vmatpush1.msra.mxu0 0.0
      %1717 = vmatprep.subr.mxu0 0.0
      %1718 = vmatpush1.msra.mxu0 0.0
      %1719 = vmatprep.subr.mxu0 0.0
      %1720 = vmatpush1.msra.mxu0 0.0
      %1721 = vmatprep.mubr.f32.mxu0 0.0
      %1722 = vmatmul.mubr.f32.gmra.mrb[0].mxu0 %v1655
      %v1723 = vpop.f32.mrb[0].mxu0
      %v1724 = vadd.f32 0.0, %v1723
      %v1725 = vpop.f32.mrb[0].mxu0
      %v1726 = vadd.f32 0.0, %v1725
      %1727 = vdwg.mxu0
      %1728 = vmatprep.subr.mxu0 %v1640
      %1729 = vmatpush1.msra.mxu0 %v1639
      %1730 = vmatprep.subr.mxu0 0.0
      %1731 = vmatpush1.msra.mxu0 0.0
      %1732 = vmatprep.subr.mxu0 0.0
      %1733 = vmatpush1.msra.mxu0 0.0
      %1734 = vmatprep.subr.mxu0 0.0
      %1735 = vmatpush1.msra.mxu0 0.0
      %1736 = vmatprep.subr.mxu0 0.0
      %1737 = vmatpush1.msra.mxu0 0.0
      %1738 = vmatprep.subr.mxu0 0.0
      %1739 = vmatpush1.msra.mxu0 0.0
      %1740 = vmatprep.subr.mxu0 0.0
      %1741 = vmatpush1.msra.mxu0 0.0
      %1742 = vmatprep.subr.mxu0 0.0
      %1743 = vmatpush1.msra.mxu0 0.0
      %1744 = vmatprep.subr.mxu0 0.0
      %1745 = vmatpush1.msra.mxu0 0.0
      %1746 = vmatprep.subr.mxu0 0.0
      %1747 = vmatpush1.msra.mxu0 0.0
      %1748 = vmatprep.subr.mxu0 0.0
      %1749 = vmatpush1.msra.mxu0 0.0
      %1750 = vmatprep.subr.mxu0 0.0
      %1751 = vmatpush1.msra.mxu0 0.0
      %1752 = vmatprep.subr.mxu0 0.0
      %1753 = vmatpush1.msra.mxu0 0.0
      %1754 = vmatprep.subr.mxu0 0.0
      %1755 = vmatpush1.msra.mxu0 0.0
      %1756 = vmatprep.subr.mxu0 0.0
      %1757 = vmatpush1.msra.mxu0 0.0
      %1758 = vmatprep.subr.mxu0 0.0
      %1759 = vmatpush1.msra.mxu0 0.0
      %1760 = vmatprep.subr.mxu0 0.0
      %1761 = vmatpush1.msra.mxu0 0.0
      %1762 = vmatprep.subr.mxu0 0.0
      %1763 = vmatpush1.msra.mxu0 0.0
      %1764 = vmatprep.subr.mxu0 0.0
      %1765 = vmatpush1.msra.mxu0 0.0
      %1766 = vmatprep.subr.mxu0 0.0
      %1767 = vmatpush1.msra.mxu0 0.0
      %1768 = vmatprep.subr.mxu0 0.0
      %1769 = vmatpush1.msra.mxu0 0.0
      %1770 = vmatprep.subr.mxu0 0.0
      %1771 = vmatpush1.msra.mxu0 0.0
      %1772 = vmatprep.subr.mxu0 0.0
      %1773 = vmatpush1.msra.mxu0 0.0
      %1774 = vmatprep.subr.mxu0 0.0
      %1775 = vmatpush1.msra.mxu0 0.0
      %1776 = vmatprep.subr.mxu0 0.0
      %1777 = vmatpush1.msra.mxu0 0.0
      %1778 = vmatprep.subr.mxu0 0.0
      %1779 = vmatpush1.msra.mxu0 0.0
      %1780 = vmatprep.subr.mxu0 0.0
      %1781 = vmatpush1.msra.mxu0 0.0
      %1782 = vmatprep.subr.mxu0 0.0
      %1783 = vmatpush1.msra.mxu0 0.0
      %1784 = vmatprep.subr.mxu0 0.0
      %1785 = vmatpush1.msra.mxu0 0.0
      %1786 = vmatprep.subr.mxu0 0.0
      %1787 = vmatpush1.msra.mxu0 0.0
      %1788 = vmatprep.subr.mxu0 0.0
      %1789 = vmatpush1.msra.mxu0 0.0
      %1790 = vmatprep.subr.mxu0 0.0
      %1791 = vmatpush1.msra.mxu0 0.0
      %1792 = vmatprep.mubr.f32.mxu0 0.0
      %1793 = vmatmul.mubr.f32.gmra.mrb[0].mxu0 %v1655
      %v1794 = vpop.f32.mrb[0].mxu0
      %v1795 = vadd.f32 0.0, %v1794
      %v1796 = vpop.f32.mrb[0].mxu0
      %v1797 = vadd.f32 0.0, %v1796
      %1798 = vdwg.mxu0
      %1799 = vmatprep.subr.mxu0 %v1642
      %1800 = vmatpush1.msra.mxu0 %v1641
      %1801 = vmatprep.subr.mxu0 0.0
      %1802 = vmatpush1.msra.mxu0 0.0
      %1803 = vmatprep.subr.mxu0 0.0
      %1804 = vmatpush1.msra.mxu0 0.0
      %1805 = vmatprep.subr.mxu0 0.0
      %1806 = vmatpush1.msra.mxu0 0.0
      %1807 = vmatprep.subr.mxu0 0.0
      %1808 = vmatpush1.msra.mxu0 0.0
      %1809 = vmatprep.subr.mxu0 0.0
      %1810 = vmatpush1.msra.mxu0 0.0
      %1811 = vmatprep.subr.mxu0 0.0
      %1812 = vmatpush1.msra.mxu0 0.0
      %1813 = vmatprep.subr.mxu0 0.0
      %1814 = vmatpush1.msra.mxu0 0.0
      %1815 = vmatprep.subr.mxu0 0.0
      %1816 = vmatpush1.msra.mxu0 0.0
      %1817 = vmatprep.subr.mxu0 0.0
      %1818 = vmatpush1.msra.mxu0 0.0
      %1819 = vmatprep.subr.mxu0 0.0
      %1820 = vmatpush1.msra.mxu0 0.0
      %1821 = vmatprep.subr.mxu0 0.0
      %1822 = vmatpush1.msra.mxu0 0.0
      %1823 = vmatprep.subr.mxu0 0.0
      %1824 = vmatpush1.msra.mxu0 0.0
      %1825 = vmatprep.subr.mxu0 0.0
      %1826 = vmatpush1.msra.mxu0 0.0
      %1827 = vmatprep.subr.mxu0 0.0
      %1828 = vmatpush1.msra.mxu0 0.0
      %1829 = vmatprep.subr.mxu0 0.0
      %1830 = vmatpush1.msra.mxu0 0.0
      %1831 = vmatprep.subr.mxu0 0.0
      %1832 = vmatpush1.msra.mxu0 0.0
      %1833 = vmatprep.subr.mxu0 0.0
      %1834 = vmatpush1.msra.mxu0 0.0
      %1835 = vmatprep.subr.mxu0 0.0
      %1836 = vmatpush1.msra.mxu0 0.0
      %1837 = vmatprep.subr.mxu0 0.0
      %1838 = vmatpush1.msra.mxu0 0.0
      %1839 = vmatprep.subr.mxu0 0.0
      %1840 = vmatpush1.msra.mxu0 0.0
      %1841 = vmatprep.subr.mxu0 0.0
      %1842 = vmatpush1.msra.mxu0 0.0
      %1843 = vmatprep.subr.mxu0 0.0
      %1844 = vmatpush1.msra.mxu0 0.0
      %1845 = vmatprep.subr.mxu0 0.0
      %1846 = vmatpush1.msra.mxu0 0.0
      %1847 = vmatprep.subr.mxu0 0.0
      %1848 = vmatpush1.msra.mxu0 0.0
      %1849 = vmatprep.subr.mxu0 0.0
      %1850 = vmatpush1.msra.mxu0 0.0
      %1851 = vmatprep.subr.mxu0 0.0
      %1852 = vmatpush1.msra.mxu0 0.0
      %1853 = vmatprep.subr.mxu0 0.0
      %1854 = vmatpush1.msra.mxu0 0.0
      %1855 = vmatprep.subr.mxu0 0.0
      %1856 = vmatpush1.msra.mxu0 0.0
      %1857 = vmatprep.subr.mxu0 0.0
      %1858 = vmatpush1.msra.mxu0 0.0
      %1859 = vmatprep.subr.mxu0 0.0
      %1860 = vmatpush1.msra.mxu0 0.0
      %1861 = vmatprep.subr.mxu0 0.0
      %1862 = vmatpush1.msra.mxu0 0.0
      %1863 = vmatprep.mubr.f32.mxu0 0.0
      %1864 = vmatmul.mubr.f32.gmra.mrb[0].mxu0 %v1655
      %v1865 = vpop.f32.mrb[0].mxu0
      %v1866 = vadd.f32 0.0, %v1865
      %v1867 = vpop.f32.mrb[0].mxu0
      %v1868 = vadd.f32 0.0, %v1867
      %1869 = vdwg.mxu0
      %1870 = vmatprep.subr.mxu0 %v1644
      %1871 = vmatpush1.msra.mxu0 %v1643
      %1872 = vmatprep.subr.mxu0 0.0
      %1873 = vmatpush1.msra.mxu0 0.0
      %1874 = vmatprep.subr.mxu0 0.0
      %1875 = vmatpush1.msra.mxu0 0.0
      %1876 = vmatprep.subr.mxu0 0.0
      %1877 = vmatpush1.msra.mxu0 0.0
      %1878 = vmatprep.subr.mxu0 0.0
      %1879 = vmatpush1.msra.mxu0 0.0
      %1880 = vmatprep.subr.mxu0 0.0
      %1881 = vmatpush1.msra.mxu0 0.0
      %1882 = vmatprep.subr.mxu0 0.0
      %1883 = vmatpush1.msra.mxu0 0.0
      %1884 = vmatprep.subr.mxu0 0.0
      %1885 = vmatpush1.msra.mxu0 0.0
      %1886 = vmatprep.subr.mxu0 0.0
      %1887 = vmatpush1.msra.mxu0 0.0
      %1888 = vmatprep.subr.mxu0 0.0
      %1889 = vmatpush1.msra.mxu0 0.0
      %1890 = vmatprep.subr.mxu0 0.0
      %1891 = vmatpush1.msra.mxu0 0.0
      %1892 = vmatprep.subr.mxu0 0.0
      %1893 = vmatpush1.msra.mxu0 0.0
      %1894 = vmatprep.subr.mxu0 0.0
      %1895 = vmatpush1.msra.mxu0 0.0
      %1896 = vmatprep.subr.mxu0 0.0
      %1897 = vmatpush1.msra.mxu0 0.0
      %1898 = vmatprep.subr.mxu0 0.0
      %1899 = vmatpush1.msra.mxu0 0.0
      %1900 = vmatprep.subr.mxu0 0.0
      %1901 = vmatpush1.msra.mxu0 0.0
      %1902 = vmatprep.subr.mxu0 0.0
      %1903 = vmatpush1.msra.mxu0 0.0
      %1904 = vmatprep.subr.mxu0 0.0
      %1905 = vmatpush1.msra.mxu0 0.0
      %1906 = vmatprep.subr.mxu0 0.0
      %1907 = vmatpush1.msra.mxu0 0.0
      %1908 = vmatprep.subr.mxu0 0.0
      %1909 = vmatpush1.msra.mxu0 0.0
      %1910 = vmatprep.subr.mxu0 0.0
      %1911 = vmatpush1.msra.mxu0 0.0
      %1912 = vmatprep.subr.mxu0 0.0
      %1913 = vmatpush1.msra.mxu0 0.0
      %1914 = vmatprep.subr.mxu0 0.0
      %1915 = vmatpush1.msra.mxu0 0.0
      %1916 = vmatprep.subr.mxu0 0.0
      %1917 = vmatpush1.msra.mxu0 0.0
      %1918 = vmatprep.subr.mxu0 0.0
      %1919 = vmatpush1.msra.mxu0 0.0
      %1920 = vmatprep.subr.mxu0 0.0
      %1921 = vmatpush1.msra.mxu0 0.0
      %1922 = vmatprep.subr.mxu0 0.0
      %1923 = vmatpush1.msra.mxu0 0.0
      %1924 = vmatprep.subr.mxu0 0.0
      %1925 = vmatpush1.msra.mxu0 0.0
      %1926 = vmatprep.subr.mxu0 0.0
      %1927 = vmatpush1.msra.mxu0 0.0
      %1928 = vmatprep.subr.mxu0 0.0
      %1929 = vmatpush1.msra.mxu0 0.0
      %1930 = vmatprep.subr.mxu0 0.0
      %1931 = vmatpush1.msra.mxu0 0.0
      %1932 = vmatprep.subr.mxu0 0.0
      %1933 = vmatpush1.msra.mxu0 0.0
      %1934 = vmatprep.mubr.f32.mxu0 0.0
      %1935 = vmatmul.mubr.f32.gmra.mrb[0].mxu0 %v1655
      %v1936 = vpop.f32.mrb[0].mxu0
      %v1937 = vadd.f32 0.0, %v1936
      %v1938 = vpop.f32.mrb[0].mxu0
      %v1939 = vadd.f32 0.0, %v1938
      %1940 = vdwg.mxu0
      %1941 = vmatprep.subr.mxu0 0.0
      %1942 = vmatpush1.msra.mxu0 %v1635
      %1943 = vmatprep.subr.mxu0 0.0
      %1944 = vmatpush1.msra.mxu0 0.0
      %1945 = vmatprep.subr.mxu0 0.0
      %1946 = vmatpush1.msra.mxu0 0.0
      %1947 = vmatprep.subr.mxu0 0.0
      %1948 = vmatpush1.msra.mxu0 0.0
      %1949 = vmatprep.subr.mxu0 0.0
      %1950 = vmatpush1.msra.mxu0 0.0
      %1951 = vmatprep.subr.mxu0 0.0
      %1952 = vmatpush1.msra.mxu0 0.0
      %1953 = vmatprep.subr.mxu0 0.0
      %1954 = vmatpush1.msra.mxu0 0.0
      %1955 = vmatprep.subr.mxu0 0.0
      %1956 = vmatpush1.msra.mxu0 0.0
      %1957 = vmatprep.subr.mxu0 0.0
      %1958 = vmatpush1.msra.mxu0 0.0
      %1959 = vmatprep.subr.mxu0 0.0
      %1960 = vmatpush1.msra.mxu0 0.0
      %1961 = vmatprep.subr.mxu0 0.0
      %1962 = vmatpush1.msra.mxu0 0.0
      %1963 = vmatprep.subr.mxu0 0.0
      %1964 = vmatpush1.msra.mxu0 0.0
      %1965 = vmatprep.subr.mxu0 0.0
      %1966 = vmatpush1.msra.mxu0 0.0
      %1967 = vmatprep.subr.mxu0 0.0
      %1968 = vmatpush1.msra.mxu0 0.0
      %1969 = vmatprep.subr.mxu0 0.0
      %1970 = vmatpush1.msra.mxu0 0.0
      %1971 = vmatprep.subr.mxu0 0.0
      %1972 = vmatpush1.msra.mxu0 0.0
      %1973 = vmatprep.subr.mxu0 0.0
      %1974 = vmatpush1.msra.mxu0 0.0
      %1975 = vmatprep.subr.mxu0 0.0
      %1976 = vmatpush1.msra.mxu0 0.0
      %1977 = vmatprep.subr.mxu0 0.0
      %1978 = vmatpush1.msra.mxu0 0.0
      %1979 = vmatprep.subr.mxu0 0.0
      %1980 = vmatpush1.msra.mxu0 0.0
      %1981 = vmatprep.subr.mxu0 0.0
      %1982 = vmatpush1.msra.mxu0 0.0
      %1983 = vmatprep.subr.mxu0 0.0
      %1984 = vmatpush1.msra.mxu0 0.0
      %1985 = vmatprep.subr.mxu0 0.0
      %1986 = vmatpush1.msra.mxu0 0.0
      %1987 = vmatprep.subr.mxu0 0.0
      %1988 = vmatpush1.msra.mxu0 0.0
      %1989 = vmatprep.subr.mxu0 0.0
      %1990 = vmatpush1.msra.mxu0 0.0
      %1991 = vmatprep.subr.mxu0 0.0
      %1992 = vmatpush1.msra.mxu0 0.0
      %1993 = vmatprep.subr.mxu0 0.0
      %1994 = vmatpush1.msra.mxu0 0.0
      %1995 = vmatprep.subr.mxu0 0.0
      %1996 = vmatpush1.msra.mxu0 0.0
      %1997 = vmatprep.subr.mxu0 0.0
      %1998 = vmatpush1.msra.mxu0 0.0
      %1999 = vmatprep.subr.mxu0 0.0
      %2000 = vmatpush1.msra.mxu0 0.0
      %2001 = vmatprep.subr.mxu0 0.0
      %2002 = vmatpush1.msra.mxu0 0.0
      %2003 = vmatprep.subr.mxu0 0.0
      %2004 = vmatpush1.msra.mxu0 0.0
      %2005 = vmatprep.mubr.f32.mxu0 0.0
      %2006 = vmatmul.mubr.f32.gmra.mrb[0].mxu0 %v1655
      %v2007 = vpop.f32.mrb[0].mxu0
      %v2008 = vadd.f32 0.0, %v2007
      %v2009 = vpop.f32.mrb[0].mxu0
      %2010 = vdwg.mxu0
      %v2011 = vadd.f32 %v1607, %v1724
      %v2012 = vadd.f32 %v1608, %v1726
      %v2013 = vadd.f32 %v1609, %v1795
      %v2014 = vadd.f32 %v1610, %v1797
      %v2015 = vadd.f32 %v1611, %v1866
      %v2016 = vadd.f32 %v1612, %v1868
      %v2017 = vadd.f32 %v1613, %v1937
      %v2018 = vadd.f32 %v1614, %v1939
      %v2019 = vadd.f32 %v1615, %v2008
      %s2020 = scalar_lea.vmem %s1, 32
      %v2021 = vld [vmem:[%s2020] sm:$0xff]
      %2022 = vrot.lane.b32.xlu0 %v453, 93
      %v2023 = vpop.permute.xlu0 %2022
      %2024 = vrot.lane.b32.xlu0 %v436, 93
      %v2025 = vpop.permute.xlu0 %2024
      %2026 = vrot.lane.b32.xlu0 %v437, 93
      %v2027 = vpop.permute.xlu0 %2026
      %2028 = vrot.lane.b32.xlu0 %v438, 93
      %v2029 = vpop.permute.xlu0 %2028
      %2030 = vrot.lane.b32.xlu0 %v439, 93
      %v2031 = vpop.permute.xlu0 %2030
      %2032 = vrot.lane.b32.xlu0 %v440, 93
      %v2033 = vpop.permute.xlu0 %2032
      %2034 = vrot.lane.b32.xlu0 %v441, 93
      %v2035 = vpop.permute.xlu0 %2034
      %2036 = vrot.lane.b32.xlu0 %v442, 93
      %v2037 = vpop.permute.xlu0 %2036
      %2038 = vrot.lane.b32.xlu0 %v455, 93
      %v2039 = vpop.permute.xlu0 %2038
      %vm2040 = vcmask 760832
      %v2041 = vsel %vm2040, %v2023, %v2025
      %v2042 = vsel %vm2040, %v2025, %v2027
      %v2043 = vsel %vm2040, %v2027, %v2029
      %v2044 = vsel %vm2040, %v2029, %v2031
      %v2045 = vsel %vm2040, %v2031, %v2033
      %v2046 = vsel %vm2040, %v2033, %v2035
      %v2047 = vsel %vm2040, %v2035, %v2037
      %v2048 = vsel %vm2040, %v2037, %v2039
      %v2059 = vsel %vm497, %v2021, 0
      %2061 = vmatprep.subr.mxu0 %v2042
      %2062 = vmatpush1.msra.mxu0 %v2041
      %2063 = vmatprep.subr.mxu0 0.0
      %2064 = vmatpush1.msra.mxu0 0.0
      %2065 = vmatprep.subr.mxu0 0.0
      %2066 = vmatpush1.msra.mxu0 0.0
      %2067 = vmatprep.subr.mxu0 0.0
      %2068 = vmatpush1.msra.mxu0 0.0
      %2069 = vmatprep.subr.mxu0 0.0
      %2070 = vmatpush1.msra.mxu0 0.0
      %2071 = vmatprep.subr.mxu0 0.0
      %2072 = vmatpush1.msra.mxu0 0.0
      %2073 = vmatprep.subr.mxu0 0.0
      %2074 = vmatpush1.msra.mxu0 0.0
      %2075 = vmatprep.subr.mxu0 0.0
      %2076 = vmatpush1.msra.mxu0 0.0
      %2077 = vmatprep.subr.mxu0 0.0
      %2078 = vmatpush1.msra.mxu0 0.0
      %2079 = vmatprep.subr.mxu0 0.0
      %2080 = vmatpush1.msra.mxu0 0.0
      %2081 = vmatprep.subr.mxu0 0.0
      %2082 = vmatpush1.msra.mxu0 0.0
      %2083 = vmatprep.subr.mxu0 0.0
      %2084 = vmatpush1.msra.mxu0 0.0
      %2085 = vmatprep.subr.mxu0 0.0
      %2086 = vmatpush1.msra.mxu0 0.0
      %2087 = vmatprep.subr.mxu0 0.0
      %2088 = vmatpush1.msra.mxu0 0.0
      %2089 = vmatprep.subr.mxu0 0.0
      %2090 = vmatpush1.msra.mxu0 0.0
      %2091 = vmatprep.subr.mxu0 0.0
      %2092 = vmatpush1.msra.mxu0 0.0
      %2093 = vmatprep.subr.mxu0 0.0
      %2094 = vmatpush1.msra.mxu0 0.0
      %2095 = vmatprep.subr.mxu0 0.0
      %2096 = vmatpush1.msra.mxu0 0.0
      %2097 = vmatprep.subr.mxu0 0.0
      %2098 = vmatpush1.msra.mxu0 0.0
      %2099 = vmatprep.subr.mxu0 0.0
      %2100 = vmatpush1.msra.mxu0 0.0
      %2101 = vmatprep.subr.mxu0 0.0
      %2102 = vmatpush1.msra.mxu0 0.0
      %2103 = vmatprep.subr.mxu0 0.0
      %2104 = vmatpush1.msra.mxu0 0.0
      %2105 = vmatprep.subr.mxu0 0.0
      %2106 = vmatpush1.msra.mxu0 0.0
      %2107 = vmatprep.subr.mxu0 0.0
      %2108 = vmatpush1.msra.mxu0 0.0
      %2109 = vmatprep.subr.mxu0 0.0
      %2110 = vmatpush1.msra.mxu0 0.0
      %2111 = vmatprep.subr.mxu0 0.0
      %2112 = vmatpush1.msra.mxu0 0.0
      %2113 = vmatprep.subr.mxu0 0.0
      %2114 = vmatpush1.msra.mxu0 0.0
      %2115 = vmatprep.subr.mxu0 0.0
      %2116 = vmatpush1.msra.mxu0 0.0
      %2117 = vmatprep.subr.mxu0 0.0
      %2118 = vmatpush1.msra.mxu0 0.0
      %2119 = vmatprep.subr.mxu0 0.0
      %2120 = vmatpush1.msra.mxu0 0.0
      %2121 = vmatprep.subr.mxu0 0.0
      %2122 = vmatpush1.msra.mxu0 0.0
      %2123 = vmatprep.subr.mxu0 0.0
      %2124 = vmatpush1.msra.mxu0 0.0
      %2125 = vmatprep.mubr.f32.mxu0 0.0
      %2126 = vmatmul.mubr.f32.gmra.mrb[0].mxu0 %v2059
      %v2127 = vpop.f32.mrb[0].mxu0
      %v2128 = vadd.f32 0.0, %v2127
      %v2129 = vpop.f32.mrb[0].mxu0
      %v2130 = vadd.f32 0.0, %v2129
      %2131 = vdwg.mxu0
      %2132 = vmatprep.subr.mxu0 %v2044
      %2133 = vmatpush1.msra.mxu0 %v2043
      %2134 = vmatprep.subr.mxu0 0.0
      %2135 = vmatpush1.msra.mxu0 0.0
      %2136 = vmatprep.subr.mxu0 0.0
      %2137 = vmatpush1.msra.mxu0 0.0
      %2138 = vmatprep.subr.mxu0 0.0
      %2139 = vmatpush1.msra.mxu0 0.0
      %2140 = vmatprep.subr.mxu0 0.0
      %2141 = vmatpush1.msra.mxu0 0.0
      %2142 = vmatprep.subr.mxu0 0.0
      %2143 = vmatpush1.msra.mxu0 0.0
      %2144 = vmatprep.subr.mxu0 0.0
      %2145 = vmatpush1.msra.mxu0 0.0
      %2146 = vmatprep.subr.mxu0 0.0
      %2147 = vmatpush1.msra.mxu0 0.0
      %2148 = vmatprep.subr.mxu0 0.0
      %2149 = vmatpush1.msra.mxu0 0.0
      %2150 = vmatprep.subr.mxu0 0.0
      %2151 = vmatpush1.msra.mxu0 0.0
      %2152 = vmatprep.subr.mxu0 0.0
      %2153 = vmatpush1.msra.mxu0 0.0
      %2154 = vmatprep.subr.mxu0 0.0
      %2155 = vmatpush1.msra.mxu0 0.0
      %2156 = vmatprep.subr.mxu0 0.0
      %2157 = vmatpush1.msra.mxu0 0.0
      %2158 = vmatprep.subr.mxu0 0.0
      %2159 = vmatpush1.msra.mxu0 0.0
      %2160 = vmatprep.subr.mxu0 0.0
      %2161 = vmatpush1.msra.mxu0 0.0
      %2162 = vmatprep.subr.mxu0 0.0
      %2163 = vmatpush1.msra.mxu0 0.0
      %2164 = vmatprep.subr.mxu0 0.0
      %2165 = vmatpush1.msra.mxu0 0.0
      %2166 = vmatprep.subr.mxu0 0.0
      %2167 = vmatpush1.msra.mxu0 0.0
      %2168 = vmatprep.subr.mxu0 0.0
      %2169 = vmatpush1.msra.mxu0 0.0
      %2170 = vmatprep.subr.mxu0 0.0
      %2171 = vmatpush1.msra.mxu0 0.0
      %2172 = vmatprep.subr.mxu0 0.0
      %2173 = vmatpush1.msra.mxu0 0.0
      %2174 = vmatprep.subr.mxu0 0.0
      %2175 = vmatpush1.msra.mxu0 0.0
      %2176 = vmatprep.subr.mxu0 0.0
      %2177 = vmatpush1.msra.mxu0 0.0
      %2178 = vmatprep.subr.mxu0 0.0
      %2179 = vmatpush1.msra.mxu0 0.0
      %2180 = vmatprep.subr.mxu0 0.0
      %2181 = vmatpush1.msra.mxu0 0.0
      %2182 = vmatprep.subr.mxu0 0.0
      %2183 = vmatpush1.msra.mxu0 0.0
      %2184 = vmatprep.subr.mxu0 0.0
      %2185 = vmatpush1.msra.mxu0 0.0
      %2186 = vmatprep.subr.mxu0 0.0
      %2187 = vmatpush1.msra.mxu0 0.0
      %2188 = vmatprep.subr.mxu0 0.0
      %2189 = vmatpush1.msra.mxu0 0.0
      %2190 = vmatprep.subr.mxu0 0.0
      %2191 = vmatpush1.msra.mxu0 0.0
      %2192 = vmatprep.subr.mxu0 0.0
      %2193 = vmatpush1.msra.mxu0 0.0
      %2194 = vmatprep.subr.mxu0 0.0
      %2195 = vmatpush1.msra.mxu0 0.0
      %2196 = vmatprep.mubr.f32.mxu0 0.0
      %2197 = vmatmul.mubr.f32.gmra.mrb[0].mxu0 %v2059
      %v2198 = vpop.f32.mrb[0].mxu0
      %v2199 = vadd.f32 0.0, %v2198
      %v2200 = vpop.f32.mrb[0].mxu0
      %v2201 = vadd.f32 0.0, %v2200
      %2202 = vdwg.mxu0
      %2203 = vmatprep.subr.mxu0 %v2046
      %2204 = vmatpush1.msra.mxu0 %v2045
      %2205 = vmatprep.subr.mxu0 0.0
      %2206 = vmatpush1.msra.mxu0 0.0
      %2207 = vmatprep.subr.mxu0 0.0
      %2208 = vmatpush1.msra.mxu0 0.0
      %2209 = vmatprep.subr.mxu0 0.0
      %2210 = vmatpush1.msra.mxu0 0.0
      %2211 = vmatprep.subr.mxu0 0.0
      %2212 = vmatpush1.msra.mxu0 0.0
      %2213 = vmatprep.subr.mxu0 0.0
      %2214 = vmatpush1.msra.mxu0 0.0
      %2215 = vmatprep.subr.mxu0 0.0
      %2216 = vmatpush1.msra.mxu0 0.0
      %2217 = vmatprep.subr.mxu0 0.0
      %2218 = vmatpush1.msra.mxu0 0.0
      %2219 = vmatprep.subr.mxu0 0.0
      %2220 = vmatpush1.msra.mxu0 0.0
      %2221 = vmatprep.subr.mxu0 0.0
      %2222 = vmatpush1.msra.mxu0 0.0
      %2223 = vmatprep.subr.mxu0 0.0
      %2224 = vmatpush1.msra.mxu0 0.0
      %2225 = vmatprep.subr.mxu0 0.0
      %2226 = vmatpush1.msra.mxu0 0.0
      %2227 = vmatprep.subr.mxu0 0.0
      %2228 = vmatpush1.msra.mxu0 0.0
      %2229 = vmatprep.subr.mxu0 0.0
      %2230 = vmatpush1.msra.mxu0 0.0
      %2231 = vmatprep.subr.mxu0 0.0
      %2232 = vmatpush1.msra.mxu0 0.0
      %2233 = vmatprep.subr.mxu0 0.0
      %2234 = vmatpush1.msra.mxu0 0.0
      %2235 = vmatprep.subr.mxu0 0.0
      %2236 = vmatpush1.msra.mxu0 0.0
      %2237 = vmatprep.subr.mxu0 0.0
      %2238 = vmatpush1.msra.mxu0 0.0
      %2239 = vmatprep.subr.mxu0 0.0
      %2240 = vmatpush1.msra.mxu0 0.0
      %2241 = vmatprep.subr.mxu0 0.0
      %2242 = vmatpush1.msra.mxu0 0.0
      %2243 = vmatprep.subr.mxu0 0.0
      %2244 = vmatpush1.msra.mxu0 0.0
      %2245 = vmatprep.subr.mxu0 0.0
      %2246 = vmatpush1.msra.mxu0 0.0
      %2247 = vmatprep.subr.mxu0 0.0
      %2248 = vmatpush1.msra.mxu0 0.0
      %2249 = vmatprep.subr.mxu0 0.0
      %2250 = vmatpush1.msra.mxu0 0.0
      %2251 = vmatprep.subr.mxu0 0.0
      %2252 = vmatpush1.msra.mxu0 0.0
      %2253 = vmatprep.subr.mxu0 0.0
      %2254 = vmatpush1.msra.mxu0 0.0
      %2255 = vmatprep.subr.mxu0 0.0
      %2256 = vmatpush1.msra.mxu0 0.0
      %2257 = vmatprep.subr.mxu0 0.0
      %2258 = vmatpush1.msra.mxu0 0.0
      %2259 = vmatprep.subr.mxu0 0.0
      %2260 = vmatpush1.msra.mxu0 0.0
      %2261 = vmatprep.subr.mxu0 0.0
      %2262 = vmatpush1.msra.mxu0 0.0
      %2263 = vmatprep.subr.mxu0 0.0
      %2264 = vmatpush1.msra.mxu0 0.0
      %2265 = vmatprep.subr.mxu0 0.0
      %2266 = vmatpush1.msra.mxu0 0.0
      %2267 = vmatprep.mubr.f32.mxu0 0.0
      %2268 = vmatmul.mubr.f32.gmra.mrb[0].mxu0 %v2059
      %v2269 = vpop.f32.mrb[0].mxu0
      %v2270 = vadd.f32 0.0, %v2269
      %v2271 = vpop.f32.mrb[0].mxu0
      %v2272 = vadd.f32 0.0, %v2271
      %2273 = vdwg.mxu0
      %2274 = vmatprep.subr.mxu0 %v2048
      %2275 = vmatpush1.msra.mxu0 %v2047
      %2276 = vmatprep.subr.mxu0 0.0
      %2277 = vmatpush1.msra.mxu0 0.0
      %2278 = vmatprep.subr.mxu0 0.0
      %2279 = vmatpush1.msra.mxu0 0.0
      %2280 = vmatprep.subr.mxu0 0.0
      %2281 = vmatpush1.msra.mxu0 0.0
      %2282 = vmatprep.subr.mxu0 0.0
      %2283 = vmatpush1.msra.mxu0 0.0
      %2284 = vmatprep.subr.mxu0 0.0
      %2285 = vmatpush1.msra.mxu0 0.0
      %2286 = vmatprep.subr.mxu0 0.0
      %2287 = vmatpush1.msra.mxu0 0.0
      %2288 = vmatprep.subr.mxu0 0.0
      %2289 = vmatpush1.msra.mxu0 0.0
      %2290 = vmatprep.subr.mxu0 0.0
      %2291 = vmatpush1.msra.mxu0 0.0
      %2292 = vmatprep.subr.mxu0 0.0
      %2293 = vmatpush1.msra.mxu0 0.0
      %2294 = vmatprep.subr.mxu0 0.0
      %2295 = vmatpush1.msra.mxu0 0.0
      %2296 = vmatprep.subr.mxu0 0.0
      %2297 = vmatpush1.msra.mxu0 0.0
      %2298 = vmatprep.subr.mxu0 0.0
      %2299 = vmatpush1.msra.mxu0 0.0
      %2300 = vmatprep.subr.mxu0 0.0
      %2301 = vmatpush1.msra.mxu0 0.0
      %2302 = vmatprep.subr.mxu0 0.0
      %2303 = vmatpush1.msra.mxu0 0.0
      %2304 = vmatprep.subr.mxu0 0.0
      %2305 = vmatpush1.msra.mxu0 0.0
      %2306 = vmatprep.subr.mxu0 0.0
      %2307 = vmatpush1.msra.mxu0 0.0
      %2308 = vmatprep.subr.mxu0 0.0
      %2309 = vmatpush1.msra.mxu0 0.0
      %2310 = vmatprep.subr.mxu0 0.0
      %2311 = vmatpush1.msra.mxu0 0.0
      %2312 = vmatprep.subr.mxu0 0.0
      %2313 = vmatpush1.msra.mxu0 0.0
      %2314 = vmatprep.subr.mxu0 0.0
      %2315 = vmatpush1.msra.mxu0 0.0
      %2316 = vmatprep.subr.mxu0 0.0
      %2317 = vmatpush1.msra.mxu0 0.0
      %2318 = vmatprep.subr.mxu0 0.0
      %2319 = vmatpush1.msra.mxu0 0.0
      %2320 = vmatprep.subr.mxu0 0.0
      %2321 = vmatpush1.msra.mxu0 0.0
      %2322 = vmatprep.subr.mxu0 0.0
      %2323 = vmatpush1.msra.mxu0 0.0
      %2324 = vmatprep.subr.mxu0 0.0
      %2325 = vmatpush1.msra.mxu0 0.0
      %2326 = vmatprep.subr.mxu0 0.0
      %2327 = vmatpush1.msra.mxu0 0.0
      %2328 = vmatprep.subr.mxu0 0.0
      %2329 = vmatpush1.msra.mxu0 0.0
      %2330 = vmatprep.subr.mxu0 0.0
      %2331 = vmatpush1.msra.mxu0 0.0
      %2332 = vmatprep.subr.mxu0 0.0
      %2333 = vmatpush1.msra.mxu0 0.0
      %2334 = vmatprep.subr.mxu0 0.0
      %2335 = vmatpush1.msra.mxu0 0.0
      %2336 = vmatprep.subr.mxu0 0.0
      %2337 = vmatpush1.msra.mxu0 0.0
      %2338 = vmatprep.mubr.f32.mxu0 0.0
      %2339 = vmatmul.mubr.f32.gmra.mrb[0].mxu0 %v2059
      %v2340 = vpop.f32.mrb[0].mxu0
      %v2341 = vadd.f32 0.0, %v2340
      %v2342 = vpop.f32.mrb[0].mxu0
      %v2343 = vadd.f32 0.0, %v2342
      %2344 = vdwg.mxu0
      %2345 = vmatprep.subr.mxu0 0.0
      %2346 = vmatpush1.msra.mxu0 %v2039
      %2347 = vmatprep.subr.mxu0 0.0
      %2348 = vmatpush1.msra.mxu0 0.0
      %2349 = vmatprep.subr.mxu0 0.0
      %2350 = vmatpush1.msra.mxu0 0.0
      %2351 = vmatprep.subr.mxu0 0.0
      %2352 = vmatpush1.msra.mxu0 0.0
      %2353 = vmatprep.subr.mxu0 0.0
      %2354 = vmatpush1.msra.mxu0 0.0
      %2355 = vmatprep.subr.mxu0 0.0
      %2356 = vmatpush1.msra.mxu0 0.0
      %2357 = vmatprep.subr.mxu0 0.0
      %2358 = vmatpush1.msra.mxu0 0.0
      %2359 = vmatprep.subr.mxu0 0.0
      %2360 = vmatpush1.msra.mxu0 0.0
      %2361 = vmatprep.subr.mxu0 0.0
      %2362 = vmatpush1.msra.mxu0 0.0
      %2363 = vmatprep.subr.mxu0 0.0
      %2364 = vmatpush1.msra.mxu0 0.0
      %2365 = vmatprep.subr.mxu0 0.0
      %2366 = vmatpush1.msra.mxu0 0.0
      %2367 = vmatprep.subr.mxu0 0.0
      %2368 = vmatpush1.msra.mxu0 0.0
      %2369 = vmatprep.subr.mxu0 0.0
      %2370 = vmatpush1.msra.mxu0 0.0
      %2371 = vmatprep.subr.mxu0 0.0
      %2372 = vmatpush1.msra.mxu0 0.0
      %2373 = vmatprep.subr.mxu0 0.0
      %2374 = vmatpush1.msra.mxu0 0.0
      %2375 = vmatprep.subr.mxu0 0.0
      %2376 = vmatpush1.msra.mxu0 0.0
      %2377 = vmatprep.subr.mxu0 0.0
      %2378 = vmatpush1.msra.mxu0 0.0
      %2379 = vmatprep.subr.mxu0 0.0
      %2380 = vmatpush1.msra.mxu0 0.0
      %2381 = vmatprep.subr.mxu0 0.0
      %2382 = vmatpush1.msra.mxu0 0.0
      %2383 = vmatprep.subr.mxu0 0.0
      %2384 = vmatpush1.msra.mxu0 0.0
      %2385 = vmatprep.subr.mxu0 0.0
      %2386 = vmatpush1.msra.mxu0 0.0
      %2387 = vmatprep.subr.mxu0 0.0
      %2388 = vmatpush1.msra.mxu0 0.0
      %2389 = vmatprep.subr.mxu0 0.0
      %2390 = vmatpush1.msra.mxu0 0.0
      %2391 = vmatprep.subr.mxu0 0.0
      %2392 = vmatpush1.msra.mxu0 0.0
      %2393 = vmatprep.subr.mxu0 0.0
      %2394 = vmatpush1.msra.mxu0 0.0
      %2395 = vmatprep.subr.mxu0 0.0
      %2396 = vmatpush1.msra.mxu0 0.0
      %2397 = vmatprep.subr.mxu0 0.0
      %2398 = vmatpush1.msra.mxu0 0.0
      %2399 = vmatprep.subr.mxu0 0.0
      %2400 = vmatpush1.msra.mxu0 0.0
      %2401 = vmatprep.subr.mxu0 0.0
      %2402 = vmatpush1.msra.mxu0 0.0
      %2403 = vmatprep.subr.mxu0 0.0
      %2404 = vmatpush1.msra.mxu0 0.0
      %2405 = vmatprep.subr.mxu0 0.0
      %2406 = vmatpush1.msra.mxu0 0.0
      %2407 = vmatprep.subr.mxu0 0.0
      %2408 = vmatpush1.msra.mxu0 0.0
      %2409 = vmatprep.mubr.f32.mxu0 0.0
      %2410 = vmatmul.mubr.f32.gmra.mrb[0].mxu0 %v2059
      %v2411 = vpop.f32.mrb[0].mxu0
      %v2412 = vadd.f32 0.0, %v2411
      %v2413 = vpop.f32.mrb[0].mxu0
      %2414 = vdwg.mxu0
      %v2415 = vadd.f32 %v2011, %v2128
      %v2416 = vadd.f32 %v2012, %v2130
      %v2417 = vadd.f32 %v2013, %v2199
      %v2418 = vadd.f32 %v2014, %v2201
      %v2419 = vadd.f32 %v2015, %v2270
      %v2420 = vadd.f32 %v2016, %v2272
      %v2421 = vadd.f32 %v2017, %v2341
      %v2422 = vadd.f32 %v2018, %v2343
      %v2423 = vadd.f32 %v2019, %v2412
      %s2424 = scalar_lea.vmem %s1, 40
      %v2425 = vld [vmem:[%s2424] sm:$0xff]
      %2426 = vrot.lane.b32.xlu0 %v453, 92
      %v2427 = vpop.permute.xlu0 %2426
      %2428 = vrot.lane.b32.xlu0 %v436, 92
      %v2429 = vpop.permute.xlu0 %2428
      %2430 = vrot.lane.b32.xlu0 %v437, 92
      %v2431 = vpop.permute.xlu0 %2430
      %2432 = vrot.lane.b32.xlu0 %v438, 92
      %v2433 = vpop.permute.xlu0 %2432
      %2434 = vrot.lane.b32.xlu0 %v439, 92
      %v2435 = vpop.permute.xlu0 %2434
      %2436 = vrot.lane.b32.xlu0 %v440, 92
      %v2437 = vpop.permute.xlu0 %2436
      %2438 = vrot.lane.b32.xlu0 %v441, 92
      %v2439 = vpop.permute.xlu0 %2438
      %2440 = vrot.lane.b32.xlu0 %v442, 92
      %v2441 = vpop.permute.xlu0 %2440
      %2442 = vrot.lane.b32.xlu0 %v455, 92
      %v2443 = vpop.permute.xlu0 %2442
      %vm2444 = vcmask 752640
      %v2445 = vsel %vm2444, %v2427, %v2429
      %v2446 = vsel %vm2444, %v2429, %v2431
      %v2447 = vsel %vm2444, %v2431, %v2433
      %v2448 = vsel %vm2444, %v2433, %v2435
      %v2449 = vsel %vm2444, %v2435, %v2437
      %v2450 = vsel %vm2444, %v2437, %v2439
      %v2451 = vsel %vm2444, %v2439, %v2441
      %v2452 = vsel %vm2444, %v2441, %v2443
      %v2463 = vsel %vm497, %v2425, 0
      %2465 = vmatprep.subr.mxu0 %v2446
      %2466 = vmatpush1.msra.mxu0 %v2445
      %2467 = vmatprep.subr.mxu0 0.0
      %2468 = vmatpush1.msra.mxu0 0.0
      %2469 = vmatprep.subr.mxu0 0.0
      %2470 = vmatpush1.msra.mxu0 0.0
      %2471 = vmatprep.subr.mxu0 0.0
      %2472 = vmatpush1.msra.mxu0 0.0
      %2473 = vmatprep.subr.mxu0 0.0
      %2474 = vmatpush1.msra.mxu0 0.0
      %2475 = vmatprep.subr.mxu0 0.0
      %2476 = vmatpush1.msra.mxu0 0.0
      %2477 = vmatprep.subr.mxu0 0.0
      %2478 = vmatpush1.msra.mxu0 0.0
      %2479 = vmatprep.subr.mxu0 0.0
      %2480 = vmatpush1.msra.mxu0 0.0
      %2481 = vmatprep.subr.mxu0 0.0
      %2482 = vmatpush1.msra.mxu0 0.0
      %2483 = vmatprep.subr.mxu0 0.0
      %2484 = vmatpush1.msra.mxu0 0.0
      %2485 = vmatprep.subr.mxu0 0.0
      %2486 = vmatpush1.msra.mxu0 0.0
      %2487 = vmatprep.subr.mxu0 0.0
      %2488 = vmatpush1.msra.mxu0 0.0
      %2489 = vmatprep.subr.mxu0 0.0
      %2490 = vmatpush1.msra.mxu0 0.0
      %2491 = vmatprep.subr.mxu0 0.0
      %2492 = vmatpush1.msra.mxu0 0.0
      %2493 = vmatprep.subr.mxu0 0.0
      %2494 = vmatpush1.msra.mxu0 0.0
      %2495 = vmatprep.subr.mxu0 0.0
      %2496 = vmatpush1.msra.mxu0 0.0
      %2497 = vmatprep.subr.mxu0 0.0
      %2498 = vmatpush1.msra.mxu0 0.0
      %2499 = vmatprep.subr.mxu0 0.0
      %2500 = vmatpush1.msra.mxu0 0.0
      %2501 = vmatprep.subr.mxu0 0.0
      %2502 = vmatpush1.msra.mxu0 0.0
      %2503 = vmatprep.subr.mxu0 0.0
      %2504 = vmatpush1.msra.mxu0 0.0
      %2505 = vmatprep.subr.mxu0 0.0
      %2506 = vmatpush1.msra.mxu0 0.0
      %2507 = vmatprep.subr.mxu0 0.0
      %2508 = vmatpush1.msra.mxu0 0.0
      %2509 = vmatprep.subr.mxu0 0.0
      %2510 = vmatpush1.msra.mxu0 0.0
      %2511 = vmatprep.subr.mxu0 0.0
      %2512 = vmatpush1.msra.mxu0 0.0
      %2513 = vmatprep.subr.mxu0 0.0
      %2514 = vmatpush1.msra.mxu0 0.0
      %2515 = vmatprep.subr.mxu0 0.0
      %2516 = vmatpush1.msra.mxu0 0.0
      %2517 = vmatprep.subr.mxu0 0.0
      %2518 = vmatpush1.msra.mxu0 0.0
      %2519 = vmatprep.subr.mxu0 0.0
      %2520 = vmatpush1.msra.mxu0 0.0
      %2521 = vmatprep.subr.mxu0 0.0
      %2522 = vmatpush1.msra.mxu0 0.0
      %2523 = vmatprep.subr.mxu0 0.0
      %2524 = vmatpush1.msra.mxu0 0.0
      %2525 = vmatprep.subr.mxu0 0.0
      %2526 = vmatpush1.msra.mxu0 0.0
      %2527 = vmatprep.subr.mxu0 0.0
      %2528 = vmatpush1.msra.mxu0 0.0
      %2529 = vmatprep.mubr.f32.mxu0 0.0
      %2530 = vmatmul.mubr.f32.gmra.mrb[0].mxu0 %v2463
      %v2531 = vpop.f32.mrb[0].mxu0
      %v2532 = vadd.f32 0.0, %v2531
      %v2533 = vpop.f32.mrb[0].mxu0
      %v2534 = vadd.f32 0.0, %v2533
      %2535 = vdwg.mxu0
      %2536 = vmatprep.subr.mxu0 %v2448
      %2537 = vmatpush1.msra.mxu0 %v2447
      %2538 = vmatprep.subr.mxu0 0.0
      %2539 = vmatpush1.msra.mxu0 0.0
      %2540 = vmatprep.subr.mxu0 0.0
      %2541 = vmatpush1.msra.mxu0 0.0
      %2542 = vmatprep.subr.mxu0 0.0
      %2543 = vmatpush1.msra.mxu0 0.0
      %2544 = vmatprep.subr.mxu0 0.0
      %2545 = vmatpush1.msra.mxu0 0.0
      %2546 = vmatprep.subr.mxu0 0.0
      %2547 = vmatpush1.msra.mxu0 0.0
      %2548 = vmatprep.subr.mxu0 0.0
      %2549 = vmatpush1.msra.mxu0 0.0
      %2550 = vmatprep.subr.mxu0 0.0
      %2551 = vmatpush1.msra.mxu0 0.0
      %2552 = vmatprep.subr.mxu0 0.0
      %2553 = vmatpush1.msra.mxu0 0.0
      %2554 = vmatprep.subr.mxu0 0.0
      %2555 = vmatpush1.msra.mxu0 0.0
      %2556 = vmatprep.subr.mxu0 0.0
      %2557 = vmatpush1.msra.mxu0 0.0
      %2558 = vmatprep.subr.mxu0 0.0
      %2559 = vmatpush1.msra.mxu0 0.0
      %2560 = vmatprep.subr.mxu0 0.0
      %2561 = vmatpush1.msra.mxu0 0.0
      %2562 = vmatprep.subr.mxu0 0.0
      %2563 = vmatpush1.msra.mxu0 0.0
      %2564 = vmatprep.subr.mxu0 0.0
      %2565 = vmatpush1.msra.mxu0 0.0
      %2566 = vmatprep.subr.mxu0 0.0
      %2567 = vmatpush1.msra.mxu0 0.0
      %2568 = vmatprep.subr.mxu0 0.0
      %2569 = vmatpush1.msra.mxu0 0.0
      %2570 = vmatprep.subr.mxu0 0.0
      %2571 = vmatpush1.msra.mxu0 0.0
      %2572 = vmatprep.subr.mxu0 0.0
      %2573 = vmatpush1.msra.mxu0 0.0
      %2574 = vmatprep.subr.mxu0 0.0
      %2575 = vmatpush1.msra.mxu0 0.0
      %2576 = vmatprep.subr.mxu0 0.0
      %2577 = vmatpush1.msra.mxu0 0.0
      %2578 = vmatprep.subr.mxu0 0.0
      %2579 = vmatpush1.msra.mxu0 0.0
      %2580 = vmatprep.subr.mxu0 0.0
      %2581 = vmatpush1.msra.mxu0 0.0
      %2582 = vmatprep.subr.mxu0 0.0
      %2583 = vmatpush1.msra.mxu0 0.0
      %2584 = vmatprep.subr.mxu0 0.0
      %2585 = vmatpush1.msra.mxu0 0.0
      %2586 = vmatprep.subr.mxu0 0.0
      %2587 = vmatpush1.msra.mxu0 0.0
      %2588 = vmatprep.subr.mxu0 0.0
      %2589 = vmatpush1.msra.mxu0 0.0
      %2590 = vmatprep.subr.mxu0 0.0
      %2591 = vmatpush1.msra.mxu0 0.0
      %2592 = vmatprep.subr.mxu0 0.0
      %2593 = vmatpush1.msra.mxu0 0.0
      %2594 = vmatprep.subr.mxu0 0.0
      %2595 = vmatpush1.msra.mxu0 0.0
      %2596 = vmatprep.subr.mxu0 0.0
      %2597 = vmatpush1.msra.mxu0 0.0
      %2598 = vmatprep.subr.mxu0 0.0
      %2599 = vmatpush1.msra.mxu0 0.0
      %2600 = vmatprep.mubr.f32.mxu0 0.0
      %2601 = vmatmul.mubr.f32.gmra.mrb[0].mxu0 %v2463
      %v2602 = vpop.f32.mrb[0].mxu0
      %v2603 = vadd.f32 0.0, %v2602
      %v2604 = vpop.f32.mrb[0].mxu0
      %v2605 = vadd.f32 0.0, %v2604
      %2606 = vdwg.mxu0
      %2607 = vmatprep.subr.mxu0 %v2450
      %2608 = vmatpush1.msra.mxu0 %v2449
      %2609 = vmatprep.subr.mxu0 0.0
      %2610 = vmatpush1.msra.mxu0 0.0
      %2611 = vmatprep.subr.mxu0 0.0
      %2612 = vmatpush1.msra.mxu0 0.0
      %2613 = vmatprep.subr.mxu0 0.0
      %2614 = vmatpush1.msra.mxu0 0.0
      %2615 = vmatprep.subr.mxu0 0.0
      %2616 = vmatpush1.msra.mxu0 0.0
      %2617 = vmatprep.subr.mxu0 0.0
      %2618 = vmatpush1.msra.mxu0 0.0
      %2619 = vmatprep.subr.mxu0 0.0
      %2620 = vmatpush1.msra.mxu0 0.0
      %2621 = vmatprep.subr.mxu0 0.0
      %2622 = vmatpush1.msra.mxu0 0.0
      %2623 = vmatprep.subr.mxu0 0.0
      %2624 = vmatpush1.msra.mxu0 0.0
      %2625 = vmatprep.subr.mxu0 0.0
      %2626 = vmatpush1.msra.mxu0 0.0
      %2627 = vmatprep.subr.mxu0 0.0
      %2628 = vmatpush1.msra.mxu0 0.0
      %2629 = vmatprep.subr.mxu0 0.0
      %2630 = vmatpush1.msra.mxu0 0.0
      %2631 = vmatprep.subr.mxu0 0.0
      %2632 = vmatpush1.msra.mxu0 0.0
      %2633 = vmatprep.subr.mxu0 0.0
      %2634 = vmatpush1.msra.mxu0 0.0
      %2635 = vmatprep.subr.mxu0 0.0
      %2636 = vmatpush1.msra.mxu0 0.0
      %2637 = vmatprep.subr.mxu0 0.0
      %2638 = vmatpush1.msra.mxu0 0.0
      %2639 = vmatprep.subr.mxu0 0.0
      %2640 = vmatpush1.msra.mxu0 0.0
      %2641 = vmatprep.subr.mxu0 0.0
      %2642 = vmatpush1.msra.mxu0 0.0
      %2643 = vmatprep.subr.mxu0 0.0
      %2644 = vmatpush1.msra.mxu0 0.0
      %2645 = vmatprep.subr.mxu0 0.0
      %2646 = vmatpush1.msra.mxu0 0.0
      %2647 = vmatprep.subr.mxu0 0.0
      %2648 = vmatpush1.msra.mxu0 0.0
      %2649 = vmatprep.subr.mxu0 0.0
      %2650 = vmatpush1.msra.mxu0 0.0
      %2651 = vmatprep.subr.mxu0 0.0
      %2652 = vmatpush1.msra.mxu0 0.0
      %2653 = vmatprep.subr.mxu0 0.0
      %2654 = vmatpush1.msra.mxu0 0.0
      %2655 = vmatprep.subr.mxu0 0.0
      %2656 = vmatpush1.msra.mxu0 0.0
      %2657 = vmatprep.subr.mxu0 0.0
      %2658 = vmatpush1.msra.mxu0 0.0
      %2659 = vmatprep.subr.mxu0 0.0
      %2660 = vmatpush1.msra.mxu0 0.0
      %2661 = vmatprep.subr.mxu0 0.0
      %2662 = vmatpush1.msra.mxu0 0.0
      %2663 = vmatprep.subr.mxu0 0.0
      %2664 = vmatpush1.msra.mxu0 0.0
      %2665 = vmatprep.subr.mxu0 0.0
      %2666 = vmatpush1.msra.mxu0 0.0
      %2667 = vmatprep.subr.mxu0 0.0
      %2668 = vmatpush1.msra.mxu0 0.0
      %2669 = vmatprep.subr.mxu0 0.0
      %2670 = vmatpush1.msra.mxu0 0.0
      %2671 = vmatprep.mubr.f32.mxu0 0.0
      %2672 = vmatmul.mubr.f32.gmra.mrb[0].mxu0 %v2463
      %v2673 = vpop.f32.mrb[0].mxu0
      %v2674 = vadd.f32 0.0, %v2673
      %v2675 = vpop.f32.mrb[0].mxu0
      %v2676 = vadd.f32 0.0, %v2675
      %2677 = vdwg.mxu0
      %2678 = vmatprep.subr.mxu0 %v2452
      %2679 = vmatpush1.msra.mxu0 %v2451
      %2680 = vmatprep.subr.mxu0 0.0
      %2681 = vmatpush1.msra.mxu0 0.0
      %2682 = vmatprep.subr.mxu0 0.0
      %2683 = vmatpush1.msra.mxu0 0.0
      %2684 = vmatprep.subr.mxu0 0.0
      %2685 = vmatpush1.msra.mxu0 0.0
      %2686 = vmatprep.subr.mxu0 0.0
      %2687 = vmatpush1.msra.mxu0 0.0
      %2688 = vmatprep.subr.mxu0 0.0
      %2689 = vmatpush1.msra.mxu0 0.0
      %2690 = vmatprep.subr.mxu0 0.0
      %2691 = vmatpush1.msra.mxu0 0.0
      %2692 = vmatprep.subr.mxu0 0.0
      %2693 = vmatpush1.msra.mxu0 0.0
      %2694 = vmatprep.subr.mxu0 0.0
      %2695 = vmatpush1.msra.mxu0 0.0
      %2696 = vmatprep.subr.mxu0 0.0
      %2697 = vmatpush1.msra.mxu0 0.0
      %2698 = vmatprep.subr.mxu0 0.0
      %2699 = vmatpush1.msra.mxu0 0.0
      %2700 = vmatprep.subr.mxu0 0.0
      %2701 = vmatpush1.msra.mxu0 0.0
      %2702 = vmatprep.subr.mxu0 0.0
      %2703 = vmatpush1.msra.mxu0 0.0
      %2704 = vmatprep.subr.mxu0 0.0
      %2705 = vmatpush1.msra.mxu0 0.0
      %2706 = vmatprep.subr.mxu0 0.0
      %2707 = vmatpush1.msra.mxu0 0.0
      %2708 = vmatprep.subr.mxu0 0.0
      %2709 = vmatpush1.msra.mxu0 0.0
      %2710 = vmatprep.subr.mxu0 0.0
      %2711 = vmatpush1.msra.mxu0 0.0
      %2712 = vmatprep.subr.mxu0 0.0
      %2713 = vmatpush1.msra.mxu0 0.0
      %2714 = vmatprep.subr.mxu0 0.0
      %2715 = vmatpush1.msra.mxu0 0.0
      %2716 = vmatprep.subr.mxu0 0.0
      %2717 = vmatpush1.msra.mxu0 0.0
      %2718 = vmatprep.subr.mxu0 0.0
      %2719 = vmatpush1.msra.mxu0 0.0
      %2720 = vmatprep.subr.mxu0 0.0
      %2721 = vmatpush1.msra.mxu0 0.0
      %2722 = vmatprep.subr.mxu0 0.0
      %2723 = vmatpush1.msra.mxu0 0.0
      %2724 = vmatprep.subr.mxu0 0.0
      %2725 = vmatpush1.msra.mxu0 0.0
      %2726 = vmatprep.subr.mxu0 0.0
      %2727 = vmatpush1.msra.mxu0 0.0
      %2728 = vmatprep.subr.mxu0 0.0
      %2729 = vmatpush1.msra.mxu0 0.0
      %2730 = vmatprep.subr.mxu0 0.0
      %2731 = vmatpush1.msra.mxu0 0.0
      %2732 = vmatprep.subr.mxu0 0.0
      %2733 = vmatpush1.msra.mxu0 0.0
      %2734 = vmatprep.subr.mxu0 0.0
      %2735 = vmatpush1.msra.mxu0 0.0
      %2736 = vmatprep.subr.mxu0 0.0
      %2737 = vmatpush1.msra.mxu0 0.0
      %2738 = vmatprep.subr.mxu0 0.0
      %2739 = vmatpush1.msra.mxu0 0.0
      %2740 = vmatprep.subr.mxu0 0.0
      %2741 = vmatpush1.msra.mxu0 0.0
      %2742 = vmatprep.mubr.f32.mxu0 0.0
      %2743 = vmatmul.mubr.f32.gmra.mrb[0].mxu0 %v2463
      %v2744 = vpop.f32.mrb[0].mxu0
      %v2745 = vadd.f32 0.0, %v2744
      %v2746 = vpop.f32.mrb[0].mxu0
      %v2747 = vadd.f32 0.0, %v2746
      %2748 = vdwg.mxu0
      %2749 = vmatprep.subr.mxu0 0.0
      %2750 = vmatpush1.msra.mxu0 %v2443
      %2751 = vmatprep.subr.mxu0 0.0
      %2752 = vmatpush1.msra.mxu0 0.0
      %2753 = vmatprep.subr.mxu0 0.0
      %2754 = vmatpush1.msra.mxu0 0.0
      %2755 = vmatprep.subr.mxu0 0.0
      %2756 = vmatpush1.msra.mxu0 0.0
      %2757 = vmatprep.subr.mxu0 0.0
      %2758 = vmatpush1.msra.mxu0 0.0
      %2759 = vmatprep.subr.mxu0 0.0
      %2760 = vmatpush1.msra.mxu0 0.0
      %2761 = vmatprep.subr.mxu0 0.0
      %2762 = vmatpush1.msra.mxu0 0.0
      %2763 = vmatprep.subr.mxu0 0.0
      %2764 = vmatpush1.msra.mxu0 0.0
      %2765 = vmatprep.subr.mxu0 0.0
      %2766 = vmatpush1.msra.mxu0 0.0
      %2767 = vmatprep.subr.mxu0 0.0
      %2768 = vmatpush1.msra.mxu0 0.0
      %2769 = vmatprep.subr.mxu0 0.0
      %2770 = vmatpush1.msra.mxu0 0.0
      %2771 = vmatprep.subr.mxu0 0.0
      %2772 = vmatpush1.msra.mxu0 0.0
      %2773 = vmatprep.subr.mxu0 0.0
      %2774 = vmatpush1.msra.mxu0 0.0
      %2775 = vmatprep.subr.mxu0 0.0
      %2776 = vmatpush1.msra.mxu0 0.0
      %2777 = vmatprep.subr.mxu0 0.0
      %2778 = vmatpush1.msra.mxu0 0.0
      %2779 = vmatprep.subr.mxu0 0.0
      %2780 = vmatpush1.msra.mxu0 0.0
      %2781 = vmatprep.subr.mxu0 0.0
      %2782 = vmatpush1.msra.mxu0 0.0
      %2783 = vmatprep.subr.mxu0 0.0
      %2784 = vmatpush1.msra.mxu0 0.0
      %2785 = vmatprep.subr.mxu0 0.0
      %2786 = vmatpush1.msra.mxu0 0.0
      %2787 = vmatprep.subr.mxu0 0.0
      %2788 = vmatpush1.msra.mxu0 0.0
      %2789 = vmatprep.subr.mxu0 0.0
      %2790 = vmatpush1.msra.mxu0 0.0
      %2791 = vmatprep.subr.mxu0 0.0
      %2792 = vmatpush1.msra.mxu0 0.0
      %2793 = vmatprep.subr.mxu0 0.0
      %2794 = vmatpush1.msra.mxu0 0.0
      %2795 = vmatprep.subr.mxu0 0.0
      %2796 = vmatpush1.msra.mxu0 0.0
      %2797 = vmatprep.subr.mxu0 0.0
      %2798 = vmatpush1.msra.mxu0 0.0
      %2799 = vmatprep.subr.mxu0 0.0
      %2800 = vmatpush1.msra.mxu0 0.0
      %2801 = vmatprep.subr.mxu0 0.0
      %2802 = vmatpush1.msra.mxu0 0.0
      %2803 = vmatprep.subr.mxu0 0.0
      %2804 = vmatpush1.msra.mxu0 0.0
      %2805 = vmatprep.subr.mxu0 0.0
      %2806 = vmatpush1.msra.mxu0 0.0
      %2807 = vmatprep.subr.mxu0 0.0
      %2808 = vmatpush1.msra.mxu0 0.0
      %2809 = vmatprep.subr.mxu0 0.0
      %2810 = vmatpush1.msra.mxu0 0.0
      %2811 = vmatprep.subr.mxu0 0.0
      %2812 = vmatpush1.msra.mxu0 0.0
      %2813 = vmatprep.mubr.f32.mxu0 0.0
      %2814 = vmatmul.mubr.f32.gmra.mrb[0].mxu0 %v2463
      %v2815 = vpop.f32.mrb[0].mxu0
      %v2816 = vadd.f32 0.0, %v2815
      %v2817 = vpop.f32.mrb[0].mxu0
      %2818 = vdwg.mxu0
      %v2819 = vadd.f32 %v2415, %v2532
      %v2820 = vadd.f32 %v2416, %v2534
      %v2821 = vadd.f32 %v2417, %v2603
      %v2822 = vadd.f32 %v2418, %v2605
      %v2823 = vadd.f32 %v2419, %v2674
      %v2824 = vadd.f32 %v2420, %v2676
      %v2825 = vadd.f32 %v2421, %v2745
      %v2826 = vadd.f32 %v2422, %v2747
      %v2827 = vadd.f32 %v2423, %v2816
      %s2828 = scalar_lea.vmem %s1, 48
      %v2829 = vld [vmem:[%s2828] sm:$0xff]
      %2831 = vrot.lane.b32.xlu0 %v453, 60
      %v2832 = vpop.permute.xlu0 %2831
      %2833 = vrot.lane.b32.xlu0 %v436, 60
      %v2834 = vpop.permute.xlu0 %2833
      %2835 = vrot.lane.b32.xlu0 %v437, 60
      %v2836 = vpop.permute.xlu0 %2835
      %2837 = vrot.lane.b32.xlu0 %v438, 60
      %v2838 = vpop.permute.xlu0 %2837
      %2839 = vrot.lane.b32.xlu0 %v439, 60
      %v2840 = vpop.permute.xlu0 %2839
      %2841 = vrot.lane.b32.xlu0 %v440, 60
      %v2842 = vpop.permute.xlu0 %2841
      %2843 = vrot.lane.b32.xlu0 %v441, 60
      %v2844 = vpop.permute.xlu0 %2843
      %2845 = vrot.lane.b32.xlu0 %v442, 60
      %v2846 = vpop.permute.xlu0 %2845
      %2847 = vrot.lane.b32.xlu0 %v455, 60
      %v2848 = vpop.permute.xlu0 %2847
      %2849 = vrot.lane.b32.xlu0 0.0, 60
      %v2850 = vpop.permute.xlu0 %2849
      %vm2851 = vcmask 490496
      %v2852 = vsel %vm2851, %v2832, %v2834
      %v2853 = vsel %vm2851, %v2834, %v2836
      %v2854 = vsel %vm2851, %v2836, %v2838
      %v2855 = vsel %vm2851, %v2838, %v2840
      %v2856 = vsel %vm2851, %v2840, %v2842
      %v2857 = vsel %vm2851, %v2842, %v2844
      %v2858 = vsel %vm2851, %v2844, %v2846
      %v2859 = vsel %vm2851, %v2846, %v2848
      %v2860 = vsel %vm2851, %v2848, %v2850
      %v2871 = vsel %vm497, %v2829, 0
      %2873 = vmatprep.subr.mxu0 %v2853
      %2874 = vmatpush1.msra.mxu0 %v2852
      %2875 = vmatprep.subr.mxu0 0.0
      %2876 = vmatpush1.msra.mxu0 0.0
      %2877 = vmatprep.subr.mxu0 0.0
      %2878 = vmatpush1.msra.mxu0 0.0
      %2879 = vmatprep.subr.mxu0 0.0
      %2880 = vmatpush1.msra.mxu0 0.0
      %2881 = vmatprep.subr.mxu0 0.0
      %2882 = vmatpush1.msra.mxu0 0.0
      %2883 = vmatprep.subr.mxu0 0.0
      %2884 = vmatpush1.msra.mxu0 0.0
      %2885 = vmatprep.subr.mxu0 0.0
      %2886 = vmatpush1.msra.mxu0 0.0
      %2887 = vmatprep.subr.mxu0 0.0
      %2888 = vmatpush1.msra.mxu0 0.0
      %2889 = vmatprep.subr.mxu0 0.0
      %2890 = vmatpush1.msra.mxu0 0.0
      %2891 = vmatprep.subr.mxu0 0.0
      %2892 = vmatpush1.msra.mxu0 0.0
      %2893 = vmatprep.subr.mxu0 0.0
      %2894 = vmatpush1.msra.mxu0 0.0
      %2895 = vmatprep.subr.mxu0 0.0
      %2896 = vmatpush1.msra.mxu0 0.0
      %2897 = vmatprep.subr.mxu0 0.0
      %2898 = vmatpush1.msra.mxu0 0.0
      %2899 = vmatprep.subr.mxu0 0.0
      %2900 = vmatpush1.msra.mxu0 0.0
      %2901 = vmatprep.subr.mxu0 0.0
      %2902 = vmatpush1.msra.mxu0 0.0
      %2903 = vmatprep.subr.mxu0 0.0
      %2904 = vmatpush1.msra.mxu0 0.0
      %2905 = vmatprep.subr.mxu0 0.0
      %2906 = vmatpush1.msra.mxu0 0.0
      %2907 = vmatprep.subr.mxu0 0.0
      %2908 = vmatpush1.msra.mxu0 0.0
      %2909 = vmatprep.subr.mxu0 0.0
      %2910 = vmatpush1.msra.mxu0 0.0
      %2911 = vmatprep.subr.mxu0 0.0
      %2912 = vmatpush1.msra.mxu0 0.0
      %2913 = vmatprep.subr.mxu0 0.0
      %2914 = vmatpush1.msra.mxu0 0.0
      %2915 = vmatprep.subr.mxu0 0.0
      %2916 = vmatpush1.msra.mxu0 0.0
      %2917 = vmatprep.subr.mxu0 0.0
      %2918 = vmatpush1.msra.mxu0 0.0
      %2919 = vmatprep.subr.mxu0 0.0
      %2920 = vmatpush1.msra.mxu0 0.0
      %2921 = vmatprep.subr.mxu0 0.0
      %2922 = vmatpush1.msra.mxu0 0.0
      %2923 = vmatprep.subr.mxu0 0.0
      %2924 = vmatpush1.msra.mxu0 0.0
      %2925 = vmatprep.subr.mxu0 0.0
      %2926 = vmatpush1.msra.mxu0 0.0
      %2927 = vmatprep.subr.mxu0 0.0
      %2928 = vmatpush1.msra.mxu0 0.0
      %2929 = vmatprep.subr.mxu0 0.0
      %2930 = vmatpush1.msra.mxu0 0.0
      %2931 = vmatprep.subr.mxu0 0.0
      %2932 = vmatpush1.msra.mxu0 0.0
      %2933 = vmatprep.subr.mxu0 0.0
      %2934 = vmatpush1.msra.mxu0 0.0
      %2935 = vmatprep.subr.mxu0 0.0
      %2936 = vmatpush1.msra.mxu0 0.0
      %2937 = vmatprep.mubr.f32.mxu0 0.0
      %2938 = vmatmul.mubr.f32.gmra.mrb[0].mxu0 %v2871
      %v2939 = vpop.f32.mrb[0].mxu0
      %v2940 = vadd.f32 0.0, %v2939
      %v2941 = vpop.f32.mrb[0].mxu0
      %v2942 = vadd.f32 0.0, %v2941
      %2943 = vdwg.mxu0
      %2944 = vmatprep.subr.mxu0 %v2855
      %2945 = vmatpush1.msra.mxu0 %v2854
      %2946 = vmatprep.subr.mxu0 0.0
      %2947 = vmatpush1.msra.mxu0 0.0
      %2948 = vmatprep.subr.mxu0 0.0
      %2949 = vmatpush1.msra.mxu0 0.0
      %2950 = vmatprep.subr.mxu0 0.0
      %2951 = vmatpush1.msra.mxu0 0.0
      %2952 = vmatprep.subr.mxu0 0.0
      %2953 = vmatpush1.msra.mxu0 0.0
      %2954 = vmatprep.subr.mxu0 0.0
      %2955 = vmatpush1.msra.mxu0 0.0
      %2956 = vmatprep.subr.mxu0 0.0
      %2957 = vmatpush1.msra.mxu0 0.0
      %2958 = vmatprep.subr.mxu0 0.0
      %2959 = vmatpush1.msra.mxu0 0.0
      %2960 = vmatprep.subr.mxu0 0.0
      %2961 = vmatpush1.msra.mxu0 0.0
      %2962 = vmatprep.subr.mxu0 0.0
      %2963 = vmatpush1.msra.mxu0 0.0
      %2964 = vmatprep.subr.mxu0 0.0
      %2965 = vmatpush1.msra.mxu0 0.0
      %2966 = vmatprep.subr.mxu0 0.0
      %2967 = vmatpush1.msra.mxu0 0.0
      %2968 = vmatprep.subr.mxu0 0.0
      %2969 = vmatpush1.msra.mxu0 0.0
      %2970 = vmatprep.subr.mxu0 0.0
      %2971 = vmatpush1.msra.mxu0 0.0
      %2972 = vmatprep.subr.mxu0 0.0
      %2973 = vmatpush1.msra.mxu0 0.0
      %2974 = vmatprep.subr.mxu0 0.0
      %2975 = vmatpush1.msra.mxu0 0.0
      %2976 = vmatprep.subr.mxu0 0.0
      %2977 = vmatpush1.msra.mxu0 0.0
      %2978 = vmatprep.subr.mxu0 0.0
      %2979 = vmatpush1.msra.mxu0 0.0
      %2980 = vmatprep.subr.mxu0 0.0
      %2981 = vmatpush1.msra.mxu0 0.0
      %2982 = vmatprep.subr.mxu0 0.0
      %2983 = vmatpush1.msra.mxu0 0.0
      %2984 = vmatprep.subr.mxu0 0.0
      %2985 = vmatpush1.msra.mxu0 0.0
      %2986 = vmatprep.subr.mxu0 0.0
      %2987 = vmatpush1.msra.mxu0 0.0
      %2988 = vmatprep.subr.mxu0 0.0
      %2989 = vmatpush1.msra.mxu0 0.0
      %2990 = vmatprep.subr.mxu0 0.0
      %2991 = vmatpush1.msra.mxu0 0.0
      %2992 = vmatprep.subr.mxu0 0.0
      %2993 = vmatpush1.msra.mxu0 0.0
      %2994 = vmatprep.subr.mxu0 0.0
      %2995 = vmatpush1.msra.mxu0 0.0
      %2996 = vmatprep.subr.mxu0 0.0
      %2997 = vmatpush1.msra.mxu0 0.0
      %2998 = vmatprep.subr.mxu0 0.0
      %2999 = vmatpush1.msra.mxu0 0.0
      %3000 = vmatprep.subr.mxu0 0.0
      %3001 = vmatpush1.msra.mxu0 0.0
      %3002 = vmatprep.subr.mxu0 0.0
      %3003 = vmatpush1.msra.mxu0 0.0
      %3004 = vmatprep.subr.mxu0 0.0
      %3005 = vmatpush1.msra.mxu0 0.0
      %3006 = vmatprep.subr.mxu0 0.0
      %3007 = vmatpush1.msra.mxu0 0.0
      %3008 = vmatprep.mubr.f32.mxu0 0.0
      %3009 = vmatmul.mubr.f32.gmra.mrb[0].mxu0 %v2871
      %v3010 = vpop.f32.mrb[0].mxu0
      %v3011 = vadd.f32 0.0, %v3010
      %v3012 = vpop.f32.mrb[0].mxu0
      %v3013 = vadd.f32 0.0, %v3012
      %3014 = vdwg.mxu0
      %3015 = vmatprep.subr.mxu0 %v2857
      %3016 = vmatpush1.msra.mxu0 %v2856
      %3017 = vmatprep.subr.mxu0 0.0
      %3018 = vmatpush1.msra.mxu0 0.0
      %3019 = vmatprep.subr.mxu0 0.0
      %3020 = vmatpush1.msra.mxu0 0.0
      %3021 = vmatprep.subr.mxu0 0.0
      %3022 = vmatpush1.msra.mxu0 0.0
      %3023 = vmatprep.subr.mxu0 0.0
      %3024 = vmatpush1.msra.mxu0 0.0
      %3025 = vmatprep.subr.mxu0 0.0
      %3026 = vmatpush1.msra.mxu0 0.0
      %3027 = vmatprep.subr.mxu0 0.0
      %3028 = vmatpush1.msra.mxu0 0.0
      %3029 = vmatprep.subr.mxu0 0.0
      %3030 = vmatpush1.msra.mxu0 0.0
      %3031 = vmatprep.subr.mxu0 0.0
      %3032 = vmatpush1.msra.mxu0 0.0
      %3033 = vmatprep.subr.mxu0 0.0
      %3034 = vmatpush1.msra.mxu0 0.0
      %3035 = vmatprep.subr.mxu0 0.0
      %3036 = vmatpush1.msra.mxu0 0.0
      %3037 = vmatprep.subr.mxu0 0.0
      %3038 = vmatpush1.msra.mxu0 0.0
      %3039 = vmatprep.subr.mxu0 0.0
      %3040 = vmatpush1.msra.mxu0 0.0
      %3041 = vmatprep.subr.mxu0 0.0
      %3042 = vmatpush1.msra.mxu0 0.0
      %3043 = vmatprep.subr.mxu0 0.0
      %3044 = vmatpush1.msra.mxu0 0.0
      %3045 = vmatprep.subr.mxu0 0.0
      %3046 = vmatpush1.msra.mxu0 0.0
      %3047 = vmatprep.subr.mxu0 0.0
      %3048 = vmatpush1.msra.mxu0 0.0
      %3049 = vmatprep.subr.mxu0 0.0
      %3050 = vmatpush1.msra.mxu0 0.0
      %3051 = vmatprep.subr.mxu0 0.0
      %3052 = vmatpush1.msra.mxu0 0.0
      %3053 = vmatprep.subr.mxu0 0.0
      %3054 = vmatpush1.msra.mxu0 0.0
      %3055 = vmatprep.subr.mxu0 0.0
      %3056 = vmatpush1.msra.mxu0 0.0
      %3057 = vmatprep.subr.mxu0 0.0
      %3058 = vmatpush1.msra.mxu0 0.0
      %3059 = vmatprep.subr.mxu0 0.0
      %3060 = vmatpush1.msra.mxu0 0.0
      %3061 = vmatprep.subr.mxu0 0.0
      %3062 = vmatpush1.msra.mxu0 0.0
      %3063 = vmatprep.subr.mxu0 0.0
      %3064 = vmatpush1.msra.mxu0 0.0
      %3065 = vmatprep.subr.mxu0 0.0
      %3066 = vmatpush1.msra.mxu0 0.0
      %3067 = vmatprep.subr.mxu0 0.0
      %3068 = vmatpush1.msra.mxu0 0.0
      %3069 = vmatprep.subr.mxu0 0.0
      %3070 = vmatpush1.msra.mxu0 0.0
      %3071 = vmatprep.subr.mxu0 0.0
      %3072 = vmatpush1.msra.mxu0 0.0
      %3073 = vmatprep.subr.mxu0 0.0
      %3074 = vmatpush1.msra.mxu0 0.0
      %3075 = vmatprep.subr.mxu0 0.0
      %3076 = vmatpush1.msra.mxu0 0.0
      %3077 = vmatprep.subr.mxu0 0.0
      %3078 = vmatpush1.msra.mxu0 0.0
      %3079 = vmatprep.mubr.f32.mxu0 0.0
      %3080 = vmatmul.mubr.f32.gmra.mrb[0].mxu0 %v2871
      %v3081 = vpop.f32.mrb[0].mxu0
      %v3082 = vadd.f32 0.0, %v3081
      %v3083 = vpop.f32.mrb[0].mxu0
      %v3084 = vadd.f32 0.0, %v3083
      %3085 = vdwg.mxu0
      %3086 = vmatprep.subr.mxu0 %v2859
      %3087 = vmatpush1.msra.mxu0 %v2858
      %3088 = vmatprep.subr.mxu0 0.0
      %3089 = vmatpush1.msra.mxu0 0.0
      %3090 = vmatprep.subr.mxu0 0.0
      %3091 = vmatpush1.msra.mxu0 0.0
      %3092 = vmatprep.subr.mxu0 0.0
      %3093 = vmatpush1.msra.mxu0 0.0
      %3094 = vmatprep.subr.mxu0 0.0
      %3095 = vmatpush1.msra.mxu0 0.0
      %3096 = vmatprep.subr.mxu0 0.0
      %3097 = vmatpush1.msra.mxu0 0.0
      %3098 = vmatprep.subr.mxu0 0.0
      %3099 = vmatpush1.msra.mxu0 0.0
      %3100 = vmatprep.subr.mxu0 0.0
      %3101 = vmatpush1.msra.mxu0 0.0
      %3102 = vmatprep.subr.mxu0 0.0
      %3103 = vmatpush1.msra.mxu0 0.0
      %3104 = vmatprep.subr.mxu0 0.0
      %3105 = vmatpush1.msra.mxu0 0.0
      %3106 = vmatprep.subr.mxu0 0.0
      %3107 = vmatpush1.msra.mxu0 0.0
      %3108 = vmatprep.subr.mxu0 0.0
      %3109 = vmatpush1.msra.mxu0 0.0
      %3110 = vmatprep.subr.mxu0 0.0
      %3111 = vmatpush1.msra.mxu0 0.0
      %3112 = vmatprep.subr.mxu0 0.0
      %3113 = vmatpush1.msra.mxu0 0.0
      %3114 = vmatprep.subr.mxu0 0.0
      %3115 = vmatpush1.msra.mxu0 0.0
      %3116 = vmatprep.subr.mxu0 0.0
      %3117 = vmatpush1.msra.mxu0 0.0
      %3118 = vmatprep.subr.mxu0 0.0
      %3119 = vmatpush1.msra.mxu0 0.0
      %3120 = vmatprep.subr.mxu0 0.0
      %3121 = vmatpush1.msra.mxu0 0.0
      %3122 = vmatprep.subr.mxu0 0.0
      %3123 = vmatpush1.msra.mxu0 0.0
      %3124 = vmatprep.subr.mxu0 0.0
      %3125 = vmatpush1.msra.mxu0 0.0
      %3126 = vmatprep.subr.mxu0 0.0
      %3127 = vmatpush1.msra.mxu0 0.0
      %3128 = vmatprep.subr.mxu0 0.0
      %3129 = vmatpush1.msra.mxu0 0.0
      %3130 = vmatprep.subr.mxu0 0.0
      %3131 = vmatpush1.msra.mxu0 0.0
      %3132 = vmatprep.subr.mxu0 0.0
      %3133 = vmatpush1.msra.mxu0 0.0
      %3134 = vmatprep.subr.mxu0 0.0
      %3135 = vmatpush1.msra.mxu0 0.0
      %3136 = vmatprep.subr.mxu0 0.0
      %3137 = vmatpush1.msra.mxu0 0.0
      %3138 = vmatprep.subr.mxu0 0.0
      %3139 = vmatpush1.msra.mxu0 0.0
      %3140 = vmatprep.subr.mxu0 0.0
      %3141 = vmatpush1.msra.mxu0 0.0
      %3142 = vmatprep.subr.mxu0 0.0
      %3143 = vmatpush1.msra.mxu0 0.0
      %3144 = vmatprep.subr.mxu0 0.0
      %3145 = vmatpush1.msra.mxu0 0.0
      %3146 = vmatprep.subr.mxu0 0.0
      %3147 = vmatpush1.msra.mxu0 0.0
      %3148 = vmatprep.subr.mxu0 0.0
      %3149 = vmatpush1.msra.mxu0 0.0
      %3150 = vmatprep.mubr.f32.mxu0 0.0
      %3151 = vmatmul.mubr.f32.gmra.mrb[0].mxu0 %v2871
      %v3152 = vpop.f32.mrb[0].mxu0
      %v3153 = vadd.f32 0.0, %v3152
      %v3154 = vpop.f32.mrb[0].mxu0
      %v3155 = vadd.f32 0.0, %v3154
      %3156 = vdwg.mxu0
      %3157 = vmatprep.subr.mxu0 0.0
      %3158 = vmatpush1.msra.mxu0 %v2860
      %3159 = vmatprep.subr.mxu0 0.0
      %3160 = vmatpush1.msra.mxu0 0.0
      %3161 = vmatprep.subr.mxu0 0.0
      %3162 = vmatpush1.msra.mxu0 0.0
      %3163 = vmatprep.subr.mxu0 0.0
      %3164 = vmatpush1.msra.mxu0 0.0
      %3165 = vmatprep.subr.mxu0 0.0
      %3166 = vmatpush1.msra.mxu0 0.0
      %3167 = vmatprep.subr.mxu0 0.0
      %3168 = vmatpush1.msra.mxu0 0.0
      %3169 = vmatprep.subr.mxu0 0.0
      %3170 = vmatpush1.msra.mxu0 0.0
      %3171 = vmatprep.subr.mxu0 0.0
      %3172 = vmatpush1.msra.mxu0 0.0
      %3173 = vmatprep.subr.mxu0 0.0
      %3174 = vmatpush1.msra.mxu0 0.0
      %3175 = vmatprep.subr.mxu0 0.0
      %3176 = vmatpush1.msra.mxu0 0.0
      %3177 = vmatprep.subr.mxu0 0.0
      %3178 = vmatpush1.msra.mxu0 0.0
      %3179 = vmatprep.subr.mxu0 0.0
      %3180 = vmatpush1.msra.mxu0 0.0
      %3181 = vmatprep.subr.mxu0 0.0
      %3182 = vmatpush1.msra.mxu0 0.0
      %3183 = vmatprep.subr.mxu0 0.0
      %3184 = vmatpush1.msra.mxu0 0.0
      %3185 = vmatprep.subr.mxu0 0.0
      %3186 = vmatpush1.msra.mxu0 0.0
      %3187 = vmatprep.subr.mxu0 0.0
      %3188 = vmatpush1.msra.mxu0 0.0
      %3189 = vmatprep.subr.mxu0 0.0
      %3190 = vmatpush1.msra.mxu0 0.0
      %3191 = vmatprep.subr.mxu0 0.0
      %3192 = vmatpush1.msra.mxu0 0.0
      %3193 = vmatprep.subr.mxu0 0.0
      %3194 = vmatpush1.msra.mxu0 0.0
      %3195 = vmatprep.subr.mxu0 0.0
      %3196 = vmatpush1.msra.mxu0 0.0
      %3197 = vmatprep.subr.mxu0 0.0
      %3198 = vmatpush1.msra.mxu0 0.0
      %3199 = vmatprep.subr.mxu0 0.0
      %3200 = vmatpush1.msra.mxu0 0.0
      %3201 = vmatprep.subr.mxu0 0.0
      %3202 = vmatpush1.msra.mxu0 0.0
      %3203 = vmatprep.subr.mxu0 0.0
      %3204 = vmatpush1.msra.mxu0 0.0
      %3205 = vmatprep.subr.mxu0 0.0
      %3206 = vmatpush1.msra.mxu0 0.0
      %3207 = vmatprep.subr.mxu0 0.0
      %3208 = vmatpush1.msra.mxu0 0.0
      %3209 = vmatprep.subr.mxu0 0.0
      %3210 = vmatpush1.msra.mxu0 0.0
      %3211 = vmatprep.subr.mxu0 0.0
      %3212 = vmatpush1.msra.mxu0 0.0
      %3213 = vmatprep.subr.mxu0 0.0
      %3214 = vmatpush1.msra.mxu0 0.0
      %3215 = vmatprep.subr.mxu0 0.0
      %3216 = vmatpush1.msra.mxu0 0.0
      %3217 = vmatprep.subr.mxu0 0.0
      %3218 = vmatpush1.msra.mxu0 0.0
      %3219 = vmatprep.subr.mxu0 0.0
      %3220 = vmatpush1.msra.mxu0 0.0
      %3221 = vmatprep.mubr.f32.mxu0 0.0
      %3222 = vmatmul.mubr.f32.gmra.mrb[0].mxu0 %v2871
      %v3223 = vpop.f32.mrb[0].mxu0
      %v3224 = vadd.f32 0.0, %v3223
      %v3225 = vpop.f32.mrb[0].mxu0
      %3226 = vdwg.mxu0
      %v3227 = vadd.f32 %v2819, %v2940
      %v3228 = vadd.f32 %v2820, %v2942
      %v3229 = vadd.f32 %v2821, %v3011
      %v3230 = vadd.f32 %v2822, %v3013
      %v3231 = vadd.f32 %v2823, %v3082
      %v3232 = vadd.f32 %v2824, %v3084
      %v3233 = vadd.f32 %v2825, %v3153
      %v3234 = vadd.f32 %v2826, %v3155
      %v3235 = vadd.f32 %v2827, %v3224
      %s3236 = scalar_lea.vmem %s1, 56
      %v3237 = vld [vmem:[%s3236] sm:$0xff]
      %3238 = vrot.lane.b32.xlu0 %v453, 59
      %v3239 = vpop.permute.xlu0 %3238
      %3240 = vrot.lane.b32.xlu0 %v436, 59
      %v3241 = vpop.permute.xlu0 %3240
      %3242 = vrot.lane.b32.xlu0 %v437, 59
      %v3243 = vpop.permute.xlu0 %3242
      %3244 = vrot.lane.b32.xlu0 %v438, 59
      %v3245 = vpop.permute.xlu0 %3244
      %3246 = vrot.lane.b32.xlu0 %v439, 59
      %v3247 = vpop.permute.xlu0 %3246
      %3248 = vrot.lane.b32.xlu0 %v440, 59
      %v3249 = vpop.permute.xlu0 %3248
      %3250 = vrot.lane.b32.xlu0 %v441, 59
      %v3251 = vpop.permute.xlu0 %3250
      %3252 = vrot.lane.b32.xlu0 %v442, 59
      %v3253 = vpop.permute.xlu0 %3252
      %3254 = vrot.lane.b32.xlu0 %v455, 59
      %v3255 = vpop.permute.xlu0 %3254
      %3256 = vrot.lane.b32.xlu0 0.0, 59
      %v3257 = vpop.permute.xlu0 %3256
      %vm3258 = vcmask 482304
      %v3259 = vsel %vm3258, %v3239, %v3241
      %v3260 = vsel %vm3258, %v3241, %v3243
      %v3261 = vsel %vm3258, %v3243, %v3245
      %v3262 = vsel %vm3258, %v3245, %v3247
      %v3263 = vsel %vm3258, %v3247, %v3249
      %v3264 = vsel %vm3258, %v3249, %v3251
      %v3265 = vsel %vm3258, %v3251, %v3253
      %v3266 = vsel %vm3258, %v3253, %v3255
      %v3267 = vsel %vm3258, %v3255, %v3257
      %v3278 = vsel %vm497, %v3237, 0
      %3280 = vmatprep.subr.mxu0 %v3260
      %3281 = vmatpush1.msra.mxu0 %v3259
      %3282 = vmatprep.subr.mxu0 0.0
      %3283 = vmatpush1.msra.mxu0 0.0
      %3284 = vmatprep.subr.mxu0 0.0
      %3285 = vmatpush1.msra.mxu0 0.0
      %3286 = vmatprep.subr.mxu0 0.0
      %3287 = vmatpush1.msra.mxu0 0.0
      %3288 = vmatprep.subr.mxu0 0.0
      %3289 = vmatpush1.msra.mxu0 0.0
      %3290 = vmatprep.subr.mxu0 0.0
      %3291 = vmatpush1.msra.mxu0 0.0
      %3292 = vmatprep.subr.mxu0 0.0
      %3293 = vmatpush1.msra.mxu0 0.0
      %3294 = vmatprep.subr.mxu0 0.0
      %3295 = vmatpush1.msra.mxu0 0.0
      %3296 = vmatprep.subr.mxu0 0.0
      %3297 = vmatpush1.msra.mxu0 0.0
      %3298 = vmatprep.subr.mxu0 0.0
      %3299 = vmatpush1.msra.mxu0 0.0
      %3300 = vmatprep.subr.mxu0 0.0
      %3301 = vmatpush1.msra.mxu0 0.0
      %3302 = vmatprep.subr.mxu0 0.0
      %3303 = vmatpush1.msra.mxu0 0.0
      %3304 = vmatprep.subr.mxu0 0.0
      %3305 = vmatpush1.msra.mxu0 0.0
      %3306 = vmatprep.subr.mxu0 0.0
      %3307 = vmatpush1.msra.mxu0 0.0
      %3308 = vmatprep.subr.mxu0 0.0
      %3309 = vmatpush1.msra.mxu0 0.0
      %3310 = vmatprep.subr.mxu0 0.0
      %3311 = vmatpush1.msra.mxu0 0.0
      %3312 = vmatprep.subr.mxu0 0.0
      %3313 = vmatpush1.msra.mxu0 0.0
      %3314 = vmatprep.subr.mxu0 0.0
      %3315 = vmatpush1.msra.mxu0 0.0
      %3316 = vmatprep.subr.mxu0 0.0
      %3317 = vmatpush1.msra.mxu0 0.0
      %3318 = vmatprep.subr.mxu0 0.0
      %3319 = vmatpush1.msra.mxu0 0.0
      %3320 = vmatprep.subr.mxu0 0.0
      %3321 = vmatpush1.msra.mxu0 0.0
      %3322 = vmatprep.subr.mxu0 0.0
      %3323 = vmatpush1.msra.mxu0 0.0
      %3324 = vmatprep.subr.mxu0 0.0
      %3325 = vmatpush1.msra.mxu0 0.0
      %3326 = vmatprep.subr.mxu0 0.0
      %3327 = vmatpush1.msra.mxu0 0.0
      %3328 = vmatprep.subr.mxu0 0.0
      %3329 = vmatpush1.msra.mxu0 0.0
      %3330 = vmatprep.subr.mxu0 0.0
      %3331 = vmatpush1.msra.mxu0 0.0
      %3332 = vmatprep.subr.mxu0 0.0
      %3333 = vmatpush1.msra.mxu0 0.0
      %3334 = vmatprep.subr.mxu0 0.0
      %3335 = vmatpush1.msra.mxu0 0.0
      %3336 = vmatprep.subr.mxu0 0.0
      %3337 = vmatpush1.msra.mxu0 0.0
      %3338 = vmatprep.subr.mxu0 0.0
      %3339 = vmatpush1.msra.mxu0 0.0
      %3340 = vmatprep.subr.mxu0 0.0
      %3341 = vmatpush1.msra.mxu0 0.0
      %3342 = vmatprep.subr.mxu0 0.0
      %3343 = vmatpush1.msra.mxu0 0.0
      %3344 = vmatprep.mubr.f32.mxu0 0.0
      %3345 = vmatmul.mubr.f32.gmra.mrb[0].mxu0 %v3278
      %v3346 = vpop.f32.mrb[0].mxu0
      %v3347 = vadd.f32 0.0, %v3346
      %v3348 = vpop.f32.mrb[0].mxu0
      %v3349 = vadd.f32 0.0, %v3348
      %3350 = vdwg.mxu0
      %3351 = vmatprep.subr.mxu0 %v3262
      %3352 = vmatpush1.msra.mxu0 %v3261
      %3353 = vmatprep.subr.mxu0 0.0
      %3354 = vmatpush1.msra.mxu0 0.0
      %3355 = vmatprep.subr.mxu0 0.0
      %3356 = vmatpush1.msra.mxu0 0.0
      %3357 = vmatprep.subr.mxu0 0.0
      %3358 = vmatpush1.msra.mxu0 0.0
      %3359 = vmatprep.subr.mxu0 0.0
      %3360 = vmatpush1.msra.mxu0 0.0
      %3361 = vmatprep.subr.mxu0 0.0
      %3362 = vmatpush1.msra.mxu0 0.0
      %3363 = vmatprep.subr.mxu0 0.0
      %3364 = vmatpush1.msra.mxu0 0.0
      %3365 = vmatprep.subr.mxu0 0.0
      %3366 = vmatpush1.msra.mxu0 0.0
      %3367 = vmatprep.subr.mxu0 0.0
      %3368 = vmatpush1.msra.mxu0 0.0
      %3369 = vmatprep.subr.mxu0 0.0
      %3370 = vmatpush1.msra.mxu0 0.0
      %3371 = vmatprep.subr.mxu0 0.0
      %3372 = vmatpush1.msra.mxu0 0.0
      %3373 = vmatprep.subr.mxu0 0.0
      %3374 = vmatpush1.msra.mxu0 0.0
      %3375 = vmatprep.subr.mxu0 0.0
      %3376 = vmatpush1.msra.mxu0 0.0
      %3377 = vmatprep.subr.mxu0 0.0
      %3378 = vmatpush1.msra.mxu0 0.0
      %3379 = vmatprep.subr.mxu0 0.0
      %3380 = vmatpush1.msra.mxu0 0.0
      %3381 = vmatprep.subr.mxu0 0.0
      %3382 = vmatpush1.msra.mxu0 0.0
      %3383 = vmatprep.subr.mxu0 0.0
      %3384 = vmatpush1.msra.mxu0 0.0
      %3385 = vmatprep.subr.mxu0 0.0
      %3386 = vmatpush1.msra.mxu0 0.0
      %3387 = vmatprep.subr.mxu0 0.0
      %3388 = vmatpush1.msra.mxu0 0.0
      %3389 = vmatprep.subr.mxu0 0.0
      %3390 = vmatpush1.msra.mxu0 0.0
      %3391 = vmatprep.subr.mxu0 0.0
      %3392 = vmatpush1.msra.mxu0 0.0
      %3393 = vmatprep.subr.mxu0 0.0
      %3394 = vmatpush1.msra.mxu0 0.0
      %3395 = vmatprep.subr.mxu0 0.0
      %3396 = vmatpush1.msra.mxu0 0.0
      %3397 = vmatprep.subr.mxu0 0.0
      %3398 = vmatpush1.msra.mxu0 0.0
      %3399 = vmatprep.subr.mxu0 0.0
      %3400 = vmatpush1.msra.mxu0 0.0
      %3401 = vmatprep.subr.mxu0 0.0
      %3402 = vmatpush1.msra.mxu0 0.0
      %3403 = vmatprep.subr.mxu0 0.0
      %3404 = vmatpush1.msra.mxu0 0.0
      %3405 = vmatprep.subr.mxu0 0.0
      %3406 = vmatpush1.msra.mxu0 0.0
      %3407 = vmatprep.subr.mxu0 0.0
      %3408 = vmatpush1.msra.mxu0 0.0
      %3409 = vmatprep.subr.mxu0 0.0
      %3410 = vmatpush1.msra.mxu0 0.0
      %3411 = vmatprep.subr.mxu0 0.0
      %3412 = vmatpush1.msra.mxu0 0.0
      %3413 = vmatprep.subr.mxu0 0.0
      %3414 = vmatpush1.msra.mxu0 0.0
      %3415 = vmatprep.mubr.f32.mxu0 0.0
      %3416 = vmatmul.mubr.f32.gmra.mrb[0].mxu0 %v3278
      %v3417 = vpop.f32.mrb[0].mxu0
      %v3418 = vadd.f32 0.0, %v3417
      %v3419 = vpop.f32.mrb[0].mxu0
      %v3420 = vadd.f32 0.0, %v3419
      %3421 = vdwg.mxu0
      %3422 = vmatprep.subr.mxu0 %v3264
      %3423 = vmatpush1.msra.mxu0 %v3263
      %3424 = vmatprep.subr.mxu0 0.0
      %3425 = vmatpush1.msra.mxu0 0.0
      %3426 = vmatprep.subr.mxu0 0.0
      %3427 = vmatpush1.msra.mxu0 0.0
      %3428 = vmatprep.subr.mxu0 0.0
      %3429 = vmatpush1.msra.mxu0 0.0
      %3430 = vmatprep.subr.mxu0 0.0
      %3431 = vmatpush1.msra.mxu0 0.0
      %3432 = vmatprep.subr.mxu0 0.0
      %3433 = vmatpush1.msra.mxu0 0.0
      %3434 = vmatprep.subr.mxu0 0.0
      %3435 = vmatpush1.msra.mxu0 0.0
      %3436 = vmatprep.subr.mxu0 0.0
      %3437 = vmatpush1.msra.mxu0 0.0
      %3438 = vmatprep.subr.mxu0 0.0
      %3439 = vmatpush1.msra.mxu0 0.0
      %3440 = vmatprep.subr.mxu0 0.0
      %3441 = vmatpush1.msra.mxu0 0.0
      %3442 = vmatprep.subr.mxu0 0.0
      %3443 = vmatpush1.msra.mxu0 0.0
      %3444 = vmatprep.subr.mxu0 0.0
      %3445 = vmatpush1.msra.mxu0 0.0
      %3446 = vmatprep.subr.mxu0 0.0
      %3447 = vmatpush1.msra.mxu0 0.0
      %3448 = vmatprep.subr.mxu0 0.0
      %3449 = vmatpush1.msra.mxu0 0.0
      %3450 = vmatprep.subr.mxu0 0.0
      %3451 = vmatpush1.msra.mxu0 0.0
      %3452 = vmatprep.subr.mxu0 0.0
      %3453 = vmatpush1.msra.mxu0 0.0
      %3454 = vmatprep.subr.mxu0 0.0
      %3455 = vmatpush1.msra.mxu0 0.0
      %3456 = vmatprep.subr.mxu0 0.0
      %3457 = vmatpush1.msra.mxu0 0.0
      %3458 = vmatprep.subr.mxu0 0.0
      %3459 = vmatpush1.msra.mxu0 0.0
      %3460 = vmatprep.subr.mxu0 0.0
      %3461 = vmatpush1.msra.mxu0 0.0
      %3462 = vmatprep.subr.mxu0 0.0
      %3463 = vmatpush1.msra.mxu0 0.0
      %3464 = vmatprep.subr.mxu0 0.0
      %3465 = vmatpush1.msra.mxu0 0.0
      %3466 = vmatprep.subr.mxu0 0.0
      %3467 = vmatpush1.msra.mxu0 0.0
      %3468 = vmatprep.subr.mxu0 0.0
      %3469 = vmatpush1.msra.mxu0 0.0
      %3470 = vmatprep.subr.mxu0 0.0
      %3471 = vmatpush1.msra.mxu0 0.0
      %3472 = vmatprep.subr.mxu0 0.0
      %3473 = vmatpush1.msra.mxu0 0.0
      %3474 = vmatprep.subr.mxu0 0.0
      %3475 = vmatpush1.msra.mxu0 0.0
      %3476 = vmatprep.subr.mxu0 0.0
      %3477 = vmatpush1.msra.mxu0 0.0
      %3478 = vmatprep.subr.mxu0 0.0
      %3479 = vmatpush1.msra.mxu0 0.0
      %3480 = vmatprep.subr.mxu0 0.0
      %3481 = vmatpush1.msra.mxu0 0.0
      %3482 = vmatprep.subr.mxu0 0.0
      %3483 = vmatpush1.msra.mxu0 0.0
      %3484 = vmatprep.subr.mxu0 0.0
      %3485 = vmatpush1.msra.mxu0 0.0
      %3486 = vmatprep.mubr.f32.mxu0 0.0
      %3487 = vmatmul.mubr.f32.gmra.mrb[0].mxu0 %v3278
      %v3488 = vpop.f32.mrb[0].mxu0
      %v3489 = vadd.f32 0.0, %v3488
      %v3490 = vpop.f32.mrb[0].mxu0
      %v3491 = vadd.f32 0.0, %v3490
      %3492 = vdwg.mxu0
      %3493 = vmatprep.subr.mxu0 %v3266
      %3494 = vmatpush1.msra.mxu0 %v3265
      %3495 = vmatprep.subr.mxu0 0.0
      %3496 = vmatpush1.msra.mxu0 0.0
      %3497 = vmatprep.subr.mxu0 0.0
      %3498 = vmatpush1.msra.mxu0 0.0
      %3499 = vmatprep.subr.mxu0 0.0
      %3500 = vmatpush1.msra.mxu0 0.0
      %3501 = vmatprep.subr.mxu0 0.0
      %3502 = vmatpush1.msra.mxu0 0.0
      %3503 = vmatprep.subr.mxu0 0.0
      %3504 = vmatpush1.msra.mxu0 0.0
      %3505 = vmatprep.subr.mxu0 0.0
      %3506 = vmatpush1.msra.mxu0 0.0
      %3507 = vmatprep.subr.mxu0 0.0
      %3508 = vmatpush1.msra.mxu0 0.0
      %3509 = vmatprep.subr.mxu0 0.0
      %3510 = vmatpush1.msra.mxu0 0.0
      %3511 = vmatprep.subr.mxu0 0.0
      %3512 = vmatpush1.msra.mxu0 0.0
      %3513 = vmatprep.subr.mxu0 0.0
      %3514 = vmatpush1.msra.mxu0 0.0
      %3515 = vmatprep.subr.mxu0 0.0
      %3516 = vmatpush1.msra.mxu0 0.0
      %3517 = vmatprep.subr.mxu0 0.0
      %3518 = vmatpush1.msra.mxu0 0.0
      %3519 = vmatprep.subr.mxu0 0.0
      %3520 = vmatpush1.msra.mxu0 0.0
      %3521 = vmatprep.subr.mxu0 0.0
      %3522 = vmatpush1.msra.mxu0 0.0
      %3523 = vmatprep.subr.mxu0 0.0
      %3524 = vmatpush1.msra.mxu0 0.0
      %3525 = vmatprep.subr.mxu0 0.0
      %3526 = vmatpush1.msra.mxu0 0.0
      %3527 = vmatprep.subr.mxu0 0.0
      %3528 = vmatpush1.msra.mxu0 0.0
      %3529 = vmatprep.subr.mxu0 0.0
      %3530 = vmatpush1.msra.mxu0 0.0
      %3531 = vmatprep.subr.mxu0 0.0
      %3532 = vmatpush1.msra.mxu0 0.0
      %3533 = vmatprep.subr.mxu0 0.0
      %3534 = vmatpush1.msra.mxu0 0.0
      %3535 = vmatprep.subr.mxu0 0.0
      %3536 = vmatpush1.msra.mxu0 0.0
      %3537 = vmatprep.subr.mxu0 0.0
      %3538 = vmatpush1.msra.mxu0 0.0
      %3539 = vmatprep.subr.mxu0 0.0
      %3540 = vmatpush1.msra.mxu0 0.0
      %3541 = vmatprep.subr.mxu0 0.0
      %3542 = vmatpush1.msra.mxu0 0.0
      %3543 = vmatprep.subr.mxu0 0.0
      %3544 = vmatpush1.msra.mxu0 0.0
      %3545 = vmatprep.subr.mxu0 0.0
      %3546 = vmatpush1.msra.mxu0 0.0
      %3547 = vmatprep.subr.mxu0 0.0
      %3548 = vmatpush1.msra.mxu0 0.0
      %3549 = vmatprep.subr.mxu0 0.0
      %3550 = vmatpush1.msra.mxu0 0.0
      %3551 = vmatprep.subr.mxu0 0.0
      %3552 = vmatpush1.msra.mxu0 0.0
      %3553 = vmatprep.subr.mxu0 0.0
      %3554 = vmatpush1.msra.mxu0 0.0
      %3555 = vmatprep.subr.mxu0 0.0
      %3556 = vmatpush1.msra.mxu0 0.0
      %3557 = vmatprep.mubr.f32.mxu0 0.0
      %3558 = vmatmul.mubr.f32.gmra.mrb[0].mxu0 %v3278
      %v3559 = vpop.f32.mrb[0].mxu0
      %v3560 = vadd.f32 0.0, %v3559
      %v3561 = vpop.f32.mrb[0].mxu0
      %v3562 = vadd.f32 0.0, %v3561
      %3563 = vdwg.mxu0
      %3564 = vmatprep.subr.mxu0 0.0
      %3565 = vmatpush1.msra.mxu0 %v3267
      %3566 = vmatprep.subr.mxu0 0.0
      %3567 = vmatpush1.msra.mxu0 0.0
      %3568 = vmatprep.subr.mxu0 0.0
      %3569 = vmatpush1.msra.mxu0 0.0
      %3570 = vmatprep.subr.mxu0 0.0
      %3571 = vmatpush1.msra.mxu0 0.0
      %3572 = vmatprep.subr.mxu0 0.0
      %3573 = vmatpush1.msra.mxu0 0.0
      %3574 = vmatprep.subr.mxu0 0.0
      %3575 = vmatpush1.msra.mxu0 0.0
      %3576 = vmatprep.subr.mxu0 0.0
      %3577 = vmatpush1.msra.mxu0 0.0
      %3578 = vmatprep.subr.mxu0 0.0
      %3579 = vmatpush1.msra.mxu0 0.0
      %3580 = vmatprep.subr.mxu0 0.0
      %3581 = vmatpush1.msra.mxu0 0.0
      %3582 = vmatprep.subr.mxu0 0.0
      %3583 = vmatpush1.msra.mxu0 0.0
      %3584 = vmatprep.subr.mxu0 0.0
      %3585 = vmatpush1.msra.mxu0 0.0
      %3586 = vmatprep.subr.mxu0 0.0
      %3587 = vmatpush1.msra.mxu0 0.0
      %3588 = vmatprep.subr.mxu0 0.0
      %3589 = vmatpush1.msra.mxu0 0.0
      %3590 = vmatprep.subr.mxu0 0.0
      %3591 = vmatpush1.msra.mxu0 0.0
      %3592 = vmatprep.subr.mxu0 0.0
      %3593 = vmatpush1.msra.mxu0 0.0
      %3594 = vmatprep.subr.mxu0 0.0
      %3595 = vmatpush1.msra.mxu0 0.0
      %3596 = vmatprep.subr.mxu0 0.0
      %3597 = vmatpush1.msra.mxu0 0.0
      %3598 = vmatprep.subr.mxu0 0.0
      %3599 = vmatpush1.msra.mxu0 0.0
      %3600 = vmatprep.subr.mxu0 0.0
      %3601 = vmatpush1.msra.mxu0 0.0
      %3602 = vmatprep.subr.mxu0 0.0
      %3603 = vmatpush1.msra.mxu0 0.0
      %3604 = vmatprep.subr.mxu0 0.0
      %3605 = vmatpush1.msra.mxu0 0.0
      %3606 = vmatprep.subr.mxu0 0.0
      %3607 = vmatpush1.msra.mxu0 0.0
      %3608 = vmatprep.subr.mxu0 0.0
      %3609 = vmatpush1.msra.mxu0 0.0
      %3610 = vmatprep.subr.mxu0 0.0
      %3611 = vmatpush1.msra.mxu0 0.0
      %3612 = vmatprep.subr.mxu0 0.0
      %3613 = vmatpush1.msra.mxu0 0.0
      %3614 = vmatprep.subr.mxu0 0.0
      %3615 = vmatpush1.msra.mxu0 0.0
      %3616 = vmatprep.subr.mxu0 0.0
      %3617 = vmatpush1.msra.mxu0 0.0
      %3618 = vmatprep.subr.mxu0 0.0
      %3619 = vmatpush1.msra.mxu0 0.0
      %3620 = vmatprep.subr.mxu0 0.0
      %3621 = vmatpush1.msra.mxu0 0.0
      %3622 = vmatprep.subr.mxu0 0.0
      %3623 = vmatpush1.msra.mxu0 0.0
      %3624 = vmatprep.subr.mxu0 0.0
      %3625 = vmatpush1.msra.mxu0 0.0
      %3626 = vmatprep.subr.mxu0 0.0
      %3627 = vmatpush1.msra.mxu0 0.0
      %3628 = vmatprep.mubr.f32.mxu0 0.0
      %3629 = vmatmul.mubr.f32.gmra.mrb[0].mxu0 %v3278
      %v3630 = vpop.f32.mrb[0].mxu0
      %v3631 = vadd.f32 0.0, %v3630
      %v3632 = vpop.f32.mrb[0].mxu0
      %3633 = vdwg.mxu0
      %v3634 = vadd.f32 %v3227, %v3347
      %v3635 = vadd.f32 %v3228, %v3349
      %v3636 = vadd.f32 %v3229, %v3418
      %v3637 = vadd.f32 %v3230, %v3420
      %v3638 = vadd.f32 %v3231, %v3489
      %v3639 = vadd.f32 %v3232, %v3491
      %v3640 = vadd.f32 %v3233, %v3560
      %v3641 = vadd.f32 %v3234, %v3562
      %v3642 = vadd.f32 %v3235, %v3631
      %s3643 = scalar_lea.vmem %s1, 64
      %v3644 = vld [vmem:[%s3643] sm:$0xff]
      %3645 = vrot.lane.b32.xlu0 %v453, 58
      %v3646 = vpop.permute.xlu0 %3645
      %3647 = vrot.lane.b32.xlu0 %v436, 58
      %v3648 = vpop.permute.xlu0 %3647
      %3649 = vrot.lane.b32.xlu0 %v437, 58
      %v3650 = vpop.permute.xlu0 %3649
      %3651 = vrot.lane.b32.xlu0 %v438, 58
      %v3652 = vpop.permute.xlu0 %3651
      %3653 = vrot.lane.b32.xlu0 %v439, 58
      %v3654 = vpop.permute.xlu0 %3653
      %3655 = vrot.lane.b32.xlu0 %v440, 58
      %v3656 = vpop.permute.xlu0 %3655
      %3657 = vrot.lane.b32.xlu0 %v441, 58
      %v3658 = vpop.permute.xlu0 %3657
      %3659 = vrot.lane.b32.xlu0 %v442, 58
      %v3660 = vpop.permute.xlu0 %3659
      %3661 = vrot.lane.b32.xlu0 %v455, 58
      %v3662 = vpop.permute.xlu0 %3661
      %3663 = vrot.lane.b32.xlu0 0.0, 58
      %v3664 = vpop.permute.xlu0 %3663
      %vm3665 = vcmask 474112
      %v3666 = vsel %vm3665, %v3646, %v3648
      %v3667 = vsel %vm3665, %v3648, %v3650
      %v3668 = vsel %vm3665, %v3650, %v3652
      %v3669 = vsel %vm3665, %v3652, %v3654
      %v3670 = vsel %vm3665, %v3654, %v3656
      %v3671 = vsel %vm3665, %v3656, %v3658
      %v3672 = vsel %vm3665, %v3658, %v3660
      %v3673 = vsel %vm3665, %v3660, %v3662
      %v3674 = vsel %vm3665, %v3662, %v3664
      %v3685 = vsel %vm497, %v3644, 0
      %3687 = vmatprep.subr.mxu0 %v3667
      %3688 = vmatpush1.msra.mxu0 %v3666
      %3689 = vmatprep.subr.mxu0 0.0
      %3690 = vmatpush1.msra.mxu0 0.0
      %3691 = vmatprep.subr.mxu0 0.0
      %3692 = vmatpush1.msra.mxu0 0.0
      %3693 = vmatprep.subr.mxu0 0.0
      %3694 = vmatpush1.msra.mxu0 0.0
      %3695 = vmatprep.subr.mxu0 0.0
      %3696 = vmatpush1.msra.mxu0 0.0
      %3697 = vmatprep.subr.mxu0 0.0
      %3698 = vmatpush1.msra.mxu0 0.0
      %3699 = vmatprep.subr.mxu0 0.0
      %3700 = vmatpush1.msra.mxu0 0.0
      %3701 = vmatprep.subr.mxu0 0.0
      %3702 = vmatpush1.msra.mxu0 0.0
      %3703 = vmatprep.subr.mxu0 0.0
      %3704 = vmatpush1.msra.mxu0 0.0
      %3705 = vmatprep.subr.mxu0 0.0
      %3706 = vmatpush1.msra.mxu0 0.0
      %3707 = vmatprep.subr.mxu0 0.0
      %3708 = vmatpush1.msra.mxu0 0.0
      %3709 = vmatprep.subr.mxu0 0.0
      %3710 = vmatpush1.msra.mxu0 0.0
      %3711 = vmatprep.subr.mxu0 0.0
      %3712 = vmatpush1.msra.mxu0 0.0
      %3713 = vmatprep.subr.mxu0 0.0
      %3714 = vmatpush1.msra.mxu0 0.0
      %3715 = vmatprep.subr.mxu0 0.0
      %3716 = vmatpush1.msra.mxu0 0.0
      %3717 = vmatprep.subr.mxu0 0.0
      %3718 = vmatpush1.msra.mxu0 0.0
      %3719 = vmatprep.subr.mxu0 0.0
      %3720 = vmatpush1.msra.mxu0 0.0
      %3721 = vmatprep.subr.mxu0 0.0
      %3722 = vmatpush1.msra.mxu0 0.0
      %3723 = vmatprep.subr.mxu0 0.0
      %3724 = vmatpush1.msra.mxu0 0.0
      %3725 = vmatprep.subr.mxu0 0.0
      %3726 = vmatpush1.msra.mxu0 0.0
      %3727 = vmatprep.subr.mxu0 0.0
      %3728 = vmatpush1.msra.mxu0 0.0
      %3729 = vmatprep.subr.mxu0 0.0
      %3730 = vmatpush1.msra.mxu0 0.0
      %3731 = vmatprep.subr.mxu0 0.0
      %3732 = vmatpush1.msra.mxu0 0.0
      %3733 = vmatprep.subr.mxu0 0.0
      %3734 = vmatpush1.msra.mxu0 0.0
      %3735 = vmatprep.subr.mxu0 0.0
      %3736 = vmatpush1.msra.mxu0 0.0
      %3737 = vmatprep.subr.mxu0 0.0
      %3738 = vmatpush1.msra.mxu0 0.0
      %3739 = vmatprep.subr.mxu0 0.0
      %3740 = vmatpush1.msra.mxu0 0.0
      %3741 = vmatprep.subr.mxu0 0.0
      %3742 = vmatpush1.msra.mxu0 0.0
      %3743 = vmatprep.subr.mxu0 0.0
      %3744 = vmatpush1.msra.mxu0 0.0
      %3745 = vmatprep.subr.mxu0 0.0
      %3746 = vmatpush1.msra.mxu0 0.0
      %3747 = vmatprep.subr.mxu0 0.0
      %3748 = vmatpush1.msra.mxu0 0.0
      %3749 = vmatprep.subr.mxu0 0.0
      %3750 = vmatpush1.msra.mxu0 0.0
      %3751 = vmatprep.mubr.f32.mxu0 0.0
      %3752 = vmatmul.mubr.f32.gmra.mrb[0].mxu0 %v3685
      %v3753 = vpop.f32.mrb[0].mxu0
      %v3754 = vadd.f32 0.0, %v3753
      %v3755 = vpop.f32.mrb[0].mxu0
      %v3756 = vadd.f32 0.0, %v3755
      %3757 = vdwg.mxu0
      %3758 = vmatprep.subr.mxu0 %v3669
      %3759 = vmatpush1.msra.mxu0 %v3668
      %3760 = vmatprep.subr.mxu0 0.0
      %3761 = vmatpush1.msra.mxu0 0.0
      %3762 = vmatprep.subr.mxu0 0.0
      %3763 = vmatpush1.msra.mxu0 0.0
      %3764 = vmatprep.subr.mxu0 0.0
      %3765 = vmatpush1.msra.mxu0 0.0
      %3766 = vmatprep.subr.mxu0 0.0
      %3767 = vmatpush1.msra.mxu0 0.0
      %3768 = vmatprep.subr.mxu0 0.0
      %3769 = vmatpush1.msra.mxu0 0.0
      %3770 = vmatprep.subr.mxu0 0.0
      %3771 = vmatpush1.msra.mxu0 0.0
      %3772 = vmatprep.subr.mxu0 0.0
      %3773 = vmatpush1.msra.mxu0 0.0
      %3774 = vmatprep.subr.mxu0 0.0
      %3775 = vmatpush1.msra.mxu0 0.0
      %3776 = vmatprep.subr.mxu0 0.0
      %3777 = vmatpush1.msra.mxu0 0.0
      %3778 = vmatprep.subr.mxu0 0.0
      %3779 = vmatpush1.msra.mxu0 0.0
      %3780 = vmatprep.subr.mxu0 0.0
      %3781 = vmatpush1.msra.mxu0 0.0
      %3782 = vmatprep.subr.mxu0 0.0
      %3783 = vmatpush1.msra.mxu0 0.0
      %3784 = vmatprep.subr.mxu0 0.0
      %3785 = vmatpush1.msra.mxu0 0.0
      %3786 = vmatprep.subr.mxu0 0.0
      %3787 = vmatpush1.msra.mxu0 0.0
      %3788 = vmatprep.subr.mxu0 0.0
      %3789 = vmatpush1.msra.mxu0 0.0
      %3790 = vmatprep.subr.mxu0 0.0
      %3791 = vmatpush1.msra.mxu0 0.0
      %3792 = vmatprep.subr.mxu0 0.0
      %3793 = vmatpush1.msra.mxu0 0.0
      %3794 = vmatprep.subr.mxu0 0.0
      %3795 = vmatpush1.msra.mxu0 0.0
      %3796 = vmatprep.subr.mxu0 0.0
      %3797 = vmatpush1.msra.mxu0 0.0
      %3798 = vmatprep.subr.mxu0 0.0
      %3799 = vmatpush1.msra.mxu0 0.0
      %3800 = vmatprep.subr.mxu0 0.0
      %3801 = vmatpush1.msra.mxu0 0.0
      %3802 = vmatprep.subr.mxu0 0.0
      %3803 = vmatpush1.msra.mxu0 0.0
      %3804 = vmatprep.subr.mxu0 0.0
      %3805 = vmatpush1.msra.mxu0 0.0
      %3806 = vmatprep.subr.mxu0 0.0
      %3807 = vmatpush1.msra.mxu0 0.0
      %3808 = vmatprep.subr.mxu0 0.0
      %3809 = vmatpush1.msra.mxu0 0.0
      %3810 = vmatprep.subr.mxu0 0.0
      %3811 = vmatpush1.msra.mxu0 0.0
      %3812 = vmatprep.subr.mxu0 0.0
      %3813 = vmatpush1.msra.mxu0 0.0
      %3814 = vmatprep.subr.mxu0 0.0
      %3815 = vmatpush1.msra.mxu0 0.0
      %3816 = vmatprep.subr.mxu0 0.0
      %3817 = vmatpush1.msra.mxu0 0.0
      %3818 = vmatprep.subr.mxu0 0.0
      %3819 = vmatpush1.msra.mxu0 0.0
      %3820 = vmatprep.subr.mxu0 0.0
      %3821 = vmatpush1.msra.mxu0 0.0
      %3822 = vmatprep.mubr.f32.mxu0 0.0
      %3823 = vmatmul.mubr.f32.gmra.mrb[0].mxu0 %v3685
      %v3824 = vpop.f32.mrb[0].mxu0
      %v3825 = vadd.f32 0.0, %v3824
      %v3826 = vpop.f32.mrb[0].mxu0
      %v3827 = vadd.f32 0.0, %v3826
      %3828 = vdwg.mxu0
      %3829 = vmatprep.subr.mxu0 %v3671
      %3830 = vmatpush1.msra.mxu0 %v3670
      %3831 = vmatprep.subr.mxu0 0.0
      %3832 = vmatpush1.msra.mxu0 0.0
      %3833 = vmatprep.subr.mxu0 0.0
      %3834 = vmatpush1.msra.mxu0 0.0
      %3835 = vmatprep.subr.mxu0 0.0
      %3836 = vmatpush1.msra.mxu0 0.0
      %3837 = vmatprep.subr.mxu0 0.0
      %3838 = vmatpush1.msra.mxu0 0.0
      %3839 = vmatprep.subr.mxu0 0.0
      %3840 = vmatpush1.msra.mxu0 0.0
      %3841 = vmatprep.subr.mxu0 0.0
      %3842 = vmatpush1.msra.mxu0 0.0
      %3843 = vmatprep.subr.mxu0 0.0
      %3844 = vmatpush1.msra.mxu0 0.0
      %3845 = vmatprep.subr.mxu0 0.0
      %3846 = vmatpush1.msra.mxu0 0.0
      %3847 = vmatprep.subr.mxu0 0.0
      %3848 = vmatpush1.msra.mxu0 0.0
      %3849 = vmatprep.subr.mxu0 0.0
      %3850 = vmatpush1.msra.mxu0 0.0
      %3851 = vmatprep.subr.mxu0 0.0
      %3852 = vmatpush1.msra.mxu0 0.0
      %3853 = vmatprep.subr.mxu0 0.0
      %3854 = vmatpush1.msra.mxu0 0.0
      %3855 = vmatprep.subr.mxu0 0.0
      %3856 = vmatpush1.msra.mxu0 0.0
      %3857 = vmatprep.subr.mxu0 0.0
      %3858 = vmatpush1.msra.mxu0 0.0
      %3859 = vmatprep.subr.mxu0 0.0
      %3860 = vmatpush1.msra.mxu0 0.0
      %3861 = vmatprep.subr.mxu0 0.0
      %3862 = vmatpush1.msra.mxu0 0.0
      %3863 = vmatprep.subr.mxu0 0.0
      %3864 = vmatpush1.msra.mxu0 0.0
      %3865 = vmatprep.subr.mxu0 0.0
      %3866 = vmatpush1.msra.mxu0 0.0
      %3867 = vmatprep.subr.mxu0 0.0
      %3868 = vmatpush1.msra.mxu0 0.0
      %3869 = vmatprep.subr.mxu0 0.0
      %3870 = vmatpush1.msra.mxu0 0.0
      %3871 = vmatprep.subr.mxu0 0.0
      %3872 = vmatpush1.msra.mxu0 0.0
      %3873 = vmatprep.subr.mxu0 0.0
      %3874 = vmatpush1.msra.mxu0 0.0
      %3875 = vmatprep.subr.mxu0 0.0
      %3876 = vmatpush1.msra.mxu0 0.0
      %3877 = vmatprep.subr.mxu0 0.0
      %3878 = vmatpush1.msra.mxu0 0.0
      %3879 = vmatprep.subr.mxu0 0.0
      %3880 = vmatpush1.msra.mxu0 0.0
      %3881 = vmatprep.subr.mxu0 0.0
      %3882 = vmatpush1.msra.mxu0 0.0
      %3883 = vmatprep.subr.mxu0 0.0
      %3884 = vmatpush1.msra.mxu0 0.0
      %3885 = vmatprep.subr.mxu0 0.0
      %3886 = vmatpush1.msra.mxu0 0.0
      %3887 = vmatprep.subr.mxu0 0.0
      %3888 = vmatpush1.msra.mxu0 0.0
      %3889 = vmatprep.subr.mxu0 0.0
      %3890 = vmatpush1.msra.mxu0 0.0
      %3891 = vmatprep.subr.mxu0 0.0
      %3892 = vmatpush1.msra.mxu0 0.0
      %3893 = vmatprep.mubr.f32.mxu0 0.0
      %3894 = vmatmul.mubr.f32.gmra.mrb[0].mxu0 %v3685
      %v3895 = vpop.f32.mrb[0].mxu0
      %v3896 = vadd.f32 0.0, %v3895
      %v3897 = vpop.f32.mrb[0].mxu0
      %v3898 = vadd.f32 0.0, %v3897
      %3899 = vdwg.mxu0
      %3900 = vmatprep.subr.mxu0 %v3673
      %3901 = vmatpush1.msra.mxu0 %v3672
      %3902 = vmatprep.subr.mxu0 0.0
      %3903 = vmatpush1.msra.mxu0 0.0
      %3904 = vmatprep.subr.mxu0 0.0
      %3905 = vmatpush1.msra.mxu0 0.0
      %3906 = vmatprep.subr.mxu0 0.0
      %3907 = vmatpush1.msra.mxu0 0.0
      %3908 = vmatprep.subr.mxu0 0.0
      %3909 = vmatpush1.msra.mxu0 0.0
      %3910 = vmatprep.subr.mxu0 0.0
      %3911 = vmatpush1.msra.mxu0 0.0
      %3912 = vmatprep.subr.mxu0 0.0
      %3913 = vmatpush1.msra.mxu0 0.0
      %3914 = vmatprep.subr.mxu0 0.0
      %3915 = vmatpush1.msra.mxu0 0.0
      %3916 = vmatprep.subr.mxu0 0.0
      %3917 = vmatpush1.msra.mxu0 0.0
      %3918 = vmatprep.subr.mxu0 0.0
      %3919 = vmatpush1.msra.mxu0 0.0
      %3920 = vmatprep.subr.mxu0 0.0
      %3921 = vmatpush1.msra.mxu0 0.0
      %3922 = vmatprep.subr.mxu0 0.0
      %3923 = vmatpush1.msra.mxu0 0.0
      %3924 = vmatprep.subr.mxu0 0.0
      %3925 = vmatpush1.msra.mxu0 0.0
      %3926 = vmatprep.subr.mxu0 0.0
      %3927 = vmatpush1.msra.mxu0 0.0
      %3928 = vmatprep.subr.mxu0 0.0
      %3929 = vmatpush1.msra.mxu0 0.0
      %3930 = vmatprep.subr.mxu0 0.0
      %3931 = vmatpush1.msra.mxu0 0.0
      %3932 = vmatprep.subr.mxu0 0.0
      %3933 = vmatpush1.msra.mxu0 0.0
      %3934 = vmatprep.subr.mxu0 0.0
      %3935 = vmatpush1.msra.mxu0 0.0
      %3936 = vmatprep.subr.mxu0 0.0
      %3937 = vmatpush1.msra.mxu0 0.0
      %3938 = vmatprep.subr.mxu0 0.0
      %3939 = vmatpush1.msra.mxu0 0.0
      %3940 = vmatprep.subr.mxu0 0.0
      %3941 = vmatpush1.msra.mxu0 0.0
      %3942 = vmatprep.subr.mxu0 0.0
      %3943 = vmatpush1.msra.mxu0 0.0
      %3944 = vmatprep.subr.mxu0 0.0
      %3945 = vmatpush1.msra.mxu0 0.0
      %3946 = vmatprep.subr.mxu0 0.0
      %3947 = vmatpush1.msra.mxu0 0.0
      %3948 = vmatprep.subr.mxu0 0.0
      %3949 = vmatpush1.msra.mxu0 0.0
      %3950 = vmatprep.subr.mxu0 0.0
      %3951 = vmatpush1.msra.mxu0 0.0
      %3952 = vmatprep.subr.mxu0 0.0
      %3953 = vmatpush1.msra.mxu0 0.0
      %3954 = vmatprep.subr.mxu0 0.0
      %3955 = vmatpush1.msra.mxu0 0.0
      %3956 = vmatprep.subr.mxu0 0.0
      %3957 = vmatpush1.msra.mxu0 0.0
      %3958 = vmatprep.subr.mxu0 0.0
      %3959 = vmatpush1.msra.mxu0 0.0
      %3960 = vmatprep.subr.mxu0 0.0
      %3961 = vmatpush1.msra.mxu0 0.0
      %3962 = vmatprep.subr.mxu0 0.0
      %3963 = vmatpush1.msra.mxu0 0.0
      %3964 = vmatprep.mubr.f32.mxu0 0.0
      %3965 = vmatmul.mubr.f32.gmra.mrb[0].mxu0 %v3685
      %v3966 = vpop.f32.mrb[0].mxu0
      %v3967 = vadd.f32 0.0, %v3966
      %v3968 = vpop.f32.mrb[0].mxu0
      %v3969 = vadd.f32 0.0, %v3968
      %3970 = vdwg.mxu0
      %3971 = vmatprep.subr.mxu0 0.0
      %3972 = vmatpush1.msra.mxu0 %v3674
      %3973 = vmatprep.subr.mxu0 0.0
      %3974 = vmatpush1.msra.mxu0 0.0
      %3975 = vmatprep.subr.mxu0 0.0
      %3976 = vmatpush1.msra.mxu0 0.0
      %3977 = vmatprep.subr.mxu0 0.0
      %3978 = vmatpush1.msra.mxu0 0.0
      %3979 = vmatprep.subr.mxu0 0.0
      %3980 = vmatpush1.msra.mxu0 0.0
      %3981 = vmatprep.subr.mxu0 0.0
      %3982 = vmatpush1.msra.mxu0 0.0
      %3983 = vmatprep.subr.mxu0 0.0
      %3984 = vmatpush1.msra.mxu0 0.0
      %3985 = vmatprep.subr.mxu0 0.0
      %3986 = vmatpush1.msra.mxu0 0.0
      %3987 = vmatprep.subr.mxu0 0.0
      %3988 = vmatpush1.msra.mxu0 0.0
      %3989 = vmatprep.subr.mxu0 0.0
      %3990 = vmatpush1.msra.mxu0 0.0
      %3991 = vmatprep.subr.mxu0 0.0
      %3992 = vmatpush1.msra.mxu0 0.0
      %3993 = vmatprep.subr.mxu0 0.0
      %3994 = vmatpush1.msra.mxu0 0.0
      %3995 = vmatprep.subr.mxu0 0.0
      %3996 = vmatpush1.msra.mxu0 0.0
      %3997 = vmatprep.subr.mxu0 0.0
      %3998 = vmatpush1.msra.mxu0 0.0
      %3999 = vmatprep.subr.mxu0 0.0
      %4000 = vmatpush1.msra.mxu0 0.0
      %4001 = vmatprep.subr.mxu0 0.0
      %4002 = vmatpush1.msra.mxu0 0.0
      %4003 = vmatprep.subr.mxu0 0.0
      %4004 = vmatpush1.msra.mxu0 0.0
      %4005 = vmatprep.subr.mxu0 0.0
      %4006 = vmatpush1.msra.mxu0 0.0
      %4007 = vmatprep.subr.mxu0 0.0
      %4008 = vmatpush1.msra.mxu0 0.0
      %4009 = vmatprep.subr.mxu0 0.0
      %4010 = vmatpush1.msra.mxu0 0.0
      %4011 = vmatprep.subr.mxu0 0.0
      %4012 = vmatpush1.msra.mxu0 0.0
      %4013 = vmatprep.subr.mxu0 0.0
      %4014 = vmatpush1.msra.mxu0 0.0
      %4015 = vmatprep.subr.mxu0 0.0
      %4016 = vmatpush1.msra.mxu0 0.0
      %4017 = vmatprep.subr.mxu0 0.0
      %4018 = vmatpush1.msra.mxu0 0.0
      %4019 = vmatprep.subr.mxu0 0.0
      %4020 = vmatpush1.msra.mxu0 0.0
      %4021 = vmatprep.subr.mxu0 0.0
      %4022 = vmatpush1.msra.mxu0 0.0
      %4023 = vmatprep.subr.mxu0 0.0
      %4024 = vmatpush1.msra.mxu0 0.0
      %4025 = vmatprep.subr.mxu0 0.0
      %4026 = vmatpush1.msra.mxu0 0.0
      %4027 = vmatprep.subr.mxu0 0.0
      %4028 = vmatpush1.msra.mxu0 0.0
      %4029 = vmatprep.subr.mxu0 0.0
      %4030 = vmatpush1.msra.mxu0 0.0
      %4031 = vmatprep.subr.mxu0 0.0
      %4032 = vmatpush1.msra.mxu0 0.0
      %4033 = vmatprep.subr.mxu0 0.0
      %4034 = vmatpush1.msra.mxu0 0.0
      %4035 = vmatprep.mubr.f32.mxu0 0.0
      %4036 = vmatmul.mubr.f32.gmra.mrb[0].mxu0 %v3685
      %v4037 = vpop.f32.mrb[0].mxu0
      %v4038 = vadd.f32 0.0, %v4037
      %v4039 = vpop.f32.mrb[0].mxu0
      %4040 = vdwg.mxu0
      %v4041 = vadd.f32 %v3634, %v3754
      %v4042 = vadd.f32 %v3635, %v3756
      %v4043 = vadd.f32 %v3636, %v3825
      %v4044 = vadd.f32 %v3637, %v3827
      %v4045 = vadd.f32 %v3638, %v3896
      %v4046 = vadd.f32 %v3639, %v3898
      %v4047 = vadd.f32 %v3640, %v3967
      %v4048 = vadd.f32 %v3641, %v3969
      %v4049 = vadd.f32 %v3642, %v4038
      %4050 = vst [vmem:[%s291] sm:$0xff] %v4041
      %4051 = vst [vmem:[%s291 + $0x8] sm:$0xff] %v4042
      %4052 = vst [vmem:[%s291 + $0x10] sm:$0xff] %v4043
      %4053 = vst [vmem:[%s291 + $0x18] sm:$0xff] %v4044
      %4054 = vst [vmem:[%s291 + $0x20] sm:$0xff] %v4045
      %4055 = vst [vmem:[%s291 + $0x28] sm:$0xff] %v4046
      %4056 = vst [vmem:[%s291 + $0x30] sm:$0xff] %v4047
      %4057 = vst [vmem:[%s291 + $0x38] sm:$0xff] %v4048
      %vm4058 = vcmask 506880
      %4059 = vst.msk [vmem:[%s291 + $0x40] sm:$0xff] %vm4058, %v4049
      %v4060 = vsel %vm390, %v4041, 0.0
      %v4061 = vsel %vm391, %v4042, 0.0
      %v4062 = vsel %vm392, %v4043, 0.0
      %v4063 = vsel %vm393, %v4044, 0.0
      %v4064 = vsel %vm394, %v4045, 0.0
      %v4065 = vsel %vm395, %v4046, 0.0
      %v4066 = vsel %vm396, %v4047, 0.0
      %v4067 = vsel %vm397, %v4048, 0.0
      %v4068 = vsel %vm398, %v4049, 0.0
      %v4069 = vadd.f32 %v4060, %v4061
      %v4070 = vadd.f32 %v4069, %v4062
      %v4071 = vadd.f32 %v4070, %v4063
      %v4072 = vadd.f32 %v4071, %v4064
      %v4073 = vadd.f32 %v4072, %v4065
      %v4074 = vadd.f32 %v4073, %v4066
      %v4075 = vadd.f32 %v4074, %v4067
      %v4076 = vsel %vm4058, %v4068, 0.0
      %v4077 = vadd.f32 %v4075, %v4076
      %4078 = vadd.xlane.f32.xlu0 %v4077
      %v4079 = vpop.xlane.xlu0 %4078
      %vm4080 = vcmask 7168
      %4081 = vst.msk [vmem:[%s295] sm:$0xff] %vm4080, %v4079
      %v4082 = vmul.f32 %v4060, %v4060
      %v4083 = vmul.f32 %v4061, %v4061
      %v4084 = vmul.f32 %v4062, %v4062
      %v4085 = vmul.f32 %v4063, %v4063
      %v4086 = vmul.f32 %v4064, %v4064
      %v4087 = vmul.f32 %v4065, %v4065
      %v4088 = vmul.f32 %v4066, %v4066
      %v4089 = vmul.f32 %v4067, %v4067
      %v4090 = vmul.f32 %v4068, %v4068
      %v4091 = vadd.f32 %v4082, %v4083
      %v4092 = vadd.f32 %v4091, %v4084
      %v4093 = vadd.f32 %v4092, %v4085
      %v4094 = vadd.f32 %v4093, %v4086
      %v4095 = vadd.f32 %v4094, %v4087
      %v4096 = vadd.f32 %v4095, %v4088
      %v4097 = vadd.f32 %v4096, %v4089
      %v4098 = vsel %vm4058, %v4090, 0.0
      %v4099 = vadd.f32 %v4097, %v4098
      %4100 = vadd.xlane.f32.xlu0 %v4099
      %v4101 = vpop.xlane.xlu0 %4100
      %4102 = vst.msk [vmem:[%s299] sm:$0xff] %vm4080, %v4101
      %p4103 = scmp.lt.s32.totalorder %s19, 1
      %s4104 = scalar_select %p4103, %s19, 1
      %s4105 = smul.addr %s4104, 9
      %s4106 = smul.addr %s4105, 8
      %s4107 = scalar_lea.vmem %s5, %s4106
      %p4108 = scmp.lt.s32.totalorder %s19, 1
      %s4109 = scalar_select %p4108, %s19, 1
      %s4110 = smul.addr %s4109, 8
      %s4111 = scalar_lea.vmem %s6, %s4110
      %p4112 = scmp.lt.s32.totalorder %s19, 1
      %s4113 = scalar_select %p4112, %s19, 1
      %s4114 = smul.addr %s4113, 8
      %s4115 = scalar_lea.vmem %s7, %s4114
      // Predicated region
      $region41: #{unet_up_block_forward.5} parent=39 // pred_check
        %p4116 = pneg %p147
      $region42: #{unet_up_block_forward.5} parent=39 // pred_check_branch
        %4118 = sbr.rel (%p4116) target = $region44
      $region43: #{unet_up_block_forward.5} parent=39 // pred_region
        _
      $region44: #{unet_up_block_forward.5} parent=39 // pred_fallthru
        _
      // Predicated region
      $region45: #{unet_up_block_forward.5} parent=39 // pred_check
        %p4119 = pneg %p173
      $region46: #{unet_up_block_forward.5} parent=39 // pred_check_branch
        %4121 = sbr.rel (%p4119) target = $region48
      $region47: #{unet_up_block_forward.5} parent=39 // pred_region
        _
      $region48: #{unet_up_block_forward.5} parent=39 // pred_fallthru
        _
      // Predicated region
      $region49: #{unet_up_block_forward.5} parent=39 // pred_check
        %p4122 = pneg %p199
      $region50: #{unet_up_block_forward.5} parent=39 // pred_check_branch
        %4124 = sbr.rel (%p4122) target = $region52
      $region51: #{unet_up_block_forward.5} parent=39 // pred_region
        _
      $region52: #{unet_up_block_forward.5} parent=39 // pred_fallthru
        _
    $region40: #{unet_up_block_forward.5} parent=5 // pred_fallthru
      _
    %p4125 = scmp.le.s32.totalorder 2, %s14
    // Predicated region
    $region53: #{unet_up_block_forward.5} parent=5 // pred_check
      %p4126 = pneg %p4125
    $region54: #{unet_up_block_forward.5} parent=5 // pred_check_branch
      %4128 = sbr.rel (%p4126) target = $region56
    $region55: #{unet_up_block_forward.5} parent=5 // pred_region
      %s4129 = ssub.s32 %s14, 2
      // Predicated region
      $region57: #{unet_up_block_forward.5} parent=55 // pred_check
        %p4130 = pneg %p153
      $region58: #{unet_up_block_forward.5} parent=55 // pred_check_branch
        %4132 = sbr.rel (%p4130) target = $region60
      $region59: #{unet_up_block_forward.5} parent=55 // pred_region
        %p4133 = scmp.lt.s32.totalorder %s20, 1
        %s4134 = scalar_select %p4133, %s20, 1
        %s4135 = smul.addr %s4134, 9
        %s4136 = smul.addr %s4135, 8
        %s4137 = scalar_lea.vmem %s5, %s4136
      $region60: #{unet_up_block_forward.5} parent=55 // pred_fallthru
        _
      // Predicated region
      $region61: #{unet_up_block_forward.5} parent=55 // pred_check
        %p4138 = pneg %p179
      $region62: #{unet_up_block_forward.5} parent=55 // pred_check_branch
        %4140 = sbr.rel (%p4138) target = $region64
      $region63: #{unet_up_block_forward.5} parent=55 // pred_region
        %p4141 = scmp.lt.s32.totalorder %s20, 1
        %s4142 = scalar_select %p4141, %s20, 1
        %s4143 = smul.addr %s4142, 8
        %s4144 = scalar_lea.vmem %s6, %s4143
      $region64: #{unet_up_block_forward.5} parent=55 // pred_fallthru
        _
      // Predicated region
      $region65: #{unet_up_block_forward.5} parent=55 // pred_check
        %p4145 = pneg %p205
      $region66: #{unet_up_block_forward.5} parent=55 // pred_check_branch
        %4147 = sbr.rel (%p4145) target = $region68
      $region67: #{unet_up_block_forward.5} parent=55 // pred_region
        %p4148 = scmp.lt.s32.totalorder %s20, 1
        %s4149 = scalar_select %p4148, %s20, 1
        %s4150 = smul.addr %s4149, 8
        %s4151 = scalar_lea.vmem %s7, %s4150
      $region68: #{unet_up_block_forward.5} parent=55 // pred_fallthru
        _
    $region56: #{unet_up_block_forward.5} parent=5 // pred_fallthru
      _
  $region6: #{unet_up_block_forward.5} parent=0 // loop_footer
    %s18 = sadd.s32 1, %s14
  $region7: #{unet_up_block_forward.5} parent=0 // loop_footer_branch
    %13 = sbr.rel target = $region3
  $region8: #{unet_up_block_forward.5} parent=0 // loop_exit
    _

// kernel: unet_up_block_forward.4
$region0: #{unet_up_block_forward.4}
  #allocation0 [shape = 'u32[]', space=smem, size = 0x4, offset = 0x4, fixed_abs, tag = 'smem constant byte address 0x4 - core index']
  #allocation1 [shape = 'u32[144,128]{1,0:T(1,128)}', space=vmem, size = 0x12000, scoped, tag = 'internal scratch']
  %s0 = inlined_call_operand.vmem [shape: f32[2,8,1086], index: 0, kind: input, shape index: {}]
  %s1 = inlined_call_operand.vmem [shape: f32[9,8,8], index: 1, kind: input, shape index: {}]
  %s2 = inlined_call_operand.vmem [shape: f32[8,1], index: 2, kind: input, shape index: {}]
  %s3 = inlined_call_operand.vmem [shape: f32[8,1], index: 3, kind: input, shape index: {}]
  %s4 = inlined_call_operand.vmem [shape: f32[1,1086], index: 4, kind: input, shape index: {}]
  %s5 = inlined_call_operand.vmem [shape: f32[2,8,1086], index: 5, kind: output, shape index: {0}]
  %s6 = inlined_call_operand.vmem [shape: f32[2,8,1], index: 6, kind: output, shape index: {1}]
  %s7 = inlined_call_operand.vmem [shape: f32[2,8,1], index: 7, kind: output, shape index: {2}]
  %8 = xla_tuple %s5, %s6, %s7
  %s9 = sld [smem:[#allocation0]]
  $region69: #{unet_up_block_forward.4} parent=0
    _
  %s11 = ssub.s32 1, %s9
  %s12 = scalar_select 0, %s11, %s9
  loop: start=0, step=1, limit=4
  $region2: #{unet_up_block_forward.4} parent=0 // loop_pre_header
    _
  $region3: #{unet_up_block_forward.4} parent=0 // loop_header
    %s14 = sphi 0, %s18
    %p15 = scmp.ge.s32.totalorder %s14, 4
    %s24 = sphi 0, %s26
    %s27 = sphi 0, %s24
    %s28 = sphi 0, %s27
    %s44 = sphi 0, %s28
    %s48 = sphi 0, %s48
    %s50 = sphi 0, %s48
    %s51 = sphi 0, %s50
    %s65 = sphi 0, %s51
    %s69 = sphi 0, %s69
    %s71 = sphi 0, %s69
    %s72 = sphi 0, %s71
    %s86 = sphi 0, %s72
    %s90 = sphi 0, %s90
    %s92 = sphi 0, %s90
    %s93 = sphi 0, %s92
    %s107 = sphi 0, %s93
    %s111 = sphi 0, %s111
    %s113 = sphi 0, %s111
    %s114 = sphi 0, %s113
    %s128 = sphi 0, %s114
    %s134 = sphi 0, %s136
    %s137 = sphi 0, %s134
    %s138 = sphi 0, %s137
    %s154 = sphi 0, %s138
    %s160 = sphi 0, %s162
    %s163 = sphi 0, %s160
    %s164 = sphi 0, %s163
    %s180 = sphi 0, %s164
    %s186 = sphi 0, %s188
    %s189 = sphi 0, %s186
    %s190 = sphi 0, %s189
    %s206 = sphi 0, %s190
  $region4: #{unet_up_block_forward.4} parent=0 // loop_header_branch
    %17 = sbr.rel (%p15) target = $region8
  $region5: #{unet_up_block_forward.4} parent=0 // loop_body
    %s19 = ssub.s32 %s14, 1
    %s20 = ssub.s32 %s14, 2
    %s21 = sadd.s32 %s14, 1
    %s22 = ssub.s32 %s14, %s21
    %p23 = scmp.eq.s32.totalorder %s22, 0
    %s25 = sadd.s32 %s24, 1
    %s26 = scalar_select %p23, %s24, %s25
    %p29 = pneg %p23
    %p30 = scmp.eq.s32.totalorder %s14, 1
    %p31 = por %p29, %p30
    %p32 = scmp.ne.s32.totalorder %s24, %s27
    %p33 = scmp.eq.s32.totalorder %s14, 0
    %p34 = por %p32, %p33
    %p35 = scmp.ne.s32.totalorder %s24, %s27
    %p36 = scmp.eq.s32.totalorder %s19, 1
    %p37 = por %p35, %p36
    %p38 = scmp.ne.s32.totalorder %s27, %s28
    %p39 = scmp.eq.s32.totalorder %s19, 0
    %p40 = por %p38, %p39
    %p41 = scmp.ne.s32.totalorder %s27, %s28
    %p42 = scmp.eq.s32.totalorder %s20, 1
    %p43 = por %p41, %p42
    %p45 = scmp.ne.s32.totalorder %s28, %s44
    %p46 = scmp.eq.s32.totalorder %s20, 0
    %p47 = por %p45, %p46
    %s49 = sadd.s32 %s48, 1
    %p52 = scmp.eq.s32.totalorder %s14, 1
    %p53 = scmp.ne.s32.totalorder %s48, %s50
    %p54 = scmp.eq.s32.totalorder %s14, 0
    %p55 = por %p53, %p54
    %p56 = scmp.ne.s32.totalorder %s48, %s50
    %p57 = scmp.eq.s32.totalorder %s19, 1
    %p58 = por %p56, %p57
    %p59 = scmp.ne.s32.totalorder %s50, %s51
    %p60 = scmp.eq.s32.totalorder %s19, 0
    %p61 = por %p59, %p60
    %p62 = scmp.ne.s32.totalorder %s50, %s51
    %p63 = scmp.eq.s32.totalorder %s20, 1
    %p64 = por %p62, %p63
    %p66 = scmp.ne.s32.totalorder %s51, %s65
    %p67 = scmp.eq.s32.totalorder %s20, 0
    %p68 = por %p66, %p67
    %s70 = sadd.s32 %s69, 1
    %p73 = scmp.eq.s32.totalorder %s14, 1
    %p74 = scmp.ne.s32.totalorder %s69, %s71
    %p75 = scmp.eq.s32.totalorder %s14, 0
    %p76 = por %p74, %p75
    %p77 = scmp.ne.s32.totalorder %s69, %s71
    %p78 = scmp.eq.s32.totalorder %s19, 1
    %p79 = por %p77, %p78
    %p80 = scmp.ne.s32.totalorder %s71, %s72
    %p81 = scmp.eq.s32.totalorder %s19, 0
    %p82 = por %p80, %p81
    %p83 = scmp.ne.s32.totalorder %s71, %s72
    %p84 = scmp.eq.s32.totalorder %s20, 1
    %p85 = por %p83, %p84
    %p87 = scmp.ne.s32.totalorder %s72, %s86
    %p88 = scmp.eq.s32.totalorder %s20, 0
    %p89 = por %p87, %p88
    %s91 = sadd.s32 %s90, 1
    %p94 = scmp.eq.s32.totalorder %s14, 1
    %p95 = scmp.ne.s32.totalorder %s90, %s92
    %p96 = scmp.eq.s32.totalorder %s14, 0
    %p97 = por %p95, %p96
    %p98 = scmp.ne.s32.totalorder %s90, %s92
    %p99 = scmp.eq.s32.totalorder %s19, 1
    %p100 = por %p98, %p99
    %p101 = scmp.ne.s32.totalorder %s92, %s93
    %p102 = scmp.eq.s32.totalorder %s19, 0
    %p103 = por %p101, %p102
    %p104 = scmp.ne.s32.totalorder %s92, %s93
    %p105 = scmp.eq.s32.totalorder %s20, 1
    %p106 = por %p104, %p105
    %p108 = scmp.ne.s32.totalorder %s93, %s107
    %p109 = scmp.eq.s32.totalorder %s20, 0
    %p110 = por %p108, %p109
    %s112 = sadd.s32 %s111, 1
    %p115 = scmp.eq.s32.totalorder %s14, 1
    %p116 = scmp.ne.s32.totalorder %s111, %s113
    %p117 = scmp.eq.s32.totalorder %s14, 0
    %p118 = por %p116, %p117
    %p119 = scmp.ne.s32.totalorder %s111, %s113
    %p120 = scmp.eq.s32.totalorder %s19, 1
    %p121 = por %p119, %p120
    %p122 = scmp.ne.s32.totalorder %s113, %s114
    %p123 = scmp.eq.s32.totalorder %s19, 0
    %p124 = por %p122, %p123
    %p125 = scmp.ne.s32.totalorder %s113, %s114
    %p126 = scmp.eq.s32.totalorder %s20, 1
    %p127 = por %p125, %p126
    %p129 = scmp.ne.s32.totalorder %s114, %s128
    %p130 = scmp.eq.s32.totalorder %s20, 0
    %p131 = por %p129, %p130
    %s132 = ssub.s32 %s14, %s21
    %p133 = scmp.eq.s32.totalorder %s132, 0
    %s135 = sadd.s32 %s134, 1
    %s136 = scalar_select %p133, %s134, %s135
    %p139 = pneg %p133
    %p140 = scmp.eq.s32.totalorder %s14, 1
    %p141 = por %p139, %p140
    %p142 = scmp.ne.s32.totalorder %s134, %s137
    %p143 = scmp.eq.s32.totalorder %s14, 0
    %p144 = por %p142, %p143
    %p145 = scmp.ne.s32.totalorder %s134, %s137
    %p146 = scmp.eq.s32.totalorder %s19, 1
    %p147 = por %p145, %p146
    %p148 = scmp.ne.s32.totalorder %s137, %s138
    %p149 = scmp.eq.s32.totalorder %s19, 0
    %p150 = por %p148, %p149
    %p151 = scmp.ne.s32.totalorder %s137, %s138
    %p152 = scmp.eq.s32.totalorder %s20, 1
    %p153 = por %p151, %p152
    %p155 = scmp.ne.s32.totalorder %s138, %s154
    %p156 = scmp.eq.s32.totalorder %s20, 0
    %p157 = por %p155, %p156
    %s158 = ssub.s32 %s14, %s21
    %p159 = scmp.eq.s32.totalorder %s158, 0
    %s161 = sadd.s32 %s160, 1
    %s162 = scalar_select %p159, %s160, %s161
    %p165 = pneg %p159
    %p166 = scmp.eq.s32.totalorder %s14, 1
    %p167 = por %p165, %p166
    %p168 = scmp.ne.s32.totalorder %s160, %s163
    %p169 = scmp.eq.s32.totalorder %s14, 0
    %p170 = por %p168, %p169
    %p171 = scmp.ne.s32.totalorder %s160, %s163
    %p172 = scmp.eq.s32.totalorder %s19, 1
    %p173 = por %p171, %p172
    %p174 = scmp.ne.s32.totalorder %s163, %s164
    %p175 = scmp.eq.s32.totalorder %s19, 0
    %p176 = por %p174, %p175
    %p177 = scmp.ne.s32.totalorder %s163, %s164
    %p178 = scmp.eq.s32.totalorder %s20, 1
    %p179 = por %p177, %p178
    %p181 = scmp.ne.s32.totalorder %s164, %s180
    %p182 = scmp.eq.s32.totalorder %s20, 0
    %p183 = por %p181, %p182
    %s184 = ssub.s32 %s14, %s21
    %p185 = scmp.eq.s32.totalorder %s184, 0
    %s187 = sadd.s32 %s186, 1
    %s188 = scalar_select %p185, %s186, %s187
    %p191 = pneg %p185
    %p192 = scmp.eq.s32.totalorder %s14, 1
    %p193 = por %p191, %p192
    %p194 = scmp.ne.s32.totalorder %s186, %s189
    %p195 = scmp.eq.s32.totalorder %s14, 0
    %p196 = por %p194, %p195
    %p197 = scmp.ne.s32.totalorder %s186, %s189
    %p198 = scmp.eq.s32.totalorder %s19, 1
    %p199 = por %p197, %p198
    %p200 = scmp.ne.s32.totalorder %s189, %s190
    %p201 = scmp.eq.s32.totalorder %s19, 0
    %p202 = por %p200, %p201
    %p203 = scmp.ne.s32.totalorder %s189, %s190
    %p204 = scmp.eq.s32.totalorder %s20, 1
    %p205 = por %p203, %p204
    %p207 = scmp.ne.s32.totalorder %s190, %s206
    %p208 = scmp.eq.s32.totalorder %s20, 0
    %p209 = por %p207, %p208
    %p210 = scmp.le.s32.totalorder 1, %s14
    %p211 = scmp.lt.s32.totalorder %s14, 3
    %p212 = pnand %p210, %p211
    %p213 = pneg %p212
    // Predicated region
    $region9: #{unet_up_block_forward.4} parent=5 // pred_check
      _
    $region10: #{unet_up_block_forward.4} parent=5 // pred_check_branch
      %215 = sbr.rel (%p212) target = $region12
    $region11: #{unet_up_block_forward.4} parent=5 // pred_region
      %s216 = ssub.s32 %s14, 1
      // Predicated region
      $region13: #{unet_up_block_forward.4} parent=11 // pred_check
        %p217 = pneg %p61
      $region14: #{unet_up_block_forward.4} parent=11 // pred_check_branch
        %219 = sbr.rel (%p217) target = $region16
      $region15: #{unet_up_block_forward.4} parent=11 // pred_region
        _
      $region16: #{unet_up_block_forward.4} parent=11 // pred_fallthru
        _
      // Predicated region
      $region17: #{unet_up_block_forward.4} parent=11 // pred_check
        %p220 = pneg %p82
      $region18: #{unet_up_block_forward.4} parent=11 // pred_check_branch
        %222 = sbr.rel (%p220) target = $region20
      $region19: #{unet_up_block_forward.4} parent=11 // pred_region
        _
      $region20: #{unet_up_block_forward.4} parent=11 // pred_fallthru
        _
      // Predicated region
      $region21: #{unet_up_block_forward.4} parent=11 // pred_check
        %p223 = pneg %p103
      $region22: #{unet_up_block_forward.4} parent=11 // pred_check_branch
        %225 = sbr.rel (%p223) target = $region24
      $region23: #{unet_up_block_forward.4} parent=11 // pred_region
        _
      $region24: #{unet_up_block_forward.4} parent=11 // pred_fallthru
        _
      // Predicated region
      $region25: #{unet_up_block_forward.4} parent=11 // pred_check
        %p226 = pneg %p124
      $region26: #{unet_up_block_forward.4} parent=11 // pred_check_branch
        %228 = sbr.rel (%p226) target = $region28
      $region27: #{unet_up_block_forward.4} parent=11 // pred_region
        _
      $region28: #{unet_up_block_forward.4} parent=11 // pred_fallthru
        _
    $region12: #{unet_up_block_forward.4} parent=5 // pred_fallthru
      _
    %p229 = scmp.lt.s32.totalorder %s14, 2
    // Predicated region
    $region29: #{unet_up_block_forward.4} parent=5 // pred_check
      %p230 = pneg %p229
    $region30: #{unet_up_block_forward.4} parent=5 // pred_check_branch
      %232 = sbr.rel (%p230) target = $region32
    $region31: #{unet_up_block_forward.4} parent=5 // pred_region
      // Predicated region
      $region33: #{unet_up_block_forward.4} parent=31 // pred_check
        %p233 = pneg %p34
      $region34: #{unet_up_block_forward.4} parent=31 // pred_check_branch
        %235 = sbr.rel (%p233) target = $region36
      $region35: #{unet_up_block_forward.4} parent=31 // pred_region
        %p236 = scmp.lt.s32.totalorder %s14, 1
        %s237 = scalar_select %p236, %s14, 1
        %s238 = smul.addr %s237, 9
        %s239 = smul.addr %s238, 8
        %s240 = scalar_lea.vmem %s0, %s239
      $region36: #{unet_up_block_forward.4} parent=31 // pred_fallthru
        _
    $region32: #{unet_up_block_forward.4} parent=5 // pred_fallthru
      _
    %p241 = scmp.le.s32.totalorder 1, %s14
    %p242 = scmp.lt.s32.totalorder %s14, 3
    %p243 = pnand %p241, %p242
    %p244 = pneg %p243
    // Predicated region
    $region37: #{unet_up_block_forward.4} parent=5 // pred_check
      _
    $region38: #{unet_up_block_forward.4} parent=5 // pred_check_branch
      %246 = sbr.rel (%p243) target = $region40
    $region39: #{unet_up_block_forward.4} parent=5 // pred_region
      %s247 = ssub.s32 %s14, 1
      %p248 = scmp.lt.s32.totalorder %s19, 1
      %s249 = scalar_select %p248, %s19, 1
      %s250 = smul.addr %s249, 9
      %s251 = smul.addr %s250, 8
      %s252 = scalar_lea.vmem %s0, %s251
      %p253 = pneg %p40
      %p254 = pneg %p37
      %p255 = pneg %p61
      %p256 = pneg %p58
      %p257 = pneg %p82
      %p258 = pneg %p79
      %p259 = pneg %p103
      %p260 = pneg %p100
      %p261 = pneg %p124
      %p262 = pneg %p121
      %p263 = pneg %p150
      %p264 = pneg %p147
      %p265 = scmp.lt.s32.totalorder %s19, 1
      %s266 = scalar_select %p265, %s19, 1
      %s267 = smul.addr %s266, 9
      %s268 = smul.addr %s267, 8
      %s269 = scalar_lea.vmem %s5, %s268
      %p270 = pneg %p176
      %p271 = pneg %p173
      %p272 = scmp.lt.s32.totalorder %s19, 1
      %s273 = scalar_select %p272, %s19, 1
      %s274 = smul.addr %s273, 8
      %s275 = scalar_lea.vmem %s6, %s274
      %p276 = pneg %p202
      %p277 = pneg %p199
      %p278 = scmp.lt.s32.totalorder %s19, 1
      %s279 = scalar_select %p278, %s19, 1
      %s280 = smul.addr %s279, 8
      %s281 = scalar_lea.vmem %s7, %s280
      %p282 = scmp.lt.s32.totalorder %s19, 1
      %s283 = scalar_select %p282, %s19, 1
      %s284 = smul.addr %s283, 9
      %s285 = smul.addr %s284, 8
      %s286 = scalar_lea.vmem %s0, %s285
      %p287 = scmp.lt.s32.totalorder %s19, 1
      %s288 = scalar_select %p287, %s19, 1
      %s289 = smul.addr %s288, 9
      %s290 = smul.addr %s289, 8
      %s291 = scalar_lea.vmem %s5, %s290
      %p292 = scmp.lt.s32.totalorder %s19, 1
      %s293 = scalar_select %p292, %s19, 1
      %s294 = smul.addr %s293, 8
      %s295 = scalar_lea.vmem %s6, %s294
      %p296 = scmp.lt.s32.totalorder %s19, 1
      %s297 = scalar_select %p296, %s19, 1
      %s298 = smul.addr %s297, 8
      %s299 = scalar_lea.vmem %s7, %s298
      %v300 = vld [vmem:[%s286] sm:$0xff]
      %v301 = vld [vmem:[%s286 + $0x8] sm:$0xff]
      %v302 = vld [vmem:[%s286 + $0x10] sm:$0xff]
      %v303 = vld [vmem:[%s286 + $0x18] sm:$0xff]
      %v304 = vld [vmem:[%s286 + $0x20] sm:$0xff]
      %v305 = vld [vmem:[%s286 + $0x28] sm:$0xff]
      %v306 = vld [vmem:[%s286 + $0x30] sm:$0xff]
      %v307 = vld [vmem:[%s286 + $0x38] sm:$0xff]
      %v308 = vld [vmem:[%s286 + $0x40] sm:$0xff]
      %v309 = vld [vmem:[%s2] sm:$0xff]
      %311 = vset.pattern.permute.xlu0 0
      %312 = vperm.xlu0 %311, %v309
      %v313 = vpop.permute.xlu0 %312
      %v315 = vmul.f32 %v300, %v313
      %v316 = vmul.f32 %v301, %v313
      %v317 = vmul.f32 %v302, %v313
      %v318 = vmul.f32 %v303, %v313
      %v319 = vmul.f32 %v304, %v313
      %v320 = vmul.f32 %v305, %v313
      %v321 = vmul.f32 %v306, %v313
      %v322 = vmul.f32 %v307, %v313
      %v323 = vmul.f32 %v308, %v313
      %v324 = vld [vmem:[%s3] sm:$0xff]
      %326 = vset.pattern.permute.xlu0 0
      %327 = vperm.xlu0 %326, %v324
      %v328 = vpop.permute.xlu0 %327
      %v330 = vadd.f32 %v315, %v328
      %v331 = vadd.f32 %v316, %v328
      %v332 = vadd.f32 %v317, %v328
      %v333 = vadd.f32 %v318, %v328
      %v334 = vadd.f32 %v319, %v328
      %v335 = vadd.f32 %v320, %v328
      %v336 = vadd.f32 %v321, %v328
      %v337 = vadd.f32 %v322, %v328
      %v338 = vadd.f32 %v323, %v328
      %v339 = vld [vmem:[%s4] sm:$0xff]
      %v340 = vld [vmem:[%s4 + $0x8] sm:$0x1]
      %vm341 = vcmp.gt.f32.partialorder %v339, 0.5
      %vm342 = vcmp.gt.f32.partialorder %v340, 0.5
      %v343 = vsel %vm341, 1, 0
      %v344 = vsel %vm342, 1, 0
      %v345 = vlaneseq
      %v346 = vshrl.u32 %v345, 7
      %v347 = vsub.s32 0, %v346
      %v348 = vrot.slane %v343, %v347
      %v349 = vlaneseq
      %v350 = vshrl.u32 %v349, 7
      %v351 = vsub.s32 1, %v350
      %v352 = vrot.slane %v343, %v351
      %v353 = vlaneseq
      %v354 = vshrl.u32 %v353, 7
      %v355 = vsub.s32 2, %v354
      %v356 = vrot.slane %v343, %v355
      %v357 = vlaneseq
      %v358 = vshrl.u32 %v357, 7
      %v359 = vsub.s32 3, %v358
      %v360 = vrot.slane %v343, %v359
      %v361 = vlaneseq
      %v362 = vshrl.u32 %v361, 7
      %v363 = vsub.s32 4, %v362
      %v364 = vrot.slane %v343, %v363
      %v365 = vlaneseq
      %v366 = vshrl.u32 %v365, 7
      %v367 = vsub.s32 5, %v366
      %v368 = vrot.slane %v343, %v367
      %v369 = vlaneseq
      %v370 = vshrl.u32 %v369, 7
      %v371 = vsub.s32 6, %v370
      %v372 = vrot.slane %v343, %v371
      %v373 = vlaneseq
      %v374 = vshrl.u32 %v373, 7
      %v375 = vsub.s32 7, %v374
      %v376 = vrot.slane %v343, %v375
      %v377 = vlaneseq
      %v378 = vshrl.u32 %v377, 7
      %v379 = vsub.s32 0, %v378
      %v380 = vrot.slane %v344, %v379
      %vm381 = vcmp.eq.s32.totalorder %v348, 1
      %vm382 = vcmp.eq.s32.totalorder %v352, 1
      %vm383 = vcmp.eq.s32.totalorder %v356, 1
      %vm384 = vcmp.eq.s32.totalorder %v360, 1
      %vm385 = vcmp.eq.s32.totalorder %v364, 1
      %vm386 = vcmp.eq.s32.totalorder %v368, 1
      %vm387 = vcmp.eq.s32.totalorder %v372, 1
      %vm388 = vcmp.eq.s32.totalorder %v376, 1
      %vm389 = vcmp.eq.s32.totalorder %v380, 1
      %v390 = vsel %vm381, %v330, 0.0
      %v391 = vsel %vm382, %v331, 0.0
      %v392 = vsel %vm383, %v332, 0.0
      %v393 = vsel %vm384, %v333, 0.0
      %v394 = vsel %vm385, %v334, 0.0
      %v395 = vsel %vm386, %v335, 0.0
      %v396 = vsel %vm387, %v336, 0.0
      %v397 = vsel %vm388, %v337, 0.0
      %v398 = vsel %vm389, %v338, 0.0
      %408 = vrot.lane.b32.xlu0 %v390, 35
      %v409 = vpop.permute.xlu0 %408
      %410 = vrot.lane.b32.xlu0 %v391, 35
      %v411 = vpop.permute.xlu0 %410
      %412 = vrot.lane.b32.xlu0 %v392, 35
      %v413 = vpop.permute.xlu0 %412
      %414 = vrot.lane.b32.xlu0 %v393, 35
      %v415 = vpop.permute.xlu0 %414
      %416 = vrot.lane.b32.xlu0 %v394, 35
      %v417 = vpop.permute.xlu0 %416
      %418 = vrot.lane.b32.xlu0 %v395, 35
      %v419 = vpop.permute.xlu0 %418
      %420 = vrot.lane.b32.xlu0 %v396, 35
      %v421 = vpop.permute.xlu0 %420
      %422 = vrot.lane.b32.xlu0 %v397, 35
      %v423 = vpop.permute.xlu0 %422
      %424 = vrot.lane.b32.xlu0 %v398, 35
      %v425 = vpop.permute.xlu0 %424
      %vm426 = vcmask 285696
      %v427 = vsel %vm426, %v409, %v411
      %v428 = vsel %vm426, %v411, %v413
      %v429 = vsel %vm426, %v413, %v415
      %v430 = vsel %vm426, %v415, %v417
      %v431 = vsel %vm426, %v417, %v419
      %v432 = vsel %vm426, %v419, %v421
      %v433 = vsel %vm426, %v421, %v423
      %v434 = vsel %vm426, %v423, %v425
      %v444 = vsel %vm426, 0.0, %v409
      %vm445 = vcmask 793600
      %v446 = vsel %vm445, %v434, 0.0
      %v447 = vld [vmem:[%s1] sm:$0xff]
      %s448 = scalar_lea.vmem %s1, 8
      %v449 = vld [vmem:[%s448] sm:$0xff]
      %452 = vrot.lane.b32.xlu0 %v444, 127
      %v453 = vpop.permute.xlu0 %452
      %454 = vrot.lane.b32.xlu0 %v427, 127
      %v455 = vpop.permute.xlu0 %454
      %456 = vrot.lane.b32.xlu0 %v428, 127
      %v457 = vpop.permute.xlu0 %456
      %458 = vrot.lane.b32.xlu0 %v429, 127
      %v459 = vpop.permute.xlu0 %458
      %460 = vrot.lane.b32.xlu0 %v430, 127
      %v461 = vpop.permute.xlu0 %460
      %462 = vrot.lane.b32.xlu0 %v431, 127
      %v463 = vpop.permute.xlu0 %462
      %464 = vrot.lane.b32.xlu0 %v432, 127
      %v465 = vpop.permute.xlu0 %464
      %466 = vrot.lane.b32.xlu0 %v433, 127
      %v467 = vpop.permute.xlu0 %466
      %468 = vrot.lane.b32.xlu0 %v446, 127
      %v469 = vpop.permute.xlu0 %468
      %vm470 = vcmask 1039360
      %v471 = vsel %vm470, %v453, %v455
      %v472 = vsel %vm470, %v455, %v457
      %v473 = vsel %vm470, %v457, %v459
      %v474 = vsel %vm470, %v459, %v461
      %v475 = vsel %vm470, %v461, %v463
      %v476 = vsel %vm470, %v463, %v465
      %v477 = vsel %vm470, %v465, %v467
      %v478 = vsel %vm470, %v467, %v469
      %vm488 = vcmask 64512
      %v490 = vsel %vm488, %v449, 0
      %492 = vmatprep.subr.mxu0 %v472
      %493 = vmatpush1.msra.mxu0 %v471
      %494 = vmatprep.subr.mxu0 0.0
      %495 = vmatpush1.msra.mxu0 0.0
      %496 = vmatprep.subr.mxu0 0.0
      %497 = vmatpush1.msra.mxu0 0.0
      %498 = vmatprep.subr.mxu0 0.0
      %499 = vmatpush1.msra.mxu0 0.0
      %500 = vmatprep.subr.mxu0 0.0
      %501 = vmatpush1.msra.mxu0 0.0
      %502 = vmatprep.subr.mxu0 0.0
      %503 = vmatpush1.msra.mxu0 0.0
      %504 = vmatprep.subr.mxu0 0.0
      %505 = vmatpush1.msra.mxu0 0.0
      %506 = vmatprep.subr.mxu0 0.0
      %507 = vmatpush1.msra.mxu0 0.0
      %508 = vmatprep.subr.mxu0 0.0
      %509 = vmatpush1.msra.mxu0 0.0
      %510 = vmatprep.subr.mxu0 0.0
      %511 = vmatpush1.msra.mxu0 0.0
      %512 = vmatprep.subr.mxu0 0.0
      %513 = vmatpush1.msra.mxu0 0.0
      %514 = vmatprep.subr.mxu0 0.0
      %515 = vmatpush1.msra.mxu0 0.0
      %516 = vmatprep.subr.mxu0 0.0
      %517 = vmatpush1.msra.mxu0 0.0
      %518 = vmatprep.subr.mxu0 0.0
      %519 = vmatpush1.msra.mxu0 0.0
      %520 = vmatprep.subr.mxu0 0.0
      %521 = vmatpush1.msra.mxu0 0.0
      %522 = vmatprep.subr.mxu0 0.0
      %523 = vmatpush1.msra.mxu0 0.0
      %524 = vmatprep.subr.mxu0 0.0
      %525 = vmatpush1.msra.mxu0 0.0
      %526 = vmatprep.subr.mxu0 0.0
      %527 = vmatpush1.msra.mxu0 0.0
      %528 = vmatprep.subr.mxu0 0.0
      %529 = vmatpush1.msra.mxu0 0.0
      %530 = vmatprep.subr.mxu0 0.0
      %531 = vmatpush1.msra.mxu0 0.0
      %532 = vmatprep.subr.mxu0 0.0
      %533 = vmatpush1.msra.mxu0 0.0
      %534 = vmatprep.subr.mxu0 0.0
      %535 = vmatpush1.msra.mxu0 0.0
      %536 = vmatprep.subr.mxu0 0.0
      %537 = vmatpush1.msra.mxu0 0.0
      %538 = vmatprep.subr.mxu0 0.0
      %539 = vmatpush1.msra.mxu0 0.0
      %540 = vmatprep.subr.mxu0 0.0
      %541 = vmatpush1.msra.mxu0 0.0
      %542 = vmatprep.subr.mxu0 0.0
      %543 = vmatpush1.msra.mxu0 0.0
      %544 = vmatprep.subr.mxu0 0.0
      %545 = vmatpush1.msra.mxu0 0.0
      %546 = vmatprep.subr.mxu0 0.0
      %547 = vmatpush1.msra.mxu0 0.0
      %548 = vmatprep.subr.mxu0 0.0
      %549 = vmatpush1.msra.mxu0 0.0
      %550 = vmatprep.subr.mxu0 0.0
      %551 = vmatpush1.msra.mxu0 0.0
      %552 = vmatprep.subr.mxu0 0.0
      %553 = vmatpush1.msra.mxu0 0.0
      %554 = vmatprep.subr.mxu0 0.0
      %555 = vmatpush1.msra.mxu0 0.0
      %556 = vmatprep.mubr.f32.mxu0 0.0
      %557 = vmatmul.mubr.f32.gmra.mrb[0].mxu0 %v490
      %v558 = vpop.f32.mrb[0].mxu0
      %v559 = vadd.f32 0.0, %v558
      %v560 = vpop.f32.mrb[0].mxu0
      %v561 = vadd.f32 0.0, %v560
      %562 = vdwg.mxu0
      %563 = vmatprep.subr.mxu0 %v474
      %564 = vmatpush1.msra.mxu0 %v473
      %565 = vmatprep.subr.mxu0 0.0
      %566 = vmatpush1.msra.mxu0 0.0
      %567 = vmatprep.subr.mxu0 0.0
      %568 = vmatpush1.msra.mxu0 0.0
      %569 = vmatprep.subr.mxu0 0.0
      %570 = vmatpush1.msra.mxu0 0.0
      %571 = vmatprep.subr.mxu0 0.0
      %572 = vmatpush1.msra.mxu0 0.0
      %573 = vmatprep.subr.mxu0 0.0
      %574 = vmatpush1.msra.mxu0 0.0
      %575 = vmatprep.subr.mxu0 0.0
      %576 = vmatpush1.msra.mxu0 0.0
      %577 = vmatprep.subr.mxu0 0.0
      %578 = vmatpush1.msra.mxu0 0.0
      %579 = vmatprep.subr.mxu0 0.0
      %580 = vmatpush1.msra.mxu0 0.0
      %581 = vmatprep.subr.mxu0 0.0
      %582 = vmatpush1.msra.mxu0 0.0
      %583 = vmatprep.subr.mxu0 0.0
      %584 = vmatpush1.msra.mxu0 0.0
      %585 = vmatprep.subr.mxu0 0.0
      %586 = vmatpush1.msra.mxu0 0.0
      %587 = vmatprep.subr.mxu0 0.0
      %588 = vmatpush1.msra.mxu0 0.0
      %589 = vmatprep.subr.mxu0 0.0
      %590 = vmatpush1.msra.mxu0 0.0
      %591 = vmatprep.subr.mxu0 0.0
      %592 = vmatpush1.msra.mxu0 0.0
      %593 = vmatprep.subr.mxu0 0.0
      %594 = vmatpush1.msra.mxu0 0.0
      %595 = vmatprep.subr.mxu0 0.0
      %596 = vmatpush1.msra.mxu0 0.0
      %597 = vmatprep.subr.mxu0 0.0
      %598 = vmatpush1.msra.mxu0 0.0
      %599 = vmatprep.subr.mxu0 0.0
      %600 = vmatpush1.msra.mxu0 0.0
      %601 = vmatprep.subr.mxu0 0.0
      %602 = vmatpush1.msra.mxu0 0.0
      %603 = vmatprep.subr.mxu0 0.0
      %604 = vmatpush1.msra.mxu0 0.0
      %605 = vmatprep.subr.mxu0 0.0
      %606 = vmatpush1.msra.mxu0 0.0
      %607 = vmatprep.subr.mxu0 0.0
      %608 = vmatpush1.msra.mxu0 0.0
      %609 = vmatprep.subr.mxu0 0.0
      %610 = vmatpush1.msra.mxu0 0.0
      %611 = vmatprep.subr.mxu0 0.0
      %612 = vmatpush1.msra.mxu0 0.0
      %613 = vmatprep.subr.mxu0 0.0
      %614 = vmatpush1.msra.mxu0 0.0
      %615 = vmatprep.subr.mxu0 0.0
      %616 = vmatpush1.msra.mxu0 0.0
      %617 = vmatprep.subr.mxu0 0.0
      %618 = vmatpush1.msra.mxu0 0.0
      %619 = vmatprep.subr.mxu0 0.0
      %620 = vmatpush1.msra.mxu0 0.0
      %621 = vmatprep.subr.mxu0 0.0
      %622 = vmatpush1.msra.mxu0 0.0
      %623 = vmatprep.subr.mxu0 0.0
      %624 = vmatpush1.msra.mxu0 0.0
      %625 = vmatprep.subr.mxu0 0.0
      %626 = vmatpush1.msra.mxu0 0.0
      %627 = vmatprep.mubr.f32.mxu0 0.0
      %628 = vmatmul.mubr.f32.gmra.mrb[0].mxu0 %v490
      %v629 = vpop.f32.mrb[0].mxu0
      %v630 = vadd.f32 0.0, %v629
      %v631 = vpop.f32.mrb[0].mxu0
      %v632 = vadd.f32 0.0, %v631
      %633 = vdwg.mxu0
      %634 = vmatprep.subr.mxu0 %v476
      %635 = vmatpush1.msra.mxu0 %v475
      %636 = vmatprep.subr.mxu0 0.0
      %637 = vmatpush1.msra.mxu0 0.0
      %638 = vmatprep.subr.mxu0 0.0
      %639 = vmatpush1.msra.mxu0 0.0
      %640 = vmatprep.subr.mxu0 0.0
      %641 = vmatpush1.msra.mxu0 0.0
      %642 = vmatprep.subr.mxu0 0.0
      %643 = vmatpush1.msra.mxu0 0.0
      %644 = vmatprep.subr.mxu0 0.0
      %645 = vmatpush1.msra.mxu0 0.0
      %646 = vmatprep.subr.mxu0 0.0
      %647 = vmatpush1.msra.mxu0 0.0
      %648 = vmatprep.subr.mxu0 0.0
      %649 = vmatpush1.msra.mxu0 0.0
      %650 = vmatprep.subr.mxu0 0.0
      %651 = vmatpush1.msra.mxu0 0.0
      %652 = vmatprep.subr.mxu0 0.0
      %653 = vmatpush1.msra.mxu0 0.0
      %654 = vmatprep.subr.mxu0 0.0
      %655 = vmatpush1.msra.mxu0 0.0
      %656 = vmatprep.subr.mxu0 0.0
      %657 = vmatpush1.msra.mxu0 0.0
      %658 = vmatprep.subr.mxu0 0.0
      %659 = vmatpush1.msra.mxu0 0.0
      %660 = vmatprep.subr.mxu0 0.0
      %661 = vmatpush1.msra.mxu0 0.0
      %662 = vmatprep.subr.mxu0 0.0
      %663 = vmatpush1.msra.mxu0 0.0
      %664 = vmatprep.subr.mxu0 0.0
      %665 = vmatpush1.msra.mxu0 0.0
      %666 = vmatprep.subr.mxu0 0.0
      %667 = vmatpush1.msra.mxu0 0.0
      %668 = vmatprep.subr.mxu0 0.0
      %669 = vmatpush1.msra.mxu0 0.0
      %670 = vmatprep.subr.mxu0 0.0
      %671 = vmatpush1.msra.mxu0 0.0
      %672 = vmatprep.subr.mxu0 0.0
      %673 = vmatpush1.msra.mxu0 0.0
      %674 = vmatprep.subr.mxu0 0.0
      %675 = vmatpush1.msra.mxu0 0.0
      %676 = vmatprep.subr.mxu0 0.0
      %677 = vmatpush1.msra.mxu0 0.0
      %678 = vmatprep.subr.mxu0 0.0
      %679 = vmatpush1.msra.mxu0 0.0
      %680 = vmatprep.subr.mxu0 0.0
      %681 = vmatpush1.msra.mxu0 0.0
      %682 = vmatprep.subr.mxu0 0.0
      %683 = vmatpush1.msra.mxu0 0.0
      %684 = vmatprep.subr.mxu0 0.0
      %685 = vmatpush1.msra.mxu0 0.0
      %686 = vmatprep.subr.mxu0 0.0
      %687 = vmatpush1.msra.mxu0 0.0
      %688 = vmatprep.subr.mxu0 0.0
      %689 = vmatpush1.msra.mxu0 0.0
      %690 = vmatprep.subr.mxu0 0.0
      %691 = vmatpush1.msra.mxu0 0.0
      %692 = vmatprep.subr.mxu0 0.0
      %693 = vmatpush1.msra.mxu0 0.0
      %694 = vmatprep.subr.mxu0 0.0
      %695 = vmatpush1.msra.mxu0 0.0
      %696 = vmatprep.subr.mxu0 0.0
      %697 = vmatpush1.msra.mxu0 0.0
      %698 = vmatprep.mubr.f32.mxu0 0.0
      %699 = vmatmul.mubr.f32.gmra.mrb[0].mxu0 %v490
      %v700 = vpop.f32.mrb[0].mxu0
      %v701 = vadd.f32 0.0, %v700
      %v702 = vpop.f32.mrb[0].mxu0
      %v703 = vadd.f32 0.0, %v702
      %704 = vdwg.mxu0
      %705 = vmatprep.subr.mxu0 %v478
      %706 = vmatpush1.msra.mxu0 %v477
      %707 = vmatprep.subr.mxu0 0.0
      %708 = vmatpush1.msra.mxu0 0.0
      %709 = vmatprep.subr.mxu0 0.0
      %710 = vmatpush1.msra.mxu0 0.0
      %711 = vmatprep.subr.mxu0 0.0
      %712 = vmatpush1.msra.mxu0 0.0
      %713 = vmatprep.subr.mxu0 0.0
      %714 = vmatpush1.msra.mxu0 0.0
      %715 = vmatprep.subr.mxu0 0.0
      %716 = vmatpush1.msra.mxu0 0.0
      %717 = vmatprep.subr.mxu0 0.0
      %718 = vmatpush1.msra.mxu0 0.0
      %719 = vmatprep.subr.mxu0 0.0
      %720 = vmatpush1.msra.mxu0 0.0
      %721 = vmatprep.subr.mxu0 0.0
      %722 = vmatpush1.msra.mxu0 0.0
      %723 = vmatprep.subr.mxu0 0.0
      %724 = vmatpush1.msra.mxu0 0.0
      %725 = vmatprep.subr.mxu0 0.0
      %726 = vmatpush1.msra.mxu0 0.0
      %727 = vmatprep.subr.mxu0 0.0
      %728 = vmatpush1.msra.mxu0 0.0
      %729 = vmatprep.subr.mxu0 0.0
      %730 = vmatpush1.msra.mxu0 0.0
      %731 = vmatprep.subr.mxu0 0.0
      %732 = vmatpush1.msra.mxu0 0.0
      %733 = vmatprep.subr.mxu0 0.0
      %734 = vmatpush1.msra.mxu0 0.0
      %735 = vmatprep.subr.mxu0 0.0
      %736 = vmatpush1.msra.mxu0 0.0
      %737 = vmatprep.subr.mxu0 0.0
      %738 = vmatpush1.msra.mxu0 0.0
      %739 = vmatprep.subr.mxu0 0.0
      %740 = vmatpush1.msra.mxu0 0.0
      %741 = vmatprep.subr.mxu0 0.0
      %742 = vmatpush1.msra.mxu0 0.0
      %743 = vmatprep.subr.mxu0 0.0
      %744 = vmatpush1.msra.mxu0 0.0
      %745 = vmatprep.subr.mxu0 0.0
      %746 = vmatpush1.msra.mxu0 0.0
      %747 = vmatprep.subr.mxu0 0.0
      %748 = vmatpush1.msra.mxu0 0.0
      %749 = vmatprep.subr.mxu0 0.0
      %750 = vmatpush1.msra.mxu0 0.0
      %751 = vmatprep.subr.mxu0 0.0
      %752 = vmatpush1.msra.mxu0 0.0
      %753 = vmatprep.subr.mxu0 0.0
      %754 = vmatpush1.msra.mxu0 0.0
      %755 = vmatprep.subr.mxu0 0.0
      %756 = vmatpush1.msra.mxu0 0.0
      %757 = vmatprep.subr.mxu0 0.0
      %758 = vmatpush1.msra.mxu0 0.0
      %759 = vmatprep.subr.mxu0 0.0
      %760 = vmatpush1.msra.mxu0 0.0
      %761 = vmatprep.subr.mxu0 0.0
      %762 = vmatpush1.msra.mxu0 0.0
      %763 = vmatprep.subr.mxu0 0.0
      %764 = vmatpush1.msra.mxu0 0.0
      %765 = vmatprep.subr.mxu0 0.0
      %766 = vmatpush1.msra.mxu0 0.0
      %767 = vmatprep.subr.mxu0 0.0
      %768 = vmatpush1.msra.mxu0 0.0
      %769 = vmatprep.mubr.f32.mxu0 0.0
      %770 = vmatmul.mubr.f32.gmra.mrb[0].mxu0 %v490
      %v771 = vpop.f32.mrb[0].mxu0
      %v772 = vadd.f32 0.0, %v771
      %v773 = vpop.f32.mrb[0].mxu0
      %v774 = vadd.f32 0.0, %v773
      %775 = vdwg.mxu0
      %776 = vmatprep.subr.mxu0 0.0
      %777 = vmatpush1.msra.mxu0 %v469
      %778 = vmatprep.subr.mxu0 0.0
      %779 = vmatpush1.msra.mxu0 0.0
      %780 = vmatprep.subr.mxu0 0.0
      %781 = vmatpush1.msra.mxu0 0.0
      %782 = vmatprep.subr.mxu0 0.0
      %783 = vmatpush1.msra.mxu0 0.0
      %784 = vmatprep.subr.mxu0 0.0
      %785 = vmatpush1.msra.mxu0 0.0
      %786 = vmatprep.subr.mxu0 0.0
      %787 = vmatpush1.msra.mxu0 0.0
      %788 = vmatprep.subr.mxu0 0.0
      %789 = vmatpush1.msra.mxu0 0.0
      %790 = vmatprep.subr.mxu0 0.0
      %791 = vmatpush1.msra.mxu0 0.0
      %792 = vmatprep.subr.mxu0 0.0
      %793 = vmatpush1.msra.mxu0 0.0
      %794 = vmatprep.subr.mxu0 0.0
      %795 = vmatpush1.msra.mxu0 0.0
      %796 = vmatprep.subr.mxu0 0.0
      %797 = vmatpush1.msra.mxu0 0.0
      %798 = vmatprep.subr.mxu0 0.0
      %799 = vmatpush1.msra.mxu0 0.0
      %800 = vmatprep.subr.mxu0 0.0
      %801 = vmatpush1.msra.mxu0 0.0
      %802 = vmatprep.subr.mxu0 0.0
      %803 = vmatpush1.msra.mxu0 0.0
      %804 = vmatprep.subr.mxu0 0.0
      %805 = vmatpush1.msra.mxu0 0.0
      %806 = vmatprep.subr.mxu0 0.0
      %807 = vmatpush1.msra.mxu0 0.0
      %808 = vmatprep.subr.mxu0 0.0
      %809 = vmatpush1.msra.mxu0 0.0
      %810 = vmatprep.subr.mxu0 0.0
      %811 = vmatpush1.msra.mxu0 0.0
      %812 = vmatprep.subr.mxu0 0.0
      %813 = vmatpush1.msra.mxu0 0.0
      %814 = vmatprep.subr.mxu0 0.0
      %815 = vmatpush1.msra.mxu0 0.0
      %816 = vmatprep.subr.mxu0 0.0
      %817 = vmatpush1.msra.mxu0 0.0
      %818 = vmatprep.subr.mxu0 0.0
      %819 = vmatpush1.msra.mxu0 0.0
      %820 = vmatprep.subr.mxu0 0.0
      %821 = vmatpush1.msra.mxu0 0.0
      %822 = vmatprep.subr.mxu0 0.0
      %823 = vmatpush1.msra.mxu0 0.0
      %824 = vmatprep.subr.mxu0 0.0
      %825 = vmatpush1.msra.mxu0 0.0
      %826 = vmatprep.subr.mxu0 0.0
      %827 = vmatpush1.msra.mxu0 0.0
      %828 = vmatprep.subr.mxu0 0.0
      %829 = vmatpush1.msra.mxu0 0.0
      %830 = vmatprep.subr.mxu0 0.0
      %831 = vmatpush1.msra.mxu0 0.0
      %832 = vmatprep.subr.mxu0 0.0
      %833 = vmatpush1.msra.mxu0 0.0
      %834 = vmatprep.subr.mxu0 0.0
      %835 = vmatpush1.msra.mxu0 0.0
      %836 = vmatprep.subr.mxu0 0.0
      %837 = vmatpush1.msra.mxu0 0.0
      %838 = vmatprep.subr.mxu0 0.0
      %839 = vmatpush1.msra.mxu0 0.0
      %840 = vmatprep.mubr.f32.mxu0 0.0
      %841 = vmatmul.mubr.f32.gmra.mrb[0].mxu0 %v490
      %v842 = vpop.f32.mrb[0].mxu0
      %v843 = vadd.f32 0.0, %v842
      %v844 = vpop.f32.mrb[0].mxu0
      %845 = vdwg.mxu0
      %v847 = vsel %vm488, %v447, 0
      %849 = vmatprep.subr.mxu0 %v427
      %850 = vmatpush1.msra.mxu0 %v444
      %851 = vmatprep.subr.mxu0 0.0
      %852 = vmatpush1.msra.mxu0 0.0
      %853 = vmatprep.subr.mxu0 0.0
      %854 = vmatpush1.msra.mxu0 0.0
      %855 = vmatprep.subr.mxu0 0.0
      %856 = vmatpush1.msra.mxu0 0.0
      %857 = vmatprep.subr.mxu0 0.0
      %858 = vmatpush1.msra.mxu0 0.0
      %859 = vmatprep.subr.mxu0 0.0
      %860 = vmatpush1.msra.mxu0 0.0
      %861 = vmatprep.subr.mxu0 0.0
      %862 = vmatpush1.msra.mxu0 0.0
      %863 = vmatprep.subr.mxu0 0.0
      %864 = vmatpush1.msra.mxu0 0.0
      %865 = vmatprep.subr.mxu0 0.0
      %866 = vmatpush1.msra.mxu0 0.0
      %867 = vmatprep.subr.mxu0 0.0
      %868 = vmatpush1.msra.mxu0 0.0
      %869 = vmatprep.subr.mxu0 0.0
      %870 = vmatpush1.msra.mxu0 0.0
      %871 = vmatprep.subr.mxu0 0.0
      %872 = vmatpush1.msra.mxu0 0.0
      %873 = vmatprep.subr.mxu0 0.0
      %874 = vmatpush1.msra.mxu0 0.0
      %875 = vmatprep.subr.mxu0 0.0
      %876 = vmatpush1.msra.mxu0 0.0
      %877 = vmatprep.subr.mxu0 0.0
      %878 = vmatpush1.msra.mxu0 0.0
      %879 = vmatprep.subr.mxu0 0.0
      %880 = vmatpush1.msra.mxu0 0.0
      %881 = vmatprep.subr.mxu0 0.0
      %882 = vmatpush1.msra.mxu0 0.0
      %883 = vmatprep.subr.mxu0 0.0
      %884 = vmatpush1.msra.mxu0 0.0
      %885 = vmatprep.subr.mxu0 0.0
      %886 = vmatpush1.msra.mxu0 0.0
      %887 = vmatprep.subr.mxu0 0.0
      %888 = vmatpush1.msra.mxu0 0.0
      %889 = vmatprep.subr.mxu0 0.0
      %890 = vmatpush1.msra.mxu0 0.0
      %891 = vmatprep.subr.mxu0 0.0
      %892 = vmatpush1.msra.mxu0 0.0
      %893 = vmatprep.subr.mxu0 0.0
      %894 = vmatpush1.msra.mxu0 0.0
      %895 = vmatprep.subr.mxu0 0.0
      %896 = vmatpush1.msra.mxu0 0.0
      %897 = vmatprep.subr.mxu0 0.0
      %898 = vmatpush1.msra.mxu0 0.0
      %899 = vmatprep.subr.mxu0 0.0
      %900 = vmatpush1.msra.mxu0 0.0
      %901 = vmatprep.subr.mxu0 0.0
      %902 = vmatpush1.msra.mxu0 0.0
      %903 = vmatprep.subr.mxu0 0.0
      %904 = vmatpush1.msra.mxu0 0.0
      %905 = vmatprep.subr.mxu0 0.0
      %906 = vmatpush1.msra.mxu0 0.0
      %907 = vmatprep.subr.mxu0 0.0
      %908 = vmatpush1.msra.mxu0 0.0
      %909 = vmatprep.subr.mxu0 0.0
      %910 = vmatpush1.msra.mxu0 0.0
      %911 = vmatprep.subr.mxu0 0.0
      %912 = vmatpush1.msra.mxu0 0.0
      %913 = vmatprep.mubr.f32.mxu0 0.0
      %914 = vmatmul.mubr.f32.gmra.mrb[0].mxu0 %v847
      %v915 = vpop.f32.mrb[0].mxu0
      %v916 = vadd.f32 %v559, %v915
      %v917 = vpop.f32.mrb[0].mxu0
      %v918 = vadd.f32 %v561, %v917
      %919 = vdwg.mxu0
      %920 = vmatprep.subr.mxu0 %v429
      %921 = vmatpush1.msra.mxu0 %v428
      %922 = vmatprep.subr.mxu0 0.0
      %923 = vmatpush1.msra.mxu0 0.0
      %924 = vmatprep.subr.mxu0 0.0
      %925 = vmatpush1.msra.mxu0 0.0
      %926 = vmatprep.subr.mxu0 0.0
      %927 = vmatpush1.msra.mxu0 0.0
      %928 = vmatprep.subr.mxu0 0.0
      %929 = vmatpush1.msra.mxu0 0.0
      %930 = vmatprep.subr.mxu0 0.0
      %931 = vmatpush1.msra.mxu0 0.0
      %932 = vmatprep.subr.mxu0 0.0
      %933 = vmatpush1.msra.mxu0 0.0
      %934 = vmatprep.subr.mxu0 0.0
      %935 = vmatpush1.msra.mxu0 0.0
      %936 = vmatprep.subr.mxu0 0.0
      %937 = vmatpush1.msra.mxu0 0.0
      %938 = vmatprep.subr.mxu0 0.0
      %939 = vmatpush1.msra.mxu0 0.0
      %940 = vmatprep.subr.mxu0 0.0
      %941 = vmatpush1.msra.mxu0 0.0
      %942 = vmatprep.subr.mxu0 0.0
      %943 = vmatpush1.msra.mxu0 0.0
      %944 = vmatprep.subr.mxu0 0.0
      %945 = vmatpush1.msra.mxu0 0.0
      %946 = vmatprep.subr.mxu0 0.0
      %947 = vmatpush1.msra.mxu0 0.0
      %948 = vmatprep.subr.mxu0 0.0
      %949 = vmatpush1.msra.mxu0 0.0
      %950 = vmatprep.subr.mxu0 0.0
      %951 = vmatpush1.msra.mxu0 0.0
      %952 = vmatprep.subr.mxu0 0.0
      %953 = vmatpush1.msra.mxu0 0.0
      %954 = vmatprep.subr.mxu0 0.0
      %955 = vmatpush1.msra.mxu0 0.0
      %956 = vmatprep.subr.mxu0 0.0
      %957 = vmatpush1.msra.mxu0 0.0
      %958 = vmatprep.subr.mxu0 0.0
      %959 = vmatpush1.msra.mxu0 0.0
      %960 = vmatprep.subr.mxu0 0.0
      %961 = vmatpush1.msra.mxu0 0.0
      %962 = vmatprep.subr.mxu0 0.0
      %963 = vmatpush1.msra.mxu0 0.0
      %964 = vmatprep.subr.mxu0 0.0
      %965 = vmatpush1.msra.mxu0 0.0
      %966 = vmatprep.subr.mxu0 0.0
      %967 = vmatpush1.msra.mxu0 0.0
      %968 = vmatprep.subr.mxu0 0.0
      %969 = vmatpush1.msra.mxu0 0.0
      %970 = vmatprep.subr.mxu0 0.0
      %971 = vmatpush1.msra.mxu0 0.0
      %972 = vmatprep.subr.mxu0 0.0
      %973 = vmatpush1.msra.mxu0 0.0
      %974 = vmatprep.subr.mxu0 0.0
      %975 = vmatpush1.msra.mxu0 0.0
      %976 = vmatprep.subr.mxu0 0.0
      %977 = vmatpush1.msra.mxu0 0.0
      %978 = vmatprep.subr.mxu0 0.0
      %979 = vmatpush1.msra.mxu0 0.0
      %980 = vmatprep.subr.mxu0 0.0
      %981 = vmatpush1.msra.mxu0 0.0
      %982 = vmatprep.subr.mxu0 0.0
      %983 = vmatpush1.msra.mxu0 0.0
      %984 = vmatprep.mubr.f32.mxu0 0.0
      %985 = vmatmul.mubr.f32.gmra.mrb[0].mxu0 %v847
      %v986 = vpop.f32.mrb[0].mxu0
      %v987 = vadd.f32 %v630, %v986
      %v988 = vpop.f32.mrb[0].mxu0
      %v989 = vadd.f32 %v632, %v988
      %990 = vdwg.mxu0
      %991 = vmatprep.subr.mxu0 %v431
      %992 = vmatpush1.msra.mxu0 %v430
      %993 = vmatprep.subr.mxu0 0.0
      %994 = vmatpush1.msra.mxu0 0.0
      %995 = vmatprep.subr.mxu0 0.0
      %996 = vmatpush1.msra.mxu0 0.0
      %997 = vmatprep.subr.mxu0 0.0
      %998 = vmatpush1.msra.mxu0 0.0
      %999 = vmatprep.subr.mxu0 0.0
      %1000 = vmatpush1.msra.mxu0 0.0
      %1001 = vmatprep.subr.mxu0 0.0
      %1002 = vmatpush1.msra.mxu0 0.0
      %1003 = vmatprep.subr.mxu0 0.0
      %1004 = vmatpush1.msra.mxu0 0.0
      %1005 = vmatprep.subr.mxu0 0.0
      %1006 = vmatpush1.msra.mxu0 0.0
      %1007 = vmatprep.subr.mxu0 0.0
      %1008 = vmatpush1.msra.mxu0 0.0
      %1009 = vmatprep.subr.mxu0 0.0
      %1010 = vmatpush1.msra.mxu0 0.0
      %1011 = vmatprep.subr.mxu0 0.0
      %1012 = vmatpush1.msra.mxu0 0.0
      %1013 = vmatprep.subr.mxu0 0.0
      %1014 = vmatpush1.msra.mxu0 0.0
      %1015 = vmatprep.subr.mxu0 0.0
      %1016 = vmatpush1.msra.mxu0 0.0
      %1017 = vmatprep.subr.mxu0 0.0
      %1018 = vmatpush1.msra.mxu0 0.0
      %1019 = vmatprep.subr.mxu0 0.0
      %1020 = vmatpush1.msra.mxu0 0.0
      %1021 = vmatprep.subr.mxu0 0.0
      %1022 = vmatpush1.msra.mxu0 0.0
      %1023 = vmatprep.subr.mxu0 0.0
      %1024 = vmatpush1.msra.mxu0 0.0
      %1025 = vmatprep.subr.mxu0 0.0
      %1026 = vmatpush1.msra.mxu0 0.0
      %1027 = vmatprep.subr.mxu0 0.0
      %1028 = vmatpush1.msra.mxu0 0.0
      %1029 = vmatprep.subr.mxu0 0.0
      %1030 = vmatpush1.msra.mxu0 0.0
      %1031 = vmatprep.subr.mxu0 0.0
      %1032 = vmatpush1.msra.mxu0 0.0
      %1033 = vmatprep.subr.mxu0 0.0
      %1034 = vmatpush1.msra.mxu0 0.0
      %1035 = vmatprep.subr.mxu0 0.0
      %1036 = vmatpush1.msra.mxu0 0.0
      %1037 = vmatprep.subr.mxu0 0.0
      %1038 = vmatpush1.msra.mxu0 0.0
      %1039 = vmatprep.subr.mxu0 0.0
      %1040 = vmatpush1.msra.mxu0 0.0
      %1041 = vmatprep.subr.mxu0 0.0
      %1042 = vmatpush1.msra.mxu0 0.0
      %1043 = vmatprep.subr.mxu0 0.0
      %1044 = vmatpush1.msra.mxu0 0.0
      %1045 = vmatprep.subr.mxu0 0.0
      %1046 = vmatpush1.msra.mxu0 0.0
      %1047 = vmatprep.subr.mxu0 0.0
      %1048 = vmatpush1.msra.mxu0 0.0
      %1049 = vmatprep.subr.mxu0 0.0
      %1050 = vmatpush1.msra.mxu0 0.0
      %1051 = vmatprep.subr.mxu0 0.0
      %1052 = vmatpush1.msra.mxu0 0.0
      %1053 = vmatprep.subr.mxu0 0.0
      %1054 = vmatpush1.msra.mxu0 0.0
      %1055 = vmatprep.mubr.f32.mxu0 0.0
      %1056 = vmatmul.mubr.f32.gmra.mrb[0].mxu0 %v847
      %v1057 = vpop.f32.mrb[0].mxu0
      %v1058 = vadd.f32 %v701, %v1057
      %v1059 = vpop.f32.mrb[0].mxu0
      %v1060 = vadd.f32 %v703, %v1059
      %1061 = vdwg.mxu0
      %1062 = vmatprep.subr.mxu0 %v433
      %1063 = vmatpush1.msra.mxu0 %v432
      %1064 = vmatprep.subr.mxu0 0.0
      %1065 = vmatpush1.msra.mxu0 0.0
      %1066 = vmatprep.subr.mxu0 0.0
      %1067 = vmatpush1.msra.mxu0 0.0
      %1068 = vmatprep.subr.mxu0 0.0
      %1069 = vmatpush1.msra.mxu0 0.0
      %1070 = vmatprep.subr.mxu0 0.0
      %1071 = vmatpush1.msra.mxu0 0.0
      %1072 = vmatprep.subr.mxu0 0.0
      %1073 = vmatpush1.msra.mxu0 0.0
      %1074 = vmatprep.subr.mxu0 0.0
      %1075 = vmatpush1.msra.mxu0 0.0
      %1076 = vmatprep.subr.mxu0 0.0
      %1077 = vmatpush1.msra.mxu0 0.0
      %1078 = vmatprep.subr.mxu0 0.0
      %1079 = vmatpush1.msra.mxu0 0.0
      %1080 = vmatprep.subr.mxu0 0.0
      %1081 = vmatpush1.msra.mxu0 0.0
      %1082 = vmatprep.subr.mxu0 0.0
      %1083 = vmatpush1.msra.mxu0 0.0
      %1084 = vmatprep.subr.mxu0 0.0
      %1085 = vmatpush1.msra.mxu0 0.0
      %1086 = vmatprep.subr.mxu0 0.0
      %1087 = vmatpush1.msra.mxu0 0.0
      %1088 = vmatprep.subr.mxu0 0.0
      %1089 = vmatpush1.msra.mxu0 0.0
      %1090 = vmatprep.subr.mxu0 0.0
      %1091 = vmatpush1.msra.mxu0 0.0
      %1092 = vmatprep.subr.mxu0 0.0
      %1093 = vmatpush1.msra.mxu0 0.0
      %1094 = vmatprep.subr.mxu0 0.0
      %1095 = vmatpush1.msra.mxu0 0.0
      %1096 = vmatprep.subr.mxu0 0.0
      %1097 = vmatpush1.msra.mxu0 0.0
      %1098 = vmatprep.subr.mxu0 0.0
      %1099 = vmatpush1.msra.mxu0 0.0
      %1100 = vmatprep.subr.mxu0 0.0
      %1101 = vmatpush1.msra.mxu0 0.0
      %1102 = vmatprep.subr.mxu0 0.0
      %1103 = vmatpush1.msra.mxu0 0.0
      %1104 = vmatprep.subr.mxu0 0.0
      %1105 = vmatpush1.msra.mxu0 0.0
      %1106 = vmatprep.subr.mxu0 0.0
      %1107 = vmatpush1.msra.mxu0 0.0
      %1108 = vmatprep.subr.mxu0 0.0
      %1109 = vmatpush1.msra.mxu0 0.0
      %1110 = vmatprep.subr.mxu0 0.0
      %1111 = vmatpush1.msra.mxu0 0.0
      %1112 = vmatprep.subr.mxu0 0.0
      %1113 = vmatpush1.msra.mxu0 0.0
      %1114 = vmatprep.subr.mxu0 0.0
      %1115 = vmatpush1.msra.mxu0 0.0
      %1116 = vmatprep.subr.mxu0 0.0
      %1117 = vmatpush1.msra.mxu0 0.0
      %1118 = vmatprep.subr.mxu0 0.0
      %1119 = vmatpush1.msra.mxu0 0.0
      %1120 = vmatprep.subr.mxu0 0.0
      %1121 = vmatpush1.msra.mxu0 0.0
      %1122 = vmatprep.subr.mxu0 0.0
      %1123 = vmatpush1.msra.mxu0 0.0
      %1124 = vmatprep.subr.mxu0 0.0
      %1125 = vmatpush1.msra.mxu0 0.0
      %1126 = vmatprep.mubr.f32.mxu0 0.0
      %1127 = vmatmul.mubr.f32.gmra.mrb[0].mxu0 %v847
      %v1128 = vpop.f32.mrb[0].mxu0
      %v1129 = vadd.f32 %v772, %v1128
      %v1130 = vpop.f32.mrb[0].mxu0
      %v1131 = vadd.f32 %v774, %v1130
      %1132 = vdwg.mxu0
      %1133 = vmatprep.subr.mxu0 0.0
      %1134 = vmatpush1.msra.mxu0 %v446
      %1135 = vmatprep.subr.mxu0 0.0
      %1136 = vmatpush1.msra.mxu0 0.0
      %1137 = vmatprep.subr.mxu0 0.0
      %1138 = vmatpush1.msra.mxu0 0.0
      %1139 = vmatprep.subr.mxu0 0.0
      %1140 = vmatpush1.msra.mxu0 0.0
      %1141 = vmatprep.subr.mxu0 0.0
      %1142 = vmatpush1.msra.mxu0 0.0
      %1143 = vmatprep.subr.mxu0 0.0
      %1144 = vmatpush1.msra.mxu0 0.0
      %1145 = vmatprep.subr.mxu0 0.0
      %1146 = vmatpush1.msra.mxu0 0.0
      %1147 = vmatprep.subr.mxu0 0.0
      %1148 = vmatpush1.msra.mxu0 0.0
      %1149 = vmatprep.subr.mxu0 0.0
      %1150 = vmatpush1.msra.mxu0 0.0
      %1151 = vmatprep.subr.mxu0 0.0
      %1152 = vmatpush1.msra.mxu0 0.0
      %1153 = vmatprep.subr.mxu0 0.0
      %1154 = vmatpush1.msra.mxu0 0.0
      %1155 = vmatprep.subr.mxu0 0.0
      %1156 = vmatpush1.msra.mxu0 0.0
      %1157 = vmatprep.subr.mxu0 0.0
      %1158 = vmatpush1.msra.mxu0 0.0
      %1159 = vmatprep.subr.mxu0 0.0
      %1160 = vmatpush1.msra.mxu0 0.0
      %1161 = vmatprep.subr.mxu0 0.0
      %1162 = vmatpush1.msra.mxu0 0.0
      %1163 = vmatprep.subr.mxu0 0.0
      %1164 = vmatpush1.msra.mxu0 0.0
      %1165 = vmatprep.subr.mxu0 0.0
      %1166 = vmatpush1.msra.mxu0 0.0
      %1167 = vmatprep.subr.mxu0 0.0
      %1168 = vmatpush1.msra.mxu0 0.0
      %1169 = vmatprep.subr.mxu0 0.0
      %1170 = vmatpush1.msra.mxu0 0.0
      %1171 = vmatprep.subr.mxu0 0.0
      %1172 = vmatpush1.msra.mxu0 0.0
      %1173 = vmatprep.subr.mxu0 0.0
      %1174 = vmatpush1.msra.mxu0 0.0
      %1175 = vmatprep.subr.mxu0 0.0
      %1176 = vmatpush1.msra.mxu0 0.0
      %1177 = vmatprep.subr.mxu0 0.0
      %1178 = vmatpush1.msra.mxu0 0.0
      %1179 = vmatprep.subr.mxu0 0.0
      %1180 = vmatpush1.msra.mxu0 0.0
      %1181 = vmatprep.subr.mxu0 0.0
      %1182 = vmatpush1.msra.mxu0 0.0
      %1183 = vmatprep.subr.mxu0 0.0
      %1184 = vmatpush1.msra.mxu0 0.0
      %1185 = vmatprep.subr.mxu0 0.0
      %1186 = vmatpush1.msra.mxu0 0.0
      %1187 = vmatprep.subr.mxu0 0.0
      %1188 = vmatpush1.msra.mxu0 0.0
      %1189 = vmatprep.subr.mxu0 0.0
      %1190 = vmatpush1.msra.mxu0 0.0
      %1191 = vmatprep.subr.mxu0 0.0
      %1192 = vmatpush1.msra.mxu0 0.0
      %1193 = vmatprep.subr.mxu0 0.0
      %1194 = vmatpush1.msra.mxu0 0.0
      %1195 = vmatprep.subr.mxu0 0.0
      %1196 = vmatpush1.msra.mxu0 0.0
      %1197 = vmatprep.mubr.f32.mxu0 0.0
      %1198 = vmatmul.mubr.f32.gmra.mrb[0].mxu0 %v847
      %v1199 = vpop.f32.mrb[0].mxu0
      %v1200 = vadd.f32 %v843, %v1199
      %v1201 = vpop.f32.mrb[0].mxu0
      %1202 = vdwg.mxu0
      %s1203 = scalar_lea.vmem %s1, 16
      %v1204 = vld [vmem:[%s1203] sm:$0xff]
      %1205 = vrot.lane.b32.xlu0 %v444, 126
      %v1206 = vpop.permute.xlu0 %1205
      %1207 = vrot.lane.b32.xlu0 %v427, 126
      %v1208 = vpop.permute.xlu0 %1207
      %1209 = vrot.lane.b32.xlu0 %v428, 126
      %v1210 = vpop.permute.xlu0 %1209
      %1211 = vrot.lane.b32.xlu0 %v429, 126
      %v1212 = vpop.permute.xlu0 %1211
      %1213 = vrot.lane.b32.xlu0 %v430, 126
      %v1214 = vpop.permute.xlu0 %1213
      %1215 = vrot.lane.b32.xlu0 %v431, 126
      %v1216 = vpop.permute.xlu0 %1215
      %1217 = vrot.lane.b32.xlu0 %v432, 126
      %v1218 = vpop.permute.xlu0 %1217
      %1219 = vrot.lane.b32.xlu0 %v433, 126
      %v1220 = vpop.permute.xlu0 %1219
      %1221 = vrot.lane.b32.xlu0 %v446, 126
      %v1222 = vpop.permute.xlu0 %1221
      %vm1223 = vcmask 1031168
      %v1224 = vsel %vm1223, %v1206, %v1208
      %v1225 = vsel %vm1223, %v1208, %v1210
      %v1226 = vsel %vm1223, %v1210, %v1212
      %v1227 = vsel %vm1223, %v1212, %v1214
      %v1228 = vsel %vm1223, %v1214, %v1216
      %v1229 = vsel %vm1223, %v1216, %v1218
      %v1230 = vsel %vm1223, %v1218, %v1220
      %v1231 = vsel %vm1223, %v1220, %v1222
      %v1242 = vsel %vm488, %v1204, 0
      %1244 = vmatprep.subr.mxu0 %v1225
      %1245 = vmatpush1.msra.mxu0 %v1224
      %1246 = vmatprep.subr.mxu0 0.0
      %1247 = vmatpush1.msra.mxu0 0.0
      %1248 = vmatprep.subr.mxu0 0.0
      %1249 = vmatpush1.msra.mxu0 0.0
      %1250 = vmatprep.subr.mxu0 0.0
      %1251 = vmatpush1.msra.mxu0 0.0
      %1252 = vmatprep.subr.mxu0 0.0
      %1253 = vmatpush1.msra.mxu0 0.0
      %1254 = vmatprep.subr.mxu0 0.0
      %1255 = vmatpush1.msra.mxu0 0.0
      %1256 = vmatprep.subr.mxu0 0.0
      %1257 = vmatpush1.msra.mxu0 0.0
      %1258 = vmatprep.subr.mxu0 0.0
      %1259 = vmatpush1.msra.mxu0 0.0
      %1260 = vmatprep.subr.mxu0 0.0
      %1261 = vmatpush1.msra.mxu0 0.0
      %1262 = vmatprep.subr.mxu0 0.0
      %1263 = vmatpush1.msra.mxu0 0.0
      %1264 = vmatprep.subr.mxu0 0.0
      %1265 = vmatpush1.msra.mxu0 0.0
      %1266 = vmatprep.subr.mxu0 0.0
      %1267 = vmatpush1.msra.mxu0 0.0
      %1268 = vmatprep.subr.mxu0 0.0
      %1269 = vmatpush1.msra.mxu0 0.0
      %1270 = vmatprep.subr.mxu0 0.0
      %1271 = vmatpush1.msra.mxu0 0.0
      %1272 = vmatprep.subr.mxu0 0.0
      %1273 = vmatpush1.msra.mxu0 0.0
      %1274 = vmatprep.subr.mxu0 0.0
      %1275 = vmatpush1.msra.mxu0 0.0
      %1276 = vmatprep.subr.mxu0 0.0
      %1277 = vmatpush1.msra.mxu0 0.0
      %1278 = vmatprep.subr.mxu0 0.0
      %1279 = vmatpush1.msra.mxu0 0.0
      %1280 = vmatprep.subr.mxu0 0.0
      %1281 = vmatpush1.msra.mxu0 0.0
      %1282 = vmatprep.subr.mxu0 0.0
      %1283 = vmatpush1.msra.mxu0 0.0
      %1284 = vmatprep.subr.mxu0 0.0
      %1285 = vmatpush1.msra.mxu0 0.0
      %1286 = vmatprep.subr.mxu0 0.0
      %1287 = vmatpush1.msra.mxu0 0.0
      %1288 = vmatprep.subr.mxu0 0.0
      %1289 = vmatpush1.msra.mxu0 0.0
      %1290 = vmatprep.subr.mxu0 0.0
      %1291 = vmatpush1.msra.mxu0 0.0
      %1292 = vmatprep.subr.mxu0 0.0
      %1293 = vmatpush1.msra.mxu0 0.0
      %1294 = vmatprep.subr.mxu0 0.0
      %1295 = vmatpush1.msra.mxu0 0.0
      %1296 = vmatprep.subr.mxu0 0.0
      %1297 = vmatpush1.msra.mxu0 0.0
      %1298 = vmatprep.subr.mxu0 0.0
      %1299 = vmatpush1.msra.mxu0 0.0
      %1300 = vmatprep.subr.mxu0 0.0
      %1301 = vmatpush1.msra.mxu0 0.0
      %1302 = vmatprep.subr.mxu0 0.0
      %1303 = vmatpush1.msra.mxu0 0.0
      %1304 = vmatprep.subr.mxu0 0.0
      %1305 = vmatpush1.msra.mxu0 0.0
      %1306 = vmatprep.subr.mxu0 0.0
      %1307 = vmatpush1.msra.mxu0 0.0
      %1308 = vmatprep.mubr.f32.mxu0 0.0
      %1309 = vmatmul.mubr.f32.gmra.mrb[0].mxu0 %v1242
      %v1310 = vpop.f32.mrb[0].mxu0
      %v1311 = vadd.f32 0.0, %v1310
      %v1312 = vpop.f32.mrb[0].mxu0
      %v1313 = vadd.f32 0.0, %v1312
      %1314 = vdwg.mxu0
      %1315 = vmatprep.subr.mxu0 %v1227
      %1316 = vmatpush1.msra.mxu0 %v1226
      %1317 = vmatprep.subr.mxu0 0.0
      %1318 = vmatpush1.msra.mxu0 0.0
      %1319 = vmatprep.subr.mxu0 0.0
      %1320 = vmatpush1.msra.mxu0 0.0
      %1321 = vmatprep.subr.mxu0 0.0
      %1322 = vmatpush1.msra.mxu0 0.0
      %1323 = vmatprep.subr.mxu0 0.0
      %1324 = vmatpush1.msra.mxu0 0.0
      %1325 = vmatprep.subr.mxu0 0.0
      %1326 = vmatpush1.msra.mxu0 0.0
      %1327 = vmatprep.subr.mxu0 0.0
      %1328 = vmatpush1.msra.mxu0 0.0
      %1329 = vmatprep.subr.mxu0 0.0
      %1330 = vmatpush1.msra.mxu0 0.0
      %1331 = vmatprep.subr.mxu0 0.0
      %1332 = vmatpush1.msra.mxu0 0.0
      %1333 = vmatprep.subr.mxu0 0.0
      %1334 = vmatpush1.msra.mxu0 0.0
      %1335 = vmatprep.subr.mxu0 0.0
      %1336 = vmatpush1.msra.mxu0 0.0
      %1337 = vmatprep.subr.mxu0 0.0
      %1338 = vmatpush1.msra.mxu0 0.0
      %1339 = vmatprep.subr.mxu0 0.0
      %1340 = vmatpush1.msra.mxu0 0.0
      %1341 = vmatprep.subr.mxu0 0.0
      %1342 = vmatpush1.msra.mxu0 0.0
      %1343 = vmatprep.subr.mxu0 0.0
      %1344 = vmatpush1.msra.mxu0 0.0
      %1345 = vmatprep.subr.mxu0 0.0
      %1346 = vmatpush1.msra.mxu0 0.0
      %1347 = vmatprep.subr.mxu0 0.0
      %1348 = vmatpush1.msra.mxu0 0.0
      %1349 = vmatprep.subr.mxu0 0.0
      %1350 = vmatpush1.msra.mxu0 0.0
      %1351 = vmatprep.subr.mxu0 0.0
      %1352 = vmatpush1.msra.mxu0 0.0
      %1353 = vmatprep.subr.mxu0 0.0
      %1354 = vmatpush1.msra.mxu0 0.0
      %1355 = vmatprep.subr.mxu0 0.0
      %1356 = vmatpush1.msra.mxu0 0.0
      %1357 = vmatprep.subr.mxu0 0.0
      %1358 = vmatpush1.msra.mxu0 0.0
      %1359 = vmatprep.subr.mxu0 0.0
      %1360 = vmatpush1.msra.mxu0 0.0
      %1361 = vmatprep.subr.mxu0 0.0
      %1362 = vmatpush1.msra.mxu0 0.0
      %1363 = vmatprep.subr.mxu0 0.0
      %1364 = vmatpush1.msra.mxu0 0.0
      %1365 = vmatprep.subr.mxu0 0.0
      %1366 = vmatpush1.msra.mxu0 0.0
      %1367 = vmatprep.subr.mxu0 0.0
      %1368 = vmatpush1.msra.mxu0 0.0
      %1369 = vmatprep.subr.mxu0 0.0
      %1370 = vmatpush1.msra.mxu0 0.0
      %1371 = vmatprep.subr.mxu0 0.0
      %1372 = vmatpush1.msra.mxu0 0.0
      %1373 = vmatprep.subr.mxu0 0.0
      %1374 = vmatpush1.msra.mxu0 0.0
      %1375 = vmatprep.subr.mxu0 0.0
      %1376 = vmatpush1.msra.mxu0 0.0
      %1377 = vmatprep.subr.mxu0 0.0
      %1378 = vmatpush1.msra.mxu0 0.0
      %1379 = vmatprep.mubr.f32.mxu0 0.0
      %1380 = vmatmul.mubr.f32.gmra.mrb[0].mxu0 %v1242
      %v1381 = vpop.f32.mrb[0].mxu0
      %v1382 = vadd.f32 0.0, %v1381
      %v1383 = vpop.f32.mrb[0].mxu0
      %v1384 = vadd.f32 0.0, %v1383
      %1385 = vdwg.mxu0
      %1386 = vmatprep.subr.mxu0 %v1229
      %1387 = vmatpush1.msra.mxu0 %v1228
      %1388 = vmatprep.subr.mxu0 0.0
      %1389 = vmatpush1.msra.mxu0 0.0
      %1390 = vmatprep.subr.mxu0 0.0
      %1391 = vmatpush1.msra.mxu0 0.0
      %1392 = vmatprep.subr.mxu0 0.0
      %1393 = vmatpush1.msra.mxu0 0.0
      %1394 = vmatprep.subr.mxu0 0.0
      %1395 = vmatpush1.msra.mxu0 0.0
      %1396 = vmatprep.subr.mxu0 0.0
      %1397 = vmatpush1.msra.mxu0 0.0
      %1398 = vmatprep.subr.mxu0 0.0
      %1399 = vmatpush1.msra.mxu0 0.0
      %1400 = vmatprep.subr.mxu0 0.0
      %1401 = vmatpush1.msra.mxu0 0.0
      %1402 = vmatprep.subr.mxu0 0.0
      %1403 = vmatpush1.msra.mxu0 0.0
      %1404 = vmatprep.subr.mxu0 0.0
      %1405 = vmatpush1.msra.mxu0 0.0
      %1406 = vmatprep.subr.mxu0 0.0
      %1407 = vmatpush1.msra.mxu0 0.0
      %1408 = vmatprep.subr.mxu0 0.0
      %1409 = vmatpush1.msra.mxu0 0.0
      %1410 = vmatprep.subr.mxu0 0.0
      %1411 = vmatpush1.msra.mxu0 0.0
      %1412 = vmatprep.subr.mxu0 0.0
      %1413 = vmatpush1.msra.mxu0 0.0
      %1414 = vmatprep.subr.mxu0 0.0
      %1415 = vmatpush1.msra.mxu0 0.0
      %1416 = vmatprep.subr.mxu0 0.0
      %1417 = vmatpush1.msra.mxu0 0.0
      %1418 = vmatprep.subr.mxu0 0.0
      %1419 = vmatpush1.msra.mxu0 0.0
      %1420 = vmatprep.subr.mxu0 0.0
      %1421 = vmatpush1.msra.mxu0 0.0
      %1422 = vmatprep.subr.mxu0 0.0
      %1423 = vmatpush1.msra.mxu0 0.0
      %1424 = vmatprep.subr.mxu0 0.0
      %1425 = vmatpush1.msra.mxu0 0.0
      %1426 = vmatprep.subr.mxu0 0.0
      %1427 = vmatpush1.msra.mxu0 0.0
      %1428 = vmatprep.subr.mxu0 0.0
      %1429 = vmatpush1.msra.mxu0 0.0
      %1430 = vmatprep.subr.mxu0 0.0
      %1431 = vmatpush1.msra.mxu0 0.0
      %1432 = vmatprep.subr.mxu0 0.0
      %1433 = vmatpush1.msra.mxu0 0.0
      %1434 = vmatprep.subr.mxu0 0.0
      %1435 = vmatpush1.msra.mxu0 0.0
      %1436 = vmatprep.subr.mxu0 0.0
      %1437 = vmatpush1.msra.mxu0 0.0
      %1438 = vmatprep.subr.mxu0 0.0
      %1439 = vmatpush1.msra.mxu0 0.0
      %1440 = vmatprep.subr.mxu0 0.0
      %1441 = vmatpush1.msra.mxu0 0.0
      %1442 = vmatprep.subr.mxu0 0.0
      %1443 = vmatpush1.msra.mxu0 0.0
      %1444 = vmatprep.subr.mxu0 0.0
      %1445 = vmatpush1.msra.mxu0 0.0
      %1446 = vmatprep.subr.mxu0 0.0
      %1447 = vmatpush1.msra.mxu0 0.0
      %1448 = vmatprep.subr.mxu0 0.0
      %1449 = vmatpush1.msra.mxu0 0.0
      %1450 = vmatprep.mubr.f32.mxu0 0.0
      %1451 = vmatmul.mubr.f32.gmra.mrb[0].mxu0 %v1242
      %v1452 = vpop.f32.mrb[0].mxu0
      %v1453 = vadd.f32 0.0, %v1452
      %v1454 = vpop.f32.mrb[0].mxu0
      %v1455 = vadd.f32 0.0, %v1454
      %1456 = vdwg.mxu0
      %1457 = vmatprep.subr.mxu0 %v1231
      %1458 = vmatpush1.msra.mxu0 %v1230
      %1459 = vmatprep.subr.mxu0 0.0
      %1460 = vmatpush1.msra.mxu0 0.0
      %1461 = vmatprep.subr.mxu0 0.0
      %1462 = vmatpush1.msra.mxu0 0.0
      %1463 = vmatprep.subr.mxu0 0.0
      %1464 = vmatpush1.msra.mxu0 0.0
      %1465 = vmatprep.subr.mxu0 0.0
      %1466 = vmatpush1.msra.mxu0 0.0
      %1467 = vmatprep.subr.mxu0 0.0
      %1468 = vmatpush1.msra.mxu0 0.0
      %1469 = vmatprep.subr.mxu0 0.0
      %1470 = vmatpush1.msra.mxu0 0.0
      %1471 = vmatprep.subr.mxu0 0.0
      %1472 = vmatpush1.msra.mxu0 0.0
      %1473 = vmatprep.subr.mxu0 0.0
      %1474 = vmatpush1.msra.mxu0 0.0
      %1475 = vmatprep.subr.mxu0 0.0
      %1476 = vmatpush1.msra.mxu0 0.0
      %1477 = vmatprep.subr.mxu0 0.0
      %1478 = vmatpush1.msra.mxu0 0.0
      %1479 = vmatprep.subr.mxu0 0.0
      %1480 = vmatpush1.msra.mxu0 0.0
      %1481 = vmatprep.subr.mxu0 0.0
      %1482 = vmatpush1.msra.mxu0 0.0
      %1483 = vmatprep.subr.mxu0 0.0
      %1484 = vmatpush1.msra.mxu0 0.0
      %1485 = vmatprep.subr.mxu0 0.0
      %1486 = vmatpush1.msra.mxu0 0.0
      %1487 = vmatprep.subr.mxu0 0.0
      %1488 = vmatpush1.msra.mxu0 0.0
      %1489 = vmatprep.subr.mxu0 0.0
      %1490 = vmatpush1.msra.mxu0 0.0
      %1491 = vmatprep.subr.mxu0 0.0
      %1492 = vmatpush1.msra.mxu0 0.0
      %1493 = vmatprep.subr.mxu0 0.0
      %1494 = vmatpush1.msra.mxu0 0.0
      %1495 = vmatprep.subr.mxu0 0.0
      %1496 = vmatpush1.msra.mxu0 0.0
      %1497 = vmatprep.subr.mxu0 0.0
      %1498 = vmatpush1.msra.mxu0 0.0
      %1499 = vmatprep.subr.mxu0 0.0
      %1500 = vmatpush1.msra.mxu0 0.0
      %1501 = vmatprep.subr.mxu0 0.0
      %1502 = vmatpush1.msra.mxu0 0.0
      %1503 = vmatprep.subr.mxu0 0.0
      %1504 = vmatpush1.msra.mxu0 0.0
      %1505 = vmatprep.subr.mxu0 0.0
      %1506 = vmatpush1.msra.mxu0 0.0
      %1507 = vmatprep.subr.mxu0 0.0
      %1508 = vmatpush1.msra.mxu0 0.0
      %1509 = vmatprep.subr.mxu0 0.0
      %1510 = vmatpush1.msra.mxu0 0.0
      %1511 = vmatprep.subr.mxu0 0.0
      %1512 = vmatpush1.msra.mxu0 0.0
      %1513 = vmatprep.subr.mxu0 0.0
      %1514 = vmatpush1.msra.mxu0 0.0
      %1515 = vmatprep.subr.mxu0 0.0
      %1516 = vmatpush1.msra.mxu0 0.0
      %1517 = vmatprep.subr.mxu0 0.0
      %1518 = vmatpush1.msra.mxu0 0.0
      %1519 = vmatprep.subr.mxu0 0.0
      %1520 = vmatpush1.msra.mxu0 0.0
      %1521 = vmatprep.mubr.f32.mxu0 0.0
      %1522 = vmatmul.mubr.f32.gmra.mrb[0].mxu0 %v1242
      %v1523 = vpop.f32.mrb[0].mxu0
      %v1524 = vadd.f32 0.0, %v1523
      %v1525 = vpop.f32.mrb[0].mxu0
      %v1526 = vadd.f32 0.0, %v1525
      %1527 = vdwg.mxu0
      %1528 = vmatprep.subr.mxu0 0.0
      %1529 = vmatpush1.msra.mxu0 %v1222
      %1530 = vmatprep.subr.mxu0 0.0
      %1531 = vmatpush1.msra.mxu0 0.0
      %1532 = vmatprep.subr.mxu0 0.0
      %1533 = vmatpush1.msra.mxu0 0.0
      %1534 = vmatprep.subr.mxu0 0.0
      %1535 = vmatpush1.msra.mxu0 0.0
      %1536 = vmatprep.subr.mxu0 0.0
      %1537 = vmatpush1.msra.mxu0 0.0
      %1538 = vmatprep.subr.mxu0 0.0
      %1539 = vmatpush1.msra.mxu0 0.0
      %1540 = vmatprep.subr.mxu0 0.0
      %1541 = vmatpush1.msra.mxu0 0.0
      %1542 = vmatprep.subr.mxu0 0.0
      %1543 = vmatpush1.msra.mxu0 0.0
      %1544 = vmatprep.subr.mxu0 0.0
      %1545 = vmatpush1.msra.mxu0 0.0
      %1546 = vmatprep.subr.mxu0 0.0
      %1547 = vmatpush1.msra.mxu0 0.0
      %1548 = vmatprep.subr.mxu0 0.0
      %1549 = vmatpush1.msra.mxu0 0.0
      %1550 = vmatprep.subr.mxu0 0.0
      %1551 = vmatpush1.msra.mxu0 0.0
      %1552 = vmatprep.subr.mxu0 0.0
      %1553 = vmatpush1.msra.mxu0 0.0
      %1554 = vmatprep.subr.mxu0 0.0
      %1555 = vmatpush1.msra.mxu0 0.0
      %1556 = vmatprep.subr.mxu0 0.0
      %1557 = vmatpush1.msra.mxu0 0.0
      %1558 = vmatprep.subr.mxu0 0.0
      %1559 = vmatpush1.msra.mxu0 0.0
      %1560 = vmatprep.subr.mxu0 0.0
      %1561 = vmatpush1.msra.mxu0 0.0
      %1562 = vmatprep.subr.mxu0 0.0
      %1563 = vmatpush1.msra.mxu0 0.0
      %1564 = vmatprep.subr.mxu0 0.0
      %1565 = vmatpush1.msra.mxu0 0.0
      %1566 = vmatprep.subr.mxu0 0.0
      %1567 = vmatpush1.msra.mxu0 0.0
      %1568 = vmatprep.subr.mxu0 0.0
      %1569 = vmatpush1.msra.mxu0 0.0
      %1570 = vmatprep.subr.mxu0 0.0
      %1571 = vmatpush1.msra.mxu0 0.0
      %1572 = vmatprep.subr.mxu0 0.0
      %1573 = vmatpush1.msra.mxu0 0.0
      %1574 = vmatprep.subr.mxu0 0.0
      %1575 = vmatpush1.msra.mxu0 0.0
      %1576 = vmatprep.subr.mxu0 0.0
      %1577 = vmatpush1.msra.mxu0 0.0
      %1578 = vmatprep.subr.mxu0 0.0
      %1579 = vmatpush1.msra.mxu0 0.0
      %1580 = vmatprep.subr.mxu0 0.0
      %1581 = vmatpush1.msra.mxu0 0.0
      %1582 = vmatprep.subr.mxu0 0.0
      %1583 = vmatpush1.msra.mxu0 0.0
      %1584 = vmatprep.subr.mxu0 0.0
      %1585 = vmatpush1.msra.mxu0 0.0
      %1586 = vmatprep.subr.mxu0 0.0
      %1587 = vmatpush1.msra.mxu0 0.0
      %1588 = vmatprep.subr.mxu0 0.0
      %1589 = vmatpush1.msra.mxu0 0.0
      %1590 = vmatprep.subr.mxu0 0.0
      %1591 = vmatpush1.msra.mxu0 0.0
      %1592 = vmatprep.mubr.f32.mxu0 0.0
      %1593 = vmatmul.mubr.f32.gmra.mrb[0].mxu0 %v1242
      %v1594 = vpop.f32.mrb[0].mxu0
      %v1595 = vadd.f32 0.0, %v1594
      %v1596 = vpop.f32.mrb[0].mxu0
      %1597 = vdwg.mxu0
      %v1598 = vadd.f32 %v916, %v1311
      %v1599 = vadd.f32 %v918, %v1313
      %v1600 = vadd.f32 %v987, %v1382
      %v1601 = vadd.f32 %v989, %v1384
      %v1602 = vadd.f32 %v1058, %v1453
      %v1603 = vadd.f32 %v1060, %v1455
      %v1604 = vadd.f32 %v1129, %v1524
      %v1605 = vadd.f32 %v1131, %v1526
      %v1606 = vadd.f32 %v1200, %v1595
      %s1607 = scalar_lea.vmem %s1, 24
      %v1608 = vld [vmem:[%s1607] sm:$0xff]
      %1609 = vrot.lane.b32.xlu0 %v444, 94
      %v1610 = vpop.permute.xlu0 %1609
      %1611 = vrot.lane.b32.xlu0 %v427, 94
      %v1612 = vpop.permute.xlu0 %1611
      %1613 = vrot.lane.b32.xlu0 %v428, 94
      %v1614 = vpop.permute.xlu0 %1613
      %1615 = vrot.lane.b32.xlu0 %v429, 94
      %v1616 = vpop.permute.xlu0 %1615
      %1617 = vrot.lane.b32.xlu0 %v430, 94
      %v1618 = vpop.permute.xlu0 %1617
      %1619 = vrot.lane.b32.xlu0 %v431, 94
      %v1620 = vpop.permute.xlu0 %1619
      %1621 = vrot.lane.b32.xlu0 %v432, 94
      %v1622 = vpop.permute.xlu0 %1621
      %1623 = vrot.lane.b32.xlu0 %v433, 94
      %v1624 = vpop.permute.xlu0 %1623
      %1625 = vrot.lane.b32.xlu0 %v446, 94
      %v1626 = vpop.permute.xlu0 %1625
      %vm1627 = vcmask 769024
      %v1628 = vsel %vm1627, %v1610, %v1612
      %v1629 = vsel %vm1627, %v1612, %v1614
      %v1630 = vsel %vm1627, %v1614, %v1616
      %v1631 = vsel %vm1627, %v1616, %v1618
      %v1632 = vsel %vm1627, %v1618, %v1620
      %v1633 = vsel %vm1627, %v1620, %v1622
      %v1634 = vsel %vm1627, %v1622, %v1624
      %v1635 = vsel %vm1627, %v1624, %v1626
      %v1646 = vsel %vm488, %v1608, 0
      %1648 = vmatprep.subr.mxu0 %v1629
      %1649 = vmatpush1.msra.mxu0 %v1628
      %1650 = vmatprep.subr.mxu0 0.0
      %1651 = vmatpush1.msra.mxu0 0.0
      %1652 = vmatprep.subr.mxu0 0.0
      %1653 = vmatpush1.msra.mxu0 0.0
      %1654 = vmatprep.subr.mxu0 0.0
      %1655 = vmatpush1.msra.mxu0 0.0
      %1656 = vmatprep.subr.mxu0 0.0
      %1657 = vmatpush1.msra.mxu0 0.0
      %1658 = vmatprep.subr.mxu0 0.0
      %1659 = vmatpush1.msra.mxu0 0.0
      %1660 = vmatprep.subr.mxu0 0.0
      %1661 = vmatpush1.msra.mxu0 0.0
      %1662 = vmatprep.subr.mxu0 0.0
      %1663 = vmatpush1.msra.mxu0 0.0
      %1664 = vmatprep.subr.mxu0 0.0
      %1665 = vmatpush1.msra.mxu0 0.0
      %1666 = vmatprep.subr.mxu0 0.0
      %1667 = vmatpush1.msra.mxu0 0.0
      %1668 = vmatprep.subr.mxu0 0.0
      %1669 = vmatpush1.msra.mxu0 0.0
      %1670 = vmatprep.subr.mxu0 0.0
      %1671 = vmatpush1.msra.mxu0 0.0
      %1672 = vmatprep.subr.mxu0 0.0
      %1673 = vmatpush1.msra.mxu0 0.0
      %1674 = vmatprep.subr.mxu0 0.0
      %1675 = vmatpush1.msra.mxu0 0.0
      %1676 = vmatprep.subr.mxu0 0.0
      %1677 = vmatpush1.msra.mxu0 0.0
      %1678 = vmatprep.subr.mxu0 0.0
      %1679 = vmatpush1.msra.mxu0 0.0
      %1680 = vmatprep.subr.mxu0 0.0
      %1681 = vmatpush1.msra.mxu0 0.0
      %1682 = vmatprep.subr.mxu0 0.0
      %1683 = vmatpush1.msra.mxu0 0.0
      %1684 = vmatprep.subr.mxu0 0.0
      %1685 = vmatpush1.msra.mxu0 0.0
      %1686 = vmatprep.subr.mxu0 0.0
      %1687 = vmatpush1.msra.mxu0 0.0
      %1688 = vmatprep.subr.mxu0 0.0
      %1689 = vmatpush1.msra.mxu0 0.0
      %1690 = vmatprep.subr.mxu0 0.0
      %1691 = vmatpush1.msra.mxu0 0.0
      %1692 = vmatprep.subr.mxu0 0.0
      %1693 = vmatpush1.msra.mxu0 0.0
      %1694 = vmatprep.subr.mxu0 0.0
      %1695 = vmatpush1.msra.mxu0 0.0
      %1696 = vmatprep.subr.mxu0 0.0
      %1697 = vmatpush1.msra.mxu0 0.0
      %1698 = vmatprep.subr.mxu0 0.0
      %1699 = vmatpush1.msra.mxu0 0.0
      %1700 = vmatprep.subr.mxu0 0.0
      %1701 = vmatpush1.msra.mxu0 0.0
      %1702 = vmatprep.subr.mxu0 0.0
      %1703 = vmatpush1.msra.mxu0 0.0
      %1704 = vmatprep.subr.mxu0 0.0
      %1705 = vmatpush1.msra.mxu0 0.0
      %1706 = vmatprep.subr.mxu0 0.0
      %1707 = vmatpush1.msra.mxu0 0.0
      %1708 = vmatprep.subr.mxu0 0.0
      %1709 = vmatpush1.msra.mxu0 0.0
      %1710 = vmatprep.subr.mxu0 0.0
      %1711 = vmatpush1.msra.mxu0 0.0
      %1712 = vmatprep.mubr.f32.mxu0 0.0
      %1713 = vmatmul.mubr.f32.gmra.mrb[0].mxu0 %v1646
      %v1714 = vpop.f32.mrb[0].mxu0
      %v1715 = vadd.f32 0.0, %v1714
      %v1716 = vpop.f32.mrb[0].mxu0
      %v1717 = vadd.f32 0.0, %v1716
      %1718 = vdwg.mxu0
      %1719 = vmatprep.subr.mxu0 %v1631
      %1720 = vmatpush1.msra.mxu0 %v1630
      %1721 = vmatprep.subr.mxu0 0.0
      %1722 = vmatpush1.msra.mxu0 0.0
      %1723 = vmatprep.subr.mxu0 0.0
      %1724 = vmatpush1.msra.mxu0 0.0
      %1725 = vmatprep.subr.mxu0 0.0
      %1726 = vmatpush1.msra.mxu0 0.0
      %1727 = vmatprep.subr.mxu0 0.0
      %1728 = vmatpush1.msra.mxu0 0.0
      %1729 = vmatprep.subr.mxu0 0.0
      %1730 = vmatpush1.msra.mxu0 0.0
      %1731 = vmatprep.subr.mxu0 0.0
      %1732 = vmatpush1.msra.mxu0 0.0
      %1733 = vmatprep.subr.mxu0 0.0
      %1734 = vmatpush1.msra.mxu0 0.0
      %1735 = vmatprep.subr.mxu0 0.0
      %1736 = vmatpush1.msra.mxu0 0.0
      %1737 = vmatprep.subr.mxu0 0.0
      %1738 = vmatpush1.msra.mxu0 0.0
      %1739 = vmatprep.subr.mxu0 0.0
      %1740 = vmatpush1.msra.mxu0 0.0
      %1741 = vmatprep.subr.mxu0 0.0
      %1742 = vmatpush1.msra.mxu0 0.0
      %1743 = vmatprep.subr.mxu0 0.0
      %1744 = vmatpush1.msra.mxu0 0.0
      %1745 = vmatprep.subr.mxu0 0.0
      %1746 = vmatpush1.msra.mxu0 0.0
      %1747 = vmatprep.subr.mxu0 0.0
      %1748 = vmatpush1.msra.mxu0 0.0
      %1749 = vmatprep.subr.mxu0 0.0
      %1750 = vmatpush1.msra.mxu0 0.0
      %1751 = vmatprep.subr.mxu0 0.0
      %1752 = vmatpush1.msra.mxu0 0.0
      %1753 = vmatprep.subr.mxu0 0.0
      %1754 = vmatpush1.msra.mxu0 0.0
      %1755 = vmatprep.subr.mxu0 0.0
      %1756 = vmatpush1.msra.mxu0 0.0
      %1757 = vmatprep.subr.mxu0 0.0
      %1758 = vmatpush1.msra.mxu0 0.0
      %1759 = vmatprep.subr.mxu0 0.0
      %1760 = vmatpush1.msra.mxu0 0.0
      %1761 = vmatprep.subr.mxu0 0.0
      %1762 = vmatpush1.msra.mxu0 0.0
      %1763 = vmatprep.subr.mxu0 0.0
      %1764 = vmatpush1.msra.mxu0 0.0
      %1765 = vmatprep.subr.mxu0 0.0
      %1766 = vmatpush1.msra.mxu0 0.0
      %1767 = vmatprep.subr.mxu0 0.0
      %1768 = vmatpush1.msra.mxu0 0.0
      %1769 = vmatprep.subr.mxu0 0.0
      %1770 = vmatpush1.msra.mxu0 0.0
      %1771 = vmatprep.subr.mxu0 0.0
      %1772 = vmatpush1.msra.mxu0 0.0
      %1773 = vmatprep.subr.mxu0 0.0
      %1774 = vmatpush1.msra.mxu0 0.0
      %1775 = vmatprep.subr.mxu0 0.0
      %1776 = vmatpush1.msra.mxu0 0.0
      %1777 = vmatprep.subr.mxu0 0.0
      %1778 = vmatpush1.msra.mxu0 0.0
      %1779 = vmatprep.subr.mxu0 0.0
      %1780 = vmatpush1.msra.mxu0 0.0
      %1781 = vmatprep.subr.mxu0 0.0
      %1782 = vmatpush1.msra.mxu0 0.0
      %1783 = vmatprep.mubr.f32.mxu0 0.0
      %1784 = vmatmul.mubr.f32.gmra.mrb[0].mxu0 %v1646
      %v1785 = vpop.f32.mrb[0].mxu0
      %v1786 = vadd.f32 0.0, %v1785
      %v1787 = vpop.f32.mrb[0].mxu0
      %v1788 = vadd.f32 0.0, %v1787
      %1789 = vdwg.mxu0
      %1790 = vmatprep.subr.mxu0 %v1633
      %1791 = vmatpush1.msra.mxu0 %v1632
      %1792 = vmatprep.subr.mxu0 0.0
      %1793 = vmatpush1.msra.mxu0 0.0
      %1794 = vmatprep.subr.mxu0 0.0
      %1795 = vmatpush1.msra.mxu0 0.0
      %1796 = vmatprep.subr.mxu0 0.0
      %1797 = vmatpush1.msra.mxu0 0.0
      %1798 = vmatprep.subr.mxu0 0.0
      %1799 = vmatpush1.msra.mxu0 0.0
      %1800 = vmatprep.subr.mxu0 0.0
      %1801 = vmatpush1.msra.mxu0 0.0
      %1802 = vmatprep.subr.mxu0 0.0
      %1803 = vmatpush1.msra.mxu0 0.0
      %1804 = vmatprep.subr.mxu0 0.0
      %1805 = vmatpush1.msra.mxu0 0.0
      %1806 = vmatprep.subr.mxu0 0.0
      %1807 = vmatpush1.msra.mxu0 0.0
      %1808 = vmatprep.subr.mxu0 0.0
      %1809 = vmatpush1.msra.mxu0 0.0
      %1810 = vmatprep.subr.mxu0 0.0
      %1811 = vmatpush1.msra.mxu0 0.0
      %1812 = vmatprep.subr.mxu0 0.0
      %1813 = vmatpush1.msra.mxu0 0.0
      %1814 = vmatprep.subr.mxu0 0.0
      %1815 = vmatpush1.msra.mxu0 0.0
      %1816 = vmatprep.subr.mxu0 0.0
      %1817 = vmatpush1.msra.mxu0 0.0
      %1818 = vmatprep.subr.mxu0 0.0
      %1819 = vmatpush1.msra.mxu0 0.0
      %1820 = vmatprep.subr.mxu0 0.0
      %1821 = vmatpush1.msra.mxu0 0.0
      %1822 = vmatprep.subr.mxu0 0.0
      %1823 = vmatpush1.msra.mxu0 0.0
      %1824 = vmatprep.subr.mxu0 0.0
      %1825 = vmatpush1.msra.mxu0 0.0
      %1826 = vmatprep.subr.mxu0 0.0
      %1827 = vmatpush1.msra.mxu0 0.0
      %1828 = vmatprep.subr.mxu0 0.0
      %1829 = vmatpush1.msra.mxu0 0.0
      %1830 = vmatprep.subr.mxu0 0.0
      %1831 = vmatpush1.msra.mxu0 0.0
      %1832 = vmatprep.subr.mxu0 0.0
      %1833 = vmatpush1.msra.mxu0 0.0
      %1834 = vmatprep.subr.mxu0 0.0
      %1835 = vmatpush1.msra.mxu0 0.0
      %1836 = vmatprep.subr.mxu0 0.0
      %1837 = vmatpush1.msra.mxu0 0.0
      %1838 = vmatprep.subr.mxu0 0.0
      %1839 = vmatpush1.msra.mxu0 0.0
      %1840 = vmatprep.subr.mxu0 0.0
      %1841 = vmatpush1.msra.mxu0 0.0
      %1842 = vmatprep.subr.mxu0 0.0
      %1843 = vmatpush1.msra.mxu0 0.0
      %1844 = vmatprep.subr.mxu0 0.0
      %1845 = vmatpush1.msra.mxu0 0.0
      %1846 = vmatprep.subr.mxu0 0.0
      %1847 = vmatpush1.msra.mxu0 0.0
      %1848 = vmatprep.subr.mxu0 0.0
      %1849 = vmatpush1.msra.mxu0 0.0
      %1850 = vmatprep.subr.mxu0 0.0
      %1851 = vmatpush1.msra.mxu0 0.0
      %1852 = vmatprep.subr.mxu0 0.0
      %1853 = vmatpush1.msra.mxu0 0.0
      %1854 = vmatprep.mubr.f32.mxu0 0.0
      %1855 = vmatmul.mubr.f32.gmra.mrb[0].mxu0 %v1646
      %v1856 = vpop.f32.mrb[0].mxu0
      %v1857 = vadd.f32 0.0, %v1856
      %v1858 = vpop.f32.mrb[0].mxu0
      %v1859 = vadd.f32 0.0, %v1858
      %1860 = vdwg.mxu0
      %1861 = vmatprep.subr.mxu0 %v1635
      %1862 = vmatpush1.msra.mxu0 %v1634
      %1863 = vmatprep.subr.mxu0 0.0
      %1864 = vmatpush1.msra.mxu0 0.0
      %1865 = vmatprep.subr.mxu0 0.0
      %1866 = vmatpush1.msra.mxu0 0.0
      %1867 = vmatprep.subr.mxu0 0.0
      %1868 = vmatpush1.msra.mxu0 0.0
      %1869 = vmatprep.subr.mxu0 0.0
      %1870 = vmatpush1.msra.mxu0 0.0
      %1871 = vmatprep.subr.mxu0 0.0
      %1872 = vmatpush1.msra.mxu0 0.0
      %1873 = vmatprep.subr.mxu0 0.0
      %1874 = vmatpush1.msra.mxu0 0.0
      %1875 = vmatprep.subr.mxu0 0.0
      %1876 = vmatpush1.msra.mxu0 0.0
      %1877 = vmatprep.subr.mxu0 0.0
      %1878 = vmatpush1.msra.mxu0 0.0
      %1879 = vmatprep.subr.mxu0 0.0
      %1880 = vmatpush1.msra.mxu0 0.0
      %1881 = vmatprep.subr.mxu0 0.0
      %1882 = vmatpush1.msra.mxu0 0.0
      %1883 = vmatprep.subr.mxu0 0.0
      %1884 = vmatpush1.msra.mxu0 0.0
      %1885 = vmatprep.subr.mxu0 0.0
      %1886 = vmatpush1.msra.mxu0 0.0
      %1887 = vmatprep.subr.mxu0 0.0
      %1888 = vmatpush1.msra.mxu0 0.0
      %1889 = vmatprep.subr.mxu0 0.0
      %1890 = vmatpush1.msra.mxu0 0.0
      %1891 = vmatprep.subr.mxu0 0.0
      %1892 = vmatpush1.msra.mxu0 0.0
      %1893 = vmatprep.subr.mxu0 0.0
      %1894 = vmatpush1.msra.mxu0 0.0
      %1895 = vmatprep.subr.mxu0 0.0
      %1896 = vmatpush1.msra.mxu0 0.0
      %1897 = vmatprep.subr.mxu0 0.0
      %1898 = vmatpush1.msra.mxu0 0.0
      %1899 = vmatprep.subr.mxu0 0.0
      %1900 = vmatpush1.msra.mxu0 0.0
      %1901 = vmatprep.subr.mxu0 0.0
      %1902 = vmatpush1.msra.mxu0 0.0
      %1903 = vmatprep.subr.mxu0 0.0
      %1904 = vmatpush1.msra.mxu0 0.0
      %1905 = vmatprep.subr.mxu0 0.0
      %1906 = vmatpush1.msra.mxu0 0.0
      %1907 = vmatprep.subr.mxu0 0.0
      %1908 = vmatpush1.msra.mxu0 0.0
      %1909 = vmatprep.subr.mxu0 0.0
      %1910 = vmatpush1.msra.mxu0 0.0
      %1911 = vmatprep.subr.mxu0 0.0
      %1912 = vmatpush1.msra.mxu0 0.0
      %1913 = vmatprep.subr.mxu0 0.0
      %1914 = vmatpush1.msra.mxu0 0.0
      %1915 = vmatprep.subr.mxu0 0.0
      %1916 = vmatpush1.msra.mxu0 0.0
      %1917 = vmatprep.subr.mxu0 0.0
      %1918 = vmatpush1.msra.mxu0 0.0
      %1919 = vmatprep.subr.mxu0 0.0
      %1920 = vmatpush1.msra.mxu0 0.0
      %1921 = vmatprep.subr.mxu0 0.0
      %1922 = vmatpush1.msra.mxu0 0.0
      %1923 = vmatprep.subr.mxu0 0.0
      %1924 = vmatpush1.msra.mxu0 0.0
      %1925 = vmatprep.mubr.f32.mxu0 0.0
      %1926 = vmatmul.mubr.f32.gmra.mrb[0].mxu0 %v1646
      %v1927 = vpop.f32.mrb[0].mxu0
      %v1928 = vadd.f32 0.0, %v1927
      %v1929 = vpop.f32.mrb[0].mxu0
      %v1930 = vadd.f32 0.0, %v1929
      %1931 = vdwg.mxu0
      %1932 = vmatprep.subr.mxu0 0.0
      %1933 = vmatpush1.msra.mxu0 %v1626
      %1934 = vmatprep.subr.mxu0 0.0
      %1935 = vmatpush1.msra.mxu0 0.0
      %1936 = vmatprep.subr.mxu0 0.0
      %1937 = vmatpush1.msra.mxu0 0.0
      %1938 = vmatprep.subr.mxu0 0.0
      %1939 = vmatpush1.msra.mxu0 0.0
      %1940 = vmatprep.subr.mxu0 0.0
      %1941 = vmatpush1.msra.mxu0 0.0
      %1942 = vmatprep.subr.mxu0 0.0
      %1943 = vmatpush1.msra.mxu0 0.0
      %1944 = vmatprep.subr.mxu0 0.0
      %1945 = vmatpush1.msra.mxu0 0.0
      %1946 = vmatprep.subr.mxu0 0.0
      %1947 = vmatpush1.msra.mxu0 0.0
      %1948 = vmatprep.subr.mxu0 0.0
      %1949 = vmatpush1.msra.mxu0 0.0
      %1950 = vmatprep.subr.mxu0 0.0
      %1951 = vmatpush1.msra.mxu0 0.0
      %1952 = vmatprep.subr.mxu0 0.0
      %1953 = vmatpush1.msra.mxu0 0.0
      %1954 = vmatprep.subr.mxu0 0.0
      %1955 = vmatpush1.msra.mxu0 0.0
      %1956 = vmatprep.subr.mxu0 0.0
      %1957 = vmatpush1.msra.mxu0 0.0
      %1958 = vmatprep.subr.mxu0 0.0
      %1959 = vmatpush1.msra.mxu0 0.0
      %1960 = vmatprep.subr.mxu0 0.0
      %1961 = vmatpush1.msra.mxu0 0.0
      %1962 = vmatprep.subr.mxu0 0.0
      %1963 = vmatpush1.msra.mxu0 0.0
      %1964 = vmatprep.subr.mxu0 0.0
      %1965 = vmatpush1.msra.mxu0 0.0
      %1966 = vmatprep.subr.mxu0 0.0
      %1967 = vmatpush1.msra.mxu0 0.0
      %1968 = vmatprep.subr.mxu0 0.0
      %1969 = vmatpush1.msra.mxu0 0.0
      %1970 = vmatprep.subr.mxu0 0.0
      %1971 = vmatpush1.msra.mxu0 0.0
      %1972 = vmatprep.subr.mxu0 0.0
      %1973 = vmatpush1.msra.mxu0 0.0
      %1974 = vmatprep.subr.mxu0 0.0
      %1975 = vmatpush1.msra.mxu0 0.0
      %1976 = vmatprep.subr.mxu0 0.0
      %1977 = vmatpush1.msra.mxu0 0.0
      %1978 = vmatprep.subr.mxu0 0.0
      %1979 = vmatpush1.msra.mxu0 0.0
      %1980 = vmatprep.subr.mxu0 0.0
      %1981 = vmatpush1.msra.mxu0 0.0
      %1982 = vmatprep.subr.mxu0 0.0
      %1983 = vmatpush1.msra.mxu0 0.0
      %1984 = vmatprep.subr.mxu0 0.0
      %1985 = vmatpush1.msra.mxu0 0.0
      %1986 = vmatprep.subr.mxu0 0.0
      %1987 = vmatpush1.msra.mxu0 0.0
      %1988 = vmatprep.subr.mxu0 0.0
      %1989 = vmatpush1.msra.mxu0 0.0
      %1990 = vmatprep.subr.mxu0 0.0
      %1991 = vmatpush1.msra.mxu0 0.0
      %1992 = vmatprep.subr.mxu0 0.0
      %1993 = vmatpush1.msra.mxu0 0.0
      %1994 = vmatprep.subr.mxu0 0.0
      %1995 = vmatpush1.msra.mxu0 0.0
      %1996 = vmatprep.mubr.f32.mxu0 0.0
      %1997 = vmatmul.mubr.f32.gmra.mrb[0].mxu0 %v1646
      %v1998 = vpop.f32.mrb[0].mxu0
      %v1999 = vadd.f32 0.0, %v1998
      %v2000 = vpop.f32.mrb[0].mxu0
      %2001 = vdwg.mxu0
      %v2002 = vadd.f32 %v1598, %v1715
      %v2003 = vadd.f32 %v1599, %v1717
      %v2004 = vadd.f32 %v1600, %v1786
      %v2005 = vadd.f32 %v1601, %v1788
      %v2006 = vadd.f32 %v1602, %v1857
      %v2007 = vadd.f32 %v1603, %v1859
      %v2008 = vadd.f32 %v1604, %v1928
      %v2009 = vadd.f32 %v1605, %v1930
      %v2010 = vadd.f32 %v1606, %v1999
      %s2011 = scalar_lea.vmem %s1, 32
      %v2012 = vld [vmem:[%s2011] sm:$0xff]
      %2013 = vrot.lane.b32.xlu0 %v444, 93
      %v2014 = vpop.permute.xlu0 %2013
      %2015 = vrot.lane.b32.xlu0 %v427, 93
      %v2016 = vpop.permute.xlu0 %2015
      %2017 = vrot.lane.b32.xlu0 %v428, 93
      %v2018 = vpop.permute.xlu0 %2017
      %2019 = vrot.lane.b32.xlu0 %v429, 93
      %v2020 = vpop.permute.xlu0 %2019
      %2021 = vrot.lane.b32.xlu0 %v430, 93
      %v2022 = vpop.permute.xlu0 %2021
      %2023 = vrot.lane.b32.xlu0 %v431, 93
      %v2024 = vpop.permute.xlu0 %2023
      %2025 = vrot.lane.b32.xlu0 %v432, 93
      %v2026 = vpop.permute.xlu0 %2025
      %2027 = vrot.lane.b32.xlu0 %v433, 93
      %v2028 = vpop.permute.xlu0 %2027
      %2029 = vrot.lane.b32.xlu0 %v446, 93
      %v2030 = vpop.permute.xlu0 %2029
      %vm2031 = vcmask 760832
      %v2032 = vsel %vm2031, %v2014, %v2016
      %v2033 = vsel %vm2031, %v2016, %v2018
      %v2034 = vsel %vm2031, %v2018, %v2020
      %v2035 = vsel %vm2031, %v2020, %v2022
      %v2036 = vsel %vm2031, %v2022, %v2024
      %v2037 = vsel %vm2031, %v2024, %v2026
      %v2038 = vsel %vm2031, %v2026, %v2028
      %v2039 = vsel %vm2031, %v2028, %v2030
      %v2050 = vsel %vm488, %v2012, 0
      %2052 = vmatprep.subr.mxu0 %v2033
      %2053 = vmatpush1.msra.mxu0 %v2032
      %2054 = vmatprep.subr.mxu0 0.0
      %2055 = vmatpush1.msra.mxu0 0.0
      %2056 = vmatprep.subr.mxu0 0.0
      %2057 = vmatpush1.msra.mxu0 0.0
      %2058 = vmatprep.subr.mxu0 0.0
      %2059 = vmatpush1.msra.mxu0 0.0
      %2060 = vmatprep.subr.mxu0 0.0
      %2061 = vmatpush1.msra.mxu0 0.0
      %2062 = vmatprep.subr.mxu0 0.0
      %2063 = vmatpush1.msra.mxu0 0.0
      %2064 = vmatprep.subr.mxu0 0.0
      %2065 = vmatpush1.msra.mxu0 0.0
      %2066 = vmatprep.subr.mxu0 0.0
      %2067 = vmatpush1.msra.mxu0 0.0
      %2068 = vmatprep.subr.mxu0 0.0
      %2069 = vmatpush1.msra.mxu0 0.0
      %2070 = vmatprep.subr.mxu0 0.0
      %2071 = vmatpush1.msra.mxu0 0.0
      %2072 = vmatprep.subr.mxu0 0.0
      %2073 = vmatpush1.msra.mxu0 0.0
      %2074 = vmatprep.subr.mxu0 0.0
      %2075 = vmatpush1.msra.mxu0 0.0
      %2076 = vmatprep.subr.mxu0 0.0
      %2077 = vmatpush1.msra.mxu0 0.0
      %2078 = vmatprep.subr.mxu0 0.0
      %2079 = vmatpush1.msra.mxu0 0.0
      %2080 = vmatprep.subr.mxu0 0.0
      %2081 = vmatpush1.msra.mxu0 0.0
      %2082 = vmatprep.subr.mxu0 0.0
      %2083 = vmatpush1.msra.mxu0 0.0
      %2084 = vmatprep.subr.mxu0 0.0
      %2085 = vmatpush1.msra.mxu0 0.0
      %2086 = vmatprep.subr.mxu0 0.0
      %2087 = vmatpush1.msra.mxu0 0.0
      %2088 = vmatprep.subr.mxu0 0.0
      %2089 = vmatpush1.msra.mxu0 0.0
      %2090 = vmatprep.subr.mxu0 0.0
      %2091 = vmatpush1.msra.mxu0 0.0
      %2092 = vmatprep.subr.mxu0 0.0
      %2093 = vmatpush1.msra.mxu0 0.0
      %2094 = vmatprep.subr.mxu0 0.0
      %2095 = vmatpush1.msra.mxu0 0.0
      %2096 = vmatprep.subr.mxu0 0.0
      %2097 = vmatpush1.msra.mxu0 0.0
      %2098 = vmatprep.subr.mxu0 0.0
      %2099 = vmatpush1.msra.mxu0 0.0
      %2100 = vmatprep.subr.mxu0 0.0
      %2101 = vmatpush1.msra.mxu0 0.0
      %2102 = vmatprep.subr.mxu0 0.0
      %2103 = vmatpush1.msra.mxu0 0.0
      %2104 = vmatprep.subr.mxu0 0.0
      %2105 = vmatpush1.msra.mxu0 0.0
      %2106 = vmatprep.subr.mxu0 0.0
      %2107 = vmatpush1.msra.mxu0 0.0
      %2108 = vmatprep.subr.mxu0 0.0
      %2109 = vmatpush1.msra.mxu0 0.0
      %2110 = vmatprep.subr.mxu0 0.0
      %2111 = vmatpush1.msra.mxu0 0.0
      %2112 = vmatprep.subr.mxu0 0.0
      %2113 = vmatpush1.msra.mxu0 0.0
      %2114 = vmatprep.subr.mxu0 0.0
      %2115 = vmatpush1.msra.mxu0 0.0
      %2116 = vmatprep.mubr.f32.mxu0 0.0
      %2117 = vmatmul.mubr.f32.gmra.mrb[0].mxu0 %v2050
      %v2118 = vpop.f32.mrb[0].mxu0
      %v2119 = vadd.f32 0.0, %v2118
      %v2120 = vpop.f32.mrb[0].mxu0
      %v2121 = vadd.f32 0.0, %v2120
      %2122 = vdwg.mxu0
      %2123 = vmatprep.subr.mxu0 %v2035
      %2124 = vmatpush1.msra.mxu0 %v2034
      %2125 = vmatprep.subr.mxu0 0.0
      %2126 = vmatpush1.msra.mxu0 0.0
      %2127 = vmatprep.subr.mxu0 0.0
      %2128 = vmatpush1.msra.mxu0 0.0
      %2129 = vmatprep.subr.mxu0 0.0
      %2130 = vmatpush1.msra.mxu0 0.0
      %2131 = vmatprep.subr.mxu0 0.0
      %2132 = vmatpush1.msra.mxu0 0.0
      %2133 = vmatprep.subr.mxu0 0.0
      %2134 = vmatpush1.msra.mxu0 0.0
      %2135 = vmatprep.subr.mxu0 0.0
      %2136 = vmatpush1.msra.mxu0 0.0
      %2137 = vmatprep.subr.mxu0 0.0
      %2138 = vmatpush1.msra.mxu0 0.0
      %2139 = vmatprep.subr.mxu0 0.0
      %2140 = vmatpush1.msra.mxu0 0.0
      %2141 = vmatprep.subr.mxu0 0.0
      %2142 = vmatpush1.msra.mxu0 0.0
      %2143 = vmatprep.subr.mxu0 0.0
      %2144 = vmatpush1.msra.mxu0 0.0
      %2145 = vmatprep.subr.mxu0 0.0
      %2146 = vmatpush1.msra.mxu0 0.0
      %2147 = vmatprep.subr.mxu0 0.0
      %2148 = vmatpush1.msra.mxu0 0.0
      %2149 = vmatprep.subr.mxu0 0.0
      %2150 = vmatpush1.msra.mxu0 0.0
      %2151 = vmatprep.subr.mxu0 0.0
      %2152 = vmatpush1.msra.mxu0 0.0
      %2153 = vmatprep.subr.mxu0 0.0
      %2154 = vmatpush1.msra.mxu0 0.0
      %2155 = vmatprep.subr.mxu0 0.0
      %2156 = vmatpush1.msra.mxu0 0.0
      %2157 = vmatprep.subr.mxu0 0.0
      %2158 = vmatpush1.msra.mxu0 0.0
      %2159 = vmatprep.subr.mxu0 0.0
      %2160 = vmatpush1.msra.mxu0 0.0
      %2161 = vmatprep.subr.mxu0 0.0
      %2162 = vmatpush1.msra.mxu0 0.0
      %2163 = vmatprep.subr.mxu0 0.0
      %2164 = vmatpush1.msra.mxu0 0.0
      %2165 = vmatprep.subr.mxu0 0.0
      %2166 = vmatpush1.msra.mxu0 0.0
      %2167 = vmatprep.subr.mxu0 0.0
      %2168 = vmatpush1.msra.mxu0 0.0
      %2169 = vmatprep.subr.mxu0 0.0
      %2170 = vmatpush1.msra.mxu0 0.0
      %2171 = vmatprep.subr.mxu0 0.0
      %2172 = vmatpush1.msra.mxu0 0.0
      %2173 = vmatprep.subr.mxu0 0.0
      %2174 = vmatpush1.msra.mxu0 0.0
      %2175 = vmatprep.subr.mxu0 0.0
      %2176 = vmatpush1.msra.mxu0 0.0
      %2177 = vmatprep.subr.mxu0 0.0
      %2178 = vmatpush1.msra.mxu0 0.0
      %2179 = vmatprep.subr.mxu0 0.0
      %2180 = vmatpush1.msra.mxu0 0.0
      %2181 = vmatprep.subr.mxu0 0.0
      %2182 = vmatpush1.msra.mxu0 0.0
      %2183 = vmatprep.subr.mxu0 0.0
      %2184 = vmatpush1.msra.mxu0 0.0
      %2185 = vmatprep.subr.mxu0 0.0
      %2186 = vmatpush1.msra.mxu0 0.0
      %2187 = vmatprep.mubr.f32.mxu0 0.0
      %2188 = vmatmul.mubr.f32.gmra.mrb[0].mxu0 %v2050
      %v2189 = vpop.f32.mrb[0].mxu0
      %v2190 = vadd.f32 0.0, %v2189
      %v2191 = vpop.f32.mrb[0].mxu0
      %v2192 = vadd.f32 0.0, %v2191
      %2193 = vdwg.mxu0
      %2194 = vmatprep.subr.mxu0 %v2037
      %2195 = vmatpush1.msra.mxu0 %v2036
      %2196 = vmatprep.subr.mxu0 0.0
      %2197 = vmatpush1.msra.mxu0 0.0
      %2198 = vmatprep.subr.mxu0 0.0
      %2199 = vmatpush1.msra.mxu0 0.0
      %2200 = vmatprep.subr.mxu0 0.0
      %2201 = vmatpush1.msra.mxu0 0.0
      %2202 = vmatprep.subr.mxu0 0.0
      %2203 = vmatpush1.msra.mxu0 0.0
      %2204 = vmatprep.subr.mxu0 0.0
      %2205 = vmatpush1.msra.mxu0 0.0
      %2206 = vmatprep.subr.mxu0 0.0
      %2207 = vmatpush1.msra.mxu0 0.0
      %2208 = vmatprep.subr.mxu0 0.0
      %2209 = vmatpush1.msra.mxu0 0.0
      %2210 = vmatprep.subr.mxu0 0.0
      %2211 = vmatpush1.msra.mxu0 0.0
      %2212 = vmatprep.subr.mxu0 0.0
      %2213 = vmatpush1.msra.mxu0 0.0
      %2214 = vmatprep.subr.mxu0 0.0
      %2215 = vmatpush1.msra.mxu0 0.0
      %2216 = vmatprep.subr.mxu0 0.0
      %2217 = vmatpush1.msra.mxu0 0.0
      %2218 = vmatprep.subr.mxu0 0.0
      %2219 = vmatpush1.msra.mxu0 0.0
      %2220 = vmatprep.subr.mxu0 0.0
      %2221 = vmatpush1.msra.mxu0 0.0
      %2222 = vmatprep.subr.mxu0 0.0
      %2223 = vmatpush1.msra.mxu0 0.0
      %2224 = vmatprep.subr.mxu0 0.0
      %2225 = vmatpush1.msra.mxu0 0.0
      %2226 = vmatprep.subr.mxu0 0.0
      %2227 = vmatpush1.msra.mxu0 0.0
      %2228 = vmatprep.subr.mxu0 0.0
      %2229 = vmatpush1.msra.mxu0 0.0
      %2230 = vmatprep.subr.mxu0 0.0
      %2231 = vmatpush1.msra.mxu0 0.0
      %2232 = vmatprep.subr.mxu0 0.0
      %2233 = vmatpush1.msra.mxu0 0.0
      %2234 = vmatprep.subr.mxu0 0.0
      %2235 = vmatpush1.msra.mxu0 0.0
      %2236 = vmatprep.subr.mxu0 0.0
      %2237 = vmatpush1.msra.mxu0 0.0
      %2238 = vmatprep.subr.mxu0 0.0
      %2239 = vmatpush1.msra.mxu0 0.0
      %2240 = vmatprep.subr.mxu0 0.0
      %2241 = vmatpush1.msra.mxu0 0.0
      %2242 = vmatprep.subr.mxu0 0.0
      %2243 = vmatpush1.msra.mxu0 0.0
      %2244 = vmatprep.subr.mxu0 0.0
      %2245 = vmatpush1.msra.mxu0 0.0
      %2246 = vmatprep.subr.mxu0 0.0
      %2247 = vmatpush1.msra.mxu0 0.0
      %2248 = vmatprep.subr.mxu0 0.0
      %2249 = vmatpush1.msra.mxu0 0.0
      %2250 = vmatprep.subr.mxu0 0.0
      %2251 = vmatpush1.msra.mxu0 0.0
      %2252 = vmatprep.subr.mxu0 0.0
      %2253 = vmatpush1.msra.mxu0 0.0
      %2254 = vmatprep.subr.mxu0 0.0
      %2255 = vmatpush1.msra.mxu0 0.0
      %2256 = vmatprep.subr.mxu0 0.0
      %2257 = vmatpush1.msra.mxu0 0.0
      %2258 = vmatprep.mubr.f32.mxu0 0.0
      %2259 = vmatmul.mubr.f32.gmra.mrb[0].mxu0 %v2050
      %v2260 = vpop.f32.mrb[0].mxu0
      %v2261 = vadd.f32 0.0, %v2260
      %v2262 = vpop.f32.mrb[0].mxu0
      %v2263 = vadd.f32 0.0, %v2262
      %2264 = vdwg.mxu0
      %2265 = vmatprep.subr.mxu0 %v2039
      %2266 = vmatpush1.msra.mxu0 %v2038
      %2267 = vmatprep.subr.mxu0 0.0
      %2268 = vmatpush1.msra.mxu0 0.0
      %2269 = vmatprep.subr.mxu0 0.0
      %2270 = vmatpush1.msra.mxu0 0.0
      %2271 = vmatprep.subr.mxu0 0.0
      %2272 = vmatpush1.msra.mxu0 0.0
      %2273 = vmatprep.subr.mxu0 0.0
      %2274 = vmatpush1.msra.mxu0 0.0
      %2275 = vmatprep.subr.mxu0 0.0
      %2276 = vmatpush1.msra.mxu0 0.0
      %2277 = vmatprep.subr.mxu0 0.0
      %2278 = vmatpush1.msra.mxu0 0.0
      %2279 = vmatprep.subr.mxu0 0.0
      %2280 = vmatpush1.msra.mxu0 0.0
      %2281 = vmatprep.subr.mxu0 0.0
      %2282 = vmatpush1.msra.mxu0 0.0
      %2283 = vmatprep.subr.mxu0 0.0
      %2284 = vmatpush1.msra.mxu0 0.0
      %2285 = vmatprep.subr.mxu0 0.0
      %2286 = vmatpush1.msra.mxu0 0.0
      %2287 = vmatprep.subr.mxu0 0.0
      %2288 = vmatpush1.msra.mxu0 0.0
      %2289 = vmatprep.subr.mxu0 0.0
      %2290 = vmatpush1.msra.mxu0 0.0
      %2291 = vmatprep.subr.mxu0 0.0
      %2292 = vmatpush1.msra.mxu0 0.0
      %2293 = vmatprep.subr.mxu0 0.0
      %2294 = vmatpush1.msra.mxu0 0.0
      %2295 = vmatprep.subr.mxu0 0.0
      %2296 = vmatpush1.msra.mxu0 0.0
      %2297 = vmatprep.subr.mxu0 0.0
      %2298 = vmatpush1.msra.mxu0 0.0
      %2299 = vmatprep.subr.mxu0 0.0
      %2300 = vmatpush1.msra.mxu0 0.0
      %2301 = vmatprep.subr.mxu0 0.0
      %2302 = vmatpush1.msra.mxu0 0.0
      %2303 = vmatprep.subr.mxu0 0.0
      %2304 = vmatpush1.msra.mxu0 0.0
      %2305 = vmatprep.subr.mxu0 0.0
      %2306 = vmatpush1.msra.mxu0 0.0
      %2307 = vmatprep.subr.mxu0 0.0
      %2308 = vmatpush1.msra.mxu0 0.0
      %2309 = vmatprep.subr.mxu0 0.0
      %2310 = vmatpush1.msra.mxu0 0.0
      %2311 = vmatprep.subr.mxu0 0.0
      %2312 = vmatpush1.msra.mxu0 0.0
      %2313 = vmatprep.subr.mxu0 0.0
      %2314 = vmatpush1.msra.mxu0 0.0
      %2315 = vmatprep.subr.mxu0 0.0
      %2316 = vmatpush1.msra.mxu0 0.0
      %2317 = vmatprep.subr.mxu0 0.0
      %2318 = vmatpush1.msra.mxu0 0.0
      %2319 = vmatprep.subr.mxu0 0.0
      %2320 = vmatpush1.msra.mxu0 0.0
      %2321 = vmatprep.subr.mxu0 0.0
      %2322 = vmatpush1.msra.mxu0 0.0
      %2323 = vmatprep.subr.mxu0 0.0
      %2324 = vmatpush1.msra.mxu0 0.0
      %2325 = vmatprep.subr.mxu0 0.0
      %2326 = vmatpush1.msra.mxu0 0.0
      %2327 = vmatprep.subr.mxu0 0.0
      %2328 = vmatpush1.msra.mxu0 0.0
      %2329 = vmatprep.mubr.f32.mxu0 0.0
      %2330 = vmatmul.mubr.f32.gmra.mrb[0].mxu0 %v2050
      %v2331 = vpop.f32.mrb[0].mxu0
      %v2332 = vadd.f32 0.0, %v2331
      %v2333 = vpop.f32.mrb[0].mxu0
      %v2334 = vadd.f32 0.0, %v2333
      %2335 = vdwg.mxu0
      %2336 = vmatprep.subr.mxu0 0.0
      %2337 = vmatpush1.msra.mxu0 %v2030
      %2338 = vmatprep.subr.mxu0 0.0
      %2339 = vmatpush1.msra.mxu0 0.0
      %2340 = vmatprep.subr.mxu0 0.0
      %2341 = vmatpush1.msra.mxu0 0.0
      %2342 = vmatprep.subr.mxu0 0.0
      %2343 = vmatpush1.msra.mxu0 0.0
      %2344 = vmatprep.subr.mxu0 0.0
      %2345 = vmatpush1.msra.mxu0 0.0
      %2346 = vmatprep.subr.mxu0 0.0
      %2347 = vmatpush1.msra.mxu0 0.0
      %2348 = vmatprep.subr.mxu0 0.0
      %2349 = vmatpush1.msra.mxu0 0.0
      %2350 = vmatprep.subr.mxu0 0.0
      %2351 = vmatpush1.msra.mxu0 0.0
      %2352 = vmatprep.subr.mxu0 0.0
      %2353 = vmatpush1.msra.mxu0 0.0
      %2354 = vmatprep.subr.mxu0 0.0
      %2355 = vmatpush1.msra.mxu0 0.0
      %2356 = vmatprep.subr.mxu0 0.0
      %2357 = vmatpush1.msra.mxu0 0.0
      %2358 = vmatprep.subr.mxu0 0.0
      %2359 = vmatpush1.msra.mxu0 0.0
      %2360 = vmatprep.subr.mxu0 0.0
      %2361 = vmatpush1.msra.mxu0 0.0
      %2362 = vmatprep.subr.mxu0 0.0
      %2363 = vmatpush1.msra.mxu0 0.0
      %2364 = vmatprep.subr.mxu0 0.0
      %2365 = vmatpush1.msra.mxu0 0.0
      %2366 = vmatprep.subr.mxu0 0.0
      %2367 = vmatpush1.msra.mxu0 0.0
      %2368 = vmatprep.subr.mxu0 0.0
      %2369 = vmatpush1.msra.mxu0 0.0
      %2370 = vmatprep.subr.mxu0 0.0
      %2371 = vmatpush1.msra.mxu0 0.0
      %2372 = vmatprep.subr.mxu0 0.0
      %2373 = vmatpush1.msra.mxu0 0.0
      %2374 = vmatprep.subr.mxu0 0.0
      %2375 = vmatpush1.msra.mxu0 0.0
      %2376 = vmatprep.subr.mxu0 0.0
      %2377 = vmatpush1.msra.mxu0 0.0
      %2378 = vmatprep.subr.mxu0 0.0
      %2379 = vmatpush1.msra.mxu0 0.0
      %2380 = vmatprep.subr.mxu0 0.0
      %2381 = vmatpush1.msra.mxu0 0.0
      %2382 = vmatprep.subr.mxu0 0.0
      %2383 = vmatpush1.msra.mxu0 0.0
      %2384 = vmatprep.subr.mxu0 0.0
      %2385 = vmatpush1.msra.mxu0 0.0
      %2386 = vmatprep.subr.mxu0 0.0
      %2387 = vmatpush1.msra.mxu0 0.0
      %2388 = vmatprep.subr.mxu0 0.0
      %2389 = vmatpush1.msra.mxu0 0.0
      %2390 = vmatprep.subr.mxu0 0.0
      %2391 = vmatpush1.msra.mxu0 0.0
      %2392 = vmatprep.subr.mxu0 0.0
      %2393 = vmatpush1.msra.mxu0 0.0
      %2394 = vmatprep.subr.mxu0 0.0
      %2395 = vmatpush1.msra.mxu0 0.0
      %2396 = vmatprep.subr.mxu0 0.0
      %2397 = vmatpush1.msra.mxu0 0.0
      %2398 = vmatprep.subr.mxu0 0.0
      %2399 = vmatpush1.msra.mxu0 0.0
      %2400 = vmatprep.mubr.f32.mxu0 0.0
      %2401 = vmatmul.mubr.f32.gmra.mrb[0].mxu0 %v2050
      %v2402 = vpop.f32.mrb[0].mxu0
      %v2403 = vadd.f32 0.0, %v2402
      %v2404 = vpop.f32.mrb[0].mxu0
      %2405 = vdwg.mxu0
      %v2406 = vadd.f32 %v2002, %v2119
      %v2407 = vadd.f32 %v2003, %v2121
      %v2408 = vadd.f32 %v2004, %v2190
      %v2409 = vadd.f32 %v2005, %v2192
      %v2410 = vadd.f32 %v2006, %v2261
      %v2411 = vadd.f32 %v2007, %v2263
      %v2412 = vadd.f32 %v2008, %v2332
      %v2413 = vadd.f32 %v2009, %v2334
      %v2414 = vadd.f32 %v2010, %v2403
      %s2415 = scalar_lea.vmem %s1, 40
      %v2416 = vld [vmem:[%s2415] sm:$0xff]
      %2417 = vrot.lane.b32.xlu0 %v444, 92
      %v2418 = vpop.permute.xlu0 %2417
      %2419 = vrot.lane.b32.xlu0 %v427, 92
      %v2420 = vpop.permute.xlu0 %2419
      %2421 = vrot.lane.b32.xlu0 %v428, 92
      %v2422 = vpop.permute.xlu0 %2421
      %2423 = vrot.lane.b32.xlu0 %v429, 92
      %v2424 = vpop.permute.xlu0 %2423
      %2425 = vrot.lane.b32.xlu0 %v430, 92
      %v2426 = vpop.permute.xlu0 %2425
      %2427 = vrot.lane.b32.xlu0 %v431, 92
      %v2428 = vpop.permute.xlu0 %2427
      %2429 = vrot.lane.b32.xlu0 %v432, 92
      %v2430 = vpop.permute.xlu0 %2429
      %2431 = vrot.lane.b32.xlu0 %v433, 92
      %v2432 = vpop.permute.xlu0 %2431
      %2433 = vrot.lane.b32.xlu0 %v446, 92
      %v2434 = vpop.permute.xlu0 %2433
      %vm2435 = vcmask 752640
      %v2436 = vsel %vm2435, %v2418, %v2420
      %v2437 = vsel %vm2435, %v2420, %v2422
      %v2438 = vsel %vm2435, %v2422, %v2424
      %v2439 = vsel %vm2435, %v2424, %v2426
      %v2440 = vsel %vm2435, %v2426, %v2428
      %v2441 = vsel %vm2435, %v2428, %v2430
      %v2442 = vsel %vm2435, %v2430, %v2432
      %v2443 = vsel %vm2435, %v2432, %v2434
      %v2454 = vsel %vm488, %v2416, 0
      %2456 = vmatprep.subr.mxu0 %v2437
      %2457 = vmatpush1.msra.mxu0 %v2436
      %2458 = vmatprep.subr.mxu0 0.0
      %2459 = vmatpush1.msra.mxu0 0.0
      %2460 = vmatprep.subr.mxu0 0.0
      %2461 = vmatpush1.msra.mxu0 0.0
      %2462 = vmatprep.subr.mxu0 0.0
      %2463 = vmatpush1.msra.mxu0 0.0
      %2464 = vmatprep.subr.mxu0 0.0
      %2465 = vmatpush1.msra.mxu0 0.0
      %2466 = vmatprep.subr.mxu0 0.0
      %2467 = vmatpush1.msra.mxu0 0.0
      %2468 = vmatprep.subr.mxu0 0.0
      %2469 = vmatpush1.msra.mxu0 0.0
      %2470 = vmatprep.subr.mxu0 0.0
      %2471 = vmatpush1.msra.mxu0 0.0
      %2472 = vmatprep.subr.mxu0 0.0
      %2473 = vmatpush1.msra.mxu0 0.0
      %2474 = vmatprep.subr.mxu0 0.0
      %2475 = vmatpush1.msra.mxu0 0.0
      %2476 = vmatprep.subr.mxu0 0.0
      %2477 = vmatpush1.msra.mxu0 0.0
      %2478 = vmatprep.subr.mxu0 0.0
      %2479 = vmatpush1.msra.mxu0 0.0
      %2480 = vmatprep.subr.mxu0 0.0
      %2481 = vmatpush1.msra.mxu0 0.0
      %2482 = vmatprep.subr.mxu0 0.0
      %2483 = vmatpush1.msra.mxu0 0.0
      %2484 = vmatprep.subr.mxu0 0.0
      %2485 = vmatpush1.msra.mxu0 0.0
      %2486 = vmatprep.subr.mxu0 0.0
      %2487 = vmatpush1.msra.mxu0 0.0
      %2488 = vmatprep.subr.mxu0 0.0
      %2489 = vmatpush1.msra.mxu0 0.0
      %2490 = vmatprep.subr.mxu0 0.0
      %2491 = vmatpush1.msra.mxu0 0.0
      %2492 = vmatprep.subr.mxu0 0.0
      %2493 = vmatpush1.msra.mxu0 0.0
      %2494 = vmatprep.subr.mxu0 0.0
      %2495 = vmatpush1.msra.mxu0 0.0
      %2496 = vmatprep.subr.mxu0 0.0
      %2497 = vmatpush1.msra.mxu0 0.0
      %2498 = vmatprep.subr.mxu0 0.0
      %2499 = vmatpush1.msra.mxu0 0.0
      %2500 = vmatprep.subr.mxu0 0.0
      %2501 = vmatpush1.msra.mxu0 0.0
      %2502 = vmatprep.subr.mxu0 0.0
      %2503 = vmatpush1.msra.mxu0 0.0
      %2504 = vmatprep.subr.mxu0 0.0
      %2505 = vmatpush1.msra.mxu0 0.0
      %2506 = vmatprep.subr.mxu0 0.0
      %2507 = vmatpush1.msra.mxu0 0.0
      %2508 = vmatprep.subr.mxu0 0.0
      %2509 = vmatpush1.msra.mxu0 0.0
      %2510 = vmatprep.subr.mxu0 0.0
      %2511 = vmatpush1.msra.mxu0 0.0
      %2512 = vmatprep.subr.mxu0 0.0
      %2513 = vmatpush1.msra.mxu0 0.0
      %2514 = vmatprep.subr.mxu0 0.0
      %2515 = vmatpush1.msra.mxu0 0.0
      %2516 = vmatprep.subr.mxu0 0.0
      %2517 = vmatpush1.msra.mxu0 0.0
      %2518 = vmatprep.subr.mxu0 0.0
      %2519 = vmatpush1.msra.mxu0 0.0
      %2520 = vmatprep.mubr.f32.mxu0 0.0
      %2521 = vmatmul.mubr.f32.gmra.mrb[0].mxu0 %v2454
      %v2522 = vpop.f32.mrb[0].mxu0
      %v2523 = vadd.f32 0.0, %v2522
      %v2524 = vpop.f32.mrb[0].mxu0
      %v2525 = vadd.f32 0.0, %v2524
      %2526 = vdwg.mxu0
      %2527 = vmatprep.subr.mxu0 %v2439
      %2528 = vmatpush1.msra.mxu0 %v2438
      %2529 = vmatprep.subr.mxu0 0.0
      %2530 = vmatpush1.msra.mxu0 0.0
      %2531 = vmatprep.subr.mxu0 0.0
      %2532 = vmatpush1.msra.mxu0 0.0
      %2533 = vmatprep.subr.mxu0 0.0
      %2534 = vmatpush1.msra.mxu0 0.0
      %2535 = vmatprep.subr.mxu0 0.0
      %2536 = vmatpush1.msra.mxu0 0.0
      %2537 = vmatprep.subr.mxu0 0.0
      %2538 = vmatpush1.msra.mxu0 0.0
      %2539 = vmatprep.subr.mxu0 0.0
      %2540 = vmatpush1.msra.mxu0 0.0
      %2541 = vmatprep.subr.mxu0 0.0
      %2542 = vmatpush1.msra.mxu0 0.0
      %2543 = vmatprep.subr.mxu0 0.0
      %2544 = vmatpush1.msra.mxu0 0.0
      %2545 = vmatprep.subr.mxu0 0.0
      %2546 = vmatpush1.msra.mxu0 0.0
      %2547 = vmatprep.subr.mxu0 0.0
      %2548 = vmatpush1.msra.mxu0 0.0
      %2549 = vmatprep.subr.mxu0 0.0
      %2550 = vmatpush1.msra.mxu0 0.0
      %2551 = vmatprep.subr.mxu0 0.0
      %2552 = vmatpush1.msra.mxu0 0.0
      %2553 = vmatprep.subr.mxu0 0.0
      %2554 = vmatpush1.msra.mxu0 0.0
      %2555 = vmatprep.subr.mxu0 0.0
      %2556 = vmatpush1.msra.mxu0 0.0
      %2557 = vmatprep.subr.mxu0 0.0
      %2558 = vmatpush1.msra.mxu0 0.0
      %2559 = vmatprep.subr.mxu0 0.0
      %2560 = vmatpush1.msra.mxu0 0.0
      %2561 = vmatprep.subr.mxu0 0.0
      %2562 = vmatpush1.msra.mxu0 0.0
      %2563 = vmatprep.subr.mxu0 0.0
      %2564 = vmatpush1.msra.mxu0 0.0
      %2565 = vmatprep.subr.mxu0 0.0
      %2566 = vmatpush1.msra.mxu0 0.0
      %2567 = vmatprep.subr.mxu0 0.0
      %2568 = vmatpush1.msra.mxu0 0.0
      %2569 = vmatprep.subr.mxu0 0.0
      %2570 = vmatpush1.msra.mxu0 0.0
      %2571 = vmatprep.subr.mxu0 0.0
      %2572 = vmatpush1.msra.mxu0 0.0
      %2573 = vmatprep.subr.mxu0 0.0
      %2574 = vmatpush1.msra.mxu0 0.0
      %2575 = vmatprep.subr.mxu0 0.0
      %2576 = vmatpush1.msra.mxu0 0.0
      %2577 = vmatprep.subr.mxu0 0.0
      %2578 = vmatpush1.msra.mxu0 0.0
      %2579 = vmatprep.subr.mxu0 0.0
      %2580 = vmatpush1.msra.mxu0 0.0
      %2581 = vmatprep.subr.mxu0 0.0
      %2582 = vmatpush1.msra.mxu0 0.0
      %2583 = vmatprep.subr.mxu0 0.0
      %2584 = vmatpush1.msra.mxu0 0.0
      %2585 = vmatprep.subr.mxu0 0.0
      %2586 = vmatpush1.msra.mxu0 0.0
      %2587 = vmatprep.subr.mxu0 0.0
      %2588 = vmatpush1.msra.mxu0 0.0
      %2589 = vmatprep.subr.mxu0 0.0
      %2590 = vmatpush1.msra.mxu0 0.0
      %2591 = vmatprep.mubr.f32.mxu0 0.0
      %2592 = vmatmul.mubr.f32.gmra.mrb[0].mxu0 %v2454
      %v2593 = vpop.f32.mrb[0].mxu0
      %v2594 = vadd.f32 0.0, %v2593
      %v2595 = vpop.f32.mrb[0].mxu0
      %v2596 = vadd.f32 0.0, %v2595
      %2597 = vdwg.mxu0
      %2598 = vmatprep.subr.mxu0 %v2441
      %2599 = vmatpush1.msra.mxu0 %v2440
      %2600 = vmatprep.subr.mxu0 0.0
      %2601 = vmatpush1.msra.mxu0 0.0
      %2602 = vmatprep.subr.mxu0 0.0
      %2603 = vmatpush1.msra.mxu0 0.0
      %2604 = vmatprep.subr.mxu0 0.0
      %2605 = vmatpush1.msra.mxu0 0.0
      %2606 = vmatprep.subr.mxu0 0.0
      %2607 = vmatpush1.msra.mxu0 0.0
      %2608 = vmatprep.subr.mxu0 0.0
      %2609 = vmatpush1.msra.mxu0 0.0
      %2610 = vmatprep.subr.mxu0 0.0
      %2611 = vmatpush1.msra.mxu0 0.0
      %2612 = vmatprep.subr.mxu0 0.0
      %2613 = vmatpush1.msra.mxu0 0.0
      %2614 = vmatprep.subr.mxu0 0.0
      %2615 = vmatpush1.msra.mxu0 0.0
      %2616 = vmatprep.subr.mxu0 0.0
      %2617 = vmatpush1.msra.mxu0 0.0
      %2618 = vmatprep.subr.mxu0 0.0
      %2619 = vmatpush1.msra.mxu0 0.0
      %2620 = vmatprep.subr.mxu0 0.0
      %2621 = vmatpush1.msra.mxu0 0.0
      %2622 = vmatprep.subr.mxu0 0.0
      %2623 = vmatpush1.msra.mxu0 0.0
      %2624 = vmatprep.subr.mxu0 0.0
      %2625 = vmatpush1.msra.mxu0 0.0
      %2626 = vmatprep.subr.mxu0 0.0
      %2627 = vmatpush1.msra.mxu0 0.0
      %2628 = vmatprep.subr.mxu0 0.0
      %2629 = vmatpush1.msra.mxu0 0.0
      %2630 = vmatprep.subr.mxu0 0.0
      %2631 = vmatpush1.msra.mxu0 0.0
      %2632 = vmatprep.subr.mxu0 0.0
      %2633 = vmatpush1.msra.mxu0 0.0
      %2634 = vmatprep.subr.mxu0 0.0
      %2635 = vmatpush1.msra.mxu0 0.0
      %2636 = vmatprep.subr.mxu0 0.0
      %2637 = vmatpush1.msra.mxu0 0.0
      %2638 = vmatprep.subr.mxu0 0.0
      %2639 = vmatpush1.msra.mxu0 0.0
      %2640 = vmatprep.subr.mxu0 0.0
      %2641 = vmatpush1.msra.mxu0 0.0
      %2642 = vmatprep.subr.mxu0 0.0
      %2643 = vmatpush1.msra.mxu0 0.0
      %2644 = vmatprep.subr.mxu0 0.0
      %2645 = vmatpush1.msra.mxu0 0.0
      %2646 = vmatprep.subr.mxu0 0.0
      %2647 = vmatpush1.msra.mxu0 0.0
      %2648 = vmatprep.subr.mxu0 0.0
      %2649 = vmatpush1.msra.mxu0 0.0
      %2650 = vmatprep.subr.mxu0 0.0
      %2651 = vmatpush1.msra.mxu0 0.0
      %2652 = vmatprep.subr.mxu0 0.0
      %2653 = vmatpush1.msra.mxu0 0.0
      %2654 = vmatprep.subr.mxu0 0.0
      %2655 = vmatpush1.msra.mxu0 0.0
      %2656 = vmatprep.subr.mxu0 0.0
      %2657 = vmatpush1.msra.mxu0 0.0
      %2658 = vmatprep.subr.mxu0 0.0
      %2659 = vmatpush1.msra.mxu0 0.0
      %2660 = vmatprep.subr.mxu0 0.0
      %2661 = vmatpush1.msra.mxu0 0.0
      %2662 = vmatprep.mubr.f32.mxu0 0.0
      %2663 = vmatmul.mubr.f32.gmra.mrb[0].mxu0 %v2454
      %v2664 = vpop.f32.mrb[0].mxu0
      %v2665 = vadd.f32 0.0, %v2664
      %v2666 = vpop.f32.mrb[0].mxu0
      %v2667 = vadd.f32 0.0, %v2666
      %2668 = vdwg.mxu0
      %2669 = vmatprep.subr.mxu0 %v2443
      %2670 = vmatpush1.msra.mxu0 %v2442
      %2671 = vmatprep.subr.mxu0 0.0
      %2672 = vmatpush1.msra.mxu0 0.0
      %2673 = vmatprep.subr.mxu0 0.0
      %2674 = vmatpush1.msra.mxu0 0.0
      %2675 = vmatprep.subr.mxu0 0.0
      %2676 = vmatpush1.msra.mxu0 0.0
      %2677 = vmatprep.subr.mxu0 0.0
      %2678 = vmatpush1.msra.mxu0 0.0
      %2679 = vmatprep.subr.mxu0 0.0
      %2680 = vmatpush1.msra.mxu0 0.0
      %2681 = vmatprep.subr.mxu0 0.0
      %2682 = vmatpush1.msra.mxu0 0.0
      %2683 = vmatprep.subr.mxu0 0.0
      %2684 = vmatpush1.msra.mxu0 0.0
      %2685 = vmatprep.subr.mxu0 0.0
      %2686 = vmatpush1.msra.mxu0 0.0
      %2687 = vmatprep.subr.mxu0 0.0
      %2688 = vmatpush1.msra.mxu0 0.0
      %2689 = vmatprep.subr.mxu0 0.0
      %2690 = vmatpush1.msra.mxu0 0.0
      %2691 = vmatprep.subr.mxu0 0.0
      %2692 = vmatpush1.msra.mxu0 0.0
      %2693 = vmatprep.subr.mxu0 0.0
      %2694 = vmatpush1.msra.mxu0 0.0
      %2695 = vmatprep.subr.mxu0 0.0
      %2696 = vmatpush1.msra.mxu0 0.0
      %2697 = vmatprep.subr.mxu0 0.0
      %2698 = vmatpush1.msra.mxu0 0.0
      %2699 = vmatprep.subr.mxu0 0.0
      %2700 = vmatpush1.msra.mxu0 0.0
      %2701 = vmatprep.subr.mxu0 0.0
      %2702 = vmatpush1.msra.mxu0 0.0
      %2703 = vmatprep.subr.mxu0 0.0
      %2704 = vmatpush1.msra.mxu0 0.0
      %2705 = vmatprep.subr.mxu0 0.0
      %2706 = vmatpush1.msra.mxu0 0.0
      %2707 = vmatprep.subr.mxu0 0.0
      %2708 = vmatpush1.msra.mxu0 0.0
      %2709 = vmatprep.subr.mxu0 0.0
      %2710 = vmatpush1.msra.mxu0 0.0
      %2711 = vmatprep.subr.mxu0 0.0
      %2712 = vmatpush1.msra.mxu0 0.0
      %2713 = vmatprep.subr.mxu0 0.0
      %2714 = vmatpush1.msra.mxu0 0.0
      %2715 = vmatprep.subr.mxu0 0.0
      %2716 = vmatpush1.msra.mxu0 0.0
      %2717 = vmatprep.subr.mxu0 0.0
      %2718 = vmatpush1.msra.mxu0 0.0
      %2719 = vmatprep.subr.mxu0 0.0
      %2720 = vmatpush1.msra.mxu0 0.0
      %2721 = vmatprep.subr.mxu0 0.0
      %2722 = vmatpush1.msra.mxu0 0.0
      %2723 = vmatprep.subr.mxu0 0.0
      %2724 = vmatpush1.msra.mxu0 0.0
      %2725 = vmatprep.subr.mxu0 0.0
      %2726 = vmatpush1.msra.mxu0 0.0
      %2727 = vmatprep.subr.mxu0 0.0
      %2728 = vmatpush1.msra.mxu0 0.0
      %2729 = vmatprep.subr.mxu0 0.0
      %2730 = vmatpush1.msra.mxu0 0.0
      %2731 = vmatprep.subr.mxu0 0.0
      %2732 = vmatpush1.msra.mxu0 0.0
      %2733 = vmatprep.mubr.f32.mxu0 0.0
      %2734 = vmatmul.mubr.f32.gmra.mrb[0].mxu0 %v2454
      %v2735 = vpop.f32.mrb[0].mxu0
      %v2736 = vadd.f32 0.0, %v2735
      %v2737 = vpop.f32.mrb[0].mxu0
      %v2738 = vadd.f32 0.0, %v2737
      %2739 = vdwg.mxu0
      %2740 = vmatprep.subr.mxu0 0.0
      %2741 = vmatpush1.msra.mxu0 %v2434
      %2742 = vmatprep.subr.mxu0 0.0
      %2743 = vmatpush1.msra.mxu0 0.0
      %2744 = vmatprep.subr.mxu0 0.0
      %2745 = vmatpush1.msra.mxu0 0.0
      %2746 = vmatprep.subr.mxu0 0.0
      %2747 = vmatpush1.msra.mxu0 0.0
      %2748 = vmatprep.subr.mxu0 0.0
      %2749 = vmatpush1.msra.mxu0 0.0
      %2750 = vmatprep.subr.mxu0 0.0
      %2751 = vmatpush1.msra.mxu0 0.0
      %2752 = vmatprep.subr.mxu0 0.0
      %2753 = vmatpush1.msra.mxu0 0.0
      %2754 = vmatprep.subr.mxu0 0.0
      %2755 = vmatpush1.msra.mxu0 0.0
      %2756 = vmatprep.subr.mxu0 0.0
      %2757 = vmatpush1.msra.mxu0 0.0
      %2758 = vmatprep.subr.mxu0 0.0
      %2759 = vmatpush1.msra.mxu0 0.0
      %2760 = vmatprep.subr.mxu0 0.0
      %2761 = vmatpush1.msra.mxu0 0.0
      %2762 = vmatprep.subr.mxu0 0.0
      %2763 = vmatpush1.msra.mxu0 0.0
      %2764 = vmatprep.subr.mxu0 0.0
      %2765 = vmatpush1.msra.mxu0 0.0
      %2766 = vmatprep.subr.mxu0 0.0
      %2767 = vmatpush1.msra.mxu0 0.0
      %2768 = vmatprep.subr.mxu0 0.0
      %2769 = vmatpush1.msra.mxu0 0.0
      %2770 = vmatprep.subr.mxu0 0.0
      %2771 = vmatpush1.msra.mxu0 0.0
      %2772 = vmatprep.subr.mxu0 0.0
      %2773 = vmatpush1.msra.mxu0 0.0
      %2774 = vmatprep.subr.mxu0 0.0
      %2775 = vmatpush1.msra.mxu0 0.0
      %2776 = vmatprep.subr.mxu0 0.0
      %2777 = vmatpush1.msra.mxu0 0.0
      %2778 = vmatprep.subr.mxu0 0.0
      %2779 = vmatpush1.msra.mxu0 0.0
      %2780 = vmatprep.subr.mxu0 0.0
      %2781 = vmatpush1.msra.mxu0 0.0
      %2782 = vmatprep.subr.mxu0 0.0
      %2783 = vmatpush1.msra.mxu0 0.0
      %2784 = vmatprep.subr.mxu0 0.0
      %2785 = vmatpush1.msra.mxu0 0.0
      %2786 = vmatprep.subr.mxu0 0.0
      %2787 = vmatpush1.msra.mxu0 0.0
      %2788 = vmatprep.subr.mxu0 0.0
      %2789 = vmatpush1.msra.mxu0 0.0
      %2790 = vmatprep.subr.mxu0 0.0
      %2791 = vmatpush1.msra.mxu0 0.0
      %2792 = vmatprep.subr.mxu0 0.0
      %2793 = vmatpush1.msra.mxu0 0.0
      %2794 = vmatprep.subr.mxu0 0.0
      %2795 = vmatpush1.msra.mxu0 0.0
      %2796 = vmatprep.subr.mxu0 0.0
      %2797 = vmatpush1.msra.mxu0 0.0
      %2798 = vmatprep.subr.mxu0 0.0
      %2799 = vmatpush1.msra.mxu0 0.0
      %2800 = vmatprep.subr.mxu0 0.0
      %2801 = vmatpush1.msra.mxu0 0.0
      %2802 = vmatprep.subr.mxu0 0.0
      %2803 = vmatpush1.msra.mxu0 0.0
      %2804 = vmatprep.mubr.f32.mxu0 0.0
      %2805 = vmatmul.mubr.f32.gmra.mrb[0].mxu0 %v2454
      %v2806 = vpop.f32.mrb[0].mxu0
      %v2807 = vadd.f32 0.0, %v2806
      %v2808 = vpop.f32.mrb[0].mxu0
      %2809 = vdwg.mxu0
      %v2810 = vadd.f32 %v2406, %v2523
      %v2811 = vadd.f32 %v2407, %v2525
      %v2812 = vadd.f32 %v2408, %v2594
      %v2813 = vadd.f32 %v2409, %v2596
      %v2814 = vadd.f32 %v2410, %v2665
      %v2815 = vadd.f32 %v2411, %v2667
      %v2816 = vadd.f32 %v2412, %v2736
      %v2817 = vadd.f32 %v2413, %v2738
      %v2818 = vadd.f32 %v2414, %v2807
      %s2819 = scalar_lea.vmem %s1, 48
      %v2820 = vld [vmem:[%s2819] sm:$0xff]
      %2822 = vrot.lane.b32.xlu0 %v444, 60
      %v2823 = vpop.permute.xlu0 %2822
      %2824 = vrot.lane.b32.xlu0 %v427, 60
      %v2825 = vpop.permute.xlu0 %2824
      %2826 = vrot.lane.b32.xlu0 %v428, 60
      %v2827 = vpop.permute.xlu0 %2826
      %2828 = vrot.lane.b32.xlu0 %v429, 60
      %v2829 = vpop.permute.xlu0 %2828
      %2830 = vrot.lane.b32.xlu0 %v430, 60
      %v2831 = vpop.permute.xlu0 %2830
      %2832 = vrot.lane.b32.xlu0 %v431, 60
      %v2833 = vpop.permute.xlu0 %2832
      %2834 = vrot.lane.b32.xlu0 %v432, 60
      %v2835 = vpop.permute.xlu0 %2834
      %2836 = vrot.lane.b32.xlu0 %v433, 60
      %v2837 = vpop.permute.xlu0 %2836
      %2838 = vrot.lane.b32.xlu0 %v446, 60
      %v2839 = vpop.permute.xlu0 %2838
      %2840 = vrot.lane.b32.xlu0 0.0, 60
      %v2841 = vpop.permute.xlu0 %2840
      %vm2842 = vcmask 490496
      %v2843 = vsel %vm2842, %v2823, %v2825
      %v2844 = vsel %vm2842, %v2825, %v2827
      %v2845 = vsel %vm2842, %v2827, %v2829
      %v2846 = vsel %vm2842, %v2829, %v2831
      %v2847 = vsel %vm2842, %v2831, %v2833
      %v2848 = vsel %vm2842, %v2833, %v2835
      %v2849 = vsel %vm2842, %v2835, %v2837
      %v2850 = vsel %vm2842, %v2837, %v2839
      %v2851 = vsel %vm2842, %v2839, %v2841
      %v2862 = vsel %vm488, %v2820, 0
      %2864 = vmatprep.subr.mxu0 %v2844
      %2865 = vmatpush1.msra.mxu0 %v2843
      %2866 = vmatprep.subr.mxu0 0.0
      %2867 = vmatpush1.msra.mxu0 0.0
      %2868 = vmatprep.subr.mxu0 0.0
      %2869 = vmatpush1.msra.mxu0 0.0
      %2870 = vmatprep.subr.mxu0 0.0
      %2871 = vmatpush1.msra.mxu0 0.0
      %2872 = vmatprep.subr.mxu0 0.0
      %2873 = vmatpush1.msra.mxu0 0.0
      %2874 = vmatprep.subr.mxu0 0.0
      %2875 = vmatpush1.msra.mxu0 0.0
      %2876 = vmatprep.subr.mxu0 0.0
      %2877 = vmatpush1.msra.mxu0 0.0
      %2878 = vmatprep.subr.mxu0 0.0
      %2879 = vmatpush1.msra.mxu0 0.0
      %2880 = vmatprep.subr.mxu0 0.0
      %2881 = vmatpush1.msra.mxu0 0.0
      %2882 = vmatprep.subr.mxu0 0.0
      %2883 = vmatpush1.msra.mxu0 0.0
      %2884 = vmatprep.subr.mxu0 0.0
      %2885 = vmatpush1.msra.mxu0 0.0
      %2886 = vmatprep.subr.mxu0 0.0
      %2887 = vmatpush1.msra.mxu0 0.0
      %2888 = vmatprep.subr.mxu0 0.0
      %2889 = vmatpush1.msra.mxu0 0.0
      %2890 = vmatprep.subr.mxu0 0.0
      %2891 = vmatpush1.msra.mxu0 0.0
      %2892 = vmatprep.subr.mxu0 0.0
      %2893 = vmatpush1.msra.mxu0 0.0
      %2894 = vmatprep.subr.mxu0 0.0
      %2895 = vmatpush1.msra.mxu0 0.0
      %2896 = vmatprep.subr.mxu0 0.0
      %2897 = vmatpush1.msra.mxu0 0.0
      %2898 = vmatprep.subr.mxu0 0.0
      %2899 = vmatpush1.msra.mxu0 0.0
      %2900 = vmatprep.subr.mxu0 0.0
      %2901 = vmatpush1.msra.mxu0 0.0
      %2902 = vmatprep.subr.mxu0 0.0
      %2903 = vmatpush1.msra.mxu0 0.0
      %2904 = vmatprep.subr.mxu0 0.0
      %2905 = vmatpush1.msra.mxu0 0.0
      %2906 = vmatprep.subr.mxu0 0.0
      %2907 = vmatpush1.msra.mxu0 0.0
      %2908 = vmatprep.subr.mxu0 0.0
      %2909 = vmatpush1.msra.mxu0 0.0
      %2910 = vmatprep.subr.mxu0 0.0
      %2911 = vmatpush1.msra.mxu0 0.0
      %2912 = vmatprep.subr.mxu0 0.0
      %2913 = vmatpush1.msra.mxu0 0.0
      %2914 = vmatprep.subr.mxu0 0.0
      %2915 = vmatpush1.msra.mxu0 0.0
      %2916 = vmatprep.subr.mxu0 0.0
      %2917 = vmatpush1.msra.mxu0 0.0
      %2918 = vmatprep.subr.mxu0 0.0
      %2919 = vmatpush1.msra.mxu0 0.0
      %2920 = vmatprep.subr.mxu0 0.0
      %2921 = vmatpush1.msra.mxu0 0.0
      %2922 = vmatprep.subr.mxu0 0.0
      %2923 = vmatpush1.msra.mxu0 0.0
      %2924 = vmatprep.subr.mxu0 0.0
      %2925 = vmatpush1.msra.mxu0 0.0
      %2926 = vmatprep.subr.mxu0 0.0
      %2927 = vmatpush1.msra.mxu0 0.0
      %2928 = vmatprep.mubr.f32.mxu0 0.0
      %2929 = vmatmul.mubr.f32.gmra.mrb[0].mxu0 %v2862
      %v2930 = vpop.f32.mrb[0].mxu0
      %v2931 = vadd.f32 0.0, %v2930
      %v2932 = vpop.f32.mrb[0].mxu0
      %v2933 = vadd.f32 0.0, %v2932
      %2934 = vdwg.mxu0
      %2935 = vmatprep.subr.mxu0 %v2846
      %2936 = vmatpush1.msra.mxu0 %v2845
      %2937 = vmatprep.subr.mxu0 0.0
      %2938 = vmatpush1.msra.mxu0 0.0
      %2939 = vmatprep.subr.mxu0 0.0
      %2940 = vmatpush1.msra.mxu0 0.0
      %2941 = vmatprep.subr.mxu0 0.0
      %2942 = vmatpush1.msra.mxu0 0.0
      %2943 = vmatprep.subr.mxu0 0.0
      %2944 = vmatpush1.msra.mxu0 0.0
      %2945 = vmatprep.subr.mxu0 0.0
      %2946 = vmatpush1.msra.mxu0 0.0
      %2947 = vmatprep.subr.mxu0 0.0
      %2948 = vmatpush1.msra.mxu0 0.0
      %2949 = vmatprep.subr.mxu0 0.0
      %2950 = vmatpush1.msra.mxu0 0.0
      %2951 = vmatprep.subr.mxu0 0.0
      %2952 = vmatpush1.msra.mxu0 0.0
      %2953 = vmatprep.subr.mxu0 0.0
      %2954 = vmatpush1.msra.mxu0 0.0
      %2955 = vmatprep.subr.mxu0 0.0
      %2956 = vmatpush1.msra.mxu0 0.0
      %2957 = vmatprep.subr.mxu0 0.0
      %2958 = vmatpush1.msra.mxu0 0.0
      %2959 = vmatprep.subr.mxu0 0.0
      %2960 = vmatpush1.msra.mxu0 0.0
      %2961 = vmatprep.subr.mxu0 0.0
      %2962 = vmatpush1.msra.mxu0 0.0
      %2963 = vmatprep.subr.mxu0 0.0
      %2964 = vmatpush1.msra.mxu0 0.0
      %2965 = vmatprep.subr.mxu0 0.0
      %2966 = vmatpush1.msra.mxu0 0.0
      %2967 = vmatprep.subr.mxu0 0.0
      %2968 = vmatpush1.msra.mxu0 0.0
      %2969 = vmatprep.subr.mxu0 0.0
      %2970 = vmatpush1.msra.mxu0 0.0
      %2971 = vmatprep.subr.mxu0 0.0
      %2972 = vmatpush1.msra.mxu0 0.0
      %2973 = vmatprep.subr.mxu0 0.0
      %2974 = vmatpush1.msra.mxu0 0.0
      %2975 = vmatprep.subr.mxu0 0.0
      %2976 = vmatpush1.msra.mxu0 0.0
      %2977 = vmatprep.subr.mxu0 0.0
      %2978 = vmatpush1.msra.mxu0 0.0
      %2979 = vmatprep.subr.mxu0 0.0
      %2980 = vmatpush1.msra.mxu0 0.0
      %2981 = vmatprep.subr.mxu0 0.0
      %2982 = vmatpush1.msra.mxu0 0.0
      %2983 = vmatprep.subr.mxu0 0.0
      %2984 = vmatpush1.msra.mxu0 0.0
      %2985 = vmatprep.subr.mxu0 0.0
      %2986 = vmatpush1.msra.mxu0 0.0
      %2987 = vmatprep.subr.mxu0 0.0
      %2988 = vmatpush1.msra.mxu0 0.0
      %2989 = vmatprep.subr.mxu0 0.0
      %2990 = vmatpush1.msra.mxu0 0.0
      %2991 = vmatprep.subr.mxu0 0.0
      %2992 = vmatpush1.msra.mxu0 0.0
      %2993 = vmatprep.subr.mxu0 0.0
      %2994 = vmatpush1.msra.mxu0 0.0
      %2995 = vmatprep.subr.mxu0 0.0
      %2996 = vmatpush1.msra.mxu0 0.0
      %2997 = vmatprep.subr.mxu0 0.0
      %2998 = vmatpush1.msra.mxu0 0.0
      %2999 = vmatprep.mubr.f32.mxu0 0.0
      %3000 = vmatmul.mubr.f32.gmra.mrb[0].mxu0 %v2862
      %v3001 = vpop.f32.mrb[0].mxu0
      %v3002 = vadd.f32 0.0, %v3001
      %v3003 = vpop.f32.mrb[0].mxu0
      %v3004 = vadd.f32 0.0, %v3003
      %3005 = vdwg.mxu0
      %3006 = vmatprep.subr.mxu0 %v2848
      %3007 = vmatpush1.msra.mxu0 %v2847
      %3008 = vmatprep.subr.mxu0 0.0
      %3009 = vmatpush1.msra.mxu0 0.0
      %3010 = vmatprep.subr.mxu0 0.0
      %3011 = vmatpush1.msra.mxu0 0.0
      %3012 = vmatprep.subr.mxu0 0.0
      %3013 = vmatpush1.msra.mxu0 0.0
      %3014 = vmatprep.subr.mxu0 0.0
      %3015 = vmatpush1.msra.mxu0 0.0
      %3016 = vmatprep.subr.mxu0 0.0
      %3017 = vmatpush1.msra.mxu0 0.0
      %3018 = vmatprep.subr.mxu0 0.0
      %3019 = vmatpush1.msra.mxu0 0.0
      %3020 = vmatprep.subr.mxu0 0.0
      %3021 = vmatpush1.msra.mxu0 0.0
      %3022 = vmatprep.subr.mxu0 0.0
      %3023 = vmatpush1.msra.mxu0 0.0
      %3024 = vmatprep.subr.mxu0 0.0
      %3025 = vmatpush1.msra.mxu0 0.0
      %3026 = vmatprep.subr.mxu0 0.0
      %3027 = vmatpush1.msra.mxu0 0.0
      %3028 = vmatprep.subr.mxu0 0.0
      %3029 = vmatpush1.msra.mxu0 0.0
      %3030 = vmatprep.subr.mxu0 0.0
      %3031 = vmatpush1.msra.mxu0 0.0
      %3032 = vmatprep.subr.mxu0 0.0
      %3033 = vmatpush1.msra.mxu0 0.0
      %3034 = vmatprep.subr.mxu0 0.0
      %3035 = vmatpush1.msra.mxu0 0.0
      %3036 = vmatprep.subr.mxu0 0.0
      %3037 = vmatpush1.msra.mxu0 0.0
      %3038 = vmatprep.subr.mxu0 0.0
      %3039 = vmatpush1.msra.mxu0 0.0
      %3040 = vmatprep.subr.mxu0 0.0
      %3041 = vmatpush1.msra.mxu0 0.0
      %3042 = vmatprep.subr.mxu0 0.0
      %3043 = vmatpush1.msra.mxu0 0.0
      %3044 = vmatprep.subr.mxu0 0.0
      %3045 = vmatpush1.msra.mxu0 0.0
      %3046 = vmatprep.subr.mxu0 0.0
      %3047 = vmatpush1.msra.mxu0 0.0
      %3048 = vmatprep.subr.mxu0 0.0
      %3049 = vmatpush1.msra.mxu0 0.0
      %3050 = vmatprep.subr.mxu0 0.0
      %3051 = vmatpush1.msra.mxu0 0.0
      %3052 = vmatprep.subr.mxu0 0.0
      %3053 = vmatpush1.msra.mxu0 0.0
      %3054 = vmatprep.subr.mxu0 0.0
      %3055 = vmatpush1.msra.mxu0 0.0
      %3056 = vmatprep.subr.mxu0 0.0
      %3057 = vmatpush1.msra.mxu0 0.0
      %3058 = vmatprep.subr.mxu0 0.0
      %3059 = vmatpush1.msra.mxu0 0.0
      %3060 = vmatprep.subr.mxu0 0.0
      %3061 = vmatpush1.msra.mxu0 0.0
      %3062 = vmatprep.subr.mxu0 0.0
      %3063 = vmatpush1.msra.mxu0 0.0
      %3064 = vmatprep.subr.mxu0 0.0
      %3065 = vmatpush1.msra.mxu0 0.0
      %3066 = vmatprep.subr.mxu0 0.0
      %3067 = vmatpush1.msra.mxu0 0.0
      %3068 = vmatprep.subr.mxu0 0.0
      %3069 = vmatpush1.msra.mxu0 0.0
      %3070 = vmatprep.mubr.f32.mxu0 0.0
      %3071 = vmatmul.mubr.f32.gmra.mrb[0].mxu0 %v2862
      %v3072 = vpop.f32.mrb[0].mxu0
      %v3073 = vadd.f32 0.0, %v3072
      %v3074 = vpop.f32.mrb[0].mxu0
      %v3075 = vadd.f32 0.0, %v3074
      %3076 = vdwg.mxu0
      %3077 = vmatprep.subr.mxu0 %v2850
      %3078 = vmatpush1.msra.mxu0 %v2849
      %3079 = vmatprep.subr.mxu0 0.0
      %3080 = vmatpush1.msra.mxu0 0.0
      %3081 = vmatprep.subr.mxu0 0.0
      %3082 = vmatpush1.msra.mxu0 0.0
      %3083 = vmatprep.subr.mxu0 0.0
      %3084 = vmatpush1.msra.mxu0 0.0
      %3085 = vmatprep.subr.mxu0 0.0
      %3086 = vmatpush1.msra.mxu0 0.0
      %3087 = vmatprep.subr.mxu0 0.0
      %3088 = vmatpush1.msra.mxu0 0.0
      %3089 = vmatprep.subr.mxu0 0.0
      %3090 = vmatpush1.msra.mxu0 0.0
      %3091 = vmatprep.subr.mxu0 0.0
      %3092 = vmatpush1.msra.mxu0 0.0
      %3093 = vmatprep.subr.mxu0 0.0
      %3094 = vmatpush1.msra.mxu0 0.0
      %3095 = vmatprep.subr.mxu0 0.0
      %3096 = vmatpush1.msra.mxu0 0.0
      %3097 = vmatprep.subr.mxu0 0.0
      %3098 = vmatpush1.msra.mxu0 0.0
      %3099 = vmatprep.subr.mxu0 0.0
      %3100 = vmatpush1.msra.mxu0 0.0
      %3101 = vmatprep.subr.mxu0 0.0
      %3102 = vmatpush1.msra.mxu0 0.0
      %3103 = vmatprep.subr.mxu0 0.0
      %3104 = vmatpush1.msra.mxu0 0.0
      %3105 = vmatprep.subr.mxu0 0.0
      %3106 = vmatpush1.msra.mxu0 0.0
      %3107 = vmatprep.subr.mxu0 0.0
      %3108 = vmatpush1.msra.mxu0 0.0
      %3109 = vmatprep.subr.mxu0 0.0
      %3110 = vmatpush1.msra.mxu0 0.0
      %3111 = vmatprep.subr.mxu0 0.0
      %3112 = vmatpush1.msra.mxu0 0.0
      %3113 = vmatprep.subr.mxu0 0.0
      %3114 = vmatpush1.msra.mxu0 0.0
      %3115 = vmatprep.subr.mxu0 0.0
      %3116 = vmatpush1.msra.mxu0 0.0
      %3117 = vmatprep.subr.mxu0 0.0
      %3118 = vmatpush1.msra.mxu0 0.0
      %3119 = vmatprep.subr.mxu0 0.0
      %3120 = vmatpush1.msra.mxu0 0.0
      %3121 = vmatprep.subr.mxu0 0.0
      %3122 = vmatpush1.msra.mxu0 0.0
      %3123 = vmatprep.subr.mxu0 0.0
      %3124 = vmatpush1.msra.mxu0 0.0
      %3125 = vmatprep.subr.mxu0 0.0
      %3126 = vmatpush1.msra.mxu0 0.0
      %3127 = vmatprep.subr.mxu0 0.0
      %3128 = vmatpush1.msra.mxu0 0.0
      %3129 = vmatprep.subr.mxu0 0.0
      %3130 = vmatpush1.msra.mxu0 0.0
      %3131 = vmatprep.subr.mxu0 0.0
      %3132 = vmatpush1.msra.mxu0 0.0
      %3133 = vmatprep.subr.mxu0 0.0
      %3134 = vmatpush1.msra.mxu0 0.0
      %3135 = vmatprep.subr.mxu0 0.0
      %3136 = vmatpush1.msra.mxu0 0.0
      %3137 = vmatprep.subr.mxu0 0.0
      %3138 = vmatpush1.msra.mxu0 0.0
      %3139 = vmatprep.subr.mxu0 0.0
      %3140 = vmatpush1.msra.mxu0 0.0
      %3141 = vmatprep.mubr.f32.mxu0 0.0
      %3142 = vmatmul.mubr.f32.gmra.mrb[0].mxu0 %v2862
      %v3143 = vpop.f32.mrb[0].mxu0
      %v3144 = vadd.f32 0.0, %v3143
      %v3145 = vpop.f32.mrb[0].mxu0
      %v3146 = vadd.f32 0.0, %v3145
      %3147 = vdwg.mxu0
      %3148 = vmatprep.subr.mxu0 0.0
      %3149 = vmatpush1.msra.mxu0 %v2851
      %3150 = vmatprep.subr.mxu0 0.0
      %3151 = vmatpush1.msra.mxu0 0.0
      %3152 = vmatprep.subr.mxu0 0.0
      %3153 = vmatpush1.msra.mxu0 0.0
      %3154 = vmatprep.subr.mxu0 0.0
      %3155 = vmatpush1.msra.mxu0 0.0
      %3156 = vmatprep.subr.mxu0 0.0
      %3157 = vmatpush1.msra.mxu0 0.0
      %3158 = vmatprep.subr.mxu0 0.0
      %3159 = vmatpush1.msra.mxu0 0.0
      %3160 = vmatprep.subr.mxu0 0.0
      %3161 = vmatpush1.msra.mxu0 0.0
      %3162 = vmatprep.subr.mxu0 0.0
      %3163 = vmatpush1.msra.mxu0 0.0
      %3164 = vmatprep.subr.mxu0 0.0
      %3165 = vmatpush1.msra.mxu0 0.0
      %3166 = vmatprep.subr.mxu0 0.0
      %3167 = vmatpush1.msra.mxu0 0.0
      %3168 = vmatprep.subr.mxu0 0.0
      %3169 = vmatpush1.msra.mxu0 0.0
      %3170 = vmatprep.subr.mxu0 0.0
      %3171 = vmatpush1.msra.mxu0 0.0
      %3172 = vmatprep.subr.mxu0 0.0
      %3173 = vmatpush1.msra.mxu0 0.0
      %3174 = vmatprep.subr.mxu0 0.0
      %3175 = vmatpush1.msra.mxu0 0.0
      %3176 = vmatprep.subr.mxu0 0.0
      %3177 = vmatpush1.msra.mxu0 0.0
      %3178 = vmatprep.subr.mxu0 0.0
      %3179 = vmatpush1.msra.mxu0 0.0
      %3180 = vmatprep.subr.mxu0 0.0
      %3181 = vmatpush1.msra.mxu0 0.0
      %3182 = vmatprep.subr.mxu0 0.0
      %3183 = vmatpush1.msra.mxu0 0.0
      %3184 = vmatprep.subr.mxu0 0.0
      %3185 = vmatpush1.msra.mxu0 0.0
      %3186 = vmatprep.subr.mxu0 0.0
      %3187 = vmatpush1.msra.mxu0 0.0
      %3188 = vmatprep.subr.mxu0 0.0
      %3189 = vmatpush1.msra.mxu0 0.0
      %3190 = vmatprep.subr.mxu0 0.0
      %3191 = vmatpush1.msra.mxu0 0.0
      %3192 = vmatprep.subr.mxu0 0.0
      %3193 = vmatpush1.msra.mxu0 0.0
      %3194 = vmatprep.subr.mxu0 0.0
      %3195 = vmatpush1.msra.mxu0 0.0
      %3196 = vmatprep.subr.mxu0 0.0
      %3197 = vmatpush1.msra.mxu0 0.0
      %3198 = vmatprep.subr.mxu0 0.0
      %3199 = vmatpush1.msra.mxu0 0.0
      %3200 = vmatprep.subr.mxu0 0.0
      %3201 = vmatpush1.msra.mxu0 0.0
      %3202 = vmatprep.subr.mxu0 0.0
      %3203 = vmatpush1.msra.mxu0 0.0
      %3204 = vmatprep.subr.mxu0 0.0
      %3205 = vmatpush1.msra.mxu0 0.0
      %3206 = vmatprep.subr.mxu0 0.0
      %3207 = vmatpush1.msra.mxu0 0.0
      %3208 = vmatprep.subr.mxu0 0.0
      %3209 = vmatpush1.msra.mxu0 0.0
      %3210 = vmatprep.subr.mxu0 0.0
      %3211 = vmatpush1.msra.mxu0 0.0
      %3212 = vmatprep.mubr.f32.mxu0 0.0
      %3213 = vmatmul.mubr.f32.gmra.mrb[0].mxu0 %v2862
      %v3214 = vpop.f32.mrb[0].mxu0
      %v3215 = vadd.f32 0.0, %v3214
      %v3216 = vpop.f32.mrb[0].mxu0
      %3217 = vdwg.mxu0
      %v3218 = vadd.f32 %v2810, %v2931
      %v3219 = vadd.f32 %v2811, %v2933
      %v3220 = vadd.f32 %v2812, %v3002
      %v3221 = vadd.f32 %v2813, %v3004
      %v3222 = vadd.f32 %v2814, %v3073
      %v3223 = vadd.f32 %v2815, %v3075
      %v3224 = vadd.f32 %v2816, %v3144
      %v3225 = vadd.f32 %v2817, %v3146
      %v3226 = vadd.f32 %v2818, %v3215
      %s3227 = scalar_lea.vmem %s1, 56
      %v3228 = vld [vmem:[%s3227] sm:$0xff]
      %3229 = vrot.lane.b32.xlu0 %v444, 59
      %v3230 = vpop.permute.xlu0 %3229
      %3231 = vrot.lane.b32.xlu0 %v427, 59
      %v3232 = vpop.permute.xlu0 %3231
      %3233 = vrot.lane.b32.xlu0 %v428, 59
      %v3234 = vpop.permute.xlu0 %3233
      %3235 = vrot.lane.b32.xlu0 %v429, 59
      %v3236 = vpop.permute.xlu0 %3235
      %3237 = vrot.lane.b32.xlu0 %v430, 59
      %v3238 = vpop.permute.xlu0 %3237
      %3239 = vrot.lane.b32.xlu0 %v431, 59
      %v3240 = vpop.permute.xlu0 %3239
      %3241 = vrot.lane.b32.xlu0 %v432, 59
      %v3242 = vpop.permute.xlu0 %3241
      %3243 = vrot.lane.b32.xlu0 %v433, 59
      %v3244 = vpop.permute.xlu0 %3243
      %3245 = vrot.lane.b32.xlu0 %v446, 59
      %v3246 = vpop.permute.xlu0 %3245
      %3247 = vrot.lane.b32.xlu0 0.0, 59
      %v3248 = vpop.permute.xlu0 %3247
      %vm3249 = vcmask 482304
      %v3250 = vsel %vm3249, %v3230, %v3232
      %v3251 = vsel %vm3249, %v3232, %v3234
      %v3252 = vsel %vm3249, %v3234, %v3236
      %v3253 = vsel %vm3249, %v3236, %v3238
      %v3254 = vsel %vm3249, %v3238, %v3240
      %v3255 = vsel %vm3249, %v3240, %v3242
      %v3256 = vsel %vm3249, %v3242, %v3244
      %v3257 = vsel %vm3249, %v3244, %v3246
      %v3258 = vsel %vm3249, %v3246, %v3248
      %v3269 = vsel %vm488, %v3228, 0
      %3271 = vmatprep.subr.mxu0 %v3251
      %3272 = vmatpush1.msra.mxu0 %v3250
      %3273 = vmatprep.subr.mxu0 0.0
      %3274 = vmatpush1.msra.mxu0 0.0
      %3275 = vmatprep.subr.mxu0 0.0
      %3276 = vmatpush1.msra.mxu0 0.0
      %3277 = vmatprep.subr.mxu0 0.0
      %3278 = vmatpush1.msra.mxu0 0.0
      %3279 = vmatprep.subr.mxu0 0.0
      %3280 = vmatpush1.msra.mxu0 0.0
      %3281 = vmatprep.subr.mxu0 0.0
      %3282 = vmatpush1.msra.mxu0 0.0
      %3283 = vmatprep.subr.mxu0 0.0
      %3284 = vmatpush1.msra.mxu0 0.0
      %3285 = vmatprep.subr.mxu0 0.0
      %3286 = vmatpush1.msra.mxu0 0.0
      %3287 = vmatprep.subr.mxu0 0.0
      %3288 = vmatpush1.msra.mxu0 0.0
      %3289 = vmatprep.subr.mxu0 0.0
      %3290 = vmatpush1.msra.mxu0 0.0
      %3291 = vmatprep.subr.mxu0 0.0
      %3292 = vmatpush1.msra.mxu0 0.0
      %3293 = vmatprep.subr.mxu0 0.0
      %3294 = vmatpush1.msra.mxu0 0.0
      %3295 = vmatprep.subr.mxu0 0.0
      %3296 = vmatpush1.msra.mxu0 0.0
      %3297 = vmatprep.subr.mxu0 0.0
      %3298 = vmatpush1.msra.mxu0 0.0
      %3299 = vmatprep.subr.mxu0 0.0
      %3300 = vmatpush1.msra.mxu0 0.0
      %3301 = vmatprep.subr.mxu0 0.0
      %3302 = vmatpush1.msra.mxu0 0.0
      %3303 = vmatprep.subr.mxu0 0.0
      %3304 = vmatpush1.msra.mxu0 0.0
      %3305 = vmatprep.subr.mxu0 0.0
      %3306 = vmatpush1.msra.mxu0 0.0
      %3307 = vmatprep.subr.mxu0 0.0
      %3308 = vmatpush1.msra.mxu0 0.0
      %3309 = vmatprep.subr.mxu0 0.0
      %3310 = vmatpush1.msra.mxu0 0.0
      %3311 = vmatprep.subr.mxu0 0.0
      %3312 = vmatpush1.msra.mxu0 0.0
      %3313 = vmatprep.subr.mxu0 0.0
      %3314 = vmatpush1.msra.mxu0 0.0
      %3315 = vmatprep.subr.mxu0 0.0
      %3316 = vmatpush1.msra.mxu0 0.0
      %3317 = vmatprep.subr.mxu0 0.0
      %3318 = vmatpush1.msra.mxu0 0.0
      %3319 = vmatprep.subr.mxu0 0.0
      %3320 = vmatpush1.msra.mxu0 0.0
      %3321 = vmatprep.subr.mxu0 0.0
      %3322 = vmatpush1.msra.mxu0 0.0
      %3323 = vmatprep.subr.mxu0 0.0
      %3324 = vmatpush1.msra.mxu0 0.0
      %3325 = vmatprep.subr.mxu0 0.0
      %3326 = vmatpush1.msra.mxu0 0.0
      %3327 = vmatprep.subr.mxu0 0.0
      %3328 = vmatpush1.msra.mxu0 0.0
      %3329 = vmatprep.subr.mxu0 0.0
      %3330 = vmatpush1.msra.mxu0 0.0
      %3331 = vmatprep.subr.mxu0 0.0
      %3332 = vmatpush1.msra.mxu0 0.0
      %3333 = vmatprep.subr.mxu0 0.0
      %3334 = vmatpush1.msra.mxu0 0.0
      %3335 = vmatprep.mubr.f32.mxu0 0.0
      %3336 = vmatmul.mubr.f32.gmra.mrb[0].mxu0 %v3269
      %v3337 = vpop.f32.mrb[0].mxu0
      %v3338 = vadd.f32 0.0, %v3337
      %v3339 = vpop.f32.mrb[0].mxu0
      %v3340 = vadd.f32 0.0, %v3339
      %3341 = vdwg.mxu0
      %3342 = vmatprep.subr.mxu0 %v3253
      %3343 = vmatpush1.msra.mxu0 %v3252
      %3344 = vmatprep.subr.mxu0 0.0
      %3345 = vmatpush1.msra.mxu0 0.0
      %3346 = vmatprep.subr.mxu0 0.0
      %3347 = vmatpush1.msra.mxu0 0.0
      %3348 = vmatprep.subr.mxu0 0.0
      %3349 = vmatpush1.msra.mxu0 0.0
      %3350 = vmatprep.subr.mxu0 0.0
      %3351 = vmatpush1.msra.mxu0 0.0
      %3352 = vmatprep.subr.mxu0 0.0
      %3353 = vmatpush1.msra.mxu0 0.0
      %3354 = vmatprep.subr.mxu0 0.0
      %3355 = vmatpush1.msra.mxu0 0.0
      %3356 = vmatprep.subr.mxu0 0.0
      %3357 = vmatpush1.msra.mxu0 0.0
      %3358 = vmatprep.subr.mxu0 0.0
      %3359 = vmatpush1.msra.mxu0 0.0
      %3360 = vmatprep.subr.mxu0 0.0
      %3361 = vmatpush1.msra.mxu0 0.0
      %3362 = vmatprep.subr.mxu0 0.0
      %3363 = vmatpush1.msra.mxu0 0.0
      %3364 = vmatprep.subr.mxu0 0.0
      %3365 = vmatpush1.msra.mxu0 0.0
      %3366 = vmatprep.subr.mxu0 0.0
      %3367 = vmatpush1.msra.mxu0 0.0
      %3368 = vmatprep.subr.mxu0 0.0
      %3369 = vmatpush1.msra.mxu0 0.0
      %3370 = vmatprep.subr.mxu0 0.0
      %3371 = vmatpush1.msra.mxu0 0.0
      %3372 = vmatprep.subr.mxu0 0.0
      %3373 = vmatpush1.msra.mxu0 0.0
      %3374 = vmatprep.subr.mxu0 0.0
      %3375 = vmatpush1.msra.mxu0 0.0
      %3376 = vmatprep.subr.mxu0 0.0
      %3377 = vmatpush1.msra.mxu0 0.0
      %3378 = vmatprep.subr.mxu0 0.0
      %3379 = vmatpush1.msra.mxu0 0.0
      %3380 = vmatprep.subr.mxu0 0.0
      %3381 = vmatpush1.msra.mxu0 0.0
      %3382 = vmatprep.subr.mxu0 0.0
      %3383 = vmatpush1.msra.mxu0 0.0
      %3384 = vmatprep.subr.mxu0 0.0
      %3385 = vmatpush1.msra.mxu0 0.0
      %3386 = vmatprep.subr.mxu0 0.0
      %3387 = vmatpush1.msra.mxu0 0.0
      %3388 = vmatprep.subr.mxu0 0.0
      %3389 = vmatpush1.msra.mxu0 0.0
      %3390 = vmatprep.subr.mxu0 0.0
      %3391 = vmatpush1.msra.mxu0 0.0
      %3392 = vmatprep.subr.mxu0 0.0
      %3393 = vmatpush1.msra.mxu0 0.0
      %3394 = vmatprep.subr.mxu0 0.0
      %3395 = vmatpush1.msra.mxu0 0.0
      %3396 = vmatprep.subr.mxu0 0.0
      %3397 = vmatpush1.msra.mxu0 0.0
      %3398 = vmatprep.subr.mxu0 0.0
      %3399 = vmatpush1.msra.mxu0 0.0
      %3400 = vmatprep.subr.mxu0 0.0
      %3401 = vmatpush1.msra.mxu0 0.0
      %3402 = vmatprep.subr.mxu0 0.0
      %3403 = vmatpush1.msra.mxu0 0.0
      %3404 = vmatprep.subr.mxu0 0.0
      %3405 = vmatpush1.msra.mxu0 0.0
      %3406 = vmatprep.mubr.f32.mxu0 0.0
      %3407 = vmatmul.mubr.f32.gmra.mrb[0].mxu0 %v3269
      %v3408 = vpop.f32.mrb[0].mxu0
      %v3409 = vadd.f32 0.0, %v3408
      %v3410 = vpop.f32.mrb[0].mxu0
      %v3411 = vadd.f32 0.0, %v3410
      %3412 = vdwg.mxu0
      %3413 = vmatprep.subr.mxu0 %v3255
      %3414 = vmatpush1.msra.mxu0 %v3254
      %3415 = vmatprep.subr.mxu0 0.0
      %3416 = vmatpush1.msra.mxu0 0.0
      %3417 = vmatprep.subr.mxu0 0.0
      %3418 = vmatpush1.msra.mxu0 0.0
      %3419 = vmatprep.subr.mxu0 0.0
      %3420 = vmatpush1.msra.mxu0 0.0
      %3421 = vmatprep.subr.mxu0 0.0
      %3422 = vmatpush1.msra.mxu0 0.0
      %3423 = vmatprep.subr.mxu0 0.0
      %3424 = vmatpush1.msra.mxu0 0.0
      %3425 = vmatprep.subr.mxu0 0.0
      %3426 = vmatpush1.msra.mxu0 0.0
      %3427 = vmatprep.subr.mxu0 0.0
      %3428 = vmatpush1.msra.mxu0 0.0
      %3429 = vmatprep.subr.mxu0 0.0
      %3430 = vmatpush1.msra.mxu0 0.0
      %3431 = vmatprep.subr.mxu0 0.0
      %3432 = vmatpush1.msra.mxu0 0.0
      %3433 = vmatprep.subr.mxu0 0.0
      %3434 = vmatpush1.msra.mxu0 0.0
      %3435 = vmatprep.subr.mxu0 0.0
      %3436 = vmatpush1.msra.mxu0 0.0
      %3437 = vmatprep.subr.mxu0 0.0
      %3438 = vmatpush1.msra.mxu0 0.0
      %3439 = vmatprep.subr.mxu0 0.0
      %3440 = vmatpush1.msra.mxu0 0.0
      %3441 = vmatprep.subr.mxu0 0.0
      %3442 = vmatpush1.msra.mxu0 0.0
      %3443 = vmatprep.subr.mxu0 0.0
      %3444 = vmatpush1.msra.mxu0 0.0
      %3445 = vmatprep.subr.mxu0 0.0
      %3446 = vmatpush1.msra.mxu0 0.0
      %3447 = vmatprep.subr.mxu0 0.0
      %3448 = vmatpush1.msra.mxu0 0.0
      %3449 = vmatprep.subr.mxu0 0.0
      %3450 = vmatpush1.msra.mxu0 0.0
      %3451 = vmatprep.subr.mxu0 0.0
      %3452 = vmatpush1.msra.mxu0 0.0
      %3453 = vmatprep.subr.mxu0 0.0
      %3454 = vmatpush1.msra.mxu0 0.0
      %3455 = vmatprep.subr.mxu0 0.0
      %3456 = vmatpush1.msra.mxu0 0.0
      %3457 = vmatprep.subr.mxu0 0.0
      %3458 = vmatpush1.msra.mxu0 0.0
      %3459 = vmatprep.subr.mxu0 0.0
      %3460 = vmatpush1.msra.mxu0 0.0
      %3461 = vmatprep.subr.mxu0 0.0
      %3462 = vmatpush1.msra.mxu0 0.0
      %3463 = vmatprep.subr.mxu0 0.0
      %3464 = vmatpush1.msra.mxu0 0.0
      %3465 = vmatprep.subr.mxu0 0.0
      %3466 = vmatpush1.msra.mxu0 0.0
      %3467 = vmatprep.subr.mxu0 0.0
      %3468 = vmatpush1.msra.mxu0 0.0
      %3469 = vmatprep.subr.mxu0 0.0
      %3470 = vmatpush1.msra.mxu0 0.0
      %3471 = vmatprep.subr.mxu0 0.0
      %3472 = vmatpush1.msra.mxu0 0.0
      %3473 = vmatprep.subr.mxu0 0.0
      %3474 = vmatpush1.msra.mxu0 0.0
      %3475 = vmatprep.subr.mxu0 0.0
      %3476 = vmatpush1.msra.mxu0 0.0
      %3477 = vmatprep.mubr.f32.mxu0 0.0
      %3478 = vmatmul.mubr.f32.gmra.mrb[0].mxu0 %v3269
      %v3479 = vpop.f32.mrb[0].mxu0
      %v3480 = vadd.f32 0.0, %v3479
      %v3481 = vpop.f32.mrb[0].mxu0
      %v3482 = vadd.f32 0.0, %v3481
      %3483 = vdwg.mxu0
      %3484 = vmatprep.subr.mxu0 %v3257
      %3485 = vmatpush1.msra.mxu0 %v3256
      %3486 = vmatprep.subr.mxu0 0.0
      %3487 = vmatpush1.msra.mxu0 0.0
      %3488 = vmatprep.subr.mxu0 0.0
      %3489 = vmatpush1.msra.mxu0 0.0
      %3490 = vmatprep.subr.mxu0 0.0
      %3491 = vmatpush1.msra.mxu0 0.0
      %3492 = vmatprep.subr.mxu0 0.0
      %3493 = vmatpush1.msra.mxu0 0.0
      %3494 = vmatprep.subr.mxu0 0.0
      %3495 = vmatpush1.msra.mxu0 0.0
      %3496 = vmatprep.subr.mxu0 0.0
      %3497 = vmatpush1.msra.mxu0 0.0
      %3498 = vmatprep.subr.mxu0 0.0
      %3499 = vmatpush1.msra.mxu0 0.0
      %3500 = vmatprep.subr.mxu0 0.0
      %3501 = vmatpush1.msra.mxu0 0.0
      %3502 = vmatprep.subr.mxu0 0.0
      %3503 = vmatpush1.msra.mxu0 0.0
      %3504 = vmatprep.subr.mxu0 0.0
      %3505 = vmatpush1.msra.mxu0 0.0
      %3506 = vmatprep.subr.mxu0 0.0
      %3507 = vmatpush1.msra.mxu0 0.0
      %3508 = vmatprep.subr.mxu0 0.0
      %3509 = vmatpush1.msra.mxu0 0.0
      %3510 = vmatprep.subr.mxu0 0.0
      %3511 = vmatpush1.msra.mxu0 0.0
      %3512 = vmatprep.subr.mxu0 0.0
      %3513 = vmatpush1.msra.mxu0 0.0
      %3514 = vmatprep.subr.mxu0 0.0
      %3515 = vmatpush1.msra.mxu0 0.0
      %3516 = vmatprep.subr.mxu0 0.0
      %3517 = vmatpush1.msra.mxu0 0.0
      %3518 = vmatprep.subr.mxu0 0.0
      %3519 = vmatpush1.msra.mxu0 0.0
      %3520 = vmatprep.subr.mxu0 0.0
      %3521 = vmatpush1.msra.mxu0 0.0
      %3522 = vmatprep.subr.mxu0 0.0
      %3523 = vmatpush1.msra.mxu0 0.0
      %3524 = vmatprep.subr.mxu0 0.0
      %3525 = vmatpush1.msra.mxu0 0.0
      %3526 = vmatprep.subr.mxu0 0.0
      %3527 = vmatpush1.msra.mxu0 0.0
      %3528 = vmatprep.subr.mxu0 0.0
      %3529 = vmatpush1.msra.mxu0 0.0
      %3530 = vmatprep.subr.mxu0 0.0
      %3531 = vmatpush1.msra.mxu0 0.0
      %3532 = vmatprep.subr.mxu0 0.0
      %3533 = vmatpush1.msra.mxu0 0.0
      %3534 = vmatprep.subr.mxu0 0.0
      %3535 = vmatpush1.msra.mxu0 0.0
      %3536 = vmatprep.subr.mxu0 0.0
      %3537 = vmatpush1.msra.mxu0 0.0
      %3538 = vmatprep.subr.mxu0 0.0
      %3539 = vmatpush1.msra.mxu0 0.0
      %3540 = vmatprep.subr.mxu0 0.0
      %3541 = vmatpush1.msra.mxu0 0.0
      %3542 = vmatprep.subr.mxu0 0.0
      %3543 = vmatpush1.msra.mxu0 0.0
      %3544 = vmatprep.subr.mxu0 0.0
      %3545 = vmatpush1.msra.mxu0 0.0
      %3546 = vmatprep.subr.mxu0 0.0
      %3547 = vmatpush1.msra.mxu0 0.0
      %3548 = vmatprep.mubr.f32.mxu0 0.0
      %3549 = vmatmul.mubr.f32.gmra.mrb[0].mxu0 %v3269
      %v3550 = vpop.f32.mrb[0].mxu0
      %v3551 = vadd.f32 0.0, %v3550
      %v3552 = vpop.f32.mrb[0].mxu0
      %v3553 = vadd.f32 0.0, %v3552
      %3554 = vdwg.mxu0
      %3555 = vmatprep.subr.mxu0 0.0
      %3556 = vmatpush1.msra.mxu0 %v3258
      %3557 = vmatprep.subr.mxu0 0.0
      %3558 = vmatpush1.msra.mxu0 0.0
      %3559 = vmatprep.subr.mxu0 0.0
      %3560 = vmatpush1.msra.mxu0 0.0
      %3561 = vmatprep.subr.mxu0 0.0
      %3562 = vmatpush1.msra.mxu0 0.0
      %3563 = vmatprep.subr.mxu0 0.0
      %3564 = vmatpush1.msra.mxu0 0.0
      %3565 = vmatprep.subr.mxu0 0.0
      %3566 = vmatpush1.msra.mxu0 0.0
      %3567 = vmatprep.subr.mxu0 0.0
      %3568 = vmatpush1.msra.mxu0 0.0
      %3569 = vmatprep.subr.mxu0 0.0
      %3570 = vmatpush1.msra.mxu0 0.0
      %3571 = vmatprep.subr.mxu0 0.0
      %3572 = vmatpush1.msra.mxu0 0.0
      %3573 = vmatprep.subr.mxu0 0.0
      %3574 = vmatpush1.msra.mxu0 0.0
      %3575 = vmatprep.subr.mxu0 0.0
      %3576 = vmatpush1.msra.mxu0 0.0
      %3577 = vmatprep.subr.mxu0 0.0
      %3578 = vmatpush1.msra.mxu0 0.0
      %3579 = vmatprep.subr.mxu0 0.0
      %3580 = vmatpush1.msra.mxu0 0.0
      %3581 = vmatprep.subr.mxu0 0.0
      %3582 = vmatpush1.msra.mxu0 0.0
      %3583 = vmatprep.subr.mxu0 0.0
      %3584 = vmatpush1.msra.mxu0 0.0
      %3585 = vmatprep.subr.mxu0 0.0
      %3586 = vmatpush1.msra.mxu0 0.0
      %3587 = vmatprep.subr.mxu0 0.0
      %3588 = vmatpush1.msra.mxu0 0.0
      %3589 = vmatprep.subr.mxu0 0.0
      %3590 = vmatpush1.msra.mxu0 0.0
      %3591 = vmatprep.subr.mxu0 0.0
      %3592 = vmatpush1.msra.mxu0 0.0
      %3593 = vmatprep.subr.mxu0 0.0
      %3594 = vmatpush1.msra.mxu0 0.0
      %3595 = vmatprep.subr.mxu0 0.0
      %3596 = vmatpush1.msra.mxu0 0.0
      %3597 = vmatprep.subr.mxu0 0.0
      %3598 = vmatpush1.msra.mxu0 0.0
      %3599 = vmatprep.subr.mxu0 0.0
      %3600 = vmatpush1.msra.mxu0 0.0
      %3601 = vmatprep.subr.mxu0 0.0
      %3602 = vmatpush1.msra.mxu0 0.0
      %3603 = vmatprep.subr.mxu0 0.0
      %3604 = vmatpush1.msra.mxu0 0.0
      %3605 = vmatprep.subr.mxu0 0.0
      %3606 = vmatpush1.msra.mxu0 0.0
      %3607 = vmatprep.subr.mxu0 0.0
      %3608 = vmatpush1.msra.mxu0 0.0
      %3609 = vmatprep.subr.mxu0 0.0
      %3610 = vmatpush1.msra.mxu0 0.0
      %3611 = vmatprep.subr.mxu0 0.0
      %3612 = vmatpush1.msra.mxu0 0.0
      %3613 = vmatprep.subr.mxu0 0.0
      %3614 = vmatpush1.msra.mxu0 0.0
      %3615 = vmatprep.subr.mxu0 0.0
      %3616 = vmatpush1.msra.mxu0 0.0
      %3617 = vmatprep.subr.mxu0 0.0
      %3618 = vmatpush1.msra.mxu0 0.0
      %3619 = vmatprep.mubr.f32.mxu0 0.0
      %3620 = vmatmul.mubr.f32.gmra.mrb[0].mxu0 %v3269
      %v3621 = vpop.f32.mrb[0].mxu0
      %v3622 = vadd.f32 0.0, %v3621
      %v3623 = vpop.f32.mrb[0].mxu0
      %3624 = vdwg.mxu0
      %v3625 = vadd.f32 %v3218, %v3338
      %v3626 = vadd.f32 %v3219, %v3340
      %v3627 = vadd.f32 %v3220, %v3409
      %v3628 = vadd.f32 %v3221, %v3411
      %v3629 = vadd.f32 %v3222, %v3480
      %v3630 = vadd.f32 %v3223, %v3482
      %v3631 = vadd.f32 %v3224, %v3551
      %v3632 = vadd.f32 %v3225, %v3553
      %v3633 = vadd.f32 %v3226, %v3622
      %s3634 = scalar_lea.vmem %s1, 64
      %v3635 = vld [vmem:[%s3634] sm:$0xff]
      %3636 = vrot.lane.b32.xlu0 %v444, 58
      %v3637 = vpop.permute.xlu0 %3636
      %3638 = vrot.lane.b32.xlu0 %v427, 58
      %v3639 = vpop.permute.xlu0 %3638
      %3640 = vrot.lane.b32.xlu0 %v428, 58
      %v3641 = vpop.permute.xlu0 %3640
      %3642 = vrot.lane.b32.xlu0 %v429, 58
      %v3643 = vpop.permute.xlu0 %3642
      %3644 = vrot.lane.b32.xlu0 %v430, 58
      %v3645 = vpop.permute.xlu0 %3644
      %3646 = vrot.lane.b32.xlu0 %v431, 58
      %v3647 = vpop.permute.xlu0 %3646
      %3648 = vrot.lane.b32.xlu0 %v432, 58
      %v3649 = vpop.permute.xlu0 %3648
      %3650 = vrot.lane.b32.xlu0 %v433, 58
      %v3651 = vpop.permute.xlu0 %3650
      %3652 = vrot.lane.b32.xlu0 %v446, 58
      %v3653 = vpop.permute.xlu0 %3652
      %3654 = vrot.lane.b32.xlu0 0.0, 58
      %v3655 = vpop.permute.xlu0 %3654
      %vm3656 = vcmask 474112
      %v3657 = vsel %vm3656, %v3637, %v3639
      %v3658 = vsel %vm3656, %v3639, %v3641
      %v3659 = vsel %vm3656, %v3641, %v3643
      %v3660 = vsel %vm3656, %v3643, %v3645
      %v3661 = vsel %vm3656, %v3645, %v3647
      %v3662 = vsel %vm3656, %v3647, %v3649
      %v3663 = vsel %vm3656, %v3649, %v3651
      %v3664 = vsel %vm3656, %v3651, %v3653
      %v3665 = vsel %vm3656, %v3653, %v3655
      %v3676 = vsel %vm488, %v3635, 0
      %3678 = vmatprep.subr.mxu0 %v3658
      %3679 = vmatpush1.msra.mxu0 %v3657
      %3680 = vmatprep.subr.mxu0 0.0
      %3681 = vmatpush1.msra.mxu0 0.0
      %3682 = vmatprep.subr.mxu0 0.0
      %3683 = vmatpush1.msra.mxu0 0.0
      %3684 = vmatprep.subr.mxu0 0.0
      %3685 = vmatpush1.msra.mxu0 0.0
      %3686 = vmatprep.subr.mxu0 0.0
      %3687 = vmatpush1.msra.mxu0 0.0
      %3688 = vmatprep.subr.mxu0 0.0
      %3689 = vmatpush1.msra.mxu0 0.0
      %3690 = vmatprep.subr.mxu0 0.0
      %3691 = vmatpush1.msra.mxu0 0.0
      %3692 = vmatprep.subr.mxu0 0.0
      %3693 = vmatpush1.msra.mxu0 0.0
      %3694 = vmatprep.subr.mxu0 0.0
      %3695 = vmatpush1.msra.mxu0 0.0
      %3696 = vmatprep.subr.mxu0 0.0
      %3697 = vmatpush1.msra.mxu0 0.0
      %3698 = vmatprep.subr.mxu0 0.0
      %3699 = vmatpush1.msra.mxu0 0.0
      %3700 = vmatprep.subr.mxu0 0.0
      %3701 = vmatpush1.msra.mxu0 0.0
      %3702 = vmatprep.subr.mxu0 0.0
      %3703 = vmatpush1.msra.mxu0 0.0
      %3704 = vmatprep.subr.mxu0 0.0
      %3705 = vmatpush1.msra.mxu0 0.0
      %3706 = vmatprep.subr.mxu0 0.0
      %3707 = vmatpush1.msra.mxu0 0.0
      %3708 = vmatprep.subr.mxu0 0.0
      %3709 = vmatpush1.msra.mxu0 0.0
      %3710 = vmatprep.subr.mxu0 0.0
      %3711 = vmatpush1.msra.mxu0 0.0
      %3712 = vmatprep.subr.mxu0 0.0
      %3713 = vmatpush1.msra.mxu0 0.0
      %3714 = vmatprep.subr.mxu0 0.0
      %3715 = vmatpush1.msra.mxu0 0.0
      %3716 = vmatprep.subr.mxu0 0.0
      %3717 = vmatpush1.msra.mxu0 0.0
      %3718 = vmatprep.subr.mxu0 0.0
      %3719 = vmatpush1.msra.mxu0 0.0
      %3720 = vmatprep.subr.mxu0 0.0
      %3721 = vmatpush1.msra.mxu0 0.0
      %3722 = vmatprep.subr.mxu0 0.0
      %3723 = vmatpush1.msra.mxu0 0.0
      %3724 = vmatprep.subr.mxu0 0.0
      %3725 = vmatpush1.msra.mxu0 0.0
      %3726 = vmatprep.subr.mxu0 0.0
      %3727 = vmatpush1.msra.mxu0 0.0
      %3728 = vmatprep.subr.mxu0 0.0
      %3729 = vmatpush1.msra.mxu0 0.0
      %3730 = vmatprep.subr.mxu0 0.0
      %3731 = vmatpush1.msra.mxu0 0.0
      %3732 = vmatprep.subr.mxu0 0.0
      %3733 = vmatpush1.msra.mxu0 0.0
      %3734 = vmatprep.subr.mxu0 0.0
      %3735 = vmatpush1.msra.mxu0 0.0
      %3736 = vmatprep.subr.mxu0 0.0
      %3737 = vmatpush1.msra.mxu0 0.0
      %3738 = vmatprep.subr.mxu0 0.0
      %3739 = vmatpush1.msra.mxu0 0.0
      %3740 = vmatprep.subr.mxu0 0.0
      %3741 = vmatpush1.msra.mxu0 0.0
      %3742 = vmatprep.mubr.f32.mxu0 0.0
      %3743 = vmatmul.mubr.f32.gmra.mrb[0].mxu0 %v3676
      %v3744 = vpop.f32.mrb[0].mxu0
      %v3745 = vadd.f32 0.0, %v3744
      %v3746 = vpop.f32.mrb[0].mxu0
      %v3747 = vadd.f32 0.0, %v3746
      %3748 = vdwg.mxu0
      %3749 = vmatprep.subr.mxu0 %v3660
      %3750 = vmatpush1.msra.mxu0 %v3659
      %3751 = vmatprep.subr.mxu0 0.0
      %3752 = vmatpush1.msra.mxu0 0.0
      %3753 = vmatprep.subr.mxu0 0.0
      %3754 = vmatpush1.msra.mxu0 0.0
      %3755 = vmatprep.subr.mxu0 0.0
      %3756 = vmatpush1.msra.mxu0 0.0
      %3757 = vmatprep.subr.mxu0 0.0
      %3758 = vmatpush1.msra.mxu0 0.0
      %3759 = vmatprep.subr.mxu0 0.0
      %3760 = vmatpush1.msra.mxu0 0.0
      %3761 = vmatprep.subr.mxu0 0.0
      %3762 = vmatpush1.msra.mxu0 0.0
      %3763 = vmatprep.subr.mxu0 0.0
      %3764 = vmatpush1.msra.mxu0 0.0
      %3765 = vmatprep.subr.mxu0 0.0
      %3766 = vmatpush1.msra.mxu0 0.0
      %3767 = vmatprep.subr.mxu0 0.0
      %3768 = vmatpush1.msra.mxu0 0.0
      %3769 = vmatprep.subr.mxu0 0.0
      %3770 = vmatpush1.msra.mxu0 0.0
      %3771 = vmatprep.subr.mxu0 0.0
      %3772 = vmatpush1.msra.mxu0 0.0
      %3773 = vmatprep.subr.mxu0 0.0
      %3774 = vmatpush1.msra.mxu0 0.0
      %3775 = vmatprep.subr.mxu0 0.0
      %3776 = vmatpush1.msra.mxu0 0.0
      %3777 = vmatprep.subr.mxu0 0.0
      %3778 = vmatpush1.msra.mxu0 0.0
      %3779 = vmatprep.subr.mxu0 0.0
      %3780 = vmatpush1.msra.mxu0 0.0
      %3781 = vmatprep.subr.mxu0 0.0
      %3782 = vmatpush1.msra.mxu0 0.0
      %3783 = vmatprep.subr.mxu0 0.0
      %3784 = vmatpush1.msra.mxu0 0.0
      %3785 = vmatprep.subr.mxu0 0.0
      %3786 = vmatpush1.msra.mxu0 0.0
      %3787 = vmatprep.subr.mxu0 0.0
      %3788 = vmatpush1.msra.mxu0 0.0
      %3789 = vmatprep.subr.mxu0 0.0
      %3790 = vmatpush1.msra.mxu0 0.0
      %3791 = vmatprep.subr.mxu0 0.0
      %3792 = vmatpush1.msra.mxu0 0.0
      %3793 = vmatprep.subr.mxu0 0.0
      %3794 = vmatpush1.msra.mxu0 0.0
      %3795 = vmatprep.subr.mxu0 0.0
      %3796 = vmatpush1.msra.mxu0 0.0
      %3797 = vmatprep.subr.mxu0 0.0
      %3798 = vmatpush1.msra.mxu0 0.0
      %3799 = vmatprep.subr.mxu0 0.0
      %3800 = vmatpush1.msra.mxu0 0.0
      %3801 = vmatprep.subr.mxu0 0.0
      %3802 = vmatpush1.msra.mxu0 0.0
      %3803 = vmatprep.subr.mxu0 0.0
      %3804 = vmatpush1.msra.mxu0 0.0
      %3805 = vmatprep.subr.mxu0 0.0
      %3806 = vmatpush1.msra.mxu0 0.0
      %3807 = vmatprep.subr.mxu0 0.0
      %3808 = vmatpush1.msra.mxu0 0.0
      %3809 = vmatprep.subr.mxu0 0.0
      %3810 = vmatpush1.msra.mxu0 0.0
      %3811 = vmatprep.subr.mxu0 0.0
      %3812 = vmatpush1.msra.mxu0 0.0
      %3813 = vmatprep.mubr.f32.mxu0 0.0
      %3814 = vmatmul.mubr.f32.gmra.mrb[0].mxu0 %v3676
      %v3815 = vpop.f32.mrb[0].mxu0
      %v3816 = vadd.f32 0.0, %v3815
      %v3817 = vpop.f32.mrb[0].mxu0
      %v3818 = vadd.f32 0.0, %v3817
      %3819 = vdwg.mxu0
      %3820 = vmatprep.subr.mxu0 %v3662
      %3821 = vmatpush1.msra.mxu0 %v3661
      %3822 = vmatprep.subr.mxu0 0.0
      %3823 = vmatpush1.msra.mxu0 0.0
      %3824 = vmatprep.subr.mxu0 0.0
      %3825 = vmatpush1.msra.mxu0 0.0
      %3826 = vmatprep.subr.mxu0 0.0
      %3827 = vmatpush1.msra.mxu0 0.0
      %3828 = vmatprep.subr.mxu0 0.0
      %3829 = vmatpush1.msra.mxu0 0.0
      %3830 = vmatprep.subr.mxu0 0.0
      %3831 = vmatpush1.msra.mxu0 0.0
      %3832 = vmatprep.subr.mxu0 0.0
      %3833 = vmatpush1.msra.mxu0 0.0
      %3834 = vmatprep.subr.mxu0 0.0
      %3835 = vmatpush1.msra.mxu0 0.0
      %3836 = vmatprep.subr.mxu0 0.0
      %3837 = vmatpush1.msra.mxu0 0.0
      %3838 = vmatprep.subr.mxu0 0.0
      %3839 = vmatpush1.msra.mxu0 0.0
      %3840 = vmatprep.subr.mxu0 0.0
      %3841 = vmatpush1.msra.mxu0 0.0
      %3842 = vmatprep.subr.mxu0 0.0
      %3843 = vmatpush1.msra.mxu0 0.0
      %3844 = vmatprep.subr.mxu0 0.0
      %3845 = vmatpush1.msra.mxu0 0.0
      %3846 = vmatprep.subr.mxu0 0.0
      %3847 = vmatpush1.msra.mxu0 0.0
      %3848 = vmatprep.subr.mxu0 0.0
      %3849 = vmatpush1.msra.mxu0 0.0
      %3850 = vmatprep.subr.mxu0 0.0
      %3851 = vmatpush1.msra.mxu0 0.0
      %3852 = vmatprep.subr.mxu0 0.0
      %3853 = vmatpush1.msra.mxu0 0.0
      %3854 = vmatprep.subr.mxu0 0.0
      %3855 = vmatpush1.msra.mxu0 0.0
      %3856 = vmatprep.subr.mxu0 0.0
      %3857 = vmatpush1.msra.mxu0 0.0
      %3858 = vmatprep.subr.mxu0 0.0
      %3859 = vmatpush1.msra.mxu0 0.0
      %3860 = vmatprep.subr.mxu0 0.0
      %3861 = vmatpush1.msra.mxu0 0.0
      %3862 = vmatprep.subr.mxu0 0.0
      %3863 = vmatpush1.msra.mxu0 0.0
      %3864 = vmatprep.subr.mxu0 0.0
      %3865 = vmatpush1.msra.mxu0 0.0
      %3866 = vmatprep.subr.mxu0 0.0
      %3867 = vmatpush1.msra.mxu0 0.0
      %3868 = vmatprep.subr.mxu0 0.0
      %3869 = vmatpush1.msra.mxu0 0.0
      %3870 = vmatprep.subr.mxu0 0.0
      %3871 = vmatpush1.msra.mxu0 0.0
      %3872 = vmatprep.subr.mxu0 0.0
      %3873 = vmatpush1.msra.mxu0 0.0
      %3874 = vmatprep.subr.mxu0 0.0
      %3875 = vmatpush1.msra.mxu0 0.0
      %3876 = vmatprep.subr.mxu0 0.0
      %3877 = vmatpush1.msra.mxu0 0.0
      %3878 = vmatprep.subr.mxu0 0.0
      %3879 = vmatpush1.msra.mxu0 0.0
      %3880 = vmatprep.subr.mxu0 0.0
      %3881 = vmatpush1.msra.mxu0 0.0
      %3882 = vmatprep.subr.mxu0 0.0
      %3883 = vmatpush1.msra.mxu0 0.0
      %3884 = vmatprep.mubr.f32.mxu0 0.0
      %3885 = vmatmul.mubr.f32.gmra.mrb[0].mxu0 %v3676
      %v3886 = vpop.f32.mrb[0].mxu0
      %v3887 = vadd.f32 0.0, %v3886
      %v3888 = vpop.f32.mrb[0].mxu0
      %v3889 = vadd.f32 0.0, %v3888
      %3890 = vdwg.mxu0
      %3891 = vmatprep.subr.mxu0 %v3664
      %3892 = vmatpush1.msra.mxu0 %v3663
      %3893 = vmatprep.subr.mxu0 0.0
      %3894 = vmatpush1.msra.mxu0 0.0
      %3895 = vmatprep.subr.mxu0 0.0
      %3896 = vmatpush1.msra.mxu0 0.0
      %3897 = vmatprep.subr.mxu0 0.0
      %3898 = vmatpush1.msra.mxu0 0.0
      %3899 = vmatprep.subr.mxu0 0.0
      %3900 = vmatpush1.msra.mxu0 0.0
      %3901 = vmatprep.subr.mxu0 0.0
      %3902 = vmatpush1.msra.mxu0 0.0
      %3903 = vmatprep.subr.mxu0 0.0
      %3904 = vmatpush1.msra.mxu0 0.0
      %3905 = vmatprep.subr.mxu0 0.0
      %3906 = vmatpush1.msra.mxu0 0.0
      %3907 = vmatprep.subr.mxu0 0.0
      %3908 = vmatpush1.msra.mxu0 0.0
      %3909 = vmatprep.subr.mxu0 0.0
      %3910 = vmatpush1.msra.mxu0 0.0
      %3911 = vmatprep.subr.mxu0 0.0
      %3912 = vmatpush1.msra.mxu0 0.0
      %3913 = vmatprep.subr.mxu0 0.0
      %3914 = vmatpush1.msra.mxu0 0.0
      %3915 = vmatprep.subr.mxu0 0.0
      %3916 = vmatpush1.msra.mxu0 0.0
      %3917 = vmatprep.subr.mxu0 0.0
      %3918 = vmatpush1.msra.mxu0 0.0
      %3919 = vmatprep.subr.mxu0 0.0
      %3920 = vmatpush1.msra.mxu0 0.0
      %3921 = vmatprep.subr.mxu0 0.0
      %3922 = vmatpush1.msra.mxu0 0.0
      %3923 = vmatprep.subr.mxu0 0.0
      %3924 = vmatpush1.msra.mxu0 0.0
      %3925 = vmatprep.subr.mxu0 0.0
      %3926 = vmatpush1.msra.mxu0 0.0
      %3927 = vmatprep.subr.mxu0 0.0
      %3928 = vmatpush1.msra.mxu0 0.0
      %3929 = vmatprep.subr.mxu0 0.0
      %3930 = vmatpush1.msra.mxu0 0.0
      %3931 = vmatprep.subr.mxu0 0.0
      %3932 = vmatpush1.msra.mxu0 0.0
      %3933 = vmatprep.subr.mxu0 0.0
      %3934 = vmatpush1.msra.mxu0 0.0
      %3935 = vmatprep.subr.mxu0 0.0
      %3936 = vmatpush1.msra.mxu0 0.0
      %3937 = vmatprep.subr.mxu0 0.0
      %3938 = vmatpush1.msra.mxu0 0.0
      %3939 = vmatprep.subr.mxu0 0.0
      %3940 = vmatpush1.msra.mxu0 0.0
      %3941 = vmatprep.subr.mxu0 0.0
      %3942 = vmatpush1.msra.mxu0 0.0
      %3943 = vmatprep.subr.mxu0 0.0
      %3944 = vmatpush1.msra.mxu0 0.0
      %3945 = vmatprep.subr.mxu0 0.0
      %3946 = vmatpush1.msra.mxu0 0.0
      %3947 = vmatprep.subr.mxu0 0.0
      %3948 = vmatpush1.msra.mxu0 0.0
      %3949 = vmatprep.subr.mxu0 0.0
      %3950 = vmatpush1.msra.mxu0 0.0
      %3951 = vmatprep.subr.mxu0 0.0
      %3952 = vmatpush1.msra.mxu0 0.0
      %3953 = vmatprep.subr.mxu0 0.0
      %3954 = vmatpush1.msra.mxu0 0.0
      %3955 = vmatprep.mubr.f32.mxu0 0.0
      %3956 = vmatmul.mubr.f32.gmra.mrb[0].mxu0 %v3676
      %v3957 = vpop.f32.mrb[0].mxu0
      %v3958 = vadd.f32 0.0, %v3957
      %v3959 = vpop.f32.mrb[0].mxu0
      %v3960 = vadd.f32 0.0, %v3959
      %3961 = vdwg.mxu0
      %3962 = vmatprep.subr.mxu0 0.0
      %3963 = vmatpush1.msra.mxu0 %v3665
      %3964 = vmatprep.subr.mxu0 0.0
      %3965 = vmatpush1.msra.mxu0 0.0
      %3966 = vmatprep.subr.mxu0 0.0
      %3967 = vmatpush1.msra.mxu0 0.0
      %3968 = vmatprep.subr.mxu0 0.0
      %3969 = vmatpush1.msra.mxu0 0.0
      %3970 = vmatprep.subr.mxu0 0.0
      %3971 = vmatpush1.msra.mxu0 0.0
      %3972 = vmatprep.subr.mxu0 0.0
      %3973 = vmatpush1.msra.mxu0 0.0
      %3974 = vmatprep.subr.mxu0 0.0
      %3975 = vmatpush1.msra.mxu0 0.0
      %3976 = vmatprep.subr.mxu0 0.0
      %3977 = vmatpush1.msra.mxu0 0.0
      %3978 = vmatprep.subr.mxu0 0.0
      %3979 = vmatpush1.msra.mxu0 0.0
      %3980 = vmatprep.subr.mxu0 0.0
      %3981 = vmatpush1.msra.mxu0 0.0
      %3982 = vmatprep.subr.mxu0 0.0
      %3983 = vmatpush1.msra.mxu0 0.0
      %3984 = vmatprep.subr.mxu0 0.0
      %3985 = vmatpush1.msra.mxu0 0.0
      %3986 = vmatprep.subr.mxu0 0.0
      %3987 = vmatpush1.msra.mxu0 0.0
      %3988 = vmatprep.subr.mxu0 0.0
      %3989 = vmatpush1.msra.mxu0 0.0
      %3990 = vmatprep.subr.mxu0 0.0
      %3991 = vmatpush1.msra.mxu0 0.0
      %3992 = vmatprep.subr.mxu0 0.0
      %3993 = vmatpush1.msra.mxu0 0.0
      %3994 = vmatprep.subr.mxu0 0.0
      %3995 = vmatpush1.msra.mxu0 0.0
      %3996 = vmatprep.subr.mxu0 0.0
      %3997 = vmatpush1.msra.mxu0 0.0
      %3998 = vmatprep.subr.mxu0 0.0
      %3999 = vmatpush1.msra.mxu0 0.0
      %4000 = vmatprep.subr.mxu0 0.0
      %4001 = vmatpush1.msra.mxu0 0.0
      %4002 = vmatprep.subr.mxu0 0.0
      %4003 = vmatpush1.msra.mxu0 0.0
      %4004 = vmatprep.subr.mxu0 0.0
      %4005 = vmatpush1.msra.mxu0 0.0
      %4006 = vmatprep.subr.mxu0 0.0
      %4007 = vmatpush1.msra.mxu0 0.0
      %4008 = vmatprep.subr.mxu0 0.0
      %4009 = vmatpush1.msra.mxu0 0.0
      %4010 = vmatprep.subr.mxu0 0.0
      %4011 = vmatpush1.msra.mxu0 0.0
      %4012 = vmatprep.subr.mxu0 0.0
      %4013 = vmatpush1.msra.mxu0 0.0
      %4014 = vmatprep.subr.mxu0 0.0
      %4015 = vmatpush1.msra.mxu0 0.0
      %4016 = vmatprep.subr.mxu0 0.0
      %4017 = vmatpush1.msra.mxu0 0.0
      %4018 = vmatprep.subr.mxu0 0.0
      %4019 = vmatpush1.msra.mxu0 0.0
      %4020 = vmatprep.subr.mxu0 0.0
      %4021 = vmatpush1.msra.mxu0 0.0
      %4022 = vmatprep.subr.mxu0 0.0
      %4023 = vmatpush1.msra.mxu0 0.0
      %4024 = vmatprep.subr.mxu0 0.0
      %4025 = vmatpush1.msra.mxu0 0.0
      %4026 = vmatprep.mubr.f32.mxu0 0.0
      %4027 = vmatmul.mubr.f32.gmra.mrb[0].mxu0 %v3676
      %v4028 = vpop.f32.mrb[0].mxu0
      %v4029 = vadd.f32 0.0, %v4028
      %v4030 = vpop.f32.mrb[0].mxu0
      %4031 = vdwg.mxu0
      %v4032 = vadd.f32 %v3625, %v3745
      %v4033 = vadd.f32 %v3626, %v3747
      %v4034 = vadd.f32 %v3627, %v3816
      %v4035 = vadd.f32 %v3628, %v3818
      %v4036 = vadd.f32 %v3629, %v3887
      %v4037 = vadd.f32 %v3630, %v3889
      %v4038 = vadd.f32 %v3631, %v3958
      %v4039 = vadd.f32 %v3632, %v3960
      %v4040 = vadd.f32 %v3633, %v4029
      %4041 = vst [vmem:[%s291] sm:$0xff] %v4032
      %4042 = vst [vmem:[%s291 + $0x8] sm:$0xff] %v4033
      %4043 = vst [vmem:[%s291 + $0x10] sm:$0xff] %v4034
      %4044 = vst [vmem:[%s291 + $0x18] sm:$0xff] %v4035
      %4045 = vst [vmem:[%s291 + $0x20] sm:$0xff] %v4036
      %4046 = vst [vmem:[%s291 + $0x28] sm:$0xff] %v4037
      %4047 = vst [vmem:[%s291 + $0x30] sm:$0xff] %v4038
      %4048 = vst [vmem:[%s291 + $0x38] sm:$0xff] %v4039
      %vm4049 = vcmask 506880
      %4050 = vst.msk [vmem:[%s291 + $0x40] sm:$0xff] %vm4049, %v4040
      %v4051 = vsel %vm381, %v4032, 0.0
      %v4052 = vsel %vm382, %v4033, 0.0
      %v4053 = vsel %vm383, %v4034, 0.0
      %v4054 = vsel %vm384, %v4035, 0.0
      %v4055 = vsel %vm385, %v4036, 0.0
      %v4056 = vsel %vm386, %v4037, 0.0
      %v4057 = vsel %vm387, %v4038, 0.0
      %v4058 = vsel %vm388, %v4039, 0.0
      %v4059 = vsel %vm389, %v4040, 0.0
      %v4060 = vadd.f32 %v4051, %v4052
      %v4061 = vadd.f32 %v4060, %v4053
      %v4062 = vadd.f32 %v4061, %v4054
      %v4063 = vadd.f32 %v4062, %v4055
      %v4064 = vadd.f32 %v4063, %v4056
      %v4065 = vadd.f32 %v4064, %v4057
      %v4066 = vadd.f32 %v4065, %v4058
      %v4067 = vsel %vm4049, %v4059, 0.0
      %v4068 = vadd.f32 %v4066, %v4067
      %4069 = vadd.xlane.f32.xlu0 %v4068
      %v4070 = vpop.xlane.xlu0 %4069
      %vm4071 = vcmask 7168
      %4072 = vst.msk [vmem:[%s295] sm:$0xff] %vm4071, %v4070
      %v4073 = vmul.f32 %v4051, %v4051
      %v4074 = vmul.f32 %v4052, %v4052
      %v4075 = vmul.f32 %v4053, %v4053
      %v4076 = vmul.f32 %v4054, %v4054
      %v4077 = vmul.f32 %v4055, %v4055
      %v4078 = vmul.f32 %v4056, %v4056
      %v4079 = vmul.f32 %v4057, %v4057
      %v4080 = vmul.f32 %v4058, %v4058
      %v4081 = vmul.f32 %v4059, %v4059
      %v4082 = vadd.f32 %v4073, %v4074
      %v4083 = vadd.f32 %v4082, %v4075
      %v4084 = vadd.f32 %v4083, %v4076
      %v4085 = vadd.f32 %v4084, %v4077
      %v4086 = vadd.f32 %v4085, %v4078
      %v4087 = vadd.f32 %v4086, %v4079
      %v4088 = vadd.f32 %v4087, %v4080
      %v4089 = vsel %vm4049, %v4081, 0.0
      %v4090 = vadd.f32 %v4088, %v4089
      %4091 = vadd.xlane.f32.xlu0 %v4090
      %v4092 = vpop.xlane.xlu0 %4091
      %4093 = vst.msk [vmem:[%s299] sm:$0xff] %vm4071, %v4092
      %p4094 = scmp.lt.s32.totalorder %s19, 1
      %s4095 = scalar_select %p4094, %s19, 1
      %s4096 = smul.addr %s4095, 9
      %s4097 = smul.addr %s4096, 8
      %s4098 = scalar_lea.vmem %s5, %s4097
      %p4099 = scmp.lt.s32.totalorder %s19, 1
      %s4100 = scalar_select %p4099, %s19, 1
      %s4101 = smul.addr %s4100, 8
      %s4102 = scalar_lea.vmem %s6, %s4101
      %p4103 = scmp.lt.s32.totalorder %s19, 1
      %s4104 = scalar_select %p4103, %s19, 1
      %s4105 = smul.addr %s4104, 8
      %s4106 = scalar_lea.vmem %s7, %s4105
      // Predicated region
      $region41: #{unet_up_block_forward.4} parent=39 // pred_check
        %p4107 = pneg %p147
      $region42: #{unet_up_block_forward.4} parent=39 // pred_check_branch
        %4109 = sbr.rel (%p4107) target = $region44
      $region43: #{unet_up_block_forward.4} parent=39 // pred_region
        _
      $region44: #{unet_up_block_forward.4} parent=39 // pred_fallthru
        _
      // Predicated region
      $region45: #{unet_up_block_forward.4} parent=39 // pred_check
        %p4110 = pneg %p173
      $region46: #{unet_up_block_forward.4} parent=39 // pred_check_branch
        %4112 = sbr.rel (%p4110) target = $region48
      $region47: #{unet_up_block_forward.4} parent=39 // pred_region
        _
      $region48: #{unet_up_block_forward.4} parent=39 // pred_fallthru
        _
      // Predicated region
      $region49: #{unet_up_block_forward.4} parent=39 // pred_check
        %p4113 = pneg %p199
      $region50: #{unet_up_block_forward.4} parent=39 // pred_check_branch
        %4115 = sbr.rel (%p4113) target = $region52
      $region51: #{unet_up_block_forward.4} parent=39 // pred_region
        _
      $region52: #{unet_up_block_forward.4} parent=39 // pred_fallthru
        _
    $region40: #{unet_up_block_forward.4} parent=5 // pred_fallthru
      _
    %p4116 = scmp.le.s32.totalorder 2, %s14
    // Predicated region
    $region53: #{unet_up_block_forward.4} parent=5 // pred_check
      %p4117 = pneg %p4116
    $region54: #{unet_up_block_forward.4} parent=5 // pred_check_branch
      %4119 = sbr.rel (%p4117) target = $region56
    $region55: #{unet_up_block_forward.4} parent=5 // pred_region
      %s4120 = ssub.s32 %s14, 2
      // Predicated region
      $region57: #{unet_up_block_forward.4} parent=55 // pred_check
        %p4121 = pneg %p153
      $region58: #{unet_up_block_forward.4} parent=55 // pred_check_branch
        %4123 = sbr.rel (%p4121) target = $region60
      $region59: #{unet_up_block_forward.4} parent=55 // pred_region
        %p4124 = scmp.lt.s32.totalorder %s20, 1
        %s4125 = scalar_select %p4124, %s20, 1
        %s4126 = smul.addr %s4125, 9
        %s4127 = smul.addr %s4126, 8
        %s4128 = scalar_lea.vmem %s5, %s4127
      $region60: #{unet_up_block_forward.4} parent=55 // pred_fallthru
        _
      // Predicated region
      $region61: #{unet_up_block_forward.4} parent=55 // pred_check
        %p4129 = pneg %p179
      $region62: #{unet_up_block_forward.4} parent=55 // pred_check_branch
        %4131 = sbr.rel (%p4129) target = $region64
      $region63: #{unet_up_block_forward.4} parent=55 // pred_region
        %p4132 = scmp.lt.s32.totalorder %s20, 1
        %s4133 = scalar_select %p4132, %s20, 1
        %s4134 = smul.addr %s4133, 8
        %s4135 = scalar_lea.vmem %s6, %s4134
      $region64: #{unet_up_block_forward.4} parent=55 // pred_fallthru
        _
      // Predicated region
      $region65: #{unet_up_block_forward.4} parent=55 // pred_check
        %p4136 = pneg %p205
      $region66: #{unet_up_block_forward.4} parent=55 // pred_check_branch
        %4138 = sbr.rel (%p4136) target = $region68
      $region67: #{unet_up_block_forward.4} parent=55 // pred_region
        %p4139 = scmp.lt.s32.totalorder %s20, 1
        %s4140 = scalar_select %p4139, %s20, 1
        %s4141 = smul.addr %s4140, 8
        %s4142 = scalar_lea.vmem %s7, %s4141
      $region68: #{unet_up_block_forward.4} parent=55 // pred_fallthru
        _
    $region56: #{unet_up_block_forward.4} parent=5 // pred_fallthru
      _
  $region6: #{unet_up_block_forward.4} parent=0 // loop_footer
    %s18 = sadd.s32 1, %s14
  $region7: #{unet_up_block_forward.4} parent=0 // loop_footer_branch
    %13 = sbr.rel target = $region3
  $region8: #{unet_up_block_forward.4} parent=0 // loop_exit
    _

</llo_original>
